<compile_context>
chip_gen: v5e
topology: v5e:2x2
jax: 0.10.0
libtpu: 0.0.40
codegen_flags: <defaults>
</compile_context>

<pallas_src>
import functools

import jax
import jax.numpy as jnp
from jax import lax
from jax.experimental import pallas as pl
from jax.experimental.pallas import tpu as pltpu


# ----------------------------- Pallas kernel ------------------------------ #
def _double_conv_kernel(xcol_ref, w1_ref, w2_ref, s2_ref, o_ref,
                        y1_ref, slab_ref, *, wpp):
    """Fused (conv3x3 -> BN -> ReLU) x 2 on a block of `nblk` images.

    xcol_ref : (nblk, R1, Kc1p) bf16  host im2col of the input + ones column
    w1_ref   : (Kc1p, Cp)       bf16  conv1 weights (BN1 scale + shift folded)
    w2_ref   : (9*Cp, Cp)       bf16  conv2 weights (BN2 scale folded)
    s2_ref   : (1, Cp)          f32   conv2 BN shift
    o_ref    : (nblk, R2, Cp)   bf16  conv2 output frames
    y1_ref   : (nblk*R1, Cp)    bf16  scratch: padded intermediate frames
    slab_ref : (nblk*R2, 9*Cp)  bf16  scratch: conv2 im2col slab
    """
    nblk, r1, kc1 = xcol_ref.shape
    _, r2, cp = o_ref.shape

    # ---- conv1 (+BN+ReLU): ONE MXU matmul, K = 9*Cin + 1 ----
    # Shift rides in via the ones column, so halo / junk rows stay exactly 0
    # after ReLU -> no validity mask needed.
    lhs1 = xcol_ref[...].reshape(nblk * r1, kc1)
    y1 = jnp.dot(lhs1, w1_ref[...], preferred_element_type=jnp.float32)
    y1_ref[...] = jnp.maximum(y1, 0.0).astype(y1_ref.dtype)

    # ---- conv2 (+BN+ReLU): bf16 im2col slab + ONE MXU matmul, K = 9*Cp ----
    # 9 row-shifted copies of y1 are laid side-by-side along K; each store is a
    # lane-aligned (tap*Cp) column block, write-once (no RMW accumulator).
    for n in range(nblk):
        base = n * r1
        for dy in range(3):
            for dx in range(3):
                tap = 3 * dy + dx
                slab_ref[pl.ds(n * r2, r2), pl.ds(tap * cp, cp)] = (
                    y1_ref[pl.ds(base + dy * wpp + dx, r2), :])
    out = jnp.dot(slab_ref[...], w2_ref[...], preferred_element_type=jnp.float32)
    out = jnp.maximum(out + s2_ref[...], 0.0)
    o_ref[...] = out.reshape(nblk, r2, cp).astype(o_ref.dtype)


# ------------------------------ host glue --------------------------------- #
def _round_up(x, m):
    return (x + m - 1) // m * m


def inconv_forward(x_nchw, params, eps=1e-5):
    """Inconv/DoubleConv forward.  x: (N, Cin, H, W) f32 -> (N, Cout, H, W) f32."""
    N, Cin, H, W = x_nchw.shape
    w1, b1, g1, be1, mu1, v1 = params["block1"]
    w2, b2, g2, be2, mu2, v2 = params["block2"]
    Co = w1.shape[0]

    Cp = _round_up(Co, 128)                 # lane-dense padded channel width
    Hp = H + 2
    Wpp = _round_up(W + 2, 8)               # frame width, sublane-aligned dy shifts
    R1 = _round_up(Hp * Wpp + 2, 8)         # padded intermediate frame rows (+2 overread)
    R2 = H * Wpp                            # conv2 output rows (Wpp-W junk cols/row)
    Kc1 = 9 * Cin + 1                       # 9 taps * Cin + folded-shift ones column
    Kc1p = _round_up(Kc1, 8)

    # ---- fold eval-mode BN (running stats) into conv weights ----
    def bn_fold(weight, bias, gamma, beta, mean, var):
        scale = gamma * lax.rsqrt(var + eps)
        wt = jnp.transpose(weight, (2, 3, 1, 0)) * scale     # (3,3,C,O), scale folded
        shift = (bias - mean) * scale + beta                 # (O,)
        return wt, shift

    w1t, s1 = bn_fold(w1, b1, g1, be1, mu1, v1)
    w1f = jnp.concatenate([w1t.reshape(9 * Cin, Co), s1[None, :]], axis=0)
    w1f = jnp.pad(w1f, ((0, Kc1p - Kc1), (0, Cp - Co))).astype(jnp.bfloat16)

    w2t, s2 = bn_fold(w2, b2, g2, be2, mu2, v2)
    w2f = jnp.pad(w2t, ((0, 0), (0, 0), (0, Cp - Co), (0, Cp - Co)))
    w2f = w2f.reshape(9 * Cp, Cp).astype(jnp.bfloat16)
    s2f = jnp.pad(s2, (0, Cp - Co)).reshape(1, Cp).astype(jnp.float32)

    # ---- host im2col for conv1 (input is tiny; K = 9*Cin + 1) ----
    xh = jnp.transpose(x_nchw, (0, 2, 3, 1)).astype(jnp.float32)   # NHWC
    xp = jnp.pad(xh, ((0, 0), (1, 1), (1, 1), (0, 0)))             # (N,H+2,W+2,Cin)
    taps = [xp[:, dy:dy + H, dx:dx + W, :] for dy in range(3) for dx in range(3)]
    taps.append(jnp.ones((N, H, W, 1), jnp.float32))               # folded-shift column
    patch = jnp.concatenate(taps, axis=-1)                         # (N,H,W,Kc1)
    frame = jnp.zeros((N, Hp, Wpp, Kc1), jnp.float32)
    frame = frame.at[:, 1:H + 1, 1:W + 1, :].set(patch)            # halo rows stay 0
    xcol = frame.reshape(N, Hp * Wpp, Kc1)
    xcol = jnp.pad(xcol, ((0, 0), (0, R1 - Hp * Wpp), (0, Kc1p - Kc1)))
    xcol = xcol.astype(jnp.bfloat16)

    # ---- images per grid step (amortize per-step pipeline overhead) ----
    scratch_per_img = R1 * Cp * 2 + R2 * 9 * Cp * 2                # bf16 y1 + slab
    nblk = int(max(1, min(N, (8 * 1024 * 1024) // scratch_per_img)))
    while N % nblk:
        nblk -= 1

    kernel = functools.partial(_double_conv_kernel, wpp=Wpp)
    out = pl.pallas_call(
        kernel,
        out_shape=jax.ShapeDtypeStruct((N, R2, Cp), jnp.bfloat16),
        grid_spec=pltpu.PrefetchScalarGridSpec(
            num_scalar_prefetch=0,
            grid=(N // nblk,),
            in_specs=[
                pl.BlockSpec((nblk, R1, Kc1p), lambda b: (b, 0, 0)),  # im2col input
                pl.BlockSpec((Kc1p, Cp), lambda b: (0, 0)),           # conv1 weights
                pl.BlockSpec((9 * Cp, Cp), lambda b: (0, 0)),         # conv2 weights
                pl.BlockSpec((1, Cp), lambda b: (0, 0)),              # conv2 shift
            ],
            out_specs=pl.BlockSpec((nblk, R2, Cp), lambda b: (b, 0, 0)),
            scratch_shapes=[
                pltpu.VMEM((nblk * R1, Cp), jnp.bfloat16),        # intermediate (never HBM)
                pltpu.VMEM((nblk * R2, 9 * Cp), jnp.bfloat16),    # conv2 im2col slab
            ],
        ),
        compiler_params=pltpu.CompilerParams(
            dimension_semantics=("parallel",),
            vmem_limit_bytes=32 * 1024 * 1024,
        ),
    )(xcol, w1f, w2f, s2f)

    # Drop junk columns / padded channels; back to f32 NCHW at the boundary.
    out = out.reshape(N, H, Wpp, Cp)[:, :, :W, :Co].astype(jnp.float32)
    return jnp.transpose(out, (0, 3, 1, 2))


# --------------------------- parameter creation ---------------------------- #
def make_params(key, in_ch, out_ch):
    def block(k, cin, cout):
        kw, kb, kg, kbe, km, kv = jax.random.split(k, 6)
        weight = jax.random.normal(kw, (cout, cin, 3, 3), jnp.float32) * 0.1
        bias = jax.random.normal(kb, (cout,), jnp.float32) * 0.05
        gamma = 1.0 + 0.1 * jax.random.normal(kg, (cout,), jnp.float32)
        beta = 0.05 * jax.random.normal(kbe, (cout,), jnp.float32)
        mean = 0.05 * jax.random.normal(km, (cout,), jnp.float32)
        var = jnp.abs(jax.random.normal(kv, (cout,), jnp.float32)) * 0.1 + 0.9
        return (weight, bias, gamma, beta, mean, var)

    k1, k2 = jax.random.split(key)
    return {"block1": block(k1, in_ch, out_ch),
            "block2": block(k2, out_ch, out_ch)}


# ------------------------- pure-JAX reference check ------------------------ #
def _ref_conv_bn_relu(x, weight, bias, gamma, beta, mean, var, eps=1e-5):
    y = lax.conv_general_dilated(
        x, weight, window_strides=(1, 1), padding=((1, 1), (1, 1)),
        dimension_numbers=("NCHW", "OIHW", "NCHW"))
    y = y + bias[None, :, None, None]
    y = (y - mean[None, :, None, None]) * (gamma * lax.rsqrt(var + eps))[None, :, None, None]
    y = y + beta[None, :, None, None]
    return jnp.maximum(y, 0.0)


def _ref_inconv(x, params):
    y = _ref_conv_bn_relu(x, *params["block1"])
    return _ref_conv_bn_relu(y, *params["block2"])


# --------------------------------- main ------------------------------------ #
if __name__ == "__main__":
    key = jax.random.PRNGKey(0)
    kx, kp = jax.random.split(key)

    N, IN_CH, OUT_CH, H, W = 2, 4, 8, 16, 16
    x = jax.random.normal(kx, (N, IN_CH, H, W), jnp.float32)
    params = make_params(kp, IN_CH, OUT_CH)

    run = jax.jit(functools.partial(inconv_forward, params=params))
    out = jax.block_until_ready(run(x))

    ref = jax.block_until_ready(_ref_inconv(x, params))
    assert out.shape == (N, OUT_CH, H, W), out.shape
    # bf16 MXU operands / bf16 writeback -> looser tolerance than the f32 reference.
    err = float(jnp.max(jnp.abs(out - ref)))
    assert jnp.allclose(out, ref, atol=5e-2, rtol=5e-2), f"mismatch vs reference, max err {err}"

    print("KERNEL_OK")
</pallas_src>

<mosaic_0001>
module attributes {stable_mosaic.version = 11 : i64} {
  func.func @_double_conv_kernel(%arg0: i32, %arg1: memref<2x440x40xbf16, #tpu.memory_space<vmem>>, %arg2: memref<40x128xbf16, #tpu.memory_space<vmem>>, %arg3: memref<1152x128xbf16, #tpu.memory_space<vmem>>, %arg4: memref<1x128xf32, #tpu.memory_space<vmem>>, %arg5: memref<2x384x128xbf16, #tpu.memory_space<vmem>>, %arg6: memref<880x128xbf16, #tpu.memory_space<vmem>>, %arg7: memref<768x1152xbf16, #tpu.memory_space<vmem>>) attributes {dimension_semantics = [#tpu.dimension_semantics<parallel>], iteration_bounds = array<i64: 1>, scalar_prefetch = 0 : i64, scratch_operands = 2 : i64, tpu.core_type = #tpu.core_type<tc>, window_params = [{transform_indices = @transform_0, window_bounds = array<i64: 2, 440, 40>}, {pipeline_mode = #tpu.pipeline_mode<synchronous>, transform_indices = @transform_1, window_bounds = array<i64: 40, 128>}, {pipeline_mode = #tpu.pipeline_mode<synchronous>, transform_indices = @transform_2, window_bounds = array<i64: 1152, 128>}, {pipeline_mode = #tpu.pipeline_mode<synchronous>, transform_indices = @transform_3, window_bounds = array<i64: 1, 128>}, {transform_indices = @transform_4, window_bounds = array<i64: 2, 384, 128>}]} {
    %c0 = arith.constant 0 : index
    %c0_0 = arith.constant 0 : index
    %c0_1 = arith.constant 0 : index
    %0 = vector.load %arg1[%c0, %c0_0, %c0_1] : memref<2x440x40xbf16, #tpu.memory_space<vmem>>, vector<2x440x40xbf16>
    %1 = vector.shape_cast %0 : vector<2x440x40xbf16> to vector<880x40xbf16>
    %c0_2 = arith.constant 0 : index
    %c0_3 = arith.constant 0 : index
    %2 = vector.load %arg2[%c0_2, %c0_3] : memref<40x128xbf16, #tpu.memory_space<vmem>>, vector<40x128xbf16>
    %cst = arith.constant dense<0.000000e+00> : vector<880x128xf32>
    %3 = tpu.matmul %1, %2, %cst {dimension_numbers = #tpu.dot_dimension_numbers<[1], [0], [0], [1], [0, 0, 1, 1], [], []>} : vector<880x40xbf16>, vector<40x128xbf16>, vector<880x128xf32> -> vector<880x128xf32>
    %cst_4 = arith.constant 0.000000e+00 : f32
    %4 = vector.broadcast %cst_4 : f32 to vector<880x128xf32>
    %5 = arith.maximumf %3, %4 : vector<880x128xf32>
    %6 = arith.truncf %5 : vector<880x128xf32> to vector<880x128xbf16>
    %c0_5 = arith.constant 0 : index
    %c0_6 = arith.constant 0 : index
    %7 = vector.load %arg6[%c0_5, %c0_6] : memref<880x128xbf16, #tpu.memory_space<vmem>>, vector<880x128xbf16>
    tpu.vector_store %arg6[%c0_5, %c0_6], %6 {strides = array<i32>} : memref<880x128xbf16, #tpu.memory_space<vmem>>, vector<880x128xbf16>,
    %c0_7 = arith.constant 0 : index
    %c0_8 = arith.constant 0 : index
    %8 = vector.load %arg6[%c0_7, %c0_8] : memref<880x128xbf16, #tpu.memory_space<vmem>>, vector<384x128xbf16>
    %c0_9 = arith.constant 0 : index
    %c0_10 = arith.constant 0 : index
    %9 = vector.load %arg7[%c0_9, %c0_10] : memref<768x1152xbf16, #tpu.memory_space<vmem>>, vector<384x128xbf16>
    tpu.vector_store %arg7[%c0_9, %c0_10], %8 {strides = array<i32>} : memref<768x1152xbf16, #tpu.memory_space<vmem>>, vector<384x128xbf16>,
    %c1 = arith.constant 1 : index
    %c0_11 = arith.constant 0 : index
    %10 = vector.load %arg6[%c1, %c0_11] : memref<880x128xbf16, #tpu.memory_space<vmem>>, vector<384x128xbf16>
    %c0_12 = arith.constant 0 : index
    %c128 = arith.constant 128 : index
    %11 = vector.load %arg7[%c0_12, %c128] : memref<768x1152xbf16, #tpu.memory_space<vmem>>, vector<384x128xbf16>
    tpu.vector_store %arg7[%c0_12, %c128], %10 {strides = array<i32>} : memref<768x1152xbf16, #tpu.memory_space<vmem>>, vector<384x128xbf16>,
    %c2 = arith.constant 2 : index
    %c0_13 = arith.constant 0 : index
    %12 = vector.load %arg6[%c2, %c0_13] : memref<880x128xbf16, #tpu.memory_space<vmem>>, vector<384x128xbf16>
    %c0_14 = arith.constant 0 : index
    %c256 = arith.constant 256 : index
    %13 = vector.load %arg7[%c0_14, %c256] : memref<768x1152xbf16, #tpu.memory_space<vmem>>, vector<384x128xbf16>
    tpu.vector_store %arg7[%c0_14, %c256], %12 {strides = array<i32>} : memref<768x1152xbf16, #tpu.memory_space<vmem>>, vector<384x128xbf16>,
    %c24 = arith.constant 24 : index
    %c0_15 = arith.constant 0 : index
    %14 = vector.load %arg6[%c24, %c0_15] : memref<880x128xbf16, #tpu.memory_space<vmem>>, vector<384x128xbf16>
    %c0_16 = arith.constant 0 : index
    %c384 = arith.constant 384 : index
    %15 = vector.load %arg7[%c0_16, %c384] : memref<768x1152xbf16, #tpu.memory_space<vmem>>, vector<384x128xbf16>
    tpu.vector_store %arg7[%c0_16, %c384], %14 {strides = array<i32>} : memref<768x1152xbf16, #tpu.memory_space<vmem>>, vector<384x128xbf16>,
    %c25 = arith.constant 25 : index
    %c0_17 = arith.constant 0 : index
    %16 = vector.load %arg6[%c25, %c0_17] : memref<880x128xbf16, #tpu.memory_space<vmem>>, vector<384x128xbf16>
    %c0_18 = arith.constant 0 : index
    %c512 = arith.constant 512 : index
    %17 = vector.load %arg7[%c0_18, %c512] : memref<768x1152xbf16, #tpu.memory_space<vmem>>, vector<384x128xbf16>
    tpu.vector_store %arg7[%c0_18, %c512], %16 {strides = array<i32>} : memref<768x1152xbf16, #tpu.memory_space<vmem>>, vector<384x128xbf16>,
    %c26 = arith.constant 26 : index
    %c0_19 = arith.constant 0 : index
    %18 = vector.load %arg6[%c26, %c0_19] : memref<880x128xbf16, #tpu.memory_space<vmem>>, vector<384x128xbf16>
    %c0_20 = arith.constant 0 : index
    %c640 = arith.constant 640 : index
    %19 = vector.load %arg7[%c0_20, %c640] : memref<768x1152xbf16, #tpu.memory_space<vmem>>, vector<384x128xbf16>
    tpu.vector_store %arg7[%c0_20, %c640], %18 {strides = array<i32>} : memref<768x1152xbf16, #tpu.memory_space<vmem>>, vector<384x128xbf16>,
    %c48 = arith.constant 48 : index
    %c0_21 = arith.constant 0 : index
    %20 = vector.load %arg6[%c48, %c0_21] : memref<880x128xbf16, #tpu.memory_space<vmem>>, vector<384x128xbf16>
    %c0_22 = arith.constant 0 : index
    %c768 = arith.constant 768 : index
    %21 = vector.load %arg7[%c0_22, %c768] : memref<768x1152xbf16, #tpu.memory_space<vmem>>, vector<384x128xbf16>
    tpu.vector_store %arg7[%c0_22, %c768], %20 {strides = array<i32>} : memref<768x1152xbf16, #tpu.memory_space<vmem>>, vector<384x128xbf16>,
    %c49 = arith.constant 49 : index
    %c0_23 = arith.constant 0 : index
    %22 = vector.load %arg6[%c49, %c0_23] : memref<880x128xbf16, #tpu.memory_space<vmem>>, vector<384x128xbf16>
    %c0_24 = arith.constant 0 : index
    %c896 = arith.constant 896 : index
    %23 = vector.load %arg7[%c0_24, %c896] : memref<768x1152xbf16, #tpu.memory_space<vmem>>, vector<384x128xbf16>
    tpu.vector_store %arg7[%c0_24, %c896], %22 {strides = array<i32>} : memref<768x1152xbf16, #tpu.memory_space<vmem>>, vector<384x128xbf16>,
    %c50 = arith.constant 50 : index
    %c0_25 = arith.constant 0 : index
    %24 = vector.load %arg6[%c50, %c0_25] : memref<880x128xbf16, #tpu.memory_space<vmem>>, vector<384x128xbf16>
    %c0_26 = arith.constant 0 : index
    %c1024 = arith.constant 1024 : index
    %25 = vector.load %arg7[%c0_26, %c1024] : memref<768x1152xbf16, #tpu.memory_space<vmem>>, vector<384x128xbf16>
    tpu.vector_store %arg7[%c0_26, %c1024], %24 {strides = array<i32>} : memref<768x1152xbf16, #tpu.memory_space<vmem>>, vector<384x128xbf16>,
    %c440 = arith.constant 440 : index
    %c0_27 = arith.constant 0 : index
    %26 = vector.load %arg6[%c440, %c0_27] : memref<880x128xbf16, #tpu.memory_space<vmem>>, vector<384x128xbf16>
    %c384_28 = arith.constant 384 : index
    %c0_29 = arith.constant 0 : index
    %27 = vector.load %arg7[%c384_28, %c0_29] : memref<768x1152xbf16, #tpu.memory_space<vmem>>, vector<384x128xbf16>
    tpu.vector_store %arg7[%c384_28, %c0_29], %26 {strides = array<i32>} : memref<768x1152xbf16, #tpu.memory_space<vmem>>, vector<384x128xbf16>,
    %c441 = arith.constant 441 : index
    %c0_30 = arith.constant 0 : index
    %28 = vector.load %arg6[%c441, %c0_30] : memref<880x128xbf16, #tpu.memory_space<vmem>>, vector<384x128xbf16>
    %c384_31 = arith.constant 384 : index
    %c128_32 = arith.constant 128 : index
    %29 = vector.load %arg7[%c384_31, %c128_32] : memref<768x1152xbf16, #tpu.memory_space<vmem>>, vector<384x128xbf16>
    tpu.vector_store %arg7[%c384_31, %c128_32], %28 {strides = array<i32>} : memref<768x1152xbf16, #tpu.memory_space<vmem>>, vector<384x128xbf16>,
    %c442 = arith.constant 442 : index
    %c0_33 = arith.constant 0 : index
    %30 = vector.load %arg6[%c442, %c0_33] : memref<880x128xbf16, #tpu.memory_space<vmem>>, vector<384x128xbf16>
    %c384_34 = arith.constant 384 : index
    %c256_35 = arith.constant 256 : index
    %31 = vector.load %arg7[%c384_34, %c256_35] : memref<768x1152xbf16, #tpu.memory_space<vmem>>, vector<384x128xbf16>
    tpu.vector_store %arg7[%c384_34, %c256_35], %30 {strides = array<i32>} : memref<768x1152xbf16, #tpu.memory_space<vmem>>, vector<384x128xbf16>,
    %c464 = arith.constant 464 : index
    %c0_36 = arith.constant 0 : index
    %32 = vector.load %arg6[%c464, %c0_36] : memref<880x128xbf16, #tpu.memory_space<vmem>>, vector<384x128xbf16>
    %c384_37 = arith.constant 384 : index
    %c384_38 = arith.constant 384 : index
    %33 = vector.load %arg7[%c384_37, %c384_38] : memref<768x1152xbf16, #tpu.memory_space<vmem>>, vector<384x128xbf16>
    tpu.vector_store %arg7[%c384_37, %c384_38], %32 {strides = array<i32>} : memref<768x1152xbf16, #tpu.memory_space<vmem>>, vector<384x128xbf16>,
    %c465 = arith.constant 465 : index
    %c0_39 = arith.constant 0 : index
    %34 = vector.load %arg6[%c465, %c0_39] : memref<880x128xbf16, #tpu.memory_space<vmem>>, vector<384x128xbf16>
    %c384_40 = arith.constant 384 : index
    %c512_41 = arith.constant 512 : index
    %35 = vector.load %arg7[%c384_40, %c512_41] : memref<768x1152xbf16, #tpu.memory_space<vmem>>, vector<384x128xbf16>
    tpu.vector_store %arg7[%c384_40, %c512_41], %34 {strides = array<i32>} : memref<768x1152xbf16, #tpu.memory_space<vmem>>, vector<384x128xbf16>,
    %c466 = arith.constant 466 : index
    %c0_42 = arith.constant 0 : index
    %36 = vector.load %arg6[%c466, %c0_42] : memref<880x128xbf16, #tpu.memory_space<vmem>>, vector<384x128xbf16>
    %c384_43 = arith.constant 384 : index
    %c640_44 = arith.constant 640 : index
    %37 = vector.load %arg7[%c384_43, %c640_44] : memref<768x1152xbf16, #tpu.memory_space<vmem>>, vector<384x128xbf16>
    tpu.vector_store %arg7[%c384_43, %c640_44], %36 {strides = array<i32>} : memref<768x1152xbf16, #tpu.memory_space<vmem>>, vector<384x128xbf16>,
    %c488 = arith.constant 488 : index
    %c0_45 = arith.constant 0 : index
    %38 = vector.load %arg6[%c488, %c0_45] : memref<880x128xbf16, #tpu.memory_space<vmem>>, vector<384x128xbf16>
    %c384_46 = arith.constant 384 : index
    %c768_47 = arith.constant 768 : index
    %39 = vector.load %arg7[%c384_46, %c768_47] : memref<768x1152xbf16, #tpu.memory_space<vmem>>, vector<384x128xbf16>
    tpu.vector_store %arg7[%c384_46, %c768_47], %38 {strides = array<i32>} : memref<768x1152xbf16, #tpu.memory_space<vmem>>, vector<384x128xbf16>,
    %c489 = arith.constant 489 : index
    %c0_48 = arith.constant 0 : index
    %40 = vector.load %arg6[%c489, %c0_48] : memref<880x128xbf16, #tpu.memory_space<vmem>>, vector<384x128xbf16>
    %c384_49 = arith.constant 384 : index
    %c896_50 = arith.constant 896 : index
    %41 = vector.load %arg7[%c384_49, %c896_50] : memref<768x1152xbf16, #tpu.memory_space<vmem>>, vector<384x128xbf16>
    tpu.vector_store %arg7[%c384_49, %c896_50], %40 {strides = array<i32>} : memref<768x1152xbf16, #tpu.memory_space<vmem>>, vector<384x128xbf16>,
    %c490 = arith.constant 490 : index
    %c0_51 = arith.constant 0 : index
    %42 = vector.load %arg6[%c490, %c0_51] : memref<880x128xbf16, #tpu.memory_space<vmem>>, vector<384x128xbf16>
    %c384_52 = arith.constant 384 : index
    %c1024_53 = arith.constant 1024 : index
    %43 = vector.load %arg7[%c384_52, %c1024_53] : memref<768x1152xbf16, #tpu.memory_space<vmem>>, vector<384x128xbf16>
    tpu.vector_store %arg7[%c384_52, %c1024_53], %42 {strides = array<i32>} : memref<768x1152xbf16, #tpu.memory_space<vmem>>, vector<384x128xbf16>,
    %c0_54 = arith.constant 0 : index
    %c0_55 = arith.constant 0 : index
    %44 = vector.load %arg7[%c0_54, %c0_55] : memref<768x1152xbf16, #tpu.memory_space<vmem>>, vector<768x1152xbf16>
    %c0_56 = arith.constant 0 : index
    %c0_57 = arith.constant 0 : index
    %45 = vector.load %arg3[%c0_56, %c0_57] : memref<1152x128xbf16, #tpu.memory_space<vmem>>, vector<1152x128xbf16>
    %cst_58 = arith.constant dense<0.000000e+00> : vector<768x128xf32>
    %46 = tpu.matmul %44, %45, %cst_58 {dimension_numbers = #tpu.dot_dimension_numbers<[1], [0], [0], [1], [0, 0, 1, 1], [], []>} : vector<768x1152xbf16>, vector<1152x128xbf16>, vector<768x128xf32> -> vector<768x128xf32>
    %c0_59 = arith.constant 0 : index
    %c0_60 = arith.constant 0 : index
    %47 = vector.load %arg4[%c0_59, %c0_60] : memref<1x128xf32, #tpu.memory_space<vmem>>, vector<1x128xf32>
    %48 = vector.broadcast %47 : vector<1x128xf32> to vector<768x128xf32>
    %49 = arith.addf %46, %48 : vector<768x128xf32>
    %cst_61 = arith.constant 0.000000e+00 : f32
    %50 = vector.broadcast %cst_61 : f32 to vector<768x128xf32>
    %51 = arith.maximumf %49, %50 : vector<768x128xf32>
    %52 = vector.shape_cast %51 : vector<768x128xf32> to vector<2x384x128xf32>
    %53 = arith.truncf %52 : vector<2x384x128xf32> to vector<2x384x128xbf16>
    %c0_62 = arith.constant 0 : index
    %c0_63 = arith.constant 0 : index
    %c0_64 = arith.constant 0 : index
    %54 = vector.load %arg5[%c0_62, %c0_63, %c0_64] : memref<2x384x128xbf16, #tpu.memory_space<vmem>>, vector<2x384x128xbf16>
    tpu.vector_store %arg5[%c0_62, %c0_63, %c0_64], %53 {strides = array<i32>} : memref<2x384x128xbf16, #tpu.memory_space<vmem>>, vector<2x384x128xbf16>,
    return
  }
  func.func @transform_0(%arg0: i32) -> (i32, i32, i32) {
    %c0_i32 = arith.constant 0 : i32
    %c0_i32_0 = arith.constant 0 : i32
    %c0_i32_1 = arith.constant 0 : i32
    return %arg0, %c0_i32, %c0_i32_0 : i32, i32, i32
  }
  func.func @transform_1(%arg0: i32) -> (i32, i32) {
    %c0_i32 = arith.constant 0 : i32
    %c0_i32_0 = arith.constant 0 : i32
    %c0_i32_1 = arith.constant 0 : i32
    return %c0_i32, %c0_i32_0 : i32, i32
  }
  func.func @transform_2(%arg0: i32) -> (i32, i32) {
    %c0_i32 = arith.constant 0 : i32
    %c0_i32_0 = arith.constant 0 : i32
    %c0_i32_1 = arith.constant 0 : i32
    return %c0_i32, %c0_i32_0 : i32, i32
  }
  func.func @transform_3(%arg0: i32) -> (i32, i32) {
    %c0_i32 = arith.constant 0 : i32
    %c0_i32_0 = arith.constant 0 : i32
    %c0_i32_1 = arith.constant 0 : i32
    return %c0_i32, %c0_i32_0 : i32, i32
  }
  func.func @transform_4(%arg0: i32) -> (i32, i32, i32) {
    %c0_i32 = arith.constant 0 : i32
    %c0_i32_0 = arith.constant 0 : i32
    %c0_i32_1 = arith.constant 0 : i32
    return %arg0, %c0_i32, %c0_i32_0 : i32, i32, i32
  }
}

</mosaic_0001>

<llo_original>
// kernel: inconv_forward.1
$region0: #{inconv_forward.1}
  #allocation0 [shape = 'u32[]', space=smem, size = 0x4, offset = 0x4, fixed_abs, tag = 'smem constant byte address 0x4 - core index']
  #allocation1 [shape = 'u32[72,128]{1,0:T(1,128)}', space=vmem, size = 0x9000, scoped, tag = 'internal scratch']
  #allocation2 [shape = 'bf16[880,128]{1,0:T(8,128)(2,1)}', space=vmem, size = 0x37000, scoped, tag = 'scratch operand']
  #allocation3 [shape = 'bf16[768,1152]{1,0:T(8,128)(2,1)}', space=vmem, size = 0x1b0000, scoped, tag = 'scratch operand']
  %s0 = inlined_call_operand.vmem [shape: bf16[2,440,40], index: 0, kind: input, shape index: {}]
  %s1 = inlined_call_operand.vmem [shape: bf16[40,128], index: 1, kind: input, shape index: {}]
  %s2 = inlined_call_operand.vmem [shape: bf16[1152,128], index: 2, kind: input, shape index: {}]
  %s3 = inlined_call_operand.vmem [shape: f32[1,128], index: 3, kind: input, shape index: {}]
  %s4 = inlined_call_operand.vmem [shape: bf16[2,384,128], index: 4, kind: output, shape index: {}]
  %s5 = sld [smem:[#allocation0]]
  $region26: #{inconv_forward.1} parent=0
    _
  %s7 = ssub.s32 1, %s5
  %s8 = scalar_select 0, %s7, %s5
  // Predicated region
  $region2: #{inconv_forward.1} parent=0 // pred_check
    _
  $region3: #{inconv_forward.1} parent=0 // pred_check_branch
    %10 = sbr.rel (0) target = $region5
  $region4: #{inconv_forward.1} parent=0 // pred_region
    _
  $region5: #{inconv_forward.1} parent=0 // pred_fallthru
    _
  // Predicated region
  $region6: #{inconv_forward.1} parent=0 // pred_check
    _
  $region7: #{inconv_forward.1} parent=0 // pred_check_branch
    %12 = sbr.rel (0) target = $region9
  $region8: #{inconv_forward.1} parent=0 // pred_region
    _
  $region9: #{inconv_forward.1} parent=0 // pred_fallthru
    _
  // Predicated region
  $region10: #{inconv_forward.1} parent=0 // pred_check
    _
  $region11: #{inconv_forward.1} parent=0 // pred_check_branch
    %14 = sbr.rel (0) target = $region13
  $region12: #{inconv_forward.1} parent=0 // pred_region
    _
  $region13: #{inconv_forward.1} parent=0 // pred_fallthru
    _
  // Predicated region
  $region14: #{inconv_forward.1} parent=0 // pred_check
    _
  $region15: #{inconv_forward.1} parent=0 // pred_check_branch
    %16 = sbr.rel (0) target = $region17
  $region16: #{inconv_forward.1} parent=0 // pred_region
    _
  $region17: #{inconv_forward.1} parent=0 // pred_fallthru
    _
  %v18 = vld [vmem:[%s0] sm:$0xf]
  %v19 = vld [vmem:[%s0 + $0x4] sm:$0xf]
  %v20 = vld [vmem:[%s0 + $0x8] sm:$0xf]
  %v21 = vld [vmem:[%s0 + $0xc] sm:$0xf]
  %v22 = vld [vmem:[%s0 + $0x10] sm:$0xf]
  %v23 = vld [vmem:[%s0 + $0x14] sm:$0xf]
  %v24 = vld [vmem:[%s0 + $0x18] sm:$0xf]
  %v25 = vld [vmem:[%s0 + $0x1c] sm:$0xf]
  %v26 = vld [vmem:[%s0 + $0x20] sm:$0xf]
  %v27 = vld [vmem:[%s0 + $0x24] sm:$0xf]
  %v28 = vld [vmem:[%s0 + $0x28] sm:$0xf]
  %v29 = vld [vmem:[%s0 + $0x2c] sm:$0xf]
  %v30 = vld [vmem:[%s0 + $0x30] sm:$0xf]
  %v31 = vld [vmem:[%s0 + $0x34] sm:$0xf]
  %v32 = vld [vmem:[%s0 + $0x38] sm:$0xf]
  %v33 = vld [vmem:[%s0 + $0x3c] sm:$0xf]
  %v34 = vld [vmem:[%s0 + $0x40] sm:$0xf]
  %v35 = vld [vmem:[%s0 + $0x44] sm:$0xf]
  %v36 = vld [vmem:[%s0 + $0x48] sm:$0xf]
  %v37 = vld [vmem:[%s0 + $0x4c] sm:$0xf]
  %v38 = vld [vmem:[%s0 + $0x50] sm:$0xf]
  %v39 = vld [vmem:[%s0 + $0x54] sm:$0xf]
  %v40 = vld [vmem:[%s0 + $0x58] sm:$0xf]
  %v41 = vld [vmem:[%s0 + $0x5c] sm:$0xf]
  %v42 = vld [vmem:[%s0 + $0x60] sm:$0xf]
  %v43 = vld [vmem:[%s0 + $0x64] sm:$0xf]
  %v44 = vld [vmem:[%s0 + $0x68] sm:$0xf]
  %v45 = vld [vmem:[%s0 + $0x6c] sm:$0xf]
  %v46 = vld [vmem:[%s0 + $0x70] sm:$0xf]
  %v47 = vld [vmem:[%s0 + $0x74] sm:$0xf]
  %v48 = vld [vmem:[%s0 + $0x78] sm:$0xf]
  %v49 = vld [vmem:[%s0 + $0x7c] sm:$0xf]
  %v50 = vld [vmem:[%s0 + $0x80] sm:$0xf]
  %v51 = vld [vmem:[%s0 + $0x84] sm:$0xf]
  %v52 = vld [vmem:[%s0 + $0x88] sm:$0xf]
  %v53 = vld [vmem:[%s0 + $0x8c] sm:$0xf]
  %v54 = vld [vmem:[%s0 + $0x90] sm:$0xf]
  %v55 = vld [vmem:[%s0 + $0x94] sm:$0xf]
  %v56 = vld [vmem:[%s0 + $0x98] sm:$0xf]
  %v57 = vld [vmem:[%s0 + $0x9c] sm:$0xf]
  %v58 = vld [vmem:[%s0 + $0xa0] sm:$0xf]
  %v59 = vld [vmem:[%s0 + $0xa4] sm:$0xf]
  %v60 = vld [vmem:[%s0 + $0xa8] sm:$0xf]
  %v61 = vld [vmem:[%s0 + $0xac] sm:$0xf]
  %v62 = vld [vmem:[%s0 + $0xb0] sm:$0xf]
  %v63 = vld [vmem:[%s0 + $0xb4] sm:$0xf]
  %v64 = vld [vmem:[%s0 + $0xb8] sm:$0xf]
  %v65 = vld [vmem:[%s0 + $0xbc] sm:$0xf]
  %v66 = vld [vmem:[%s0 + $0xc0] sm:$0xf]
  %v67 = vld [vmem:[%s0 + $0xc4] sm:$0xf]
  %v68 = vld [vmem:[%s0 + $0xc8] sm:$0xf]
  %v69 = vld [vmem:[%s0 + $0xcc] sm:$0xf]
  %v70 = vld [vmem:[%s0 + $0xd0] sm:$0xf]
  %v71 = vld [vmem:[%s0 + $0xd4] sm:$0xf]
  %v72 = vld [vmem:[%s0 + $0xd8] sm:$0xf]
  %v73 = vld [vmem:[%s0 + $0xdc] sm:$0xf]
  %v74 = vld [vmem:[%s0 + $0xe0] sm:$0xf]
  %v75 = vld [vmem:[%s0 + $0xe4] sm:$0xf]
  %v76 = vld [vmem:[%s0 + $0xe8] sm:$0xf]
  %v77 = vld [vmem:[%s0 + $0xec] sm:$0xf]
  %v78 = vld [vmem:[%s0 + $0xf0] sm:$0xf]
  %v79 = vld [vmem:[%s0 + $0xf4] sm:$0xf]
  %v80 = vld [vmem:[%s0 + $0xf8] sm:$0xf]
  %v81 = vld [vmem:[%s0 + $0xfc] sm:$0xf]
  %v82 = vld [vmem:[%s0 + $0x100] sm:$0xf]
  %v83 = vld [vmem:[%s0 + $0x104] sm:$0xf]
  %v84 = vld [vmem:[%s0 + $0x108] sm:$0xf]
  %v85 = vld [vmem:[%s0 + $0x10c] sm:$0xf]
  %v86 = vld [vmem:[%s0 + $0x110] sm:$0xf]
  %v87 = vld [vmem:[%s0 + $0x114] sm:$0xf]
  %v88 = vld [vmem:[%s0 + $0x118] sm:$0xf]
  %v89 = vld [vmem:[%s0 + $0x11c] sm:$0xf]
  %v90 = vld [vmem:[%s0 + $0x120] sm:$0xf]
  %v91 = vld [vmem:[%s0 + $0x124] sm:$0xf]
  %v92 = vld [vmem:[%s0 + $0x128] sm:$0xf]
  %v93 = vld [vmem:[%s0 + $0x12c] sm:$0xf]
  %v94 = vld [vmem:[%s0 + $0x130] sm:$0xf]
  %v95 = vld [vmem:[%s0 + $0x134] sm:$0xf]
  %v96 = vld [vmem:[%s0 + $0x138] sm:$0xf]
  %v97 = vld [vmem:[%s0 + $0x13c] sm:$0xf]
  %v98 = vld [vmem:[%s0 + $0x140] sm:$0xf]
  %v99 = vld [vmem:[%s0 + $0x144] sm:$0xf]
  %v100 = vld [vmem:[%s0 + $0x148] sm:$0xf]
  %v101 = vld [vmem:[%s0 + $0x14c] sm:$0xf]
  %v102 = vld [vmem:[%s0 + $0x150] sm:$0xf]
  %v103 = vld [vmem:[%s0 + $0x154] sm:$0xf]
  %v104 = vld [vmem:[%s0 + $0x158] sm:$0xf]
  %v105 = vld [vmem:[%s0 + $0x15c] sm:$0xf]
  %v106 = vld [vmem:[%s0 + $0x160] sm:$0xf]
  %v107 = vld [vmem:[%s0 + $0x164] sm:$0xf]
  %v108 = vld [vmem:[%s0 + $0x168] sm:$0xf]
  %v109 = vld [vmem:[%s0 + $0x16c] sm:$0xf]
  %v110 = vld [vmem:[%s0 + $0x170] sm:$0xf]
  %v111 = vld [vmem:[%s0 + $0x174] sm:$0xf]
  %v112 = vld [vmem:[%s0 + $0x178] sm:$0xf]
  %v113 = vld [vmem:[%s0 + $0x17c] sm:$0xf]
  %v114 = vld [vmem:[%s0 + $0x180] sm:$0xf]
  %v115 = vld [vmem:[%s0 + $0x184] sm:$0xf]
  %v116 = vld [vmem:[%s0 + $0x188] sm:$0xf]
  %v117 = vld [vmem:[%s0 + $0x18c] sm:$0xf]
  %v118 = vld [vmem:[%s0 + $0x190] sm:$0xf]
  %v119 = vld [vmem:[%s0 + $0x194] sm:$0xf]
  %v120 = vld [vmem:[%s0 + $0x198] sm:$0xf]
  %v121 = vld [vmem:[%s0 + $0x19c] sm:$0xf]
  %v122 = vld [vmem:[%s0 + $0x1a0] sm:$0xf]
  %v123 = vld [vmem:[%s0 + $0x1a4] sm:$0xf]
  %v124 = vld [vmem:[%s0 + $0x1a8] sm:$0xf]
  %v125 = vld [vmem:[%s0 + $0x1ac] sm:$0xf]
  %v126 = vld [vmem:[%s0 + $0x1b0] sm:$0xf]
  %v127 = vld [vmem:[%s0 + $0x1b4] sm:$0xf]
  %v128 = vld [vmem:[%s1] sm:$0xf]
  %v129 = vld [vmem:[%s1 + $0x4] sm:$0xf]
  %v130 = vld [vmem:[%s1 + $0x8] sm:$0xf]
  %v131 = vld [vmem:[%s1 + $0xc] sm:$0xf]
  %v132 = vld [vmem:[%s1 + $0x10] sm:$0xf]
  %v243 = vunpack.c.l.b16 %v18
  %v244 = vunpack.c.l.b16 %v19
  %v245 = vunpack.c.l.b16 %v20
  %v246 = vunpack.c.l.b16 %v21
  %v247 = vunpack.c.l.b16 %v22
  %v248 = vunpack.c.l.b16 %v23
  %v249 = vunpack.c.l.b16 %v24
  %v250 = vunpack.c.l.b16 %v25
  %v251 = vunpack.c.l.b16 %v26
  %v252 = vunpack.c.l.b16 %v27
  %v253 = vunpack.c.l.b16 %v28
  %v254 = vunpack.c.l.b16 %v29
  %v255 = vunpack.c.l.b16 %v30
  %v256 = vunpack.c.l.b16 %v31
  %v257 = vunpack.c.l.b16 %v32
  %v258 = vunpack.c.l.b16 %v33
  %v259 = vunpack.c.l.b16 %v34
  %v260 = vunpack.c.l.b16 %v35
  %v261 = vunpack.c.l.b16 %v36
  %v262 = vunpack.c.l.b16 %v37
  %v263 = vunpack.c.l.b16 %v38
  %v264 = vunpack.c.l.b16 %v39
  %v265 = vunpack.c.l.b16 %v40
  %v266 = vunpack.c.l.b16 %v41
  %v267 = vunpack.c.l.b16 %v42
  %v268 = vunpack.c.l.b16 %v43
  %v269 = vunpack.c.l.b16 %v44
  %v270 = vunpack.c.l.b16 %v45
  %v271 = vunpack.c.l.b16 %v46
  %v272 = vunpack.c.l.b16 %v47
  %v273 = vunpack.c.l.b16 %v48
  %v274 = vunpack.c.l.b16 %v49
  %v275 = vunpack.c.l.b16 %v50
  %v276 = vunpack.c.l.b16 %v51
  %v277 = vunpack.c.l.b16 %v52
  %v278 = vunpack.c.l.b16 %v53
  %v279 = vunpack.c.l.b16 %v54
  %v280 = vunpack.c.l.b16 %v55
  %v281 = vunpack.c.l.b16 %v56
  %v282 = vunpack.c.l.b16 %v57
  %v283 = vunpack.c.l.b16 %v58
  %v284 = vunpack.c.l.b16 %v59
  %v285 = vunpack.c.l.b16 %v60
  %v286 = vunpack.c.l.b16 %v61
  %v287 = vunpack.c.l.b16 %v62
  %v288 = vunpack.c.l.b16 %v63
  %v289 = vunpack.c.l.b16 %v64
  %v290 = vunpack.c.l.b16 %v65
  %v291 = vunpack.c.l.b16 %v66
  %v292 = vunpack.c.l.b16 %v67
  %v293 = vunpack.c.l.b16 %v68
  %v294 = vunpack.c.l.b16 %v69
  %v295 = vunpack.c.l.b16 %v70
  %v296 = vunpack.c.l.b16 %v71
  %v297 = vunpack.c.l.b16 %v72
  %v298 = vunpack.c.l.b16 %v73
  %v299 = vunpack.c.l.b16 %v74
  %v300 = vunpack.c.l.b16 %v75
  %v301 = vunpack.c.l.b16 %v76
  %v302 = vunpack.c.l.b16 %v77
  %v303 = vunpack.c.l.b16 %v78
  %v304 = vunpack.c.l.b16 %v79
  %v305 = vunpack.c.l.b16 %v80
  %v306 = vunpack.c.l.b16 %v81
  %v307 = vunpack.c.l.b16 %v82
  %v308 = vunpack.c.l.b16 %v83
  %v309 = vunpack.c.l.b16 %v84
  %v310 = vunpack.c.l.b16 %v85
  %v311 = vunpack.c.l.b16 %v86
  %v312 = vunpack.c.l.b16 %v87
  %v313 = vunpack.c.l.b16 %v88
  %v314 = vunpack.c.l.b16 %v89
  %v315 = vunpack.c.l.b16 %v90
  %v316 = vunpack.c.l.b16 %v91
  %v317 = vunpack.c.l.b16 %v92
  %v318 = vunpack.c.l.b16 %v93
  %v319 = vunpack.c.l.b16 %v94
  %v320 = vunpack.c.l.b16 %v95
  %v321 = vunpack.c.l.b16 %v96
  %v322 = vunpack.c.l.b16 %v97
  %v323 = vunpack.c.l.b16 %v98
  %v324 = vunpack.c.l.b16 %v99
  %v325 = vunpack.c.l.b16 %v100
  %v326 = vunpack.c.l.b16 %v101
  %v327 = vunpack.c.l.b16 %v102
  %v328 = vunpack.c.l.b16 %v103
  %v329 = vunpack.c.l.b16 %v104
  %v330 = vunpack.c.l.b16 %v105
  %v331 = vunpack.c.l.b16 %v106
  %v332 = vunpack.c.l.b16 %v107
  %v333 = vunpack.c.l.b16 %v108
  %v334 = vunpack.c.l.b16 %v109
  %v335 = vunpack.c.l.b16 %v110
  %v336 = vunpack.c.l.b16 %v111
  %v337 = vunpack.c.l.b16 %v112
  %v338 = vunpack.c.l.b16 %v113
  %v339 = vunpack.c.l.b16 %v114
  %v340 = vunpack.c.l.b16 %v115
  %v341 = vunpack.c.l.b16 %v116
  %v342 = vunpack.c.l.b16 %v117
  %v343 = vunpack.c.l.b16 %v118
  %v344 = vunpack.c.l.b16 %v119
  %v345 = vunpack.c.l.b16 %v120
  %v346 = vunpack.c.l.b16 %v121
  %v347 = vunpack.c.l.b16 %v122
  %v348 = vunpack.c.l.b16 %v123
  %v349 = vunpack.c.l.b16 %v124
  %v350 = vunpack.c.l.b16 %v125
  %v351 = vunpack.c.l.b16 %v126
  %v352 = vunpack.c.l.b16 %v127
  %v353 = vpack.c.b16 %v244, %v243
  %v354 = vpack.c.b16 %v246, %v245
  %v355 = vpack.c.b16 %v248, %v247
  %v356 = vpack.c.b16 %v250, %v249
  %v357 = vpack.c.b16 %v252, %v251
  %v358 = vpack.c.b16 %v254, %v253
  %v359 = vpack.c.b16 %v256, %v255
  %v360 = vpack.c.b16 %v258, %v257
  %v361 = vpack.c.b16 %v260, %v259
  %v362 = vpack.c.b16 %v262, %v261
  %v363 = vpack.c.b16 %v264, %v263
  %v364 = vpack.c.b16 %v266, %v265
  %v365 = vpack.c.b16 %v268, %v267
  %v366 = vpack.c.b16 %v270, %v269
  %v367 = vpack.c.b16 %v272, %v271
  %v368 = vpack.c.b16 %v274, %v273
  %v369 = vpack.c.b16 %v276, %v275
  %v370 = vpack.c.b16 %v278, %v277
  %v371 = vpack.c.b16 %v280, %v279
  %v372 = vpack.c.b16 %v282, %v281
  %v373 = vpack.c.b16 %v284, %v283
  %v374 = vpack.c.b16 %v286, %v285
  %v375 = vpack.c.b16 %v288, %v287
  %v376 = vpack.c.b16 %v290, %v289
  %v377 = vpack.c.b16 %v292, %v291
  %v378 = vpack.c.b16 %v294, %v293
  %v379 = vpack.c.b16 %v296, %v295
  %v380 = vpack.c.b16 %v298, %v297
  %v381 = vpack.c.b16 %v300, %v299
  %v382 = vpack.c.b16 %v302, %v301
  %v383 = vpack.c.b16 %v304, %v303
  %v384 = vpack.c.b16 %v306, %v305
  %v385 = vpack.c.b16 %v308, %v307
  %v386 = vpack.c.b16 %v310, %v309
  %v387 = vpack.c.b16 %v312, %v311
  %v388 = vpack.c.b16 %v314, %v313
  %v389 = vpack.c.b16 %v316, %v315
  %v390 = vpack.c.b16 %v318, %v317
  %v391 = vpack.c.b16 %v320, %v319
  %v392 = vpack.c.b16 %v322, %v321
  %v393 = vpack.c.b16 %v324, %v323
  %v394 = vpack.c.b16 %v326, %v325
  %v395 = vpack.c.b16 %v328, %v327
  %v396 = vpack.c.b16 %v330, %v329
  %v397 = vpack.c.b16 %v332, %v331
  %v398 = vpack.c.b16 %v334, %v333
  %v399 = vpack.c.b16 %v336, %v335
  %v400 = vpack.c.b16 %v338, %v337
  %v401 = vpack.c.b16 %v340, %v339
  %v402 = vpack.c.b16 %v342, %v341
  %v403 = vpack.c.b16 %v344, %v343
  %v404 = vpack.c.b16 %v346, %v345
  %v405 = vpack.c.b16 %v348, %v347
  %v406 = vpack.c.b16 %v350, %v349
  %v407 = vpack.c.b16 %v352, %v351
  %v413 = vunpack.c.l.b16 %v128
  %v414 = vunpack.c.l.b16 %v129
  %v415 = vunpack.c.l.b16 %v130
  %v416 = vunpack.c.l.b16 %v131
  %v417 = vunpack.c.l.b16 %v132
  %v418 = vpack.c.b16 %v414, %v413
  %v419 = vpack.c.b16 %v416, %v415
  %v420 = vpack.c.b16 %v417, %v417
  %vm423 = vcmask 326656
  %v425 = vsel %vm423, %v353, 0
  %v428 = vsel %vm423, %v354, 0
  %v431 = vsel %vm423, %v355, 0
  %v434 = vsel %vm423, %v356, 0
  %v437 = vsel %vm423, %v357, 0
  %v440 = vsel %vm423, %v358, 0
  %v443 = vsel %vm423, %v359, 0
  %v446 = vsel %vm423, %v360, 0
  %v449 = vsel %vm423, %v361, 0
  %v452 = vsel %vm423, %v362, 0
  %v455 = vsel %vm423, %v363, 0
  %v458 = vsel %vm423, %v364, 0
  %v461 = vsel %vm423, %v365, 0
  %v464 = vsel %vm423, %v366, 0
  %v467 = vsel %vm423, %v367, 0
  %v470 = vsel %vm423, %v368, 0
  %v473 = vsel %vm423, %v369, 0
  %v476 = vsel %vm423, %v370, 0
  %v479 = vsel %vm423, %v371, 0
  %v482 = vsel %vm423, %v372, 0
  %v485 = vsel %vm423, %v373, 0
  %v488 = vsel %vm423, %v374, 0
  %v491 = vsel %vm423, %v375, 0
  %v494 = vsel %vm423, %v376, 0
  %v497 = vsel %vm423, %v377, 0
  %v500 = vsel %vm423, %v378, 0
  %v503 = vsel %vm423, %v379, 0
  %v506 = vsel %vm423, %v380, 0
  %v509 = vsel %vm423, %v381, 0
  %v512 = vsel %vm423, %v382, 0
  %v515 = vsel %vm423, %v383, 0
  %v518 = vsel %vm423, %v384, 0
  %v521 = vsel %vm423, %v385, 0
  %v524 = vsel %vm423, %v386, 0
  %v527 = vsel %vm423, %v387, 0
  %v530 = vsel %vm423, %v388, 0
  %v533 = vsel %vm423, %v389, 0
  %v536 = vsel %vm423, %v390, 0
  %v539 = vsel %vm423, %v391, 0
  %v542 = vsel %vm423, %v392, 0
  %v545 = vsel %vm423, %v393, 0
  %v548 = vsel %vm423, %v394, 0
  %v551 = vsel %vm423, %v395, 0
  %v554 = vsel %vm423, %v396, 0
  %v557 = vsel %vm423, %v397, 0
  %v560 = vsel %vm423, %v398, 0
  %v563 = vsel %vm423, %v399, 0
  %v566 = vsel %vm423, %v400, 0
  %v569 = vsel %vm423, %v401, 0
  %v572 = vsel %vm423, %v402, 0
  %v575 = vsel %vm423, %v403, 0
  %v578 = vsel %vm423, %v404, 0
  %v581 = vsel %vm423, %v405, 0
  %v584 = vsel %vm423, %v406, 0
  %v587 = vsel %vm423, %v407, 0
  %vm589 = vcmask 1043456
  %v591 = vsel %vm589, %v420, 0
  %593 = vmatpush.bf16.msra.mxu0 0
  %594 = vmatpush.bf16.msra.mxu0 0
  %595 = vmatpush.bf16.msra.mxu0 0
  %596 = vmatpush.bf16.msra.mxu0 0
  %597 = vmatpush.bf16.msra.mxu0 0
  %598 = vmatpush.bf16.msra.mxu0 %v591
  %599 = vmatpush.bf16.msra.mxu0 %v419
  %600 = vmatpush.bf16.msra.mxu0 %v418
  %601 = vmatmul.bf16.gmra.mxu0 %v425
  %v602 = vpop.f32.mrf.mxu0
  %v603 = vadd.f32 0.0, %v602
  %v604 = vpop.f32.mrf.mxu0
  %v605 = vadd.f32 0.0, %v604
  %606 = vmatmul.bf16.gmra.mxu0 %v428
  %v607 = vpop.f32.mrf.mxu0
  %v608 = vadd.f32 0.0, %v607
  %v609 = vpop.f32.mrf.mxu0
  %v610 = vadd.f32 0.0, %v609
  %611 = vmatmul.bf16.gmra.mxu0 %v431
  %v612 = vpop.f32.mrf.mxu0
  %v613 = vadd.f32 0.0, %v612
  %v614 = vpop.f32.mrf.mxu0
  %v615 = vadd.f32 0.0, %v614
  %616 = vmatmul.bf16.gmra.mxu0 %v434
  %v617 = vpop.f32.mrf.mxu0
  %v618 = vadd.f32 0.0, %v617
  %v619 = vpop.f32.mrf.mxu0
  %v620 = vadd.f32 0.0, %v619
  %621 = vmatmul.bf16.gmra.mxu0 %v437
  %v622 = vpop.f32.mrf.mxu0
  %v623 = vadd.f32 0.0, %v622
  %v624 = vpop.f32.mrf.mxu0
  %v625 = vadd.f32 0.0, %v624
  %626 = vmatmul.bf16.gmra.mxu0 %v440
  %v627 = vpop.f32.mrf.mxu0
  %v628 = vadd.f32 0.0, %v627
  %v629 = vpop.f32.mrf.mxu0
  %v630 = vadd.f32 0.0, %v629
  %631 = vmatmul.bf16.gmra.mxu0 %v443
  %v632 = vpop.f32.mrf.mxu0
  %v633 = vadd.f32 0.0, %v632
  %v634 = vpop.f32.mrf.mxu0
  %v635 = vadd.f32 0.0, %v634
  %636 = vmatmul.bf16.gmra.mxu0 %v446
  %v637 = vpop.f32.mrf.mxu0
  %v638 = vadd.f32 0.0, %v637
  %v639 = vpop.f32.mrf.mxu0
  %v640 = vadd.f32 0.0, %v639
  %641 = vmatmul.bf16.gmra.mxu0 %v449
  %v642 = vpop.f32.mrf.mxu0
  %v643 = vadd.f32 0.0, %v642
  %v644 = vpop.f32.mrf.mxu0
  %v645 = vadd.f32 0.0, %v644
  %646 = vmatmul.bf16.gmra.mxu0 %v452
  %v647 = vpop.f32.mrf.mxu0
  %v648 = vadd.f32 0.0, %v647
  %v649 = vpop.f32.mrf.mxu0
  %v650 = vadd.f32 0.0, %v649
  %651 = vmatmul.bf16.gmra.mxu0 %v455
  %v652 = vpop.f32.mrf.mxu0
  %v653 = vadd.f32 0.0, %v652
  %v654 = vpop.f32.mrf.mxu0
  %v655 = vadd.f32 0.0, %v654
  %656 = vmatmul.bf16.gmra.mxu0 %v458
  %v657 = vpop.f32.mrf.mxu0
  %v658 = vadd.f32 0.0, %v657
  %v659 = vpop.f32.mrf.mxu0
  %v660 = vadd.f32 0.0, %v659
  %661 = vmatmul.bf16.gmra.mxu0 %v461
  %v662 = vpop.f32.mrf.mxu0
  %v663 = vadd.f32 0.0, %v662
  %v664 = vpop.f32.mrf.mxu0
  %v665 = vadd.f32 0.0, %v664
  %666 = vmatmul.bf16.gmra.mxu0 %v464
  %v667 = vpop.f32.mrf.mxu0
  %v668 = vadd.f32 0.0, %v667
  %v669 = vpop.f32.mrf.mxu0
  %v670 = vadd.f32 0.0, %v669
  %671 = vmatmul.bf16.gmra.mxu0 %v467
  %v672 = vpop.f32.mrf.mxu0
  %v673 = vadd.f32 0.0, %v672
  %v674 = vpop.f32.mrf.mxu0
  %v675 = vadd.f32 0.0, %v674
  %676 = vmatmul.bf16.gmra.mxu0 %v470
  %v677 = vpop.f32.mrf.mxu0
  %v678 = vadd.f32 0.0, %v677
  %v679 = vpop.f32.mrf.mxu0
  %v680 = vadd.f32 0.0, %v679
  %681 = vmatmul.bf16.gmra.mxu0 %v473
  %v682 = vpop.f32.mrf.mxu0
  %v683 = vadd.f32 0.0, %v682
  %v684 = vpop.f32.mrf.mxu0
  %v685 = vadd.f32 0.0, %v684
  %686 = vmatmul.bf16.gmra.mxu0 %v476
  %v687 = vpop.f32.mrf.mxu0
  %v688 = vadd.f32 0.0, %v687
  %v689 = vpop.f32.mrf.mxu0
  %v690 = vadd.f32 0.0, %v689
  %691 = vmatmul.bf16.gmra.mxu0 %v479
  %v692 = vpop.f32.mrf.mxu0
  %v693 = vadd.f32 0.0, %v692
  %v694 = vpop.f32.mrf.mxu0
  %v695 = vadd.f32 0.0, %v694
  %696 = vmatmul.bf16.gmra.mxu0 %v482
  %v697 = vpop.f32.mrf.mxu0
  %v698 = vadd.f32 0.0, %v697
  %v699 = vpop.f32.mrf.mxu0
  %v700 = vadd.f32 0.0, %v699
  %701 = vmatmul.bf16.gmra.mxu0 %v485
  %v702 = vpop.f32.mrf.mxu0
  %v703 = vadd.f32 0.0, %v702
  %v704 = vpop.f32.mrf.mxu0
  %v705 = vadd.f32 0.0, %v704
  %706 = vmatmul.bf16.gmra.mxu0 %v488
  %v707 = vpop.f32.mrf.mxu0
  %v708 = vadd.f32 0.0, %v707
  %v709 = vpop.f32.mrf.mxu0
  %v710 = vadd.f32 0.0, %v709
  %711 = vmatmul.bf16.gmra.mxu0 %v491
  %v712 = vpop.f32.mrf.mxu0
  %v713 = vadd.f32 0.0, %v712
  %v714 = vpop.f32.mrf.mxu0
  %v715 = vadd.f32 0.0, %v714
  %716 = vmatmul.bf16.gmra.mxu0 %v494
  %v717 = vpop.f32.mrf.mxu0
  %v718 = vadd.f32 0.0, %v717
  %v719 = vpop.f32.mrf.mxu0
  %v720 = vadd.f32 0.0, %v719
  %721 = vmatmul.bf16.gmra.mxu0 %v497
  %v722 = vpop.f32.mrf.mxu0
  %v723 = vadd.f32 0.0, %v722
  %v724 = vpop.f32.mrf.mxu0
  %v725 = vadd.f32 0.0, %v724
  %726 = vmatmul.bf16.gmra.mxu0 %v500
  %v727 = vpop.f32.mrf.mxu0
  %v728 = vadd.f32 0.0, %v727
  %v729 = vpop.f32.mrf.mxu0
  %v730 = vadd.f32 0.0, %v729
  %731 = vmatmul.bf16.gmra.mxu0 %v503
  %v732 = vpop.f32.mrf.mxu0
  %v733 = vadd.f32 0.0, %v732
  %v734 = vpop.f32.mrf.mxu0
  %v735 = vadd.f32 0.0, %v734
  %736 = vmatmul.bf16.gmra.mxu0 %v506
  %v737 = vpop.f32.mrf.mxu0
  %v738 = vadd.f32 0.0, %v737
  %v739 = vpop.f32.mrf.mxu0
  %v740 = vadd.f32 0.0, %v739
  %741 = vmatmul.bf16.gmra.mxu0 %v509
  %v742 = vpop.f32.mrf.mxu0
  %v743 = vadd.f32 0.0, %v742
  %v744 = vpop.f32.mrf.mxu0
  %v745 = vadd.f32 0.0, %v744
  %746 = vmatmul.bf16.gmra.mxu0 %v512
  %v747 = vpop.f32.mrf.mxu0
  %v748 = vadd.f32 0.0, %v747
  %v749 = vpop.f32.mrf.mxu0
  %v750 = vadd.f32 0.0, %v749
  %751 = vmatmul.bf16.gmra.mxu0 %v515
  %v752 = vpop.f32.mrf.mxu0
  %v753 = vadd.f32 0.0, %v752
  %v754 = vpop.f32.mrf.mxu0
  %v755 = vadd.f32 0.0, %v754
  %756 = vmatmul.bf16.gmra.mxu0 %v518
  %v757 = vpop.f32.mrf.mxu0
  %v758 = vadd.f32 0.0, %v757
  %v759 = vpop.f32.mrf.mxu0
  %v760 = vadd.f32 0.0, %v759
  %761 = vmatmul.bf16.gmra.mxu0 %v521
  %v762 = vpop.f32.mrf.mxu0
  %v763 = vadd.f32 0.0, %v762
  %v764 = vpop.f32.mrf.mxu0
  %v765 = vadd.f32 0.0, %v764
  %766 = vmatmul.bf16.gmra.mxu0 %v524
  %v767 = vpop.f32.mrf.mxu0
  %v768 = vadd.f32 0.0, %v767
  %v769 = vpop.f32.mrf.mxu0
  %v770 = vadd.f32 0.0, %v769
  %771 = vmatmul.bf16.gmra.mxu0 %v527
  %v772 = vpop.f32.mrf.mxu0
  %v773 = vadd.f32 0.0, %v772
  %v774 = vpop.f32.mrf.mxu0
  %v775 = vadd.f32 0.0, %v774
  %776 = vmatmul.bf16.gmra.mxu0 %v530
  %v777 = vpop.f32.mrf.mxu0
  %v778 = vadd.f32 0.0, %v777
  %v779 = vpop.f32.mrf.mxu0
  %v780 = vadd.f32 0.0, %v779
  %781 = vmatmul.bf16.gmra.mxu0 %v533
  %v782 = vpop.f32.mrf.mxu0
  %v783 = vadd.f32 0.0, %v782
  %v784 = vpop.f32.mrf.mxu0
  %v785 = vadd.f32 0.0, %v784
  %786 = vmatmul.bf16.gmra.mxu0 %v536
  %v787 = vpop.f32.mrf.mxu0
  %v788 = vadd.f32 0.0, %v787
  %v789 = vpop.f32.mrf.mxu0
  %v790 = vadd.f32 0.0, %v789
  %791 = vmatmul.bf16.gmra.mxu0 %v539
  %v792 = vpop.f32.mrf.mxu0
  %v793 = vadd.f32 0.0, %v792
  %v794 = vpop.f32.mrf.mxu0
  %v795 = vadd.f32 0.0, %v794
  %796 = vmatmul.bf16.gmra.mxu0 %v542
  %v797 = vpop.f32.mrf.mxu0
  %v798 = vadd.f32 0.0, %v797
  %v799 = vpop.f32.mrf.mxu0
  %v800 = vadd.f32 0.0, %v799
  %801 = vmatmul.bf16.gmra.mxu0 %v545
  %v802 = vpop.f32.mrf.mxu0
  %v803 = vadd.f32 0.0, %v802
  %v804 = vpop.f32.mrf.mxu0
  %v805 = vadd.f32 0.0, %v804
  %806 = vmatmul.bf16.gmra.mxu0 %v548
  %v807 = vpop.f32.mrf.mxu0
  %v808 = vadd.f32 0.0, %v807
  %v809 = vpop.f32.mrf.mxu0
  %v810 = vadd.f32 0.0, %v809
  %811 = vmatmul.bf16.gmra.mxu0 %v551
  %v812 = vpop.f32.mrf.mxu0
  %v813 = vadd.f32 0.0, %v812
  %v814 = vpop.f32.mrf.mxu0
  %v815 = vadd.f32 0.0, %v814
  %816 = vmatmul.bf16.gmra.mxu0 %v554
  %v817 = vpop.f32.mrf.mxu0
  %v818 = vadd.f32 0.0, %v817
  %v819 = vpop.f32.mrf.mxu0
  %v820 = vadd.f32 0.0, %v819
  %821 = vmatmul.bf16.gmra.mxu0 %v557
  %v822 = vpop.f32.mrf.mxu0
  %v823 = vadd.f32 0.0, %v822
  %v824 = vpop.f32.mrf.mxu0
  %v825 = vadd.f32 0.0, %v824
  %826 = vmatmul.bf16.gmra.mxu0 %v560
  %v827 = vpop.f32.mrf.mxu0
  %v828 = vadd.f32 0.0, %v827
  %v829 = vpop.f32.mrf.mxu0
  %v830 = vadd.f32 0.0, %v829
  %831 = vmatmul.bf16.gmra.mxu0 %v563
  %v832 = vpop.f32.mrf.mxu0
  %v833 = vadd.f32 0.0, %v832
  %v834 = vpop.f32.mrf.mxu0
  %v835 = vadd.f32 0.0, %v834
  %836 = vmatmul.bf16.gmra.mxu0 %v566
  %v837 = vpop.f32.mrf.mxu0
  %v838 = vadd.f32 0.0, %v837
  %v839 = vpop.f32.mrf.mxu0
  %v840 = vadd.f32 0.0, %v839
  %841 = vmatmul.bf16.gmra.mxu0 %v569
  %v842 = vpop.f32.mrf.mxu0
  %v843 = vadd.f32 0.0, %v842
  %v844 = vpop.f32.mrf.mxu0
  %v845 = vadd.f32 0.0, %v844
  %846 = vmatmul.bf16.gmra.mxu0 %v572
  %v847 = vpop.f32.mrf.mxu0
  %v848 = vadd.f32 0.0, %v847
  %v849 = vpop.f32.mrf.mxu0
  %v850 = vadd.f32 0.0, %v849
  %851 = vmatmul.bf16.gmra.mxu0 %v575
  %v852 = vpop.f32.mrf.mxu0
  %v853 = vadd.f32 0.0, %v852
  %v854 = vpop.f32.mrf.mxu0
  %v855 = vadd.f32 0.0, %v854
  %856 = vmatmul.bf16.gmra.mxu0 %v578
  %v857 = vpop.f32.mrf.mxu0
  %v858 = vadd.f32 0.0, %v857
  %v859 = vpop.f32.mrf.mxu0
  %v860 = vadd.f32 0.0, %v859
  %861 = vmatmul.bf16.gmra.mxu0 %v581
  %v862 = vpop.f32.mrf.mxu0
  %v863 = vadd.f32 0.0, %v862
  %v864 = vpop.f32.mrf.mxu0
  %v865 = vadd.f32 0.0, %v864
  %866 = vmatmul.bf16.gmra.mxu0 %v584
  %v867 = vpop.f32.mrf.mxu0
  %v868 = vadd.f32 0.0, %v867
  %v869 = vpop.f32.mrf.mxu0
  %v870 = vadd.f32 0.0, %v869
  %871 = vmatmul.bf16.gmra.mxu0 %v587
  %v872 = vpop.f32.mrf.mxu0
  %v873 = vadd.f32 0.0, %v872
  %v874 = vpop.f32.mrf.mxu0
  %v875 = vadd.f32 0.0, %v874
  %876 = vdwg.mxu0
  %v877 = vmax.f32 %v603, 0.0
  %v878 = vmax.f32 %v605, 0.0
  %v879 = vmax.f32 %v608, 0.0
  %v880 = vmax.f32 %v610, 0.0
  %v881 = vmax.f32 %v613, 0.0
  %v882 = vmax.f32 %v615, 0.0
  %v883 = vmax.f32 %v618, 0.0
  %v884 = vmax.f32 %v620, 0.0
  %v885 = vmax.f32 %v623, 0.0
  %v886 = vmax.f32 %v625, 0.0
  %v887 = vmax.f32 %v628, 0.0
  %v888 = vmax.f32 %v630, 0.0
  %v889 = vmax.f32 %v633, 0.0
  %v890 = vmax.f32 %v635, 0.0
  %v891 = vmax.f32 %v638, 0.0
  %v892 = vmax.f32 %v640, 0.0
  %v893 = vmax.f32 %v643, 0.0
  %v894 = vmax.f32 %v645, 0.0
  %v895 = vmax.f32 %v648, 0.0
  %v896 = vmax.f32 %v650, 0.0
  %v897 = vmax.f32 %v653, 0.0
  %v898 = vmax.f32 %v655, 0.0
  %v899 = vmax.f32 %v658, 0.0
  %v900 = vmax.f32 %v660, 0.0
  %v901 = vmax.f32 %v663, 0.0
  %v902 = vmax.f32 %v665, 0.0
  %v903 = vmax.f32 %v668, 0.0
  %v904 = vmax.f32 %v670, 0.0
  %v905 = vmax.f32 %v673, 0.0
  %v906 = vmax.f32 %v675, 0.0
  %v907 = vmax.f32 %v678, 0.0
  %v908 = vmax.f32 %v680, 0.0
  %v909 = vmax.f32 %v683, 0.0
  %v910 = vmax.f32 %v685, 0.0
  %v911 = vmax.f32 %v688, 0.0
  %v912 = vmax.f32 %v690, 0.0
  %v913 = vmax.f32 %v693, 0.0
  %v914 = vmax.f32 %v695, 0.0
  %v915 = vmax.f32 %v698, 0.0
  %v916 = vmax.f32 %v700, 0.0
  %v917 = vmax.f32 %v703, 0.0
  %v918 = vmax.f32 %v705, 0.0
  %v919 = vmax.f32 %v708, 0.0
  %v920 = vmax.f32 %v710, 0.0
  %v921 = vmax.f32 %v713, 0.0
  %v922 = vmax.f32 %v715, 0.0
  %v923 = vmax.f32 %v718, 0.0
  %v924 = vmax.f32 %v720, 0.0
  %v925 = vmax.f32 %v723, 0.0
  %v926 = vmax.f32 %v725, 0.0
  %v927 = vmax.f32 %v728, 0.0
  %v928 = vmax.f32 %v730, 0.0
  %v929 = vmax.f32 %v733, 0.0
  %v930 = vmax.f32 %v735, 0.0
  %v931 = vmax.f32 %v738, 0.0
  %v932 = vmax.f32 %v740, 0.0
  %v933 = vmax.f32 %v743, 0.0
  %v934 = vmax.f32 %v745, 0.0
  %v935 = vmax.f32 %v748, 0.0
  %v936 = vmax.f32 %v750, 0.0
  %v937 = vmax.f32 %v753, 0.0
  %v938 = vmax.f32 %v755, 0.0
  %v939 = vmax.f32 %v758, 0.0
  %v940 = vmax.f32 %v760, 0.0
  %v941 = vmax.f32 %v763, 0.0
  %v942 = vmax.f32 %v765, 0.0
  %v943 = vmax.f32 %v768, 0.0
  %v944 = vmax.f32 %v770, 0.0
  %v945 = vmax.f32 %v773, 0.0
  %v946 = vmax.f32 %v775, 0.0
  %v947 = vmax.f32 %v778, 0.0
  %v948 = vmax.f32 %v780, 0.0
  %v949 = vmax.f32 %v783, 0.0
  %v950 = vmax.f32 %v785, 0.0
  %v951 = vmax.f32 %v788, 0.0
  %v952 = vmax.f32 %v790, 0.0
  %v953 = vmax.f32 %v793, 0.0
  %v954 = vmax.f32 %v795, 0.0
  %v955 = vmax.f32 %v798, 0.0
  %v956 = vmax.f32 %v800, 0.0
  %v957 = vmax.f32 %v803, 0.0
  %v958 = vmax.f32 %v805, 0.0
  %v959 = vmax.f32 %v808, 0.0
  %v960 = vmax.f32 %v810, 0.0
  %v961 = vmax.f32 %v813, 0.0
  %v962 = vmax.f32 %v815, 0.0
  %v963 = vmax.f32 %v818, 0.0
  %v964 = vmax.f32 %v820, 0.0
  %v965 = vmax.f32 %v823, 0.0
  %v966 = vmax.f32 %v825, 0.0
  %v967 = vmax.f32 %v828, 0.0
  %v968 = vmax.f32 %v830, 0.0
  %v969 = vmax.f32 %v833, 0.0
  %v970 = vmax.f32 %v835, 0.0
  %v971 = vmax.f32 %v838, 0.0
  %v972 = vmax.f32 %v840, 0.0
  %v973 = vmax.f32 %v843, 0.0
  %v974 = vmax.f32 %v845, 0.0
  %v975 = vmax.f32 %v848, 0.0
  %v976 = vmax.f32 %v850, 0.0
  %v977 = vmax.f32 %v853, 0.0
  %v978 = vmax.f32 %v855, 0.0
  %v979 = vmax.f32 %v858, 0.0
  %v980 = vmax.f32 %v860, 0.0
  %v981 = vmax.f32 %v863, 0.0
  %v982 = vmax.f32 %v865, 0.0
  %v983 = vmax.f32 %v868, 0.0
  %v984 = vmax.f32 %v870, 0.0
  %v985 = vmax.f32 %v873, 0.0
  %v986 = vmax.f32 %v875, 0.0
  %v987 = vpack.c.bf16 %v877, %v877
  %v988 = vpack.c.bf16 %v878, %v878
  %v989 = vpack.c.bf16 %v879, %v879
  %v990 = vpack.c.bf16 %v880, %v880
  %v991 = vpack.c.bf16 %v881, %v881
  %v992 = vpack.c.bf16 %v882, %v882
  %v993 = vpack.c.bf16 %v883, %v883
  %v994 = vpack.c.bf16 %v884, %v884
  %v995 = vpack.c.bf16 %v885, %v885
  %v996 = vpack.c.bf16 %v886, %v886
  %v997 = vpack.c.bf16 %v887, %v887
  %v998 = vpack.c.bf16 %v888, %v888
  %v999 = vpack.c.bf16 %v889, %v889
  %v1000 = vpack.c.bf16 %v890, %v890
  %v1001 = vpack.c.bf16 %v891, %v891
  %v1002 = vpack.c.bf16 %v892, %v892
  %v1003 = vpack.c.bf16 %v893, %v893
  %v1004 = vpack.c.bf16 %v894, %v894
  %v1005 = vpack.c.bf16 %v895, %v895
  %v1006 = vpack.c.bf16 %v896, %v896
  %v1007 = vpack.c.bf16 %v897, %v897
  %v1008 = vpack.c.bf16 %v898, %v898
  %v1009 = vpack.c.bf16 %v899, %v899
  %v1010 = vpack.c.bf16 %v900, %v900
  %v1011 = vpack.c.bf16 %v901, %v901
  %v1012 = vpack.c.bf16 %v902, %v902
  %v1013 = vpack.c.bf16 %v903, %v903
  %v1014 = vpack.c.bf16 %v904, %v904
  %v1015 = vpack.c.bf16 %v905, %v905
  %v1016 = vpack.c.bf16 %v906, %v906
  %v1017 = vpack.c.bf16 %v907, %v907
  %v1018 = vpack.c.bf16 %v908, %v908
  %v1019 = vpack.c.bf16 %v909, %v909
  %v1020 = vpack.c.bf16 %v910, %v910
  %v1021 = vpack.c.bf16 %v911, %v911
  %v1022 = vpack.c.bf16 %v912, %v912
  %v1023 = vpack.c.bf16 %v913, %v913
  %v1024 = vpack.c.bf16 %v914, %v914
  %v1025 = vpack.c.bf16 %v915, %v915
  %v1026 = vpack.c.bf16 %v916, %v916
  %v1027 = vpack.c.bf16 %v917, %v917
  %v1028 = vpack.c.bf16 %v918, %v918
  %v1029 = vpack.c.bf16 %v919, %v919
  %v1030 = vpack.c.bf16 %v920, %v920
  %v1031 = vpack.c.bf16 %v921, %v921
  %v1032 = vpack.c.bf16 %v922, %v922
  %v1033 = vpack.c.bf16 %v923, %v923
  %v1034 = vpack.c.bf16 %v924, %v924
  %v1035 = vpack.c.bf16 %v925, %v925
  %v1036 = vpack.c.bf16 %v926, %v926
  %v1037 = vpack.c.bf16 %v927, %v927
  %v1038 = vpack.c.bf16 %v928, %v928
  %v1039 = vpack.c.bf16 %v929, %v929
  %v1040 = vpack.c.bf16 %v930, %v930
  %v1041 = vpack.c.bf16 %v931, %v931
  %v1042 = vpack.c.bf16 %v932, %v932
  %v1043 = vpack.c.bf16 %v933, %v933
  %v1044 = vpack.c.bf16 %v934, %v934
  %v1045 = vpack.c.bf16 %v935, %v935
  %v1046 = vpack.c.bf16 %v936, %v936
  %v1047 = vpack.c.bf16 %v937, %v937
  %v1048 = vpack.c.bf16 %v938, %v938
  %v1049 = vpack.c.bf16 %v939, %v939
  %v1050 = vpack.c.bf16 %v940, %v940
  %v1051 = vpack.c.bf16 %v941, %v941
  %v1052 = vpack.c.bf16 %v942, %v942
  %v1053 = vpack.c.bf16 %v943, %v943
  %v1054 = vpack.c.bf16 %v944, %v944
  %v1055 = vpack.c.bf16 %v945, %v945
  %v1056 = vpack.c.bf16 %v946, %v946
  %v1057 = vpack.c.bf16 %v947, %v947
  %v1058 = vpack.c.bf16 %v948, %v948
  %v1059 = vpack.c.bf16 %v949, %v949
  %v1060 = vpack.c.bf16 %v950, %v950
  %v1061 = vpack.c.bf16 %v951, %v951
  %v1062 = vpack.c.bf16 %v952, %v952
  %v1063 = vpack.c.bf16 %v953, %v953
  %v1064 = vpack.c.bf16 %v954, %v954
  %v1065 = vpack.c.bf16 %v955, %v955
  %v1066 = vpack.c.bf16 %v956, %v956
  %v1067 = vpack.c.bf16 %v957, %v957
  %v1068 = vpack.c.bf16 %v958, %v958
  %v1069 = vpack.c.bf16 %v959, %v959
  %v1070 = vpack.c.bf16 %v960, %v960
  %v1071 = vpack.c.bf16 %v961, %v961
  %v1072 = vpack.c.bf16 %v962, %v962
  %v1073 = vpack.c.bf16 %v963, %v963
  %v1074 = vpack.c.bf16 %v964, %v964
  %v1075 = vpack.c.bf16 %v965, %v965
  %v1076 = vpack.c.bf16 %v966, %v966
  %v1077 = vpack.c.bf16 %v967, %v967
  %v1078 = vpack.c.bf16 %v968, %v968
  %v1079 = vpack.c.bf16 %v969, %v969
  %v1080 = vpack.c.bf16 %v970, %v970
  %v1081 = vpack.c.bf16 %v971, %v971
  %v1082 = vpack.c.bf16 %v972, %v972
  %v1083 = vpack.c.bf16 %v973, %v973
  %v1084 = vpack.c.bf16 %v974, %v974
  %v1085 = vpack.c.bf16 %v975, %v975
  %v1086 = vpack.c.bf16 %v976, %v976
  %v1087 = vpack.c.bf16 %v977, %v977
  %v1088 = vpack.c.bf16 %v978, %v978
  %v1089 = vpack.c.bf16 %v979, %v979
  %v1090 = vpack.c.bf16 %v980, %v980
  %v1091 = vpack.c.bf16 %v981, %v981
  %v1092 = vpack.c.bf16 %v982, %v982
  %v1093 = vpack.c.bf16 %v983, %v983
  %v1094 = vpack.c.bf16 %v984, %v984
  %v1095 = vpack.c.bf16 %v985, %v985
  %v1096 = vpack.c.bf16 %v986, %v986
  %1097 = vst [vmem:[#allocation2] sm:$0xf] %v987
  %1098 = vst [vmem:[#allocation2 + $0x4] sm:$0xf] %v988
  %1099 = vst [vmem:[#allocation2 + $0x8] sm:$0xf] %v989
  %1100 = vst [vmem:[#allocation2 + $0xc] sm:$0xf] %v990
  %1101 = vst [vmem:[#allocation2 + $0x10] sm:$0xf] %v991
  %1102 = vst [vmem:[#allocation2 + $0x14] sm:$0xf] %v992
  %1103 = vst [vmem:[#allocation2 + $0x18] sm:$0xf] %v993
  %1104 = vst [vmem:[#allocation2 + $0x1c] sm:$0xf] %v994
  %1105 = vst [vmem:[#allocation2 + $0x20] sm:$0xf] %v995
  %1106 = vst [vmem:[#allocation2 + $0x24] sm:$0xf] %v996
  %1107 = vst [vmem:[#allocation2 + $0x28] sm:$0xf] %v997
  %1108 = vst [vmem:[#allocation2 + $0x2c] sm:$0xf] %v998
  %1109 = vst [vmem:[#allocation2 + $0x30] sm:$0xf] %v999
  %1110 = vst [vmem:[#allocation2 + $0x34] sm:$0xf] %v1000
  %1111 = vst [vmem:[#allocation2 + $0x38] sm:$0xf] %v1001
  %1112 = vst [vmem:[#allocation2 + $0x3c] sm:$0xf] %v1002
  %1113 = vst [vmem:[#allocation2 + $0x40] sm:$0xf] %v1003
  %1114 = vst [vmem:[#allocation2 + $0x44] sm:$0xf] %v1004
  %1115 = vst [vmem:[#allocation2 + $0x48] sm:$0xf] %v1005
  %1116 = vst [vmem:[#allocation2 + $0x4c] sm:$0xf] %v1006
  %1117 = vst [vmem:[#allocation2 + $0x50] sm:$0xf] %v1007
  %1118 = vst [vmem:[#allocation2 + $0x54] sm:$0xf] %v1008
  %1119 = vst [vmem:[#allocation2 + $0x58] sm:$0xf] %v1009
  %1120 = vst [vmem:[#allocation2 + $0x5c] sm:$0xf] %v1010
  %1121 = vst [vmem:[#allocation2 + $0x60] sm:$0xf] %v1011
  %1122 = vst [vmem:[#allocation2 + $0x64] sm:$0xf] %v1012
  %1123 = vst [vmem:[#allocation2 + $0x68] sm:$0xf] %v1013
  %1124 = vst [vmem:[#allocation2 + $0x6c] sm:$0xf] %v1014
  %1125 = vst [vmem:[#allocation2 + $0x70] sm:$0xf] %v1015
  %1126 = vst [vmem:[#allocation2 + $0x74] sm:$0xf] %v1016
  %1127 = vst [vmem:[#allocation2 + $0x78] sm:$0xf] %v1017
  %1128 = vst [vmem:[#allocation2 + $0x7c] sm:$0xf] %v1018
  %1129 = vst [vmem:[#allocation2 + $0x80] sm:$0xf] %v1019
  %1130 = vst [vmem:[#allocation2 + $0x84] sm:$0xf] %v1020
  %1131 = vst [vmem:[#allocation2 + $0x88] sm:$0xf] %v1021
  %1132 = vst [vmem:[#allocation2 + $0x8c] sm:$0xf] %v1022
  %1133 = vst [vmem:[#allocation2 + $0x90] sm:$0xf] %v1023
  %1134 = vst [vmem:[#allocation2 + $0x94] sm:$0xf] %v1024
  %1135 = vst [vmem:[#allocation2 + $0x98] sm:$0xf] %v1025
  %1136 = vst [vmem:[#allocation2 + $0x9c] sm:$0xf] %v1026
  %1137 = vst [vmem:[#allocation2 + $0xa0] sm:$0xf] %v1027
  %1138 = vst [vmem:[#allocation2 + $0xa4] sm:$0xf] %v1028
  %1139 = vst [vmem:[#allocation2 + $0xa8] sm:$0xf] %v1029
  %1140 = vst [vmem:[#allocation2 + $0xac] sm:$0xf] %v1030
  %1141 = vst [vmem:[#allocation2 + $0xb0] sm:$0xf] %v1031
  %1142 = vst [vmem:[#allocation2 + $0xb4] sm:$0xf] %v1032
  %1143 = vst [vmem:[#allocation2 + $0xb8] sm:$0xf] %v1033
  %1144 = vst [vmem:[#allocation2 + $0xbc] sm:$0xf] %v1034
  %1145 = vst [vmem:[#allocation2 + $0xc0] sm:$0xf] %v1035
  %1146 = vst [vmem:[#allocation2 + $0xc4] sm:$0xf] %v1036
  %1147 = vst [vmem:[#allocation2 + $0xc8] sm:$0xf] %v1037
  %1148 = vst [vmem:[#allocation2 + $0xcc] sm:$0xf] %v1038
  %1149 = vst [vmem:[#allocation2 + $0xd0] sm:$0xf] %v1039
  %1150 = vst [vmem:[#allocation2 + $0xd4] sm:$0xf] %v1040
  %1151 = vst [vmem:[#allocation2 + $0xd8] sm:$0xf] %v1041
  %1152 = vst [vmem:[#allocation2 + $0xdc] sm:$0xf] %v1042
  %1153 = vst [vmem:[#allocation2 + $0xe0] sm:$0xf] %v1043
  %1154 = vst [vmem:[#allocation2 + $0xe4] sm:$0xf] %v1044
  %1155 = vst [vmem:[#allocation2 + $0xe8] sm:$0xf] %v1045
  %1156 = vst [vmem:[#allocation2 + $0xec] sm:$0xf] %v1046
  %1157 = vst [vmem:[#allocation2 + $0xf0] sm:$0xf] %v1047
  %1158 = vst [vmem:[#allocation2 + $0xf4] sm:$0xf] %v1048
  %1159 = vst [vmem:[#allocation2 + $0xf8] sm:$0xf] %v1049
  %1160 = vst [vmem:[#allocation2 + $0xfc] sm:$0xf] %v1050
  %1161 = vst [vmem:[#allocation2 + $0x100] sm:$0xf] %v1051
  %1162 = vst [vmem:[#allocation2 + $0x104] sm:$0xf] %v1052
  %1163 = vst [vmem:[#allocation2 + $0x108] sm:$0xf] %v1053
  %1164 = vst [vmem:[#allocation2 + $0x10c] sm:$0xf] %v1054
  %1165 = vst [vmem:[#allocation2 + $0x110] sm:$0xf] %v1055
  %1166 = vst [vmem:[#allocation2 + $0x114] sm:$0xf] %v1056
  %1167 = vst [vmem:[#allocation2 + $0x118] sm:$0xf] %v1057
  %1168 = vst [vmem:[#allocation2 + $0x11c] sm:$0xf] %v1058
  %1169 = vst [vmem:[#allocation2 + $0x120] sm:$0xf] %v1059
  %1170 = vst [vmem:[#allocation2 + $0x124] sm:$0xf] %v1060
  %1171 = vst [vmem:[#allocation2 + $0x128] sm:$0xf] %v1061
  %1172 = vst [vmem:[#allocation2 + $0x12c] sm:$0xf] %v1062
  %1173 = vst [vmem:[#allocation2 + $0x130] sm:$0xf] %v1063
  %1174 = vst [vmem:[#allocation2 + $0x134] sm:$0xf] %v1064
  %1175 = vst [vmem:[#allocation2 + $0x138] sm:$0xf] %v1065
  %1176 = vst [vmem:[#allocation2 + $0x13c] sm:$0xf] %v1066
  %1177 = vst [vmem:[#allocation2 + $0x140] sm:$0xf] %v1067
  %1178 = vst [vmem:[#allocation2 + $0x144] sm:$0xf] %v1068
  %1179 = vst [vmem:[#allocation2 + $0x148] sm:$0xf] %v1069
  %1180 = vst [vmem:[#allocation2 + $0x14c] sm:$0xf] %v1070
  %1181 = vst [vmem:[#allocation2 + $0x150] sm:$0xf] %v1071
  %1182 = vst [vmem:[#allocation2 + $0x154] sm:$0xf] %v1072
  %1183 = vst [vmem:[#allocation2 + $0x158] sm:$0xf] %v1073
  %1184 = vst [vmem:[#allocation2 + $0x15c] sm:$0xf] %v1074
  %1185 = vst [vmem:[#allocation2 + $0x160] sm:$0xf] %v1075
  %1186 = vst [vmem:[#allocation2 + $0x164] sm:$0xf] %v1076
  %1187 = vst [vmem:[#allocation2 + $0x168] sm:$0xf] %v1077
  %1188 = vst [vmem:[#allocation2 + $0x16c] sm:$0xf] %v1078
  %1189 = vst [vmem:[#allocation2 + $0x170] sm:$0xf] %v1079
  %1190 = vst [vmem:[#allocation2 + $0x174] sm:$0xf] %v1080
  %1191 = vst [vmem:[#allocation2 + $0x178] sm:$0xf] %v1081
  %1192 = vst [vmem:[#allocation2 + $0x17c] sm:$0xf] %v1082
  %1193 = vst [vmem:[#allocation2 + $0x180] sm:$0xf] %v1083
  %1194 = vst [vmem:[#allocation2 + $0x184] sm:$0xf] %v1084
  %1195 = vst [vmem:[#allocation2 + $0x188] sm:$0xf] %v1085
  %1196 = vst [vmem:[#allocation2 + $0x18c] sm:$0xf] %v1086
  %1197 = vst [vmem:[#allocation2 + $0x190] sm:$0xf] %v1087
  %1198 = vst [vmem:[#allocation2 + $0x194] sm:$0xf] %v1088
  %1199 = vst [vmem:[#allocation2 + $0x198] sm:$0xf] %v1089
  %1200 = vst [vmem:[#allocation2 + $0x19c] sm:$0xf] %v1090
  %1201 = vst [vmem:[#allocation2 + $0x1a0] sm:$0xf] %v1091
  %1202 = vst [vmem:[#allocation2 + $0x1a4] sm:$0xf] %v1092
  %1203 = vst [vmem:[#allocation2 + $0x1a8] sm:$0xf] %v1093
  %1204 = vst [vmem:[#allocation2 + $0x1ac] sm:$0xf] %v1094
  %1205 = vst [vmem:[#allocation2 + $0x1b0] sm:$0xf] %v1095
  %1206 = vst [vmem:[#allocation2 + $0x1b4] sm:$0xf] %v1096
  %v1207 = vld [vmem:[#allocation2] sm:$0xf]
  %v1208 = vld [vmem:[#allocation2 + $0x4] sm:$0xf]
  %v1209 = vld [vmem:[#allocation2 + $0x8] sm:$0xf]
  %v1210 = vld [vmem:[#allocation2 + $0xc] sm:$0xf]
  %v1211 = vld [vmem:[#allocation2 + $0x10] sm:$0xf]
  %v1212 = vld [vmem:[#allocation2 + $0x14] sm:$0xf]
  %v1213 = vld [vmem:[#allocation2 + $0x18] sm:$0xf]
  %v1214 = vld [vmem:[#allocation2 + $0x1c] sm:$0xf]
  %v1215 = vld [vmem:[#allocation2 + $0x20] sm:$0xf]
  %v1216 = vld [vmem:[#allocation2 + $0x24] sm:$0xf]
  %v1217 = vld [vmem:[#allocation2 + $0x28] sm:$0xf]
  %v1218 = vld [vmem:[#allocation2 + $0x2c] sm:$0xf]
  %v1219 = vld [vmem:[#allocation2 + $0x30] sm:$0xf]
  %v1220 = vld [vmem:[#allocation2 + $0x34] sm:$0xf]
  %v1221 = vld [vmem:[#allocation2 + $0x38] sm:$0xf]
  %v1222 = vld [vmem:[#allocation2 + $0x3c] sm:$0xf]
  %v1223 = vld [vmem:[#allocation2 + $0x40] sm:$0xf]
  %v1224 = vld [vmem:[#allocation2 + $0x44] sm:$0xf]
  %v1225 = vld [vmem:[#allocation2 + $0x48] sm:$0xf]
  %v1226 = vld [vmem:[#allocation2 + $0x4c] sm:$0xf]
  %v1227 = vld [vmem:[#allocation2 + $0x50] sm:$0xf]
  %v1228 = vld [vmem:[#allocation2 + $0x54] sm:$0xf]
  %v1229 = vld [vmem:[#allocation2 + $0x58] sm:$0xf]
  %v1230 = vld [vmem:[#allocation2 + $0x5c] sm:$0xf]
  %v1231 = vld [vmem:[#allocation2 + $0x60] sm:$0xf]
  %v1232 = vld [vmem:[#allocation2 + $0x64] sm:$0xf]
  %v1233 = vld [vmem:[#allocation2 + $0x68] sm:$0xf]
  %v1234 = vld [vmem:[#allocation2 + $0x6c] sm:$0xf]
  %v1235 = vld [vmem:[#allocation2 + $0x70] sm:$0xf]
  %v1236 = vld [vmem:[#allocation2 + $0x74] sm:$0xf]
  %v1237 = vld [vmem:[#allocation2 + $0x78] sm:$0xf]
  %v1238 = vld [vmem:[#allocation2 + $0x7c] sm:$0xf]
  %v1239 = vld [vmem:[#allocation2 + $0x80] sm:$0xf]
  %v1240 = vld [vmem:[#allocation2 + $0x84] sm:$0xf]
  %v1241 = vld [vmem:[#allocation2 + $0x88] sm:$0xf]
  %v1242 = vld [vmem:[#allocation2 + $0x8c] sm:$0xf]
  %v1243 = vld [vmem:[#allocation2 + $0x90] sm:$0xf]
  %v1244 = vld [vmem:[#allocation2 + $0x94] sm:$0xf]
  %v1245 = vld [vmem:[#allocation2 + $0x98] sm:$0xf]
  %v1246 = vld [vmem:[#allocation2 + $0x9c] sm:$0xf]
  %v1247 = vld [vmem:[#allocation2 + $0xa0] sm:$0xf]
  %v1248 = vld [vmem:[#allocation2 + $0xa4] sm:$0xf]
  %v1249 = vld [vmem:[#allocation2 + $0xa8] sm:$0xf]
  %v1250 = vld [vmem:[#allocation2 + $0xac] sm:$0xf]
  %v1251 = vld [vmem:[#allocation2 + $0xb0] sm:$0xf]
  %v1252 = vld [vmem:[#allocation2 + $0xb4] sm:$0xf]
  %v1253 = vld [vmem:[#allocation2 + $0xb8] sm:$0xf]
  %v1254 = vld [vmem:[#allocation2 + $0xbc] sm:$0xf]
  %1255 = vst [vmem:[#allocation3] sm:$0xf] %v1207
  %1256 = vst [vmem:[#allocation3 + $0x24] sm:$0xf] %v1208
  %1257 = vst [vmem:[#allocation3 + $0x48] sm:$0xf] %v1209
  %1258 = vst [vmem:[#allocation3 + $0x6c] sm:$0xf] %v1210
  %1259 = vst [vmem:[#allocation3 + $0x90] sm:$0xf] %v1211
  %1260 = vst [vmem:[#allocation3 + $0xb4] sm:$0xf] %v1212
  %1261 = vst [vmem:[#allocation3 + $0xd8] sm:$0xf] %v1213
  %1262 = vst [vmem:[#allocation3 + $0xfc] sm:$0xf] %v1214
  %1263 = vst [vmem:[#allocation3 + $0x120] sm:$0xf] %v1215
  %1264 = vst [vmem:[#allocation3 + $0x144] sm:$0xf] %v1216
  %1265 = vst [vmem:[#allocation3 + $0x168] sm:$0xf] %v1217
  %1266 = vst [vmem:[#allocation3 + $0x18c] sm:$0xf] %v1218
  %1267 = vst [vmem:[#allocation3 + $0x1b0] sm:$0xf] %v1219
  %1268 = vst [vmem:[#allocation3 + $0x1d4] sm:$0xf] %v1220
  %1269 = vst [vmem:[#allocation3 + $0x1f8] sm:$0xf] %v1221
  %1270 = vst [vmem:[#allocation3 + $0x21c] sm:$0xf] %v1222
  %1271 = vst [vmem:[#allocation3 + $0x240] sm:$0xf] %v1223
  %1272 = vst [vmem:[#allocation3 + $0x264] sm:$0xf] %v1224
  %1273 = vst [vmem:[#allocation3 + $0x288] sm:$0xf] %v1225
  %1274 = vst [vmem:[#allocation3 + $0x2ac] sm:$0xf] %v1226
  %1275 = vst [vmem:[#allocation3 + $0x2d0] sm:$0xf] %v1227
  %1276 = vst [vmem:[#allocation3 + $0x2f4] sm:$0xf] %v1228
  %1277 = vst [vmem:[#allocation3 + $0x318] sm:$0xf] %v1229
  %1278 = vst [vmem:[#allocation3 + $0x33c] sm:$0xf] %v1230
  %1279 = vst [vmem:[#allocation3 + $0x360] sm:$0xf] %v1231
  %1280 = vst [vmem:[#allocation3 + $0x384] sm:$0xf] %v1232
  %1281 = vst [vmem:[#allocation3 + $0x3a8] sm:$0xf] %v1233
  %1282 = vst [vmem:[#allocation3 + $0x3cc] sm:$0xf] %v1234
  %1283 = vst [vmem:[#allocation3 + $0x3f0] sm:$0xf] %v1235
  %1284 = vst [vmem:[#allocation3 + $0x414] sm:$0xf] %v1236
  %1285 = vst [vmem:[#allocation3 + $0x438] sm:$0xf] %v1237
  %1286 = vst [vmem:[#allocation3 + $0x45c] sm:$0xf] %v1238
  %1287 = vst [vmem:[#allocation3 + $0x480] sm:$0xf] %v1239
  %1288 = vst [vmem:[#allocation3 + $0x4a4] sm:$0xf] %v1240
  %1289 = vst [vmem:[#allocation3 + $0x4c8] sm:$0xf] %v1241
  %1290 = vst [vmem:[#allocation3 + $0x4ec] sm:$0xf] %v1242
  %1291 = vst [vmem:[#allocation3 + $0x510] sm:$0xf] %v1243
  %1292 = vst [vmem:[#allocation3 + $0x534] sm:$0xf] %v1244
  %1293 = vst [vmem:[#allocation3 + $0x558] sm:$0xf] %v1245
  %1294 = vst [vmem:[#allocation3 + $0x57c] sm:$0xf] %v1246
  %1295 = vst [vmem:[#allocation3 + $0x5a0] sm:$0xf] %v1247
  %1296 = vst [vmem:[#allocation3 + $0x5c4] sm:$0xf] %v1248
  %1297 = vst [vmem:[#allocation3 + $0x5e8] sm:$0xf] %v1249
  %1298 = vst [vmem:[#allocation3 + $0x60c] sm:$0xf] %v1250
  %1299 = vst [vmem:[#allocation3 + $0x630] sm:$0xf] %v1251
  %1300 = vst [vmem:[#allocation3 + $0x654] sm:$0xf] %v1252
  %1301 = vst [vmem:[#allocation3 + $0x678] sm:$0xf] %v1253
  %1302 = vst [vmem:[#allocation3 + $0x69c] sm:$0xf] %v1254
  %v1303 = vld [vmem:[#allocation2] sm:$0xf]
  %v1304 = vld [vmem:[#allocation2 + $0x4] sm:$0xf]
  %v1305 = vld [vmem:[#allocation2 + $0x8] sm:$0xf]
  %v1306 = vld [vmem:[#allocation2 + $0xc] sm:$0xf]
  %v1307 = vld [vmem:[#allocation2 + $0x10] sm:$0xf]
  %v1308 = vld [vmem:[#allocation2 + $0x14] sm:$0xf]
  %v1309 = vld [vmem:[#allocation2 + $0x18] sm:$0xf]
  %v1310 = vld [vmem:[#allocation2 + $0x1c] sm:$0xf]
  %v1311 = vld [vmem:[#allocation2 + $0x20] sm:$0xf]
  %v1312 = vld [vmem:[#allocation2 + $0x24] sm:$0xf]
  %v1313 = vld [vmem:[#allocation2 + $0x28] sm:$0xf]
  %v1314 = vld [vmem:[#allocation2 + $0x2c] sm:$0xf]
  %v1315 = vld [vmem:[#allocation2 + $0x30] sm:$0xf]
  %v1316 = vld [vmem:[#allocation2 + $0x34] sm:$0xf]
  %v1317 = vld [vmem:[#allocation2 + $0x38] sm:$0xf]
  %v1318 = vld [vmem:[#allocation2 + $0x3c] sm:$0xf]
  %v1319 = vld [vmem:[#allocation2 + $0x40] sm:$0xf]
  %v1320 = vld [vmem:[#allocation2 + $0x44] sm:$0xf]
  %v1321 = vld [vmem:[#allocation2 + $0x48] sm:$0xf]
  %v1322 = vld [vmem:[#allocation2 + $0x4c] sm:$0xf]
  %v1323 = vld [vmem:[#allocation2 + $0x50] sm:$0xf]
  %v1324 = vld [vmem:[#allocation2 + $0x54] sm:$0xf]
  %v1325 = vld [vmem:[#allocation2 + $0x58] sm:$0xf]
  %v1326 = vld [vmem:[#allocation2 + $0x5c] sm:$0xf]
  %v1327 = vld [vmem:[#allocation2 + $0x60] sm:$0xf]
  %v1328 = vld [vmem:[#allocation2 + $0x64] sm:$0xf]
  %v1329 = vld [vmem:[#allocation2 + $0x68] sm:$0xf]
  %v1330 = vld [vmem:[#allocation2 + $0x6c] sm:$0xf]
  %v1331 = vld [vmem:[#allocation2 + $0x70] sm:$0xf]
  %v1332 = vld [vmem:[#allocation2 + $0x74] sm:$0xf]
  %v1333 = vld [vmem:[#allocation2 + $0x78] sm:$0xf]
  %v1334 = vld [vmem:[#allocation2 + $0x7c] sm:$0xf]
  %v1335 = vld [vmem:[#allocation2 + $0x80] sm:$0xf]
  %v1336 = vld [vmem:[#allocation2 + $0x84] sm:$0xf]
  %v1337 = vld [vmem:[#allocation2 + $0x88] sm:$0xf]
  %v1338 = vld [vmem:[#allocation2 + $0x8c] sm:$0xf]
  %v1339 = vld [vmem:[#allocation2 + $0x90] sm:$0xf]
  %v1340 = vld [vmem:[#allocation2 + $0x94] sm:$0xf]
  %v1341 = vld [vmem:[#allocation2 + $0x98] sm:$0xf]
  %v1342 = vld [vmem:[#allocation2 + $0x9c] sm:$0xf]
  %v1343 = vld [vmem:[#allocation2 + $0xa0] sm:$0xf]
  %v1344 = vld [vmem:[#allocation2 + $0xa4] sm:$0xf]
  %v1345 = vld [vmem:[#allocation2 + $0xa8] sm:$0xf]
  %v1346 = vld [vmem:[#allocation2 + $0xac] sm:$0xf]
  %v1347 = vld [vmem:[#allocation2 + $0xb0] sm:$0xf]
  %v1348 = vld [vmem:[#allocation2 + $0xb4] sm:$0xf]
  %v1349 = vld [vmem:[#allocation2 + $0xb8] sm:$0xf]
  %v1350 = vld [vmem:[#allocation2 + $0xbc] sm:$0xf]
  %v1351 = vld [vmem:[#allocation2 + $0xc0] sm:$0x1]
  %vm1352 = vsmask.f32 3328
  %vm1353 = vsmask.f32 7440
  %vm1354 = vmor %vm1352, %vm1353
  %v1356 = vshrl.u32 %v1303, 16
  %v1358 = vrot.slane %v1356, 4
  %v1359 = vshll.u32 %v1303, 16
  %v1361 = vrot.slane %v1359, 5
  %v1362 = vor.u32 %v1358, %v1361
  %v1363 = vrot.slane %v1362, 4
  %v1365 = vshll.u32 %v1304, 16
  %v1367 = vrot.slane %v1365, 5
  %v1368 = vsel %vm1354, %v1363, %v1367
  %v1369 = vshrl.u32 %v1304, 16
  %v1371 = vrot.slane %v1369, 4
  %v1372 = vor.u32 %v1371, %v1367
  %v1373 = vrot.slane %v1372, 4
  %v1375 = vshll.u32 %v1305, 16
  %v1377 = vrot.slane %v1375, 5
  %v1378 = vsel %vm1354, %v1373, %v1377
  %v1379 = vshrl.u32 %v1305, 16
  %v1381 = vrot.slane %v1379, 4
  %v1382 = vor.u32 %v1381, %v1377
  %v1383 = vrot.slane %v1382, 4
  %v1385 = vshll.u32 %v1306, 16
  %v1387 = vrot.slane %v1385, 5
  %v1388 = vsel %vm1354, %v1383, %v1387
  %v1389 = vshrl.u32 %v1306, 16
  %v1391 = vrot.slane %v1389, 4
  %v1392 = vor.u32 %v1391, %v1387
  %v1393 = vrot.slane %v1392, 4
  %v1395 = vshll.u32 %v1307, 16
  %v1397 = vrot.slane %v1395, 5
  %v1398 = vsel %vm1354, %v1393, %v1397
  %v1399 = vshrl.u32 %v1307, 16
  %v1401 = vrot.slane %v1399, 4
  %v1402 = vor.u32 %v1401, %v1397
  %v1403 = vrot.slane %v1402, 4
  %v1405 = vshll.u32 %v1308, 16
  %v1407 = vrot.slane %v1405, 5
  %v1408 = vsel %vm1354, %v1403, %v1407
  %v1409 = vshrl.u32 %v1308, 16
  %v1411 = vrot.slane %v1409, 4
  %v1412 = vor.u32 %v1411, %v1407
  %v1413 = vrot.slane %v1412, 4
  %v1415 = vshll.u32 %v1309, 16
  %v1417 = vrot.slane %v1415, 5
  %v1418 = vsel %vm1354, %v1413, %v1417
  %v1419 = vshrl.u32 %v1309, 16
  %v1421 = vrot.slane %v1419, 4
  %v1422 = vor.u32 %v1421, %v1417
  %v1423 = vrot.slane %v1422, 4
  %v1425 = vshll.u32 %v1310, 16
  %v1427 = vrot.slane %v1425, 5
  %v1428 = vsel %vm1354, %v1423, %v1427
  %v1429 = vshrl.u32 %v1310, 16
  %v1431 = vrot.slane %v1429, 4
  %v1432 = vor.u32 %v1431, %v1427
  %v1433 = vrot.slane %v1432, 4
  %v1435 = vshll.u32 %v1311, 16
  %v1437 = vrot.slane %v1435, 5
  %v1438 = vsel %vm1354, %v1433, %v1437
  %v1439 = vshrl.u32 %v1311, 16
  %v1441 = vrot.slane %v1439, 4
  %v1442 = vor.u32 %v1441, %v1437
  %v1443 = vrot.slane %v1442, 4
  %v1445 = vshll.u32 %v1312, 16
  %v1447 = vrot.slane %v1445, 5
  %v1448 = vsel %vm1354, %v1443, %v1447
  %v1449 = vshrl.u32 %v1312, 16
  %v1451 = vrot.slane %v1449, 4
  %v1452 = vor.u32 %v1451, %v1447
  %v1453 = vrot.slane %v1452, 4
  %v1455 = vshll.u32 %v1313, 16
  %v1457 = vrot.slane %v1455, 5
  %v1458 = vsel %vm1354, %v1453, %v1457
  %v1459 = vshrl.u32 %v1313, 16
  %v1461 = vrot.slane %v1459, 4
  %v1462 = vor.u32 %v1461, %v1457
  %v1463 = vrot.slane %v1462, 4
  %v1465 = vshll.u32 %v1314, 16
  %v1467 = vrot.slane %v1465, 5
  %v1468 = vsel %vm1354, %v1463, %v1467
  %v1469 = vshrl.u32 %v1314, 16
  %v1471 = vrot.slane %v1469, 4
  %v1472 = vor.u32 %v1471, %v1467
  %v1473 = vrot.slane %v1472, 4
  %v1475 = vshll.u32 %v1315, 16
  %v1477 = vrot.slane %v1475, 5
  %v1478 = vsel %vm1354, %v1473, %v1477
  %v1479 = vshrl.u32 %v1315, 16
  %v1481 = vrot.slane %v1479, 4
  %v1482 = vor.u32 %v1481, %v1477
  %v1483 = vrot.slane %v1482, 4
  %v1485 = vshll.u32 %v1316, 16
  %v1487 = vrot.slane %v1485, 5
  %v1488 = vsel %vm1354, %v1483, %v1487
  %v1489 = vshrl.u32 %v1316, 16
  %v1491 = vrot.slane %v1489, 4
  %v1492 = vor.u32 %v1491, %v1487
  %v1493 = vrot.slane %v1492, 4
  %v1495 = vshll.u32 %v1317, 16
  %v1497 = vrot.slane %v1495, 5
  %v1498 = vsel %vm1354, %v1493, %v1497
  %v1499 = vshrl.u32 %v1317, 16
  %v1501 = vrot.slane %v1499, 4
  %v1502 = vor.u32 %v1501, %v1497
  %v1503 = vrot.slane %v1502, 4
  %v1505 = vshll.u32 %v1318, 16
  %v1507 = vrot.slane %v1505, 5
  %v1508 = vsel %vm1354, %v1503, %v1507
  %v1509 = vshrl.u32 %v1318, 16
  %v1511 = vrot.slane %v1509, 4
  %v1512 = vor.u32 %v1511, %v1507
  %v1513 = vrot.slane %v1512, 4
  %v1515 = vshll.u32 %v1319, 16
  %v1517 = vrot.slane %v1515, 5
  %v1518 = vsel %vm1354, %v1513, %v1517
  %v1519 = vshrl.u32 %v1319, 16
  %v1521 = vrot.slane %v1519, 4
  %v1522 = vor.u32 %v1521, %v1517
  %v1523 = vrot.slane %v1522, 4
  %v1525 = vshll.u32 %v1320, 16
  %v1527 = vrot.slane %v1525, 5
  %v1528 = vsel %vm1354, %v1523, %v1527
  %v1529 = vshrl.u32 %v1320, 16
  %v1531 = vrot.slane %v1529, 4
  %v1532 = vor.u32 %v1531, %v1527
  %v1533 = vrot.slane %v1532, 4
  %v1535 = vshll.u32 %v1321, 16
  %v1537 = vrot.slane %v1535, 5
  %v1538 = vsel %vm1354, %v1533, %v1537
  %v1539 = vshrl.u32 %v1321, 16
  %v1541 = vrot.slane %v1539, 4
  %v1542 = vor.u32 %v1541, %v1537
  %v1543 = vrot.slane %v1542, 4
  %v1545 = vshll.u32 %v1322, 16
  %v1547 = vrot.slane %v1545, 5
  %v1548 = vsel %vm1354, %v1543, %v1547
  %v1549 = vshrl.u32 %v1322, 16
  %v1551 = vrot.slane %v1549, 4
  %v1552 = vor.u32 %v1551, %v1547
  %v1553 = vrot.slane %v1552, 4
  %v1555 = vshll.u32 %v1323, 16
  %v1557 = vrot.slane %v1555, 5
  %v1558 = vsel %vm1354, %v1553, %v1557
  %v1559 = vshrl.u32 %v1323, 16
  %v1561 = vrot.slane %v1559, 4
  %v1562 = vor.u32 %v1561, %v1557
  %v1563 = vrot.slane %v1562, 4
  %v1565 = vshll.u32 %v1324, 16
  %v1567 = vrot.slane %v1565, 5
  %v1568 = vsel %vm1354, %v1563, %v1567
  %v1569 = vshrl.u32 %v1324, 16
  %v1571 = vrot.slane %v1569, 4
  %v1572 = vor.u32 %v1571, %v1567
  %v1573 = vrot.slane %v1572, 4
  %v1575 = vshll.u32 %v1325, 16
  %v1577 = vrot.slane %v1575, 5
  %v1578 = vsel %vm1354, %v1573, %v1577
  %v1579 = vshrl.u32 %v1325, 16
  %v1581 = vrot.slane %v1579, 4
  %v1582 = vor.u32 %v1581, %v1577
  %v1583 = vrot.slane %v1582, 4
  %v1585 = vshll.u32 %v1326, 16
  %v1587 = vrot.slane %v1585, 5
  %v1588 = vsel %vm1354, %v1583, %v1587
  %v1589 = vshrl.u32 %v1326, 16
  %v1591 = vrot.slane %v1589, 4
  %v1592 = vor.u32 %v1591, %v1587
  %v1593 = vrot.slane %v1592, 4
  %v1595 = vshll.u32 %v1327, 16
  %v1597 = vrot.slane %v1595, 5
  %v1598 = vsel %vm1354, %v1593, %v1597
  %v1599 = vshrl.u32 %v1327, 16
  %v1601 = vrot.slane %v1599, 4
  %v1602 = vor.u32 %v1601, %v1597
  %v1603 = vrot.slane %v1602, 4
  %v1605 = vshll.u32 %v1328, 16
  %v1607 = vrot.slane %v1605, 5
  %v1608 = vsel %vm1354, %v1603, %v1607
  %v1609 = vshrl.u32 %v1328, 16
  %v1611 = vrot.slane %v1609, 4
  %v1612 = vor.u32 %v1611, %v1607
  %v1613 = vrot.slane %v1612, 4
  %v1615 = vshll.u32 %v1329, 16
  %v1617 = vrot.slane %v1615, 5
  %v1618 = vsel %vm1354, %v1613, %v1617
  %v1619 = vshrl.u32 %v1329, 16
  %v1621 = vrot.slane %v1619, 4
  %v1622 = vor.u32 %v1621, %v1617
  %v1623 = vrot.slane %v1622, 4
  %v1625 = vshll.u32 %v1330, 16
  %v1627 = vrot.slane %v1625, 5
  %v1628 = vsel %vm1354, %v1623, %v1627
  %v1629 = vshrl.u32 %v1330, 16
  %v1631 = vrot.slane %v1629, 4
  %v1632 = vor.u32 %v1631, %v1627
  %v1633 = vrot.slane %v1632, 4
  %v1635 = vshll.u32 %v1331, 16
  %v1637 = vrot.slane %v1635, 5
  %v1638 = vsel %vm1354, %v1633, %v1637
  %v1639 = vshrl.u32 %v1331, 16
  %v1641 = vrot.slane %v1639, 4
  %v1642 = vor.u32 %v1641, %v1637
  %v1643 = vrot.slane %v1642, 4
  %v1645 = vshll.u32 %v1332, 16
  %v1647 = vrot.slane %v1645, 5
  %v1648 = vsel %vm1354, %v1643, %v1647
  %v1649 = vshrl.u32 %v1332, 16
  %v1651 = vrot.slane %v1649, 4
  %v1652 = vor.u32 %v1651, %v1647
  %v1653 = vrot.slane %v1652, 4
  %v1655 = vshll.u32 %v1333, 16
  %v1657 = vrot.slane %v1655, 5
  %v1658 = vsel %vm1354, %v1653, %v1657
  %v1659 = vshrl.u32 %v1333, 16
  %v1661 = vrot.slane %v1659, 4
  %v1662 = vor.u32 %v1661, %v1657
  %v1663 = vrot.slane %v1662, 4
  %v1665 = vshll.u32 %v1334, 16
  %v1667 = vrot.slane %v1665, 5
  %v1668 = vsel %vm1354, %v1663, %v1667
  %v1669 = vshrl.u32 %v1334, 16
  %v1671 = vrot.slane %v1669, 4
  %v1672 = vor.u32 %v1671, %v1667
  %v1673 = vrot.slane %v1672, 4
  %v1675 = vshll.u32 %v1335, 16
  %v1677 = vrot.slane %v1675, 5
  %v1678 = vsel %vm1354, %v1673, %v1677
  %v1679 = vshrl.u32 %v1335, 16
  %v1681 = vrot.slane %v1679, 4
  %v1682 = vor.u32 %v1681, %v1677
  %v1683 = vrot.slane %v1682, 4
  %v1685 = vshll.u32 %v1336, 16
  %v1687 = vrot.slane %v1685, 5
  %v1688 = vsel %vm1354, %v1683, %v1687
  %v1689 = vshrl.u32 %v1336, 16
  %v1691 = vrot.slane %v1689, 4
  %v1692 = vor.u32 %v1691, %v1687
  %v1693 = vrot.slane %v1692, 4
  %v1695 = vshll.u32 %v1337, 16
  %v1697 = vrot.slane %v1695, 5
  %v1698 = vsel %vm1354, %v1693, %v1697
  %v1699 = vshrl.u32 %v1337, 16
  %v1701 = vrot.slane %v1699, 4
  %v1702 = vor.u32 %v1701, %v1697
  %v1703 = vrot.slane %v1702, 4
  %v1705 = vshll.u32 %v1338, 16
  %v1707 = vrot.slane %v1705, 5
  %v1708 = vsel %vm1354, %v1703, %v1707
  %v1709 = vshrl.u32 %v1338, 16
  %v1711 = vrot.slane %v1709, 4
  %v1712 = vor.u32 %v1711, %v1707
  %v1713 = vrot.slane %v1712, 4
  %v1715 = vshll.u32 %v1339, 16
  %v1717 = vrot.slane %v1715, 5
  %v1718 = vsel %vm1354, %v1713, %v1717
  %v1719 = vshrl.u32 %v1339, 16
  %v1721 = vrot.slane %v1719, 4
  %v1722 = vor.u32 %v1721, %v1717
  %v1723 = vrot.slane %v1722, 4
  %v1725 = vshll.u32 %v1340, 16
  %v1727 = vrot.slane %v1725, 5
  %v1728 = vsel %vm1354, %v1723, %v1727
  %v1729 = vshrl.u32 %v1340, 16
  %v1731 = vrot.slane %v1729, 4
  %v1732 = vor.u32 %v1731, %v1727
  %v1733 = vrot.slane %v1732, 4
  %v1735 = vshll.u32 %v1341, 16
  %v1737 = vrot.slane %v1735, 5
  %v1738 = vsel %vm1354, %v1733, %v1737
  %v1739 = vshrl.u32 %v1341, 16
  %v1741 = vrot.slane %v1739, 4
  %v1742 = vor.u32 %v1741, %v1737
  %v1743 = vrot.slane %v1742, 4
  %v1745 = vshll.u32 %v1342, 16
  %v1747 = vrot.slane %v1745, 5
  %v1748 = vsel %vm1354, %v1743, %v1747
  %v1749 = vshrl.u32 %v1342, 16
  %v1751 = vrot.slane %v1749, 4
  %v1752 = vor.u32 %v1751, %v1747
  %v1753 = vrot.slane %v1752, 4
  %v1755 = vshll.u32 %v1343, 16
  %v1757 = vrot.slane %v1755, 5
  %v1758 = vsel %vm1354, %v1753, %v1757
  %v1759 = vshrl.u32 %v1343, 16
  %v1761 = vrot.slane %v1759, 4
  %v1762 = vor.u32 %v1761, %v1757
  %v1763 = vrot.slane %v1762, 4
  %v1765 = vshll.u32 %v1344, 16
  %v1767 = vrot.slane %v1765, 5
  %v1768 = vsel %vm1354, %v1763, %v1767
  %v1769 = vshrl.u32 %v1344, 16
  %v1771 = vrot.slane %v1769, 4
  %v1772 = vor.u32 %v1771, %v1767
  %v1773 = vrot.slane %v1772, 4
  %v1775 = vshll.u32 %v1345, 16
  %v1777 = vrot.slane %v1775, 5
  %v1778 = vsel %vm1354, %v1773, %v1777
  %v1779 = vshrl.u32 %v1345, 16
  %v1781 = vrot.slane %v1779, 4
  %v1782 = vor.u32 %v1781, %v1777
  %v1783 = vrot.slane %v1782, 4
  %v1785 = vshll.u32 %v1346, 16
  %v1787 = vrot.slane %v1785, 5
  %v1788 = vsel %vm1354, %v1783, %v1787
  %v1789 = vshrl.u32 %v1346, 16
  %v1791 = vrot.slane %v1789, 4
  %v1792 = vor.u32 %v1791, %v1787
  %v1793 = vrot.slane %v1792, 4
  %v1795 = vshll.u32 %v1347, 16
  %v1797 = vrot.slane %v1795, 5
  %v1798 = vsel %vm1354, %v1793, %v1797
  %v1799 = vshrl.u32 %v1347, 16
  %v1801 = vrot.slane %v1799, 4
  %v1802 = vor.u32 %v1801, %v1797
  %v1803 = vrot.slane %v1802, 4
  %v1805 = vshll.u32 %v1348, 16
  %v1807 = vrot.slane %v1805, 5
  %v1808 = vsel %vm1354, %v1803, %v1807
  %v1809 = vshrl.u32 %v1348, 16
  %v1811 = vrot.slane %v1809, 4
  %v1812 = vor.u32 %v1811, %v1807
  %v1813 = vrot.slane %v1812, 4
  %v1815 = vshll.u32 %v1349, 16
  %v1817 = vrot.slane %v1815, 5
  %v1818 = vsel %vm1354, %v1813, %v1817
  %v1819 = vshrl.u32 %v1349, 16
  %v1821 = vrot.slane %v1819, 4
  %v1822 = vor.u32 %v1821, %v1817
  %v1823 = vrot.slane %v1822, 4
  %v1825 = vshll.u32 %v1350, 16
  %v1827 = vrot.slane %v1825, 5
  %v1828 = vsel %vm1354, %v1823, %v1827
  %v1829 = vshrl.u32 %v1350, 16
  %v1831 = vrot.slane %v1829, 4
  %v1832 = vor.u32 %v1831, %v1827
  %v1833 = vrot.slane %v1832, 4
  %v1835 = vshll.u32 %v1351, 16
  %v1837 = vrot.slane %v1835, 5
  %v1838 = vsel %vm1354, %v1833, %v1837
  %1887 = vst [vmem:[#allocation3 + $0x4] sm:$0xf] %v1368
  %1888 = vst [vmem:[#allocation3 + $0x28] sm:$0xf] %v1378
  %1889 = vst [vmem:[#allocation3 + $0x4c] sm:$0xf] %v1388
  %1890 = vst [vmem:[#allocation3 + $0x70] sm:$0xf] %v1398
  %1891 = vst [vmem:[#allocation3 + $0x94] sm:$0xf] %v1408
  %1892 = vst [vmem:[#allocation3 + $0xb8] sm:$0xf] %v1418
  %1893 = vst [vmem:[#allocation3 + $0xdc] sm:$0xf] %v1428
  %1894 = vst [vmem:[#allocation3 + $0x100] sm:$0xf] %v1438
  %1895 = vst [vmem:[#allocation3 + $0x124] sm:$0xf] %v1448
  %1896 = vst [vmem:[#allocation3 + $0x148] sm:$0xf] %v1458
  %1897 = vst [vmem:[#allocation3 + $0x16c] sm:$0xf] %v1468
  %1898 = vst [vmem:[#allocation3 + $0x190] sm:$0xf] %v1478
  %1899 = vst [vmem:[#allocation3 + $0x1b4] sm:$0xf] %v1488
  %1900 = vst [vmem:[#allocation3 + $0x1d8] sm:$0xf] %v1498
  %1901 = vst [vmem:[#allocation3 + $0x1fc] sm:$0xf] %v1508
  %1902 = vst [vmem:[#allocation3 + $0x220] sm:$0xf] %v1518
  %1903 = vst [vmem:[#allocation3 + $0x244] sm:$0xf] %v1528
  %1904 = vst [vmem:[#allocation3 + $0x268] sm:$0xf] %v1538
  %1905 = vst [vmem:[#allocation3 + $0x28c] sm:$0xf] %v1548
  %1906 = vst [vmem:[#allocation3 + $0x2b0] sm:$0xf] %v1558
  %1907 = vst [vmem:[#allocation3 + $0x2d4] sm:$0xf] %v1568
  %1908 = vst [vmem:[#allocation3 + $0x2f8] sm:$0xf] %v1578
  %1909 = vst [vmem:[#allocation3 + $0x31c] sm:$0xf] %v1588
  %1910 = vst [vmem:[#allocation3 + $0x340] sm:$0xf] %v1598
  %1911 = vst [vmem:[#allocation3 + $0x364] sm:$0xf] %v1608
  %1912 = vst [vmem:[#allocation3 + $0x388] sm:$0xf] %v1618
  %1913 = vst [vmem:[#allocation3 + $0x3ac] sm:$0xf] %v1628
  %1914 = vst [vmem:[#allocation3 + $0x3d0] sm:$0xf] %v1638
  %1915 = vst [vmem:[#allocation3 + $0x3f4] sm:$0xf] %v1648
  %1916 = vst [vmem:[#allocation3 + $0x418] sm:$0xf] %v1658
  %1917 = vst [vmem:[#allocation3 + $0x43c] sm:$0xf] %v1668
  %1918 = vst [vmem:[#allocation3 + $0x460] sm:$0xf] %v1678
  %1919 = vst [vmem:[#allocation3 + $0x484] sm:$0xf] %v1688
  %1920 = vst [vmem:[#allocation3 + $0x4a8] sm:$0xf] %v1698
  %1921 = vst [vmem:[#allocation3 + $0x4cc] sm:$0xf] %v1708
  %1922 = vst [vmem:[#allocation3 + $0x4f0] sm:$0xf] %v1718
  %1923 = vst [vmem:[#allocation3 + $0x514] sm:$0xf] %v1728
  %1924 = vst [vmem:[#allocation3 + $0x538] sm:$0xf] %v1738
  %1925 = vst [vmem:[#allocation3 + $0x55c] sm:$0xf] %v1748
  %1926 = vst [vmem:[#allocation3 + $0x580] sm:$0xf] %v1758
  %1927 = vst [vmem:[#allocation3 + $0x5a4] sm:$0xf] %v1768
  %1928 = vst [vmem:[#allocation3 + $0x5c8] sm:$0xf] %v1778
  %1929 = vst [vmem:[#allocation3 + $0x5ec] sm:$0xf] %v1788
  %1930 = vst [vmem:[#allocation3 + $0x610] sm:$0xf] %v1798
  %1931 = vst [vmem:[#allocation3 + $0x634] sm:$0xf] %v1808
  %1932 = vst [vmem:[#allocation3 + $0x658] sm:$0xf] %v1818
  %1933 = vst [vmem:[#allocation3 + $0x67c] sm:$0xf] %v1828
  %1934 = vst [vmem:[#allocation3 + $0x6a0] sm:$0xf] %v1838
  %v1935 = vld [vmem:[#allocation2] sm:$0xe]
  %v1936 = vld [vmem:[#allocation2 + $0x4] sm:$0xf]
  %v1937 = vld [vmem:[#allocation2 + $0x8] sm:$0xf]
  %v1938 = vld [vmem:[#allocation2 + $0xc] sm:$0xf]
  %v1939 = vld [vmem:[#allocation2 + $0x10] sm:$0xf]
  %v1940 = vld [vmem:[#allocation2 + $0x14] sm:$0xf]
  %v1941 = vld [vmem:[#allocation2 + $0x18] sm:$0xf]
  %v1942 = vld [vmem:[#allocation2 + $0x1c] sm:$0xf]
  %v1943 = vld [vmem:[#allocation2 + $0x20] sm:$0xf]
  %v1944 = vld [vmem:[#allocation2 + $0x24] sm:$0xf]
  %v1945 = vld [vmem:[#allocation2 + $0x28] sm:$0xf]
  %v1946 = vld [vmem:[#allocation2 + $0x2c] sm:$0xf]
  %v1947 = vld [vmem:[#allocation2 + $0x30] sm:$0xf]
  %v1948 = vld [vmem:[#allocation2 + $0x34] sm:$0xf]
  %v1949 = vld [vmem:[#allocation2 + $0x38] sm:$0xf]
  %v1950 = vld [vmem:[#allocation2 + $0x3c] sm:$0xf]
  %v1951 = vld [vmem:[#allocation2 + $0x40] sm:$0xf]
  %v1952 = vld [vmem:[#allocation2 + $0x44] sm:$0xf]
  %v1953 = vld [vmem:[#allocation2 + $0x48] sm:$0xf]
  %v1954 = vld [vmem:[#allocation2 + $0x4c] sm:$0xf]
  %v1955 = vld [vmem:[#allocation2 + $0x50] sm:$0xf]
  %v1956 = vld [vmem:[#allocation2 + $0x54] sm:$0xf]
  %v1957 = vld [vmem:[#allocation2 + $0x58] sm:$0xf]
  %v1958 = vld [vmem:[#allocation2 + $0x5c] sm:$0xf]
  %v1959 = vld [vmem:[#allocation2 + $0x60] sm:$0xf]
  %v1960 = vld [vmem:[#allocation2 + $0x64] sm:$0xf]
  %v1961 = vld [vmem:[#allocation2 + $0x68] sm:$0xf]
  %v1962 = vld [vmem:[#allocation2 + $0x6c] sm:$0xf]
  %v1963 = vld [vmem:[#allocation2 + $0x70] sm:$0xf]
  %v1964 = vld [vmem:[#allocation2 + $0x74] sm:$0xf]
  %v1965 = vld [vmem:[#allocation2 + $0x78] sm:$0xf]
  %v1966 = vld [vmem:[#allocation2 + $0x7c] sm:$0xf]
  %v1967 = vld [vmem:[#allocation2 + $0x80] sm:$0xf]
  %v1968 = vld [vmem:[#allocation2 + $0x84] sm:$0xf]
  %v1969 = vld [vmem:[#allocation2 + $0x88] sm:$0xf]
  %v1970 = vld [vmem:[#allocation2 + $0x8c] sm:$0xf]
  %v1971 = vld [vmem:[#allocation2 + $0x90] sm:$0xf]
  %v1972 = vld [vmem:[#allocation2 + $0x94] sm:$0xf]
  %v1973 = vld [vmem:[#allocation2 + $0x98] sm:$0xf]
  %v1974 = vld [vmem:[#allocation2 + $0x9c] sm:$0xf]
  %v1975 = vld [vmem:[#allocation2 + $0xa0] sm:$0xf]
  %v1976 = vld [vmem:[#allocation2 + $0xa4] sm:$0xf]
  %v1977 = vld [vmem:[#allocation2 + $0xa8] sm:$0xf]
  %v1978 = vld [vmem:[#allocation2 + $0xac] sm:$0xf]
  %v1979 = vld [vmem:[#allocation2 + $0xb0] sm:$0xf]
  %v1980 = vld [vmem:[#allocation2 + $0xb4] sm:$0xf]
  %v1981 = vld [vmem:[#allocation2 + $0xb8] sm:$0xf]
  %v1982 = vld [vmem:[#allocation2 + $0xbc] sm:$0xf]
  %v1983 = vld [vmem:[#allocation2 + $0xc0] sm:$0x1]
  %vm2033 = vcmask 1042432
  %vm2034 = vcmask 1046532
  %vm2035 = vmor %vm2033, %vm2034
  %v2036 = vrot.slane %v1935, 5
  %v2037 = vrot.slane %v2036, 4
  %v2038 = vrot.slane %v1936, 5
  %v2039 = vsel %vm2035, %v2037, %v2038
  %v2040 = vrot.slane %v2038, 4
  %v2041 = vrot.slane %v1937, 5
  %v2042 = vsel %vm2035, %v2040, %v2041
  %v2043 = vrot.slane %v2041, 4
  %v2044 = vrot.slane %v1938, 5
  %v2045 = vsel %vm2035, %v2043, %v2044
  %v2046 = vrot.slane %v2044, 4
  %v2047 = vrot.slane %v1939, 5
  %v2048 = vsel %vm2035, %v2046, %v2047
  %v2049 = vrot.slane %v2047, 4
  %v2050 = vrot.slane %v1940, 5
  %v2051 = vsel %vm2035, %v2049, %v2050
  %v2052 = vrot.slane %v2050, 4
  %v2053 = vrot.slane %v1941, 5
  %v2054 = vsel %vm2035, %v2052, %v2053
  %v2055 = vrot.slane %v2053, 4
  %v2056 = vrot.slane %v1942, 5
  %v2057 = vsel %vm2035, %v2055, %v2056
  %v2058 = vrot.slane %v2056, 4
  %v2059 = vrot.slane %v1943, 5
  %v2060 = vsel %vm2035, %v2058, %v2059
  %v2061 = vrot.slane %v2059, 4
  %v2062 = vrot.slane %v1944, 5
  %v2063 = vsel %vm2035, %v2061, %v2062
  %v2064 = vrot.slane %v2062, 4
  %v2065 = vrot.slane %v1945, 5
  %v2066 = vsel %vm2035, %v2064, %v2065
  %v2067 = vrot.slane %v2065, 4
  %v2068 = vrot.slane %v1946, 5
  %v2069 = vsel %vm2035, %v2067, %v2068
  %v2070 = vrot.slane %v2068, 4
  %v2071 = vrot.slane %v1947, 5
  %v2072 = vsel %vm2035, %v2070, %v2071
  %v2073 = vrot.slane %v2071, 4
  %v2074 = vrot.slane %v1948, 5
  %v2075 = vsel %vm2035, %v2073, %v2074
  %v2076 = vrot.slane %v2074, 4
  %v2077 = vrot.slane %v1949, 5
  %v2078 = vsel %vm2035, %v2076, %v2077
  %v2079 = vrot.slane %v2077, 4
  %v2080 = vrot.slane %v1950, 5
  %v2081 = vsel %vm2035, %v2079, %v2080
  %v2082 = vrot.slane %v2080, 4
  %v2083 = vrot.slane %v1951, 5
  %v2084 = vsel %vm2035, %v2082, %v2083
  %v2085 = vrot.slane %v2083, 4
  %v2086 = vrot.slane %v1952, 5
  %v2087 = vsel %vm2035, %v2085, %v2086
  %v2088 = vrot.slane %v2086, 4
  %v2089 = vrot.slane %v1953, 5
  %v2090 = vsel %vm2035, %v2088, %v2089
  %v2091 = vrot.slane %v2089, 4
  %v2092 = vrot.slane %v1954, 5
  %v2093 = vsel %vm2035, %v2091, %v2092
  %v2094 = vrot.slane %v2092, 4
  %v2095 = vrot.slane %v1955, 5
  %v2096 = vsel %vm2035, %v2094, %v2095
  %v2097 = vrot.slane %v2095, 4
  %v2098 = vrot.slane %v1956, 5
  %v2099 = vsel %vm2035, %v2097, %v2098
  %v2100 = vrot.slane %v2098, 4
  %v2101 = vrot.slane %v1957, 5
  %v2102 = vsel %vm2035, %v2100, %v2101
  %v2103 = vrot.slane %v2101, 4
  %v2104 = vrot.slane %v1958, 5
  %v2105 = vsel %vm2035, %v2103, %v2104
  %v2106 = vrot.slane %v2104, 4
  %v2107 = vrot.slane %v1959, 5
  %v2108 = vsel %vm2035, %v2106, %v2107
  %v2109 = vrot.slane %v2107, 4
  %v2110 = vrot.slane %v1960, 5
  %v2111 = vsel %vm2035, %v2109, %v2110
  %v2112 = vrot.slane %v2110, 4
  %v2113 = vrot.slane %v1961, 5
  %v2114 = vsel %vm2035, %v2112, %v2113
  %v2115 = vrot.slane %v2113, 4
  %v2116 = vrot.slane %v1962, 5
  %v2117 = vsel %vm2035, %v2115, %v2116
  %v2118 = vrot.slane %v2116, 4
  %v2119 = vrot.slane %v1963, 5
  %v2120 = vsel %vm2035, %v2118, %v2119
  %v2121 = vrot.slane %v2119, 4
  %v2122 = vrot.slane %v1964, 5
  %v2123 = vsel %vm2035, %v2121, %v2122
  %v2124 = vrot.slane %v2122, 4
  %v2125 = vrot.slane %v1965, 5
  %v2126 = vsel %vm2035, %v2124, %v2125
  %v2127 = vrot.slane %v2125, 4
  %v2128 = vrot.slane %v1966, 5
  %v2129 = vsel %vm2035, %v2127, %v2128
  %v2130 = vrot.slane %v2128, 4
  %v2131 = vrot.slane %v1967, 5
  %v2132 = vsel %vm2035, %v2130, %v2131
  %v2133 = vrot.slane %v2131, 4
  %v2134 = vrot.slane %v1968, 5
  %v2135 = vsel %vm2035, %v2133, %v2134
  %v2136 = vrot.slane %v2134, 4
  %v2137 = vrot.slane %v1969, 5
  %v2138 = vsel %vm2035, %v2136, %v2137
  %v2139 = vrot.slane %v2137, 4
  %v2140 = vrot.slane %v1970, 5
  %v2141 = vsel %vm2035, %v2139, %v2140
  %v2142 = vrot.slane %v2140, 4
  %v2143 = vrot.slane %v1971, 5
  %v2144 = vsel %vm2035, %v2142, %v2143
  %v2145 = vrot.slane %v2143, 4
  %v2146 = vrot.slane %v1972, 5
  %v2147 = vsel %vm2035, %v2145, %v2146
  %v2148 = vrot.slane %v2146, 4
  %v2149 = vrot.slane %v1973, 5
  %v2150 = vsel %vm2035, %v2148, %v2149
  %v2151 = vrot.slane %v2149, 4
  %v2152 = vrot.slane %v1974, 5
  %v2153 = vsel %vm2035, %v2151, %v2152
  %v2154 = vrot.slane %v2152, 4
  %v2155 = vrot.slane %v1975, 5
  %v2156 = vsel %vm2035, %v2154, %v2155
  %v2157 = vrot.slane %v2155, 4
  %v2158 = vrot.slane %v1976, 5
  %v2159 = vsel %vm2035, %v2157, %v2158
  %v2160 = vrot.slane %v2158, 4
  %v2161 = vrot.slane %v1977, 5
  %v2162 = vsel %vm2035, %v2160, %v2161
  %v2163 = vrot.slane %v2161, 4
  %v2164 = vrot.slane %v1978, 5
  %v2165 = vsel %vm2035, %v2163, %v2164
  %v2166 = vrot.slane %v2164, 4
  %v2167 = vrot.slane %v1979, 5
  %v2168 = vsel %vm2035, %v2166, %v2167
  %v2169 = vrot.slane %v2167, 4
  %v2170 = vrot.slane %v1980, 5
  %v2171 = vsel %vm2035, %v2169, %v2170
  %v2172 = vrot.slane %v2170, 4
  %v2173 = vrot.slane %v1981, 5
  %v2174 = vsel %vm2035, %v2172, %v2173
  %v2175 = vrot.slane %v2173, 4
  %v2176 = vrot.slane %v1982, 5
  %v2177 = vsel %vm2035, %v2175, %v2176
  %v2178 = vrot.slane %v2176, 4
  %v2179 = vrot.slane %v1983, 5
  %v2180 = vsel %vm2035, %v2178, %v2179
  %2229 = vst [vmem:[#allocation3 + $0x8] sm:$0xf] %v2039
  %2230 = vst [vmem:[#allocation3 + $0x2c] sm:$0xf] %v2042
  %2231 = vst [vmem:[#allocation3 + $0x50] sm:$0xf] %v2045
  %2232 = vst [vmem:[#allocation3 + $0x74] sm:$0xf] %v2048
  %2233 = vst [vmem:[#allocation3 + $0x98] sm:$0xf] %v2051
  %2234 = vst [vmem:[#allocation3 + $0xbc] sm:$0xf] %v2054
  %2235 = vst [vmem:[#allocation3 + $0xe0] sm:$0xf] %v2057
  %2236 = vst [vmem:[#allocation3 + $0x104] sm:$0xf] %v2060
  %2237 = vst [vmem:[#allocation3 + $0x128] sm:$0xf] %v2063
  %2238 = vst [vmem:[#allocation3 + $0x14c] sm:$0xf] %v2066
  %2239 = vst [vmem:[#allocation3 + $0x170] sm:$0xf] %v2069
  %2240 = vst [vmem:[#allocation3 + $0x194] sm:$0xf] %v2072
  %2241 = vst [vmem:[#allocation3 + $0x1b8] sm:$0xf] %v2075
  %2242 = vst [vmem:[#allocation3 + $0x1dc] sm:$0xf] %v2078
  %2243 = vst [vmem:[#allocation3 + $0x200] sm:$0xf] %v2081
  %2244 = vst [vmem:[#allocation3 + $0x224] sm:$0xf] %v2084
  %2245 = vst [vmem:[#allocation3 + $0x248] sm:$0xf] %v2087
  %2246 = vst [vmem:[#allocation3 + $0x26c] sm:$0xf] %v2090
  %2247 = vst [vmem:[#allocation3 + $0x290] sm:$0xf] %v2093
  %2248 = vst [vmem:[#allocation3 + $0x2b4] sm:$0xf] %v2096
  %2249 = vst [vmem:[#allocation3 + $0x2d8] sm:$0xf] %v2099
  %2250 = vst [vmem:[#allocation3 + $0x2fc] sm:$0xf] %v2102
  %2251 = vst [vmem:[#allocation3 + $0x320] sm:$0xf] %v2105
  %2252 = vst [vmem:[#allocation3 + $0x344] sm:$0xf] %v2108
  %2253 = vst [vmem:[#allocation3 + $0x368] sm:$0xf] %v2111
  %2254 = vst [vmem:[#allocation3 + $0x38c] sm:$0xf] %v2114
  %2255 = vst [vmem:[#allocation3 + $0x3b0] sm:$0xf] %v2117
  %2256 = vst [vmem:[#allocation3 + $0x3d4] sm:$0xf] %v2120
  %2257 = vst [vmem:[#allocation3 + $0x3f8] sm:$0xf] %v2123
  %2258 = vst [vmem:[#allocation3 + $0x41c] sm:$0xf] %v2126
  %2259 = vst [vmem:[#allocation3 + $0x440] sm:$0xf] %v2129
  %2260 = vst [vmem:[#allocation3 + $0x464] sm:$0xf] %v2132
  %2261 = vst [vmem:[#allocation3 + $0x488] sm:$0xf] %v2135
  %2262 = vst [vmem:[#allocation3 + $0x4ac] sm:$0xf] %v2138
  %2263 = vst [vmem:[#allocation3 + $0x4d0] sm:$0xf] %v2141
  %2264 = vst [vmem:[#allocation3 + $0x4f4] sm:$0xf] %v2144
  %2265 = vst [vmem:[#allocation3 + $0x518] sm:$0xf] %v2147
  %2266 = vst [vmem:[#allocation3 + $0x53c] sm:$0xf] %v2150
  %2267 = vst [vmem:[#allocation3 + $0x560] sm:$0xf] %v2153
  %2268 = vst [vmem:[#allocation3 + $0x584] sm:$0xf] %v2156
  %2269 = vst [vmem:[#allocation3 + $0x5a8] sm:$0xf] %v2159
  %2270 = vst [vmem:[#allocation3 + $0x5cc] sm:$0xf] %v2162
  %2271 = vst [vmem:[#allocation3 + $0x5f0] sm:$0xf] %v2165
  %2272 = vst [vmem:[#allocation3 + $0x614] sm:$0xf] %v2168
  %2273 = vst [vmem:[#allocation3 + $0x638] sm:$0xf] %v2171
  %2274 = vst [vmem:[#allocation3 + $0x65c] sm:$0xf] %v2174
  %2275 = vst [vmem:[#allocation3 + $0x680] sm:$0xf] %v2177
  %2276 = vst [vmem:[#allocation3 + $0x6a4] sm:$0xf] %v2180
  %v2277 = vld [vmem:[#allocation2 + $0xc] sm:$0xf]
  %v2278 = vld [vmem:[#allocation2 + $0x10] sm:$0xf]
  %v2279 = vld [vmem:[#allocation2 + $0x14] sm:$0xf]
  %v2280 = vld [vmem:[#allocation2 + $0x18] sm:$0xf]
  %v2281 = vld [vmem:[#allocation2 + $0x1c] sm:$0xf]
  %v2282 = vld [vmem:[#allocation2 + $0x20] sm:$0xf]
  %v2283 = vld [vmem:[#allocation2 + $0x24] sm:$0xf]
  %v2284 = vld [vmem:[#allocation2 + $0x28] sm:$0xf]
  %v2285 = vld [vmem:[#allocation2 + $0x2c] sm:$0xf]
  %v2286 = vld [vmem:[#allocation2 + $0x30] sm:$0xf]
  %v2287 = vld [vmem:[#allocation2 + $0x34] sm:$0xf]
  %v2288 = vld [vmem:[#allocation2 + $0x38] sm:$0xf]
  %v2289 = vld [vmem:[#allocation2 + $0x3c] sm:$0xf]
  %v2290 = vld [vmem:[#allocation2 + $0x40] sm:$0xf]
  %v2291 = vld [vmem:[#allocation2 + $0x44] sm:$0xf]
  %v2292 = vld [vmem:[#allocation2 + $0x48] sm:$0xf]
  %v2293 = vld [vmem:[#allocation2 + $0x4c] sm:$0xf]
  %v2294 = vld [vmem:[#allocation2 + $0x50] sm:$0xf]
  %v2295 = vld [vmem:[#allocation2 + $0x54] sm:$0xf]
  %v2296 = vld [vmem:[#allocation2 + $0x58] sm:$0xf]
  %v2297 = vld [vmem:[#allocation2 + $0x5c] sm:$0xf]
  %v2298 = vld [vmem:[#allocation2 + $0x60] sm:$0xf]
  %v2299 = vld [vmem:[#allocation2 + $0x64] sm:$0xf]
  %v2300 = vld [vmem:[#allocation2 + $0x68] sm:$0xf]
  %v2301 = vld [vmem:[#allocation2 + $0x6c] sm:$0xf]
  %v2302 = vld [vmem:[#allocation2 + $0x70] sm:$0xf]
  %v2303 = vld [vmem:[#allocation2 + $0x74] sm:$0xf]
  %v2304 = vld [vmem:[#allocation2 + $0x78] sm:$0xf]
  %v2305 = vld [vmem:[#allocation2 + $0x7c] sm:$0xf]
  %v2306 = vld [vmem:[#allocation2 + $0x80] sm:$0xf]
  %v2307 = vld [vmem:[#allocation2 + $0x84] sm:$0xf]
  %v2308 = vld [vmem:[#allocation2 + $0x88] sm:$0xf]
  %v2309 = vld [vmem:[#allocation2 + $0x8c] sm:$0xf]
  %v2310 = vld [vmem:[#allocation2 + $0x90] sm:$0xf]
  %v2311 = vld [vmem:[#allocation2 + $0x94] sm:$0xf]
  %v2312 = vld [vmem:[#allocation2 + $0x98] sm:$0xf]
  %v2313 = vld [vmem:[#allocation2 + $0x9c] sm:$0xf]
  %v2314 = vld [vmem:[#allocation2 + $0xa0] sm:$0xf]
  %v2315 = vld [vmem:[#allocation2 + $0xa4] sm:$0xf]
  %v2316 = vld [vmem:[#allocation2 + $0xa8] sm:$0xf]
  %v2317 = vld [vmem:[#allocation2 + $0xac] sm:$0xf]
  %v2318 = vld [vmem:[#allocation2 + $0xb0] sm:$0xf]
  %v2319 = vld [vmem:[#allocation2 + $0xb4] sm:$0xf]
  %v2320 = vld [vmem:[#allocation2 + $0xb8] sm:$0xf]
  %v2321 = vld [vmem:[#allocation2 + $0xbc] sm:$0xf]
  %v2322 = vld [vmem:[#allocation2 + $0xc0] sm:$0xf]
  %v2323 = vld [vmem:[#allocation2 + $0xc4] sm:$0xf]
  %v2324 = vld [vmem:[#allocation2 + $0xc8] sm:$0xf]
  %2325 = vst [vmem:[#allocation3 + $0xc] sm:$0xf] %v2277
  %2326 = vst [vmem:[#allocation3 + $0x30] sm:$0xf] %v2278
  %2327 = vst [vmem:[#allocation3 + $0x54] sm:$0xf] %v2279
  %2328 = vst [vmem:[#allocation3 + $0x78] sm:$0xf] %v2280
  %2329 = vst [vmem:[#allocation3 + $0x9c] sm:$0xf] %v2281
  %2330 = vst [vmem:[#allocation3 + $0xc0] sm:$0xf] %v2282
  %2331 = vst [vmem:[#allocation3 + $0xe4] sm:$0xf] %v2283
  %2332 = vst [vmem:[#allocation3 + $0x108] sm:$0xf] %v2284
  %2333 = vst [vmem:[#allocation3 + $0x12c] sm:$0xf] %v2285
  %2334 = vst [vmem:[#allocation3 + $0x150] sm:$0xf] %v2286
  %2335 = vst [vmem:[#allocation3 + $0x174] sm:$0xf] %v2287
  %2336 = vst [vmem:[#allocation3 + $0x198] sm:$0xf] %v2288
  %2337 = vst [vmem:[#allocation3 + $0x1bc] sm:$0xf] %v2289
  %2338 = vst [vmem:[#allocation3 + $0x1e0] sm:$0xf] %v2290
  %2339 = vst [vmem:[#allocation3 + $0x204] sm:$0xf] %v2291
  %2340 = vst [vmem:[#allocation3 + $0x228] sm:$0xf] %v2292
  %2341 = vst [vmem:[#allocation3 + $0x24c] sm:$0xf] %v2293
  %2342 = vst [vmem:[#allocation3 + $0x270] sm:$0xf] %v2294
  %2343 = vst [vmem:[#allocation3 + $0x294] sm:$0xf] %v2295
  %2344 = vst [vmem:[#allocation3 + $0x2b8] sm:$0xf] %v2296
  %2345 = vst [vmem:[#allocation3 + $0x2dc] sm:$0xf] %v2297
  %2346 = vst [vmem:[#allocation3 + $0x300] sm:$0xf] %v2298
  %2347 = vst [vmem:[#allocation3 + $0x324] sm:$0xf] %v2299
  %2348 = vst [vmem:[#allocation3 + $0x348] sm:$0xf] %v2300
  %2349 = vst [vmem:[#allocation3 + $0x36c] sm:$0xf] %v2301
  %2350 = vst [vmem:[#allocation3 + $0x390] sm:$0xf] %v2302
  %2351 = vst [vmem:[#allocation3 + $0x3b4] sm:$0xf] %v2303
  %2352 = vst [vmem:[#allocation3 + $0x3d8] sm:$0xf] %v2304
  %2353 = vst [vmem:[#allocation3 + $0x3fc] sm:$0xf] %v2305
  %2354 = vst [vmem:[#allocation3 + $0x420] sm:$0xf] %v2306
  %2355 = vst [vmem:[#allocation3 + $0x444] sm:$0xf] %v2307
  %2356 = vst [vmem:[#allocation3 + $0x468] sm:$0xf] %v2308
  %2357 = vst [vmem:[#allocation3 + $0x48c] sm:$0xf] %v2309
  %2358 = vst [vmem:[#allocation3 + $0x4b0] sm:$0xf] %v2310
  %2359 = vst [vmem:[#allocation3 + $0x4d4] sm:$0xf] %v2311
  %2360 = vst [vmem:[#allocation3 + $0x4f8] sm:$0xf] %v2312
  %2361 = vst [vmem:[#allocation3 + $0x51c] sm:$0xf] %v2313
  %2362 = vst [vmem:[#allocation3 + $0x540] sm:$0xf] %v2314
  %2363 = vst [vmem:[#allocation3 + $0x564] sm:$0xf] %v2315
  %2364 = vst [vmem:[#allocation3 + $0x588] sm:$0xf] %v2316
  %2365 = vst [vmem:[#allocation3 + $0x5ac] sm:$0xf] %v2317
  %2366 = vst [vmem:[#allocation3 + $0x5d0] sm:$0xf] %v2318
  %2367 = vst [vmem:[#allocation3 + $0x5f4] sm:$0xf] %v2319
  %2368 = vst [vmem:[#allocation3 + $0x618] sm:$0xf] %v2320
  %2369 = vst [vmem:[#allocation3 + $0x63c] sm:$0xf] %v2321
  %2370 = vst [vmem:[#allocation3 + $0x660] sm:$0xf] %v2322
  %2371 = vst [vmem:[#allocation3 + $0x684] sm:$0xf] %v2323
  %2372 = vst [vmem:[#allocation3 + $0x6a8] sm:$0xf] %v2324
  %v2373 = vld [vmem:[#allocation2 + $0xc] sm:$0xf]
  %v2374 = vld [vmem:[#allocation2 + $0x10] sm:$0xf]
  %v2375 = vld [vmem:[#allocation2 + $0x14] sm:$0xf]
  %v2376 = vld [vmem:[#allocation2 + $0x18] sm:$0xf]
  %v2377 = vld [vmem:[#allocation2 + $0x1c] sm:$0xf]
  %v2378 = vld [vmem:[#allocation2 + $0x20] sm:$0xf]
  %v2379 = vld [vmem:[#allocation2 + $0x24] sm:$0xf]
  %v2380 = vld [vmem:[#allocation2 + $0x28] sm:$0xf]
  %v2381 = vld [vmem:[#allocation2 + $0x2c] sm:$0xf]
  %v2382 = vld [vmem:[#allocation2 + $0x30] sm:$0xf]
  %v2383 = vld [vmem:[#allocation2 + $0x34] sm:$0xf]
  %v2384 = vld [vmem:[#allocation2 + $0x38] sm:$0xf]
  %v2385 = vld [vmem:[#allocation2 + $0x3c] sm:$0xf]
  %v2386 = vld [vmem:[#allocation2 + $0x40] sm:$0xf]
  %v2387 = vld [vmem:[#allocation2 + $0x44] sm:$0xf]
  %v2388 = vld [vmem:[#allocation2 + $0x48] sm:$0xf]
  %v2389 = vld [vmem:[#allocation2 + $0x4c] sm:$0xf]
  %v2390 = vld [vmem:[#allocation2 + $0x50] sm:$0xf]
  %v2391 = vld [vmem:[#allocation2 + $0x54] sm:$0xf]
  %v2392 = vld [vmem:[#allocation2 + $0x58] sm:$0xf]
  %v2393 = vld [vmem:[#allocation2 + $0x5c] sm:$0xf]
  %v2394 = vld [vmem:[#allocation2 + $0x60] sm:$0xf]
  %v2395 = vld [vmem:[#allocation2 + $0x64] sm:$0xf]
  %v2396 = vld [vmem:[#allocation2 + $0x68] sm:$0xf]
  %v2397 = vld [vmem:[#allocation2 + $0x6c] sm:$0xf]
  %v2398 = vld [vmem:[#allocation2 + $0x70] sm:$0xf]
  %v2399 = vld [vmem:[#allocation2 + $0x74] sm:$0xf]
  %v2400 = vld [vmem:[#allocation2 + $0x78] sm:$0xf]
  %v2401 = vld [vmem:[#allocation2 + $0x7c] sm:$0xf]
  %v2402 = vld [vmem:[#allocation2 + $0x80] sm:$0xf]
  %v2403 = vld [vmem:[#allocation2 + $0x84] sm:$0xf]
  %v2404 = vld [vmem:[#allocation2 + $0x88] sm:$0xf]
  %v2405 = vld [vmem:[#allocation2 + $0x8c] sm:$0xf]
  %v2406 = vld [vmem:[#allocation2 + $0x90] sm:$0xf]
  %v2407 = vld [vmem:[#allocation2 + $0x94] sm:$0xf]
  %v2408 = vld [vmem:[#allocation2 + $0x98] sm:$0xf]
  %v2409 = vld [vmem:[#allocation2 + $0x9c] sm:$0xf]
  %v2410 = vld [vmem:[#allocation2 + $0xa0] sm:$0xf]
  %v2411 = vld [vmem:[#allocation2 + $0xa4] sm:$0xf]
  %v2412 = vld [vmem:[#allocation2 + $0xa8] sm:$0xf]
  %v2413 = vld [vmem:[#allocation2 + $0xac] sm:$0xf]
  %v2414 = vld [vmem:[#allocation2 + $0xb0] sm:$0xf]
  %v2415 = vld [vmem:[#allocation2 + $0xb4] sm:$0xf]
  %v2416 = vld [vmem:[#allocation2 + $0xb8] sm:$0xf]
  %v2417 = vld [vmem:[#allocation2 + $0xbc] sm:$0xf]
  %v2418 = vld [vmem:[#allocation2 + $0xc0] sm:$0xf]
  %v2419 = vld [vmem:[#allocation2 + $0xc4] sm:$0xf]
  %v2420 = vld [vmem:[#allocation2 + $0xc8] sm:$0xf]
  %v2421 = vld [vmem:[#allocation2 + $0xcc] sm:$0x1]
  %v2423 = vshrl.u32 %v2373, 16
  %v2425 = vrot.slane %v2423, 4
  %v2426 = vshll.u32 %v2373, 16
  %v2428 = vrot.slane %v2426, 5
  %v2429 = vor.u32 %v2425, %v2428
  %v2430 = vrot.slane %v2429, 4
  %v2432 = vshll.u32 %v2374, 16
  %v2434 = vrot.slane %v2432, 5
  %v2435 = vsel %vm1354, %v2430, %v2434
  %v2436 = vshrl.u32 %v2374, 16
  %v2438 = vrot.slane %v2436, 4
  %v2439 = vor.u32 %v2438, %v2434
  %v2440 = vrot.slane %v2439, 4
  %v2442 = vshll.u32 %v2375, 16
  %v2444 = vrot.slane %v2442, 5
  %v2445 = vsel %vm1354, %v2440, %v2444
  %v2446 = vshrl.u32 %v2375, 16
  %v2448 = vrot.slane %v2446, 4
  %v2449 = vor.u32 %v2448, %v2444
  %v2450 = vrot.slane %v2449, 4
  %v2452 = vshll.u32 %v2376, 16
  %v2454 = vrot.slane %v2452, 5
  %v2455 = vsel %vm1354, %v2450, %v2454
  %v2456 = vshrl.u32 %v2376, 16
  %v2458 = vrot.slane %v2456, 4
  %v2459 = vor.u32 %v2458, %v2454
  %v2460 = vrot.slane %v2459, 4
  %v2462 = vshll.u32 %v2377, 16
  %v2464 = vrot.slane %v2462, 5
  %v2465 = vsel %vm1354, %v2460, %v2464
  %v2466 = vshrl.u32 %v2377, 16
  %v2468 = vrot.slane %v2466, 4
  %v2469 = vor.u32 %v2468, %v2464
  %v2470 = vrot.slane %v2469, 4
  %v2472 = vshll.u32 %v2378, 16
  %v2474 = vrot.slane %v2472, 5
  %v2475 = vsel %vm1354, %v2470, %v2474
  %v2476 = vshrl.u32 %v2378, 16
  %v2478 = vrot.slane %v2476, 4
  %v2479 = vor.u32 %v2478, %v2474
  %v2480 = vrot.slane %v2479, 4
  %v2482 = vshll.u32 %v2379, 16
  %v2484 = vrot.slane %v2482, 5
  %v2485 = vsel %vm1354, %v2480, %v2484
  %v2486 = vshrl.u32 %v2379, 16
  %v2488 = vrot.slane %v2486, 4
  %v2489 = vor.u32 %v2488, %v2484
  %v2490 = vrot.slane %v2489, 4
  %v2492 = vshll.u32 %v2380, 16
  %v2494 = vrot.slane %v2492, 5
  %v2495 = vsel %vm1354, %v2490, %v2494
  %v2496 = vshrl.u32 %v2380, 16
  %v2498 = vrot.slane %v2496, 4
  %v2499 = vor.u32 %v2498, %v2494
  %v2500 = vrot.slane %v2499, 4
  %v2502 = vshll.u32 %v2381, 16
  %v2504 = vrot.slane %v2502, 5
  %v2505 = vsel %vm1354, %v2500, %v2504
  %v2506 = vshrl.u32 %v2381, 16
  %v2508 = vrot.slane %v2506, 4
  %v2509 = vor.u32 %v2508, %v2504
  %v2510 = vrot.slane %v2509, 4
  %v2512 = vshll.u32 %v2382, 16
  %v2514 = vrot.slane %v2512, 5
  %v2515 = vsel %vm1354, %v2510, %v2514
  %v2516 = vshrl.u32 %v2382, 16
  %v2518 = vrot.slane %v2516, 4
  %v2519 = vor.u32 %v2518, %v2514
  %v2520 = vrot.slane %v2519, 4
  %v2522 = vshll.u32 %v2383, 16
  %v2524 = vrot.slane %v2522, 5
  %v2525 = vsel %vm1354, %v2520, %v2524
  %v2526 = vshrl.u32 %v2383, 16
  %v2528 = vrot.slane %v2526, 4
  %v2529 = vor.u32 %v2528, %v2524
  %v2530 = vrot.slane %v2529, 4
  %v2532 = vshll.u32 %v2384, 16
  %v2534 = vrot.slane %v2532, 5
  %v2535 = vsel %vm1354, %v2530, %v2534
  %v2536 = vshrl.u32 %v2384, 16
  %v2538 = vrot.slane %v2536, 4
  %v2539 = vor.u32 %v2538, %v2534
  %v2540 = vrot.slane %v2539, 4
  %v2542 = vshll.u32 %v2385, 16
  %v2544 = vrot.slane %v2542, 5
  %v2545 = vsel %vm1354, %v2540, %v2544
  %v2546 = vshrl.u32 %v2385, 16
  %v2548 = vrot.slane %v2546, 4
  %v2549 = vor.u32 %v2548, %v2544
  %v2550 = vrot.slane %v2549, 4
  %v2552 = vshll.u32 %v2386, 16
  %v2554 = vrot.slane %v2552, 5
  %v2555 = vsel %vm1354, %v2550, %v2554
  %v2556 = vshrl.u32 %v2386, 16
  %v2558 = vrot.slane %v2556, 4
  %v2559 = vor.u32 %v2558, %v2554
  %v2560 = vrot.slane %v2559, 4
  %v2562 = vshll.u32 %v2387, 16
  %v2564 = vrot.slane %v2562, 5
  %v2565 = vsel %vm1354, %v2560, %v2564
  %v2566 = vshrl.u32 %v2387, 16
  %v2568 = vrot.slane %v2566, 4
  %v2569 = vor.u32 %v2568, %v2564
  %v2570 = vrot.slane %v2569, 4
  %v2572 = vshll.u32 %v2388, 16
  %v2574 = vrot.slane %v2572, 5
  %v2575 = vsel %vm1354, %v2570, %v2574
  %v2576 = vshrl.u32 %v2388, 16
  %v2578 = vrot.slane %v2576, 4
  %v2579 = vor.u32 %v2578, %v2574
  %v2580 = vrot.slane %v2579, 4
  %v2582 = vshll.u32 %v2389, 16
  %v2584 = vrot.slane %v2582, 5
  %v2585 = vsel %vm1354, %v2580, %v2584
  %v2586 = vshrl.u32 %v2389, 16
  %v2588 = vrot.slane %v2586, 4
  %v2589 = vor.u32 %v2588, %v2584
  %v2590 = vrot.slane %v2589, 4
  %v2592 = vshll.u32 %v2390, 16
  %v2594 = vrot.slane %v2592, 5
  %v2595 = vsel %vm1354, %v2590, %v2594
  %v2596 = vshrl.u32 %v2390, 16
  %v2598 = vrot.slane %v2596, 4
  %v2599 = vor.u32 %v2598, %v2594
  %v2600 = vrot.slane %v2599, 4
  %v2602 = vshll.u32 %v2391, 16
  %v2604 = vrot.slane %v2602, 5
  %v2605 = vsel %vm1354, %v2600, %v2604
  %v2606 = vshrl.u32 %v2391, 16
  %v2608 = vrot.slane %v2606, 4
  %v2609 = vor.u32 %v2608, %v2604
  %v2610 = vrot.slane %v2609, 4
  %v2612 = vshll.u32 %v2392, 16
  %v2614 = vrot.slane %v2612, 5
  %v2615 = vsel %vm1354, %v2610, %v2614
  %v2616 = vshrl.u32 %v2392, 16
  %v2618 = vrot.slane %v2616, 4
  %v2619 = vor.u32 %v2618, %v2614
  %v2620 = vrot.slane %v2619, 4
  %v2622 = vshll.u32 %v2393, 16
  %v2624 = vrot.slane %v2622, 5
  %v2625 = vsel %vm1354, %v2620, %v2624
  %v2626 = vshrl.u32 %v2393, 16
  %v2628 = vrot.slane %v2626, 4
  %v2629 = vor.u32 %v2628, %v2624
  %v2630 = vrot.slane %v2629, 4
  %v2632 = vshll.u32 %v2394, 16
  %v2634 = vrot.slane %v2632, 5
  %v2635 = vsel %vm1354, %v2630, %v2634
  %v2636 = vshrl.u32 %v2394, 16
  %v2638 = vrot.slane %v2636, 4
  %v2639 = vor.u32 %v2638, %v2634
  %v2640 = vrot.slane %v2639, 4
  %v2642 = vshll.u32 %v2395, 16
  %v2644 = vrot.slane %v2642, 5
  %v2645 = vsel %vm1354, %v2640, %v2644
  %v2646 = vshrl.u32 %v2395, 16
  %v2648 = vrot.slane %v2646, 4
  %v2649 = vor.u32 %v2648, %v2644
  %v2650 = vrot.slane %v2649, 4
  %v2652 = vshll.u32 %v2396, 16
  %v2654 = vrot.slane %v2652, 5
  %v2655 = vsel %vm1354, %v2650, %v2654
  %v2656 = vshrl.u32 %v2396, 16
  %v2658 = vrot.slane %v2656, 4
  %v2659 = vor.u32 %v2658, %v2654
  %v2660 = vrot.slane %v2659, 4
  %v2662 = vshll.u32 %v2397, 16
  %v2664 = vrot.slane %v2662, 5
  %v2665 = vsel %vm1354, %v2660, %v2664
  %v2666 = vshrl.u32 %v2397, 16
  %v2668 = vrot.slane %v2666, 4
  %v2669 = vor.u32 %v2668, %v2664
  %v2670 = vrot.slane %v2669, 4
  %v2672 = vshll.u32 %v2398, 16
  %v2674 = vrot.slane %v2672, 5
  %v2675 = vsel %vm1354, %v2670, %v2674
  %v2676 = vshrl.u32 %v2398, 16
  %v2678 = vrot.slane %v2676, 4
  %v2679 = vor.u32 %v2678, %v2674
  %v2680 = vrot.slane %v2679, 4
  %v2682 = vshll.u32 %v2399, 16
  %v2684 = vrot.slane %v2682, 5
  %v2685 = vsel %vm1354, %v2680, %v2684
  %v2686 = vshrl.u32 %v2399, 16
  %v2688 = vrot.slane %v2686, 4
  %v2689 = vor.u32 %v2688, %v2684
  %v2690 = vrot.slane %v2689, 4
  %v2692 = vshll.u32 %v2400, 16
  %v2694 = vrot.slane %v2692, 5
  %v2695 = vsel %vm1354, %v2690, %v2694
  %v2696 = vshrl.u32 %v2400, 16
  %v2698 = vrot.slane %v2696, 4
  %v2699 = vor.u32 %v2698, %v2694
  %v2700 = vrot.slane %v2699, 4
  %v2702 = vshll.u32 %v2401, 16
  %v2704 = vrot.slane %v2702, 5
  %v2705 = vsel %vm1354, %v2700, %v2704
  %v2706 = vshrl.u32 %v2401, 16
  %v2708 = vrot.slane %v2706, 4
  %v2709 = vor.u32 %v2708, %v2704
  %v2710 = vrot.slane %v2709, 4
  %v2712 = vshll.u32 %v2402, 16
  %v2714 = vrot.slane %v2712, 5
  %v2715 = vsel %vm1354, %v2710, %v2714
  %v2716 = vshrl.u32 %v2402, 16
  %v2718 = vrot.slane %v2716, 4
  %v2719 = vor.u32 %v2718, %v2714
  %v2720 = vrot.slane %v2719, 4
  %v2722 = vshll.u32 %v2403, 16
  %v2724 = vrot.slane %v2722, 5
  %v2725 = vsel %vm1354, %v2720, %v2724
  %v2726 = vshrl.u32 %v2403, 16
  %v2728 = vrot.slane %v2726, 4
  %v2729 = vor.u32 %v2728, %v2724
  %v2730 = vrot.slane %v2729, 4
  %v2732 = vshll.u32 %v2404, 16
  %v2734 = vrot.slane %v2732, 5
  %v2735 = vsel %vm1354, %v2730, %v2734
  %v2736 = vshrl.u32 %v2404, 16
  %v2738 = vrot.slane %v2736, 4
  %v2739 = vor.u32 %v2738, %v2734
  %v2740 = vrot.slane %v2739, 4
  %v2742 = vshll.u32 %v2405, 16
  %v2744 = vrot.slane %v2742, 5
  %v2745 = vsel %vm1354, %v2740, %v2744
  %v2746 = vshrl.u32 %v2405, 16
  %v2748 = vrot.slane %v2746, 4
  %v2749 = vor.u32 %v2748, %v2744
  %v2750 = vrot.slane %v2749, 4
  %v2752 = vshll.u32 %v2406, 16
  %v2754 = vrot.slane %v2752, 5
  %v2755 = vsel %vm1354, %v2750, %v2754
  %v2756 = vshrl.u32 %v2406, 16
  %v2758 = vrot.slane %v2756, 4
  %v2759 = vor.u32 %v2758, %v2754
  %v2760 = vrot.slane %v2759, 4
  %v2762 = vshll.u32 %v2407, 16
  %v2764 = vrot.slane %v2762, 5
  %v2765 = vsel %vm1354, %v2760, %v2764
  %v2766 = vshrl.u32 %v2407, 16
  %v2768 = vrot.slane %v2766, 4
  %v2769 = vor.u32 %v2768, %v2764
  %v2770 = vrot.slane %v2769, 4
  %v2772 = vshll.u32 %v2408, 16
  %v2774 = vrot.slane %v2772, 5
  %v2775 = vsel %vm1354, %v2770, %v2774
  %v2776 = vshrl.u32 %v2408, 16
  %v2778 = vrot.slane %v2776, 4
  %v2779 = vor.u32 %v2778, %v2774
  %v2780 = vrot.slane %v2779, 4
  %v2782 = vshll.u32 %v2409, 16
  %v2784 = vrot.slane %v2782, 5
  %v2785 = vsel %vm1354, %v2780, %v2784
  %v2786 = vshrl.u32 %v2409, 16
  %v2788 = vrot.slane %v2786, 4
  %v2789 = vor.u32 %v2788, %v2784
  %v2790 = vrot.slane %v2789, 4
  %v2792 = vshll.u32 %v2410, 16
  %v2794 = vrot.slane %v2792, 5
  %v2795 = vsel %vm1354, %v2790, %v2794
  %v2796 = vshrl.u32 %v2410, 16
  %v2798 = vrot.slane %v2796, 4
  %v2799 = vor.u32 %v2798, %v2794
  %v2800 = vrot.slane %v2799, 4
  %v2802 = vshll.u32 %v2411, 16
  %v2804 = vrot.slane %v2802, 5
  %v2805 = vsel %vm1354, %v2800, %v2804
  %v2806 = vshrl.u32 %v2411, 16
  %v2808 = vrot.slane %v2806, 4
  %v2809 = vor.u32 %v2808, %v2804
  %v2810 = vrot.slane %v2809, 4
  %v2812 = vshll.u32 %v2412, 16
  %v2814 = vrot.slane %v2812, 5
  %v2815 = vsel %vm1354, %v2810, %v2814
  %v2816 = vshrl.u32 %v2412, 16
  %v2818 = vrot.slane %v2816, 4
  %v2819 = vor.u32 %v2818, %v2814
  %v2820 = vrot.slane %v2819, 4
  %v2822 = vshll.u32 %v2413, 16
  %v2824 = vrot.slane %v2822, 5
  %v2825 = vsel %vm1354, %v2820, %v2824
  %v2826 = vshrl.u32 %v2413, 16
  %v2828 = vrot.slane %v2826, 4
  %v2829 = vor.u32 %v2828, %v2824
  %v2830 = vrot.slane %v2829, 4
  %v2832 = vshll.u32 %v2414, 16
  %v2834 = vrot.slane %v2832, 5
  %v2835 = vsel %vm1354, %v2830, %v2834
  %v2836 = vshrl.u32 %v2414, 16
  %v2838 = vrot.slane %v2836, 4
  %v2839 = vor.u32 %v2838, %v2834
  %v2840 = vrot.slane %v2839, 4
  %v2842 = vshll.u32 %v2415, 16
  %v2844 = vrot.slane %v2842, 5
  %v2845 = vsel %vm1354, %v2840, %v2844
  %v2846 = vshrl.u32 %v2415, 16
  %v2848 = vrot.slane %v2846, 4
  %v2849 = vor.u32 %v2848, %v2844
  %v2850 = vrot.slane %v2849, 4
  %v2852 = vshll.u32 %v2416, 16
  %v2854 = vrot.slane %v2852, 5
  %v2855 = vsel %vm1354, %v2850, %v2854
  %v2856 = vshrl.u32 %v2416, 16
  %v2858 = vrot.slane %v2856, 4
  %v2859 = vor.u32 %v2858, %v2854
  %v2860 = vrot.slane %v2859, 4
  %v2862 = vshll.u32 %v2417, 16
  %v2864 = vrot.slane %v2862, 5
  %v2865 = vsel %vm1354, %v2860, %v2864
  %v2866 = vshrl.u32 %v2417, 16
  %v2868 = vrot.slane %v2866, 4
  %v2869 = vor.u32 %v2868, %v2864
  %v2870 = vrot.slane %v2869, 4
  %v2872 = vshll.u32 %v2418, 16
  %v2874 = vrot.slane %v2872, 5
  %v2875 = vsel %vm1354, %v2870, %v2874
  %v2876 = vshrl.u32 %v2418, 16
  %v2878 = vrot.slane %v2876, 4
  %v2879 = vor.u32 %v2878, %v2874
  %v2880 = vrot.slane %v2879, 4
  %v2882 = vshll.u32 %v2419, 16
  %v2884 = vrot.slane %v2882, 5
  %v2885 = vsel %vm1354, %v2880, %v2884
  %v2886 = vshrl.u32 %v2419, 16
  %v2888 = vrot.slane %v2886, 4
  %v2889 = vor.u32 %v2888, %v2884
  %v2890 = vrot.slane %v2889, 4
  %v2892 = vshll.u32 %v2420, 16
  %v2894 = vrot.slane %v2892, 5
  %v2895 = vsel %vm1354, %v2890, %v2894
  %v2896 = vshrl.u32 %v2420, 16
  %v2898 = vrot.slane %v2896, 4
  %v2899 = vor.u32 %v2898, %v2894
  %v2900 = vrot.slane %v2899, 4
  %v2902 = vshll.u32 %v2421, 16
  %v2904 = vrot.slane %v2902, 5
  %v2905 = vsel %vm1354, %v2900, %v2904
  %2954 = vst [vmem:[#allocation3 + $0x10] sm:$0xf] %v2435
  %2955 = vst [vmem:[#allocation3 + $0x34] sm:$0xf] %v2445
  %2956 = vst [vmem:[#allocation3 + $0x58] sm:$0xf] %v2455
  %2957 = vst [vmem:[#allocation3 + $0x7c] sm:$0xf] %v2465
  %2958 = vst [vmem:[#allocation3 + $0xa0] sm:$0xf] %v2475
  %2959 = vst [vmem:[#allocation3 + $0xc4] sm:$0xf] %v2485
  %2960 = vst [vmem:[#allocation3 + $0xe8] sm:$0xf] %v2495
  %2961 = vst [vmem:[#allocation3 + $0x10c] sm:$0xf] %v2505
  %2962 = vst [vmem:[#allocation3 + $0x130] sm:$0xf] %v2515
  %2963 = vst [vmem:[#allocation3 + $0x154] sm:$0xf] %v2525
  %2964 = vst [vmem:[#allocation3 + $0x178] sm:$0xf] %v2535
  %2965 = vst [vmem:[#allocation3 + $0x19c] sm:$0xf] %v2545
  %2966 = vst [vmem:[#allocation3 + $0x1c0] sm:$0xf] %v2555
  %2967 = vst [vmem:[#allocation3 + $0x1e4] sm:$0xf] %v2565
  %2968 = vst [vmem:[#allocation3 + $0x208] sm:$0xf] %v2575
  %2969 = vst [vmem:[#allocation3 + $0x22c] sm:$0xf] %v2585
  %2970 = vst [vmem:[#allocation3 + $0x250] sm:$0xf] %v2595
  %2971 = vst [vmem:[#allocation3 + $0x274] sm:$0xf] %v2605
  %2972 = vst [vmem:[#allocation3 + $0x298] sm:$0xf] %v2615
  %2973 = vst [vmem:[#allocation3 + $0x2bc] sm:$0xf] %v2625
  %2974 = vst [vmem:[#allocation3 + $0x2e0] sm:$0xf] %v2635
  %2975 = vst [vmem:[#allocation3 + $0x304] sm:$0xf] %v2645
  %2976 = vst [vmem:[#allocation3 + $0x328] sm:$0xf] %v2655
  %2977 = vst [vmem:[#allocation3 + $0x34c] sm:$0xf] %v2665
  %2978 = vst [vmem:[#allocation3 + $0x370] sm:$0xf] %v2675
  %2979 = vst [vmem:[#allocation3 + $0x394] sm:$0xf] %v2685
  %2980 = vst [vmem:[#allocation3 + $0x3b8] sm:$0xf] %v2695
  %2981 = vst [vmem:[#allocation3 + $0x3dc] sm:$0xf] %v2705
  %2982 = vst [vmem:[#allocation3 + $0x400] sm:$0xf] %v2715
  %2983 = vst [vmem:[#allocation3 + $0x424] sm:$0xf] %v2725
  %2984 = vst [vmem:[#allocation3 + $0x448] sm:$0xf] %v2735
  %2985 = vst [vmem:[#allocation3 + $0x46c] sm:$0xf] %v2745
  %2986 = vst [vmem:[#allocation3 + $0x490] sm:$0xf] %v2755
  %2987 = vst [vmem:[#allocation3 + $0x4b4] sm:$0xf] %v2765
  %2988 = vst [vmem:[#allocation3 + $0x4d8] sm:$0xf] %v2775
  %2989 = vst [vmem:[#allocation3 + $0x4fc] sm:$0xf] %v2785
  %2990 = vst [vmem:[#allocation3 + $0x520] sm:$0xf] %v2795
  %2991 = vst [vmem:[#allocation3 + $0x544] sm:$0xf] %v2805
  %2992 = vst [vmem:[#allocation3 + $0x568] sm:$0xf] %v2815
  %2993 = vst [vmem:[#allocation3 + $0x58c] sm:$0xf] %v2825
  %2994 = vst [vmem:[#allocation3 + $0x5b0] sm:$0xf] %v2835
  %2995 = vst [vmem:[#allocation3 + $0x5d4] sm:$0xf] %v2845
  %2996 = vst [vmem:[#allocation3 + $0x5f8] sm:$0xf] %v2855
  %2997 = vst [vmem:[#allocation3 + $0x61c] sm:$0xf] %v2865
  %2998 = vst [vmem:[#allocation3 + $0x640] sm:$0xf] %v2875
  %2999 = vst [vmem:[#allocation3 + $0x664] sm:$0xf] %v2885
  %3000 = vst [vmem:[#allocation3 + $0x688] sm:$0xf] %v2895
  %3001 = vst [vmem:[#allocation3 + $0x6ac] sm:$0xf] %v2905
  %v3002 = vld [vmem:[#allocation2 + $0xc] sm:$0xe]
  %v3003 = vld [vmem:[#allocation2 + $0x10] sm:$0xf]
  %v3004 = vld [vmem:[#allocation2 + $0x14] sm:$0xf]
  %v3005 = vld [vmem:[#allocation2 + $0x18] sm:$0xf]
  %v3006 = vld [vmem:[#allocation2 + $0x1c] sm:$0xf]
  %v3007 = vld [vmem:[#allocation2 + $0x20] sm:$0xf]
  %v3008 = vld [vmem:[#allocation2 + $0x24] sm:$0xf]
  %v3009 = vld [vmem:[#allocation2 + $0x28] sm:$0xf]
  %v3010 = vld [vmem:[#allocation2 + $0x2c] sm:$0xf]
  %v3011 = vld [vmem:[#allocation2 + $0x30] sm:$0xf]
  %v3012 = vld [vmem:[#allocation2 + $0x34] sm:$0xf]
  %v3013 = vld [vmem:[#allocation2 + $0x38] sm:$0xf]
  %v3014 = vld [vmem:[#allocation2 + $0x3c] sm:$0xf]
  %v3015 = vld [vmem:[#allocation2 + $0x40] sm:$0xf]
  %v3016 = vld [vmem:[#allocation2 + $0x44] sm:$0xf]
  %v3017 = vld [vmem:[#allocation2 + $0x48] sm:$0xf]
  %v3018 = vld [vmem:[#allocation2 + $0x4c] sm:$0xf]
  %v3019 = vld [vmem:[#allocation2 + $0x50] sm:$0xf]
  %v3020 = vld [vmem:[#allocation2 + $0x54] sm:$0xf]
  %v3021 = vld [vmem:[#allocation2 + $0x58] sm:$0xf]
  %v3022 = vld [vmem:[#allocation2 + $0x5c] sm:$0xf]
  %v3023 = vld [vmem:[#allocation2 + $0x60] sm:$0xf]
  %v3024 = vld [vmem:[#allocation2 + $0x64] sm:$0xf]
  %v3025 = vld [vmem:[#allocation2 + $0x68] sm:$0xf]
  %v3026 = vld [vmem:[#allocation2 + $0x6c] sm:$0xf]
  %v3027 = vld [vmem:[#allocation2 + $0x70] sm:$0xf]
  %v3028 = vld [vmem:[#allocation2 + $0x74] sm:$0xf]
  %v3029 = vld [vmem:[#allocation2 + $0x78] sm:$0xf]
  %v3030 = vld [vmem:[#allocation2 + $0x7c] sm:$0xf]
  %v3031 = vld [vmem:[#allocation2 + $0x80] sm:$0xf]
  %v3032 = vld [vmem:[#allocation2 + $0x84] sm:$0xf]
  %v3033 = vld [vmem:[#allocation2 + $0x88] sm:$0xf]
  %v3034 = vld [vmem:[#allocation2 + $0x8c] sm:$0xf]
  %v3035 = vld [vmem:[#allocation2 + $0x90] sm:$0xf]
  %v3036 = vld [vmem:[#allocation2 + $0x94] sm:$0xf]
  %v3037 = vld [vmem:[#allocation2 + $0x98] sm:$0xf]
  %v3038 = vld [vmem:[#allocation2 + $0x9c] sm:$0xf]
  %v3039 = vld [vmem:[#allocation2 + $0xa0] sm:$0xf]
  %v3040 = vld [vmem:[#allocation2 + $0xa4] sm:$0xf]
  %v3041 = vld [vmem:[#allocation2 + $0xa8] sm:$0xf]
  %v3042 = vld [vmem:[#allocation2 + $0xac] sm:$0xf]
  %v3043 = vld [vmem:[#allocation2 + $0xb0] sm:$0xf]
  %v3044 = vld [vmem:[#allocation2 + $0xb4] sm:$0xf]
  %v3045 = vld [vmem:[#allocation2 + $0xb8] sm:$0xf]
  %v3046 = vld [vmem:[#allocation2 + $0xbc] sm:$0xf]
  %v3047 = vld [vmem:[#allocation2 + $0xc0] sm:$0xf]
  %v3048 = vld [vmem:[#allocation2 + $0xc4] sm:$0xf]
  %v3049 = vld [vmem:[#allocation2 + $0xc8] sm:$0xf]
  %v3050 = vld [vmem:[#allocation2 + $0xcc] sm:$0x1]
  %v3100 = vrot.slane %v3002, 5
  %v3101 = vrot.slane %v3100, 4
  %v3102 = vrot.slane %v3003, 5
  %v3103 = vsel %vm2035, %v3101, %v3102
  %v3104 = vrot.slane %v3102, 4
  %v3105 = vrot.slane %v3004, 5
  %v3106 = vsel %vm2035, %v3104, %v3105
  %v3107 = vrot.slane %v3105, 4
  %v3108 = vrot.slane %v3005, 5
  %v3109 = vsel %vm2035, %v3107, %v3108
  %v3110 = vrot.slane %v3108, 4
  %v3111 = vrot.slane %v3006, 5
  %v3112 = vsel %vm2035, %v3110, %v3111
  %v3113 = vrot.slane %v3111, 4
  %v3114 = vrot.slane %v3007, 5
  %v3115 = vsel %vm2035, %v3113, %v3114
  %v3116 = vrot.slane %v3114, 4
  %v3117 = vrot.slane %v3008, 5
  %v3118 = vsel %vm2035, %v3116, %v3117
  %v3119 = vrot.slane %v3117, 4
  %v3120 = vrot.slane %v3009, 5
  %v3121 = vsel %vm2035, %v3119, %v3120
  %v3122 = vrot.slane %v3120, 4
  %v3123 = vrot.slane %v3010, 5
  %v3124 = vsel %vm2035, %v3122, %v3123
  %v3125 = vrot.slane %v3123, 4
  %v3126 = vrot.slane %v3011, 5
  %v3127 = vsel %vm2035, %v3125, %v3126
  %v3128 = vrot.slane %v3126, 4
  %v3129 = vrot.slane %v3012, 5
  %v3130 = vsel %vm2035, %v3128, %v3129
  %v3131 = vrot.slane %v3129, 4
  %v3132 = vrot.slane %v3013, 5
  %v3133 = vsel %vm2035, %v3131, %v3132
  %v3134 = vrot.slane %v3132, 4
  %v3135 = vrot.slane %v3014, 5
  %v3136 = vsel %vm2035, %v3134, %v3135
  %v3137 = vrot.slane %v3135, 4
  %v3138 = vrot.slane %v3015, 5
  %v3139 = vsel %vm2035, %v3137, %v3138
  %v3140 = vrot.slane %v3138, 4
  %v3141 = vrot.slane %v3016, 5
  %v3142 = vsel %vm2035, %v3140, %v3141
  %v3143 = vrot.slane %v3141, 4
  %v3144 = vrot.slane %v3017, 5
  %v3145 = vsel %vm2035, %v3143, %v3144
  %v3146 = vrot.slane %v3144, 4
  %v3147 = vrot.slane %v3018, 5
  %v3148 = vsel %vm2035, %v3146, %v3147
  %v3149 = vrot.slane %v3147, 4
  %v3150 = vrot.slane %v3019, 5
  %v3151 = vsel %vm2035, %v3149, %v3150
  %v3152 = vrot.slane %v3150, 4
  %v3153 = vrot.slane %v3020, 5
  %v3154 = vsel %vm2035, %v3152, %v3153
  %v3155 = vrot.slane %v3153, 4
  %v3156 = vrot.slane %v3021, 5
  %v3157 = vsel %vm2035, %v3155, %v3156
  %v3158 = vrot.slane %v3156, 4
  %v3159 = vrot.slane %v3022, 5
  %v3160 = vsel %vm2035, %v3158, %v3159
  %v3161 = vrot.slane %v3159, 4
  %v3162 = vrot.slane %v3023, 5
  %v3163 = vsel %vm2035, %v3161, %v3162
  %v3164 = vrot.slane %v3162, 4
  %v3165 = vrot.slane %v3024, 5
  %v3166 = vsel %vm2035, %v3164, %v3165
  %v3167 = vrot.slane %v3165, 4
  %v3168 = vrot.slane %v3025, 5
  %v3169 = vsel %vm2035, %v3167, %v3168
  %v3170 = vrot.slane %v3168, 4
  %v3171 = vrot.slane %v3026, 5
  %v3172 = vsel %vm2035, %v3170, %v3171
  %v3173 = vrot.slane %v3171, 4
  %v3174 = vrot.slane %v3027, 5
  %v3175 = vsel %vm2035, %v3173, %v3174
  %v3176 = vrot.slane %v3174, 4
  %v3177 = vrot.slane %v3028, 5
  %v3178 = vsel %vm2035, %v3176, %v3177
  %v3179 = vrot.slane %v3177, 4
  %v3180 = vrot.slane %v3029, 5
  %v3181 = vsel %vm2035, %v3179, %v3180
  %v3182 = vrot.slane %v3180, 4
  %v3183 = vrot.slane %v3030, 5
  %v3184 = vsel %vm2035, %v3182, %v3183
  %v3185 = vrot.slane %v3183, 4
  %v3186 = vrot.slane %v3031, 5
  %v3187 = vsel %vm2035, %v3185, %v3186
  %v3188 = vrot.slane %v3186, 4
  %v3189 = vrot.slane %v3032, 5
  %v3190 = vsel %vm2035, %v3188, %v3189
  %v3191 = vrot.slane %v3189, 4
  %v3192 = vrot.slane %v3033, 5
  %v3193 = vsel %vm2035, %v3191, %v3192
  %v3194 = vrot.slane %v3192, 4
  %v3195 = vrot.slane %v3034, 5
  %v3196 = vsel %vm2035, %v3194, %v3195
  %v3197 = vrot.slane %v3195, 4
  %v3198 = vrot.slane %v3035, 5
  %v3199 = vsel %vm2035, %v3197, %v3198
  %v3200 = vrot.slane %v3198, 4
  %v3201 = vrot.slane %v3036, 5
  %v3202 = vsel %vm2035, %v3200, %v3201
  %v3203 = vrot.slane %v3201, 4
  %v3204 = vrot.slane %v3037, 5
  %v3205 = vsel %vm2035, %v3203, %v3204
  %v3206 = vrot.slane %v3204, 4
  %v3207 = vrot.slane %v3038, 5
  %v3208 = vsel %vm2035, %v3206, %v3207
  %v3209 = vrot.slane %v3207, 4
  %v3210 = vrot.slane %v3039, 5
  %v3211 = vsel %vm2035, %v3209, %v3210
  %v3212 = vrot.slane %v3210, 4
  %v3213 = vrot.slane %v3040, 5
  %v3214 = vsel %vm2035, %v3212, %v3213
  %v3215 = vrot.slane %v3213, 4
  %v3216 = vrot.slane %v3041, 5
  %v3217 = vsel %vm2035, %v3215, %v3216
  %v3218 = vrot.slane %v3216, 4
  %v3219 = vrot.slane %v3042, 5
  %v3220 = vsel %vm2035, %v3218, %v3219
  %v3221 = vrot.slane %v3219, 4
  %v3222 = vrot.slane %v3043, 5
  %v3223 = vsel %vm2035, %v3221, %v3222
  %v3224 = vrot.slane %v3222, 4
  %v3225 = vrot.slane %v3044, 5
  %v3226 = vsel %vm2035, %v3224, %v3225
  %v3227 = vrot.slane %v3225, 4
  %v3228 = vrot.slane %v3045, 5
  %v3229 = vsel %vm2035, %v3227, %v3228
  %v3230 = vrot.slane %v3228, 4
  %v3231 = vrot.slane %v3046, 5
  %v3232 = vsel %vm2035, %v3230, %v3231
  %v3233 = vrot.slane %v3231, 4
  %v3234 = vrot.slane %v3047, 5
  %v3235 = vsel %vm2035, %v3233, %v3234
  %v3236 = vrot.slane %v3234, 4
  %v3237 = vrot.slane %v3048, 5
  %v3238 = vsel %vm2035, %v3236, %v3237
  %v3239 = vrot.slane %v3237, 4
  %v3240 = vrot.slane %v3049, 5
  %v3241 = vsel %vm2035, %v3239, %v3240
  %v3242 = vrot.slane %v3240, 4
  %v3243 = vrot.slane %v3050, 5
  %v3244 = vsel %vm2035, %v3242, %v3243
  %3293 = vst [vmem:[#allocation3 + $0x14] sm:$0xf] %v3103
  %3294 = vst [vmem:[#allocation3 + $0x38] sm:$0xf] %v3106
  %3295 = vst [vmem:[#allocation3 + $0x5c] sm:$0xf] %v3109
  %3296 = vst [vmem:[#allocation3 + $0x80] sm:$0xf] %v3112
  %3297 = vst [vmem:[#allocation3 + $0xa4] sm:$0xf] %v3115
  %3298 = vst [vmem:[#allocation3 + $0xc8] sm:$0xf] %v3118
  %3299 = vst [vmem:[#allocation3 + $0xec] sm:$0xf] %v3121
  %3300 = vst [vmem:[#allocation3 + $0x110] sm:$0xf] %v3124
  %3301 = vst [vmem:[#allocation3 + $0x134] sm:$0xf] %v3127
  %3302 = vst [vmem:[#allocation3 + $0x158] sm:$0xf] %v3130
  %3303 = vst [vmem:[#allocation3 + $0x17c] sm:$0xf] %v3133
  %3304 = vst [vmem:[#allocation3 + $0x1a0] sm:$0xf] %v3136
  %3305 = vst [vmem:[#allocation3 + $0x1c4] sm:$0xf] %v3139
  %3306 = vst [vmem:[#allocation3 + $0x1e8] sm:$0xf] %v3142
  %3307 = vst [vmem:[#allocation3 + $0x20c] sm:$0xf] %v3145
  %3308 = vst [vmem:[#allocation3 + $0x230] sm:$0xf] %v3148
  %3309 = vst [vmem:[#allocation3 + $0x254] sm:$0xf] %v3151
  %3310 = vst [vmem:[#allocation3 + $0x278] sm:$0xf] %v3154
  %3311 = vst [vmem:[#allocation3 + $0x29c] sm:$0xf] %v3157
  %3312 = vst [vmem:[#allocation3 + $0x2c0] sm:$0xf] %v3160
  %3313 = vst [vmem:[#allocation3 + $0x2e4] sm:$0xf] %v3163
  %3314 = vst [vmem:[#allocation3 + $0x308] sm:$0xf] %v3166
  %3315 = vst [vmem:[#allocation3 + $0x32c] sm:$0xf] %v3169
  %3316 = vst [vmem:[#allocation3 + $0x350] sm:$0xf] %v3172
  %3317 = vst [vmem:[#allocation3 + $0x374] sm:$0xf] %v3175
  %3318 = vst [vmem:[#allocation3 + $0x398] sm:$0xf] %v3178
  %3319 = vst [vmem:[#allocation3 + $0x3bc] sm:$0xf] %v3181
  %3320 = vst [vmem:[#allocation3 + $0x3e0] sm:$0xf] %v3184
  %3321 = vst [vmem:[#allocation3 + $0x404] sm:$0xf] %v3187
  %3322 = vst [vmem:[#allocation3 + $0x428] sm:$0xf] %v3190
  %3323 = vst [vmem:[#allocation3 + $0x44c] sm:$0xf] %v3193
  %3324 = vst [vmem:[#allocation3 + $0x470] sm:$0xf] %v3196
  %3325 = vst [vmem:[#allocation3 + $0x494] sm:$0xf] %v3199
  %3326 = vst [vmem:[#allocation3 + $0x4b8] sm:$0xf] %v3202
  %3327 = vst [vmem:[#allocation3 + $0x4dc] sm:$0xf] %v3205
  %3328 = vst [vmem:[#allocation3 + $0x500] sm:$0xf] %v3208
  %3329 = vst [vmem:[#allocation3 + $0x524] sm:$0xf] %v3211
  %3330 = vst [vmem:[#allocation3 + $0x548] sm:$0xf] %v3214
  %3331 = vst [vmem:[#allocation3 + $0x56c] sm:$0xf] %v3217
  %3332 = vst [vmem:[#allocation3 + $0x590] sm:$0xf] %v3220
  %3333 = vst [vmem:[#allocation3 + $0x5b4] sm:$0xf] %v3223
  %3334 = vst [vmem:[#allocation3 + $0x5d8] sm:$0xf] %v3226
  %3335 = vst [vmem:[#allocation3 + $0x5fc] sm:$0xf] %v3229
  %3336 = vst [vmem:[#allocation3 + $0x620] sm:$0xf] %v3232
  %3337 = vst [vmem:[#allocation3 + $0x644] sm:$0xf] %v3235
  %3338 = vst [vmem:[#allocation3 + $0x668] sm:$0xf] %v3238
  %3339 = vst [vmem:[#allocation3 + $0x68c] sm:$0xf] %v3241
  %3340 = vst [vmem:[#allocation3 + $0x6b0] sm:$0xf] %v3244
  %v3341 = vld [vmem:[#allocation2 + $0x18] sm:$0xf]
  %v3342 = vld [vmem:[#allocation2 + $0x1c] sm:$0xf]
  %v3343 = vld [vmem:[#allocation2 + $0x20] sm:$0xf]
  %v3344 = vld [vmem:[#allocation2 + $0x24] sm:$0xf]
  %v3345 = vld [vmem:[#allocation2 + $0x28] sm:$0xf]
  %v3346 = vld [vmem:[#allocation2 + $0x2c] sm:$0xf]
  %v3347 = vld [vmem:[#allocation2 + $0x30] sm:$0xf]
  %v3348 = vld [vmem:[#allocation2 + $0x34] sm:$0xf]
  %v3349 = vld [vmem:[#allocation2 + $0x38] sm:$0xf]
  %v3350 = vld [vmem:[#allocation2 + $0x3c] sm:$0xf]
  %v3351 = vld [vmem:[#allocation2 + $0x40] sm:$0xf]
  %v3352 = vld [vmem:[#allocation2 + $0x44] sm:$0xf]
  %v3353 = vld [vmem:[#allocation2 + $0x48] sm:$0xf]
  %v3354 = vld [vmem:[#allocation2 + $0x4c] sm:$0xf]
  %v3355 = vld [vmem:[#allocation2 + $0x50] sm:$0xf]
  %v3356 = vld [vmem:[#allocation2 + $0x54] sm:$0xf]
  %v3357 = vld [vmem:[#allocation2 + $0x58] sm:$0xf]
  %v3358 = vld [vmem:[#allocation2 + $0x5c] sm:$0xf]
  %v3359 = vld [vmem:[#allocation2 + $0x60] sm:$0xf]
  %v3360 = vld [vmem:[#allocation2 + $0x64] sm:$0xf]
  %v3361 = vld [vmem:[#allocation2 + $0x68] sm:$0xf]
  %v3362 = vld [vmem:[#allocation2 + $0x6c] sm:$0xf]
  %v3363 = vld [vmem:[#allocation2 + $0x70] sm:$0xf]
  %v3364 = vld [vmem:[#allocation2 + $0x74] sm:$0xf]
  %v3365 = vld [vmem:[#allocation2 + $0x78] sm:$0xf]
  %v3366 = vld [vmem:[#allocation2 + $0x7c] sm:$0xf]
  %v3367 = vld [vmem:[#allocation2 + $0x80] sm:$0xf]
  %v3368 = vld [vmem:[#allocation2 + $0x84] sm:$0xf]
  %v3369 = vld [vmem:[#allocation2 + $0x88] sm:$0xf]
  %v3370 = vld [vmem:[#allocation2 + $0x8c] sm:$0xf]
  %v3371 = vld [vmem:[#allocation2 + $0x90] sm:$0xf]
  %v3372 = vld [vmem:[#allocation2 + $0x94] sm:$0xf]
  %v3373 = vld [vmem:[#allocation2 + $0x98] sm:$0xf]
  %v3374 = vld [vmem:[#allocation2 + $0x9c] sm:$0xf]
  %v3375 = vld [vmem:[#allocation2 + $0xa0] sm:$0xf]
  %v3376 = vld [vmem:[#allocation2 + $0xa4] sm:$0xf]
  %v3377 = vld [vmem:[#allocation2 + $0xa8] sm:$0xf]
  %v3378 = vld [vmem:[#allocation2 + $0xac] sm:$0xf]
  %v3379 = vld [vmem:[#allocation2 + $0xb0] sm:$0xf]
  %v3380 = vld [vmem:[#allocation2 + $0xb4] sm:$0xf]
  %v3381 = vld [vmem:[#allocation2 + $0xb8] sm:$0xf]
  %v3382 = vld [vmem:[#allocation2 + $0xbc] sm:$0xf]
  %v3383 = vld [vmem:[#allocation2 + $0xc0] sm:$0xf]
  %v3384 = vld [vmem:[#allocation2 + $0xc4] sm:$0xf]
  %v3385 = vld [vmem:[#allocation2 + $0xc8] sm:$0xf]
  %v3386 = vld [vmem:[#allocation2 + $0xcc] sm:$0xf]
  %v3387 = vld [vmem:[#allocation2 + $0xd0] sm:$0xf]
  %v3388 = vld [vmem:[#allocation2 + $0xd4] sm:$0xf]
  %3389 = vst [vmem:[#allocation3 + $0x18] sm:$0xf] %v3341
  %3390 = vst [vmem:[#allocation3 + $0x3c] sm:$0xf] %v3342
  %3391 = vst [vmem:[#allocation3 + $0x60] sm:$0xf] %v3343
  %3392 = vst [vmem:[#allocation3 + $0x84] sm:$0xf] %v3344
  %3393 = vst [vmem:[#allocation3 + $0xa8] sm:$0xf] %v3345
  %3394 = vst [vmem:[#allocation3 + $0xcc] sm:$0xf] %v3346
  %3395 = vst [vmem:[#allocation3 + $0xf0] sm:$0xf] %v3347
  %3396 = vst [vmem:[#allocation3 + $0x114] sm:$0xf] %v3348
  %3397 = vst [vmem:[#allocation3 + $0x138] sm:$0xf] %v3349
  %3398 = vst [vmem:[#allocation3 + $0x15c] sm:$0xf] %v3350
  %3399 = vst [vmem:[#allocation3 + $0x180] sm:$0xf] %v3351
  %3400 = vst [vmem:[#allocation3 + $0x1a4] sm:$0xf] %v3352
  %3401 = vst [vmem:[#allocation3 + $0x1c8] sm:$0xf] %v3353
  %3402 = vst [vmem:[#allocation3 + $0x1ec] sm:$0xf] %v3354
  %3403 = vst [vmem:[#allocation3 + $0x210] sm:$0xf] %v3355
  %3404 = vst [vmem:[#allocation3 + $0x234] sm:$0xf] %v3356
  %3405 = vst [vmem:[#allocation3 + $0x258] sm:$0xf] %v3357
  %3406 = vst [vmem:[#allocation3 + $0x27c] sm:$0xf] %v3358
  %3407 = vst [vmem:[#allocation3 + $0x2a0] sm:$0xf] %v3359
  %3408 = vst [vmem:[#allocation3 + $0x2c4] sm:$0xf] %v3360
  %3409 = vst [vmem:[#allocation3 + $0x2e8] sm:$0xf] %v3361
  %3410 = vst [vmem:[#allocation3 + $0x30c] sm:$0xf] %v3362
  %3411 = vst [vmem:[#allocation3 + $0x330] sm:$0xf] %v3363
  %3412 = vst [vmem:[#allocation3 + $0x354] sm:$0xf] %v3364
  %3413 = vst [vmem:[#allocation3 + $0x378] sm:$0xf] %v3365
  %3414 = vst [vmem:[#allocation3 + $0x39c] sm:$0xf] %v3366
  %3415 = vst [vmem:[#allocation3 + $0x3c0] sm:$0xf] %v3367
  %3416 = vst [vmem:[#allocation3 + $0x3e4] sm:$0xf] %v3368
  %3417 = vst [vmem:[#allocation3 + $0x408] sm:$0xf] %v3369
  %3418 = vst [vmem:[#allocation3 + $0x42c] sm:$0xf] %v3370
  %3419 = vst [vmem:[#allocation3 + $0x450] sm:$0xf] %v3371
  %3420 = vst [vmem:[#allocation3 + $0x474] sm:$0xf] %v3372
  %3421 = vst [vmem:[#allocation3 + $0x498] sm:$0xf] %v3373
  %3422 = vst [vmem:[#allocation3 + $0x4bc] sm:$0xf] %v3374
  %3423 = vst [vmem:[#allocation3 + $0x4e0] sm:$0xf] %v3375
  %3424 = vst [vmem:[#allocation3 + $0x504] sm:$0xf] %v3376
  %3425 = vst [vmem:[#allocation3 + $0x528] sm:$0xf] %v3377
  %3426 = vst [vmem:[#allocation3 + $0x54c] sm:$0xf] %v3378
  %3427 = vst [vmem:[#allocation3 + $0x570] sm:$0xf] %v3379
  %3428 = vst [vmem:[#allocation3 + $0x594] sm:$0xf] %v3380
  %3429 = vst [vmem:[#allocation3 + $0x5b8] sm:$0xf] %v3381
  %3430 = vst [vmem:[#allocation3 + $0x5dc] sm:$0xf] %v3382
  %3431 = vst [vmem:[#allocation3 + $0x600] sm:$0xf] %v3383
  %3432 = vst [vmem:[#allocation3 + $0x624] sm:$0xf] %v3384
  %3433 = vst [vmem:[#allocation3 + $0x648] sm:$0xf] %v3385
  %3434 = vst [vmem:[#allocation3 + $0x66c] sm:$0xf] %v3386
  %3435 = vst [vmem:[#allocation3 + $0x690] sm:$0xf] %v3387
  %3436 = vst [vmem:[#allocation3 + $0x6b4] sm:$0xf] %v3388
  %v3437 = vld [vmem:[#allocation2 + $0x18] sm:$0xf]
  %v3438 = vld [vmem:[#allocation2 + $0x1c] sm:$0xf]
  %v3439 = vld [vmem:[#allocation2 + $0x20] sm:$0xf]
  %v3440 = vld [vmem:[#allocation2 + $0x24] sm:$0xf]
  %v3441 = vld [vmem:[#allocation2 + $0x28] sm:$0xf]
  %v3442 = vld [vmem:[#allocation2 + $0x2c] sm:$0xf]
  %v3443 = vld [vmem:[#allocation2 + $0x30] sm:$0xf]
  %v3444 = vld [vmem:[#allocation2 + $0x34] sm:$0xf]
  %v3445 = vld [vmem:[#allocation2 + $0x38] sm:$0xf]
  %v3446 = vld [vmem:[#allocation2 + $0x3c] sm:$0xf]
  %v3447 = vld [vmem:[#allocation2 + $0x40] sm:$0xf]
  %v3448 = vld [vmem:[#allocation2 + $0x44] sm:$0xf]
  %v3449 = vld [vmem:[#allocation2 + $0x48] sm:$0xf]
  %v3450 = vld [vmem:[#allocation2 + $0x4c] sm:$0xf]
  %v3451 = vld [vmem:[#allocation2 + $0x50] sm:$0xf]
  %v3452 = vld [vmem:[#allocation2 + $0x54] sm:$0xf]
  %v3453 = vld [vmem:[#allocation2 + $0x58] sm:$0xf]
  %v3454 = vld [vmem:[#allocation2 + $0x5c] sm:$0xf]
  %v3455 = vld [vmem:[#allocation2 + $0x60] sm:$0xf]
  %v3456 = vld [vmem:[#allocation2 + $0x64] sm:$0xf]
  %v3457 = vld [vmem:[#allocation2 + $0x68] sm:$0xf]
  %v3458 = vld [vmem:[#allocation2 + $0x6c] sm:$0xf]
  %v3459 = vld [vmem:[#allocation2 + $0x70] sm:$0xf]
  %v3460 = vld [vmem:[#allocation2 + $0x74] sm:$0xf]
  %v3461 = vld [vmem:[#allocation2 + $0x78] sm:$0xf]
  %v3462 = vld [vmem:[#allocation2 + $0x7c] sm:$0xf]
  %v3463 = vld [vmem:[#allocation2 + $0x80] sm:$0xf]
  %v3464 = vld [vmem:[#allocation2 + $0x84] sm:$0xf]
  %v3465 = vld [vmem:[#allocation2 + $0x88] sm:$0xf]
  %v3466 = vld [vmem:[#allocation2 + $0x8c] sm:$0xf]
  %v3467 = vld [vmem:[#allocation2 + $0x90] sm:$0xf]
  %v3468 = vld [vmem:[#allocation2 + $0x94] sm:$0xf]
  %v3469 = vld [vmem:[#allocation2 + $0x98] sm:$0xf]
  %v3470 = vld [vmem:[#allocation2 + $0x9c] sm:$0xf]
  %v3471 = vld [vmem:[#allocation2 + $0xa0] sm:$0xf]
  %v3472 = vld [vmem:[#allocation2 + $0xa4] sm:$0xf]
  %v3473 = vld [vmem:[#allocation2 + $0xa8] sm:$0xf]
  %v3474 = vld [vmem:[#allocation2 + $0xac] sm:$0xf]
  %v3475 = vld [vmem:[#allocation2 + $0xb0] sm:$0xf]
  %v3476 = vld [vmem:[#allocation2 + $0xb4] sm:$0xf]
  %v3477 = vld [vmem:[#allocation2 + $0xb8] sm:$0xf]
  %v3478 = vld [vmem:[#allocation2 + $0xbc] sm:$0xf]
  %v3479 = vld [vmem:[#allocation2 + $0xc0] sm:$0xf]
  %v3480 = vld [vmem:[#allocation2 + $0xc4] sm:$0xf]
  %v3481 = vld [vmem:[#allocation2 + $0xc8] sm:$0xf]
  %v3482 = vld [vmem:[#allocation2 + $0xcc] sm:$0xf]
  %v3483 = vld [vmem:[#allocation2 + $0xd0] sm:$0xf]
  %v3484 = vld [vmem:[#allocation2 + $0xd4] sm:$0xf]
  %v3485 = vld [vmem:[#allocation2 + $0xd8] sm:$0x1]
  %v3487 = vshrl.u32 %v3437, 16
  %v3489 = vrot.slane %v3487, 4
  %v3490 = vshll.u32 %v3437, 16
  %v3492 = vrot.slane %v3490, 5
  %v3493 = vor.u32 %v3489, %v3492
  %v3494 = vrot.slane %v3493, 4
  %v3496 = vshll.u32 %v3438, 16
  %v3498 = vrot.slane %v3496, 5
  %v3499 = vsel %vm1354, %v3494, %v3498
  %v3500 = vshrl.u32 %v3438, 16
  %v3502 = vrot.slane %v3500, 4
  %v3503 = vor.u32 %v3502, %v3498
  %v3504 = vrot.slane %v3503, 4
  %v3506 = vshll.u32 %v3439, 16
  %v3508 = vrot.slane %v3506, 5
  %v3509 = vsel %vm1354, %v3504, %v3508
  %v3510 = vshrl.u32 %v3439, 16
  %v3512 = vrot.slane %v3510, 4
  %v3513 = vor.u32 %v3512, %v3508
  %v3514 = vrot.slane %v3513, 4
  %v3516 = vshll.u32 %v3440, 16
  %v3518 = vrot.slane %v3516, 5
  %v3519 = vsel %vm1354, %v3514, %v3518
  %v3520 = vshrl.u32 %v3440, 16
  %v3522 = vrot.slane %v3520, 4
  %v3523 = vor.u32 %v3522, %v3518
  %v3524 = vrot.slane %v3523, 4
  %v3526 = vshll.u32 %v3441, 16
  %v3528 = vrot.slane %v3526, 5
  %v3529 = vsel %vm1354, %v3524, %v3528
  %v3530 = vshrl.u32 %v3441, 16
  %v3532 = vrot.slane %v3530, 4
  %v3533 = vor.u32 %v3532, %v3528
  %v3534 = vrot.slane %v3533, 4
  %v3536 = vshll.u32 %v3442, 16
  %v3538 = vrot.slane %v3536, 5
  %v3539 = vsel %vm1354, %v3534, %v3538
  %v3540 = vshrl.u32 %v3442, 16
  %v3542 = vrot.slane %v3540, 4
  %v3543 = vor.u32 %v3542, %v3538
  %v3544 = vrot.slane %v3543, 4
  %v3546 = vshll.u32 %v3443, 16
  %v3548 = vrot.slane %v3546, 5
  %v3549 = vsel %vm1354, %v3544, %v3548
  %v3550 = vshrl.u32 %v3443, 16
  %v3552 = vrot.slane %v3550, 4
  %v3553 = vor.u32 %v3552, %v3548
  %v3554 = vrot.slane %v3553, 4
  %v3556 = vshll.u32 %v3444, 16
  %v3558 = vrot.slane %v3556, 5
  %v3559 = vsel %vm1354, %v3554, %v3558
  %v3560 = vshrl.u32 %v3444, 16
  %v3562 = vrot.slane %v3560, 4
  %v3563 = vor.u32 %v3562, %v3558
  %v3564 = vrot.slane %v3563, 4
  %v3566 = vshll.u32 %v3445, 16
  %v3568 = vrot.slane %v3566, 5
  %v3569 = vsel %vm1354, %v3564, %v3568
  %v3570 = vshrl.u32 %v3445, 16
  %v3572 = vrot.slane %v3570, 4
  %v3573 = vor.u32 %v3572, %v3568
  %v3574 = vrot.slane %v3573, 4
  %v3576 = vshll.u32 %v3446, 16
  %v3578 = vrot.slane %v3576, 5
  %v3579 = vsel %vm1354, %v3574, %v3578
  %v3580 = vshrl.u32 %v3446, 16
  %v3582 = vrot.slane %v3580, 4
  %v3583 = vor.u32 %v3582, %v3578
  %v3584 = vrot.slane %v3583, 4
  %v3586 = vshll.u32 %v3447, 16
  %v3588 = vrot.slane %v3586, 5
  %v3589 = vsel %vm1354, %v3584, %v3588
  %v3590 = vshrl.u32 %v3447, 16
  %v3592 = vrot.slane %v3590, 4
  %v3593 = vor.u32 %v3592, %v3588
  %v3594 = vrot.slane %v3593, 4
  %v3596 = vshll.u32 %v3448, 16
  %v3598 = vrot.slane %v3596, 5
  %v3599 = vsel %vm1354, %v3594, %v3598
  %v3600 = vshrl.u32 %v3448, 16
  %v3602 = vrot.slane %v3600, 4
  %v3603 = vor.u32 %v3602, %v3598
  %v3604 = vrot.slane %v3603, 4
  %v3606 = vshll.u32 %v3449, 16
  %v3608 = vrot.slane %v3606, 5
  %v3609 = vsel %vm1354, %v3604, %v3608
  %v3610 = vshrl.u32 %v3449, 16
  %v3612 = vrot.slane %v3610, 4
  %v3613 = vor.u32 %v3612, %v3608
  %v3614 = vrot.slane %v3613, 4
  %v3616 = vshll.u32 %v3450, 16
  %v3618 = vrot.slane %v3616, 5
  %v3619 = vsel %vm1354, %v3614, %v3618
  %v3620 = vshrl.u32 %v3450, 16
  %v3622 = vrot.slane %v3620, 4
  %v3623 = vor.u32 %v3622, %v3618
  %v3624 = vrot.slane %v3623, 4
  %v3626 = vshll.u32 %v3451, 16
  %v3628 = vrot.slane %v3626, 5
  %v3629 = vsel %vm1354, %v3624, %v3628
  %v3630 = vshrl.u32 %v3451, 16
  %v3632 = vrot.slane %v3630, 4
  %v3633 = vor.u32 %v3632, %v3628
  %v3634 = vrot.slane %v3633, 4
  %v3636 = vshll.u32 %v3452, 16
  %v3638 = vrot.slane %v3636, 5
  %v3639 = vsel %vm1354, %v3634, %v3638
  %v3640 = vshrl.u32 %v3452, 16
  %v3642 = vrot.slane %v3640, 4
  %v3643 = vor.u32 %v3642, %v3638
  %v3644 = vrot.slane %v3643, 4
  %v3646 = vshll.u32 %v3453, 16
  %v3648 = vrot.slane %v3646, 5
  %v3649 = vsel %vm1354, %v3644, %v3648
  %v3650 = vshrl.u32 %v3453, 16
  %v3652 = vrot.slane %v3650, 4
  %v3653 = vor.u32 %v3652, %v3648
  %v3654 = vrot.slane %v3653, 4
  %v3656 = vshll.u32 %v3454, 16
  %v3658 = vrot.slane %v3656, 5
  %v3659 = vsel %vm1354, %v3654, %v3658
  %v3660 = vshrl.u32 %v3454, 16
  %v3662 = vrot.slane %v3660, 4
  %v3663 = vor.u32 %v3662, %v3658
  %v3664 = vrot.slane %v3663, 4
  %v3666 = vshll.u32 %v3455, 16
  %v3668 = vrot.slane %v3666, 5
  %v3669 = vsel %vm1354, %v3664, %v3668
  %v3670 = vshrl.u32 %v3455, 16
  %v3672 = vrot.slane %v3670, 4
  %v3673 = vor.u32 %v3672, %v3668
  %v3674 = vrot.slane %v3673, 4
  %v3676 = vshll.u32 %v3456, 16
  %v3678 = vrot.slane %v3676, 5
  %v3679 = vsel %vm1354, %v3674, %v3678
  %v3680 = vshrl.u32 %v3456, 16
  %v3682 = vrot.slane %v3680, 4
  %v3683 = vor.u32 %v3682, %v3678
  %v3684 = vrot.slane %v3683, 4
  %v3686 = vshll.u32 %v3457, 16
  %v3688 = vrot.slane %v3686, 5
  %v3689 = vsel %vm1354, %v3684, %v3688
  %v3690 = vshrl.u32 %v3457, 16
  %v3692 = vrot.slane %v3690, 4
  %v3693 = vor.u32 %v3692, %v3688
  %v3694 = vrot.slane %v3693, 4
  %v3696 = vshll.u32 %v3458, 16
  %v3698 = vrot.slane %v3696, 5
  %v3699 = vsel %vm1354, %v3694, %v3698
  %v3700 = vshrl.u32 %v3458, 16
  %v3702 = vrot.slane %v3700, 4
  %v3703 = vor.u32 %v3702, %v3698
  %v3704 = vrot.slane %v3703, 4
  %v3706 = vshll.u32 %v3459, 16
  %v3708 = vrot.slane %v3706, 5
  %v3709 = vsel %vm1354, %v3704, %v3708
  %v3710 = vshrl.u32 %v3459, 16
  %v3712 = vrot.slane %v3710, 4
  %v3713 = vor.u32 %v3712, %v3708
  %v3714 = vrot.slane %v3713, 4
  %v3716 = vshll.u32 %v3460, 16
  %v3718 = vrot.slane %v3716, 5
  %v3719 = vsel %vm1354, %v3714, %v3718
  %v3720 = vshrl.u32 %v3460, 16
  %v3722 = vrot.slane %v3720, 4
  %v3723 = vor.u32 %v3722, %v3718
  %v3724 = vrot.slane %v3723, 4
  %v3726 = vshll.u32 %v3461, 16
  %v3728 = vrot.slane %v3726, 5
  %v3729 = vsel %vm1354, %v3724, %v3728
  %v3730 = vshrl.u32 %v3461, 16
  %v3732 = vrot.slane %v3730, 4
  %v3733 = vor.u32 %v3732, %v3728
  %v3734 = vrot.slane %v3733, 4
  %v3736 = vshll.u32 %v3462, 16
  %v3738 = vrot.slane %v3736, 5
  %v3739 = vsel %vm1354, %v3734, %v3738
  %v3740 = vshrl.u32 %v3462, 16
  %v3742 = vrot.slane %v3740, 4
  %v3743 = vor.u32 %v3742, %v3738
  %v3744 = vrot.slane %v3743, 4
  %v3746 = vshll.u32 %v3463, 16
  %v3748 = vrot.slane %v3746, 5
  %v3749 = vsel %vm1354, %v3744, %v3748
  %v3750 = vshrl.u32 %v3463, 16
  %v3752 = vrot.slane %v3750, 4
  %v3753 = vor.u32 %v3752, %v3748
  %v3754 = vrot.slane %v3753, 4
  %v3756 = vshll.u32 %v3464, 16
  %v3758 = vrot.slane %v3756, 5
  %v3759 = vsel %vm1354, %v3754, %v3758
  %v3760 = vshrl.u32 %v3464, 16
  %v3762 = vrot.slane %v3760, 4
  %v3763 = vor.u32 %v3762, %v3758
  %v3764 = vrot.slane %v3763, 4
  %v3766 = vshll.u32 %v3465, 16
  %v3768 = vrot.slane %v3766, 5
  %v3769 = vsel %vm1354, %v3764, %v3768
  %v3770 = vshrl.u32 %v3465, 16
  %v3772 = vrot.slane %v3770, 4
  %v3773 = vor.u32 %v3772, %v3768
  %v3774 = vrot.slane %v3773, 4
  %v3776 = vshll.u32 %v3466, 16
  %v3778 = vrot.slane %v3776, 5
  %v3779 = vsel %vm1354, %v3774, %v3778
  %v3780 = vshrl.u32 %v3466, 16
  %v3782 = vrot.slane %v3780, 4
  %v3783 = vor.u32 %v3782, %v3778
  %v3784 = vrot.slane %v3783, 4
  %v3786 = vshll.u32 %v3467, 16
  %v3788 = vrot.slane %v3786, 5
  %v3789 = vsel %vm1354, %v3784, %v3788
  %v3790 = vshrl.u32 %v3467, 16
  %v3792 = vrot.slane %v3790, 4
  %v3793 = vor.u32 %v3792, %v3788
  %v3794 = vrot.slane %v3793, 4
  %v3796 = vshll.u32 %v3468, 16
  %v3798 = vrot.slane %v3796, 5
  %v3799 = vsel %vm1354, %v3794, %v3798
  %v3800 = vshrl.u32 %v3468, 16
  %v3802 = vrot.slane %v3800, 4
  %v3803 = vor.u32 %v3802, %v3798
  %v3804 = vrot.slane %v3803, 4
  %v3806 = vshll.u32 %v3469, 16
  %v3808 = vrot.slane %v3806, 5
  %v3809 = vsel %vm1354, %v3804, %v3808
  %v3810 = vshrl.u32 %v3469, 16
  %v3812 = vrot.slane %v3810, 4
  %v3813 = vor.u32 %v3812, %v3808
  %v3814 = vrot.slane %v3813, 4
  %v3816 = vshll.u32 %v3470, 16
  %v3818 = vrot.slane %v3816, 5
  %v3819 = vsel %vm1354, %v3814, %v3818
  %v3820 = vshrl.u32 %v3470, 16
  %v3822 = vrot.slane %v3820, 4
  %v3823 = vor.u32 %v3822, %v3818
  %v3824 = vrot.slane %v3823, 4
  %v3826 = vshll.u32 %v3471, 16
  %v3828 = vrot.slane %v3826, 5
  %v3829 = vsel %vm1354, %v3824, %v3828
  %v3830 = vshrl.u32 %v3471, 16
  %v3832 = vrot.slane %v3830, 4
  %v3833 = vor.u32 %v3832, %v3828
  %v3834 = vrot.slane %v3833, 4
  %v3836 = vshll.u32 %v3472, 16
  %v3838 = vrot.slane %v3836, 5
  %v3839 = vsel %vm1354, %v3834, %v3838
  %v3840 = vshrl.u32 %v3472, 16
  %v3842 = vrot.slane %v3840, 4
  %v3843 = vor.u32 %v3842, %v3838
  %v3844 = vrot.slane %v3843, 4
  %v3846 = vshll.u32 %v3473, 16
  %v3848 = vrot.slane %v3846, 5
  %v3849 = vsel %vm1354, %v3844, %v3848
  %v3850 = vshrl.u32 %v3473, 16
  %v3852 = vrot.slane %v3850, 4
  %v3853 = vor.u32 %v3852, %v3848
  %v3854 = vrot.slane %v3853, 4
  %v3856 = vshll.u32 %v3474, 16
  %v3858 = vrot.slane %v3856, 5
  %v3859 = vsel %vm1354, %v3854, %v3858
  %v3860 = vshrl.u32 %v3474, 16
  %v3862 = vrot.slane %v3860, 4
  %v3863 = vor.u32 %v3862, %v3858
  %v3864 = vrot.slane %v3863, 4
  %v3866 = vshll.u32 %v3475, 16
  %v3868 = vrot.slane %v3866, 5
  %v3869 = vsel %vm1354, %v3864, %v3868
  %v3870 = vshrl.u32 %v3475, 16
  %v3872 = vrot.slane %v3870, 4
  %v3873 = vor.u32 %v3872, %v3868
  %v3874 = vrot.slane %v3873, 4
  %v3876 = vshll.u32 %v3476, 16
  %v3878 = vrot.slane %v3876, 5
  %v3879 = vsel %vm1354, %v3874, %v3878
  %v3880 = vshrl.u32 %v3476, 16
  %v3882 = vrot.slane %v3880, 4
  %v3883 = vor.u32 %v3882, %v3878
  %v3884 = vrot.slane %v3883, 4
  %v3886 = vshll.u32 %v3477, 16
  %v3888 = vrot.slane %v3886, 5
  %v3889 = vsel %vm1354, %v3884, %v3888
  %v3890 = vshrl.u32 %v3477, 16
  %v3892 = vrot.slane %v3890, 4
  %v3893 = vor.u32 %v3892, %v3888
  %v3894 = vrot.slane %v3893, 4
  %v3896 = vshll.u32 %v3478, 16
  %v3898 = vrot.slane %v3896, 5
  %v3899 = vsel %vm1354, %v3894, %v3898
  %v3900 = vshrl.u32 %v3478, 16
  %v3902 = vrot.slane %v3900, 4
  %v3903 = vor.u32 %v3902, %v3898
  %v3904 = vrot.slane %v3903, 4
  %v3906 = vshll.u32 %v3479, 16
  %v3908 = vrot.slane %v3906, 5
  %v3909 = vsel %vm1354, %v3904, %v3908
  %v3910 = vshrl.u32 %v3479, 16
  %v3912 = vrot.slane %v3910, 4
  %v3913 = vor.u32 %v3912, %v3908
  %v3914 = vrot.slane %v3913, 4
  %v3916 = vshll.u32 %v3480, 16
  %v3918 = vrot.slane %v3916, 5
  %v3919 = vsel %vm1354, %v3914, %v3918
  %v3920 = vshrl.u32 %v3480, 16
  %v3922 = vrot.slane %v3920, 4
  %v3923 = vor.u32 %v3922, %v3918
  %v3924 = vrot.slane %v3923, 4
  %v3926 = vshll.u32 %v3481, 16
  %v3928 = vrot.slane %v3926, 5
  %v3929 = vsel %vm1354, %v3924, %v3928
  %v3930 = vshrl.u32 %v3481, 16
  %v3932 = vrot.slane %v3930, 4
  %v3933 = vor.u32 %v3932, %v3928
  %v3934 = vrot.slane %v3933, 4
  %v3936 = vshll.u32 %v3482, 16
  %v3938 = vrot.slane %v3936, 5
  %v3939 = vsel %vm1354, %v3934, %v3938
  %v3940 = vshrl.u32 %v3482, 16
  %v3942 = vrot.slane %v3940, 4
  %v3943 = vor.u32 %v3942, %v3938
  %v3944 = vrot.slane %v3943, 4
  %v3946 = vshll.u32 %v3483, 16
  %v3948 = vrot.slane %v3946, 5
  %v3949 = vsel %vm1354, %v3944, %v3948
  %v3950 = vshrl.u32 %v3483, 16
  %v3952 = vrot.slane %v3950, 4
  %v3953 = vor.u32 %v3952, %v3948
  %v3954 = vrot.slane %v3953, 4
  %v3956 = vshll.u32 %v3484, 16
  %v3958 = vrot.slane %v3956, 5
  %v3959 = vsel %vm1354, %v3954, %v3958
  %v3960 = vshrl.u32 %v3484, 16
  %v3962 = vrot.slane %v3960, 4
  %v3963 = vor.u32 %v3962, %v3958
  %v3964 = vrot.slane %v3963, 4
  %v3966 = vshll.u32 %v3485, 16
  %v3968 = vrot.slane %v3966, 5
  %v3969 = vsel %vm1354, %v3964, %v3968
  %4018 = vst [vmem:[#allocation3 + $0x1c] sm:$0xf] %v3499
  %4019 = vst [vmem:[#allocation3 + $0x40] sm:$0xf] %v3509
  %4020 = vst [vmem:[#allocation3 + $0x64] sm:$0xf] %v3519
  %4021 = vst [vmem:[#allocation3 + $0x88] sm:$0xf] %v3529
  %4022 = vst [vmem:[#allocation3 + $0xac] sm:$0xf] %v3539
  %4023 = vst [vmem:[#allocation3 + $0xd0] sm:$0xf] %v3549
  %4024 = vst [vmem:[#allocation3 + $0xf4] sm:$0xf] %v3559
  %4025 = vst [vmem:[#allocation3 + $0x118] sm:$0xf] %v3569
  %4026 = vst [vmem:[#allocation3 + $0x13c] sm:$0xf] %v3579
  %4027 = vst [vmem:[#allocation3 + $0x160] sm:$0xf] %v3589
  %4028 = vst [vmem:[#allocation3 + $0x184] sm:$0xf] %v3599
  %4029 = vst [vmem:[#allocation3 + $0x1a8] sm:$0xf] %v3609
  %4030 = vst [vmem:[#allocation3 + $0x1cc] sm:$0xf] %v3619
  %4031 = vst [vmem:[#allocation3 + $0x1f0] sm:$0xf] %v3629
  %4032 = vst [vmem:[#allocation3 + $0x214] sm:$0xf] %v3639
  %4033 = vst [vmem:[#allocation3 + $0x238] sm:$0xf] %v3649
  %4034 = vst [vmem:[#allocation3 + $0x25c] sm:$0xf] %v3659
  %4035 = vst [vmem:[#allocation3 + $0x280] sm:$0xf] %v3669
  %4036 = vst [vmem:[#allocation3 + $0x2a4] sm:$0xf] %v3679
  %4037 = vst [vmem:[#allocation3 + $0x2c8] sm:$0xf] %v3689
  %4038 = vst [vmem:[#allocation3 + $0x2ec] sm:$0xf] %v3699
  %4039 = vst [vmem:[#allocation3 + $0x310] sm:$0xf] %v3709
  %4040 = vst [vmem:[#allocation3 + $0x334] sm:$0xf] %v3719
  %4041 = vst [vmem:[#allocation3 + $0x358] sm:$0xf] %v3729
  %4042 = vst [vmem:[#allocation3 + $0x37c] sm:$0xf] %v3739
  %4043 = vst [vmem:[#allocation3 + $0x3a0] sm:$0xf] %v3749
  %4044 = vst [vmem:[#allocation3 + $0x3c4] sm:$0xf] %v3759
  %4045 = vst [vmem:[#allocation3 + $0x3e8] sm:$0xf] %v3769
  %4046 = vst [vmem:[#allocation3 + $0x40c] sm:$0xf] %v3779
  %4047 = vst [vmem:[#allocation3 + $0x430] sm:$0xf] %v3789
  %4048 = vst [vmem:[#allocation3 + $0x454] sm:$0xf] %v3799
  %4049 = vst [vmem:[#allocation3 + $0x478] sm:$0xf] %v3809
  %4050 = vst [vmem:[#allocation3 + $0x49c] sm:$0xf] %v3819
  %4051 = vst [vmem:[#allocation3 + $0x4c0] sm:$0xf] %v3829
  %4052 = vst [vmem:[#allocation3 + $0x4e4] sm:$0xf] %v3839
  %4053 = vst [vmem:[#allocation3 + $0x508] sm:$0xf] %v3849
  %4054 = vst [vmem:[#allocation3 + $0x52c] sm:$0xf] %v3859
  %4055 = vst [vmem:[#allocation3 + $0x550] sm:$0xf] %v3869
  %4056 = vst [vmem:[#allocation3 + $0x574] sm:$0xf] %v3879
  %4057 = vst [vmem:[#allocation3 + $0x598] sm:$0xf] %v3889
  %4058 = vst [vmem:[#allocation3 + $0x5bc] sm:$0xf] %v3899
  %4059 = vst [vmem:[#allocation3 + $0x5e0] sm:$0xf] %v3909
  %4060 = vst [vmem:[#allocation3 + $0x604] sm:$0xf] %v3919
  %4061 = vst [vmem:[#allocation3 + $0x628] sm:$0xf] %v3929
  %4062 = vst [vmem:[#allocation3 + $0x64c] sm:$0xf] %v3939
  %4063 = vst [vmem:[#allocation3 + $0x670] sm:$0xf] %v3949
  %4064 = vst [vmem:[#allocation3 + $0x694] sm:$0xf] %v3959
  %4065 = vst [vmem:[#allocation3 + $0x6b8] sm:$0xf] %v3969
  %v4066 = vld [vmem:[#allocation2 + $0x18] sm:$0xe]
  %v4067 = vld [vmem:[#allocation2 + $0x1c] sm:$0xf]
  %v4068 = vld [vmem:[#allocation2 + $0x20] sm:$0xf]
  %v4069 = vld [vmem:[#allocation2 + $0x24] sm:$0xf]
  %v4070 = vld [vmem:[#allocation2 + $0x28] sm:$0xf]
  %v4071 = vld [vmem:[#allocation2 + $0x2c] sm:$0xf]
  %v4072 = vld [vmem:[#allocation2 + $0x30] sm:$0xf]
  %v4073 = vld [vmem:[#allocation2 + $0x34] sm:$0xf]
  %v4074 = vld [vmem:[#allocation2 + $0x38] sm:$0xf]
  %v4075 = vld [vmem:[#allocation2 + $0x3c] sm:$0xf]
  %v4076 = vld [vmem:[#allocation2 + $0x40] sm:$0xf]
  %v4077 = vld [vmem:[#allocation2 + $0x44] sm:$0xf]
  %v4078 = vld [vmem:[#allocation2 + $0x48] sm:$0xf]
  %v4079 = vld [vmem:[#allocation2 + $0x4c] sm:$0xf]
  %v4080 = vld [vmem:[#allocation2 + $0x50] sm:$0xf]
  %v4081 = vld [vmem:[#allocation2 + $0x54] sm:$0xf]
  %v4082 = vld [vmem:[#allocation2 + $0x58] sm:$0xf]
  %v4083 = vld [vmem:[#allocation2 + $0x5c] sm:$0xf]
  %v4084 = vld [vmem:[#allocation2 + $0x60] sm:$0xf]
  %v4085 = vld [vmem:[#allocation2 + $0x64] sm:$0xf]
  %v4086 = vld [vmem:[#allocation2 + $0x68] sm:$0xf]
  %v4087 = vld [vmem:[#allocation2 + $0x6c] sm:$0xf]
  %v4088 = vld [vmem:[#allocation2 + $0x70] sm:$0xf]
  %v4089 = vld [vmem:[#allocation2 + $0x74] sm:$0xf]
  %v4090 = vld [vmem:[#allocation2 + $0x78] sm:$0xf]
  %v4091 = vld [vmem:[#allocation2 + $0x7c] sm:$0xf]
  %v4092 = vld [vmem:[#allocation2 + $0x80] sm:$0xf]
  %v4093 = vld [vmem:[#allocation2 + $0x84] sm:$0xf]
  %v4094 = vld [vmem:[#allocation2 + $0x88] sm:$0xf]
  %v4095 = vld [vmem:[#allocation2 + $0x8c] sm:$0xf]
  %v4096 = vld [vmem:[#allocation2 + $0x90] sm:$0xf]
  %v4097 = vld [vmem:[#allocation2 + $0x94] sm:$0xf]
  %v4098 = vld [vmem:[#allocation2 + $0x98] sm:$0xf]
  %v4099 = vld [vmem:[#allocation2 + $0x9c] sm:$0xf]
  %v4100 = vld [vmem:[#allocation2 + $0xa0] sm:$0xf]
  %v4101 = vld [vmem:[#allocation2 + $0xa4] sm:$0xf]
  %v4102 = vld [vmem:[#allocation2 + $0xa8] sm:$0xf]
  %v4103 = vld [vmem:[#allocation2 + $0xac] sm:$0xf]
  %v4104 = vld [vmem:[#allocation2 + $0xb0] sm:$0xf]
  %v4105 = vld [vmem:[#allocation2 + $0xb4] sm:$0xf]
  %v4106 = vld [vmem:[#allocation2 + $0xb8] sm:$0xf]
  %v4107 = vld [vmem:[#allocation2 + $0xbc] sm:$0xf]
  %v4108 = vld [vmem:[#allocation2 + $0xc0] sm:$0xf]
  %v4109 = vld [vmem:[#allocation2 + $0xc4] sm:$0xf]
  %v4110 = vld [vmem:[#allocation2 + $0xc8] sm:$0xf]
  %v4111 = vld [vmem:[#allocation2 + $0xcc] sm:$0xf]
  %v4112 = vld [vmem:[#allocation2 + $0xd0] sm:$0xf]
  %v4113 = vld [vmem:[#allocation2 + $0xd4] sm:$0xf]
  %v4114 = vld [vmem:[#allocation2 + $0xd8] sm:$0x1]
  %v4164 = vrot.slane %v4066, 5
  %v4165 = vrot.slane %v4164, 4
  %v4166 = vrot.slane %v4067, 5
  %v4167 = vsel %vm2035, %v4165, %v4166
  %v4168 = vrot.slane %v4166, 4
  %v4169 = vrot.slane %v4068, 5
  %v4170 = vsel %vm2035, %v4168, %v4169
  %v4171 = vrot.slane %v4169, 4
  %v4172 = vrot.slane %v4069, 5
  %v4173 = vsel %vm2035, %v4171, %v4172
  %v4174 = vrot.slane %v4172, 4
  %v4175 = vrot.slane %v4070, 5
  %v4176 = vsel %vm2035, %v4174, %v4175
  %v4177 = vrot.slane %v4175, 4
  %v4178 = vrot.slane %v4071, 5
  %v4179 = vsel %vm2035, %v4177, %v4178
  %v4180 = vrot.slane %v4178, 4
  %v4181 = vrot.slane %v4072, 5
  %v4182 = vsel %vm2035, %v4180, %v4181
  %v4183 = vrot.slane %v4181, 4
  %v4184 = vrot.slane %v4073, 5
  %v4185 = vsel %vm2035, %v4183, %v4184
  %v4186 = vrot.slane %v4184, 4
  %v4187 = vrot.slane %v4074, 5
  %v4188 = vsel %vm2035, %v4186, %v4187
  %v4189 = vrot.slane %v4187, 4
  %v4190 = vrot.slane %v4075, 5
  %v4191 = vsel %vm2035, %v4189, %v4190
  %v4192 = vrot.slane %v4190, 4
  %v4193 = vrot.slane %v4076, 5
  %v4194 = vsel %vm2035, %v4192, %v4193
  %v4195 = vrot.slane %v4193, 4
  %v4196 = vrot.slane %v4077, 5
  %v4197 = vsel %vm2035, %v4195, %v4196
  %v4198 = vrot.slane %v4196, 4
  %v4199 = vrot.slane %v4078, 5
  %v4200 = vsel %vm2035, %v4198, %v4199
  %v4201 = vrot.slane %v4199, 4
  %v4202 = vrot.slane %v4079, 5
  %v4203 = vsel %vm2035, %v4201, %v4202
  %v4204 = vrot.slane %v4202, 4
  %v4205 = vrot.slane %v4080, 5
  %v4206 = vsel %vm2035, %v4204, %v4205
  %v4207 = vrot.slane %v4205, 4
  %v4208 = vrot.slane %v4081, 5
  %v4209 = vsel %vm2035, %v4207, %v4208
  %v4210 = vrot.slane %v4208, 4
  %v4211 = vrot.slane %v4082, 5
  %v4212 = vsel %vm2035, %v4210, %v4211
  %v4213 = vrot.slane %v4211, 4
  %v4214 = vrot.slane %v4083, 5
  %v4215 = vsel %vm2035, %v4213, %v4214
  %v4216 = vrot.slane %v4214, 4
  %v4217 = vrot.slane %v4084, 5
  %v4218 = vsel %vm2035, %v4216, %v4217
  %v4219 = vrot.slane %v4217, 4
  %v4220 = vrot.slane %v4085, 5
  %v4221 = vsel %vm2035, %v4219, %v4220
  %v4222 = vrot.slane %v4220, 4
  %v4223 = vrot.slane %v4086, 5
  %v4224 = vsel %vm2035, %v4222, %v4223
  %v4225 = vrot.slane %v4223, 4
  %v4226 = vrot.slane %v4087, 5
  %v4227 = vsel %vm2035, %v4225, %v4226
  %v4228 = vrot.slane %v4226, 4
  %v4229 = vrot.slane %v4088, 5
  %v4230 = vsel %vm2035, %v4228, %v4229
  %v4231 = vrot.slane %v4229, 4
  %v4232 = vrot.slane %v4089, 5
  %v4233 = vsel %vm2035, %v4231, %v4232
  %v4234 = vrot.slane %v4232, 4
  %v4235 = vrot.slane %v4090, 5
  %v4236 = vsel %vm2035, %v4234, %v4235
  %v4237 = vrot.slane %v4235, 4
  %v4238 = vrot.slane %v4091, 5
  %v4239 = vsel %vm2035, %v4237, %v4238
  %v4240 = vrot.slane %v4238, 4
  %v4241 = vrot.slane %v4092, 5
  %v4242 = vsel %vm2035, %v4240, %v4241
  %v4243 = vrot.slane %v4241, 4
  %v4244 = vrot.slane %v4093, 5
  %v4245 = vsel %vm2035, %v4243, %v4244
  %v4246 = vrot.slane %v4244, 4
  %v4247 = vrot.slane %v4094, 5
  %v4248 = vsel %vm2035, %v4246, %v4247
  %v4249 = vrot.slane %v4247, 4
  %v4250 = vrot.slane %v4095, 5
  %v4251 = vsel %vm2035, %v4249, %v4250
  %v4252 = vrot.slane %v4250, 4
  %v4253 = vrot.slane %v4096, 5
  %v4254 = vsel %vm2035, %v4252, %v4253
  %v4255 = vrot.slane %v4253, 4
  %v4256 = vrot.slane %v4097, 5
  %v4257 = vsel %vm2035, %v4255, %v4256
  %v4258 = vrot.slane %v4256, 4
  %v4259 = vrot.slane %v4098, 5
  %v4260 = vsel %vm2035, %v4258, %v4259
  %v4261 = vrot.slane %v4259, 4
  %v4262 = vrot.slane %v4099, 5
  %v4263 = vsel %vm2035, %v4261, %v4262
  %v4264 = vrot.slane %v4262, 4
  %v4265 = vrot.slane %v4100, 5
  %v4266 = vsel %vm2035, %v4264, %v4265
  %v4267 = vrot.slane %v4265, 4
  %v4268 = vrot.slane %v4101, 5
  %v4269 = vsel %vm2035, %v4267, %v4268
  %v4270 = vrot.slane %v4268, 4
  %v4271 = vrot.slane %v4102, 5
  %v4272 = vsel %vm2035, %v4270, %v4271
  %v4273 = vrot.slane %v4271, 4
  %v4274 = vrot.slane %v4103, 5
  %v4275 = vsel %vm2035, %v4273, %v4274
  %v4276 = vrot.slane %v4274, 4
  %v4277 = vrot.slane %v4104, 5
  %v4278 = vsel %vm2035, %v4276, %v4277
  %v4279 = vrot.slane %v4277, 4
  %v4280 = vrot.slane %v4105, 5
  %v4281 = vsel %vm2035, %v4279, %v4280
  %v4282 = vrot.slane %v4280, 4
  %v4283 = vrot.slane %v4106, 5
  %v4284 = vsel %vm2035, %v4282, %v4283
  %v4285 = vrot.slane %v4283, 4
  %v4286 = vrot.slane %v4107, 5
  %v4287 = vsel %vm2035, %v4285, %v4286
  %v4288 = vrot.slane %v4286, 4
  %v4289 = vrot.slane %v4108, 5
  %v4290 = vsel %vm2035, %v4288, %v4289
  %v4291 = vrot.slane %v4289, 4
  %v4292 = vrot.slane %v4109, 5
  %v4293 = vsel %vm2035, %v4291, %v4292
  %v4294 = vrot.slane %v4292, 4
  %v4295 = vrot.slane %v4110, 5
  %v4296 = vsel %vm2035, %v4294, %v4295
  %v4297 = vrot.slane %v4295, 4
  %v4298 = vrot.slane %v4111, 5
  %v4299 = vsel %vm2035, %v4297, %v4298
  %v4300 = vrot.slane %v4298, 4
  %v4301 = vrot.slane %v4112, 5
  %v4302 = vsel %vm2035, %v4300, %v4301
  %v4303 = vrot.slane %v4301, 4
  %v4304 = vrot.slane %v4113, 5
  %v4305 = vsel %vm2035, %v4303, %v4304
  %v4306 = vrot.slane %v4304, 4
  %v4307 = vrot.slane %v4114, 5
  %v4308 = vsel %vm2035, %v4306, %v4307
  %4357 = vst [vmem:[#allocation3 + $0x20] sm:$0xf] %v4167
  %4358 = vst [vmem:[#allocation3 + $0x44] sm:$0xf] %v4170
  %4359 = vst [vmem:[#allocation3 + $0x68] sm:$0xf] %v4173
  %4360 = vst [vmem:[#allocation3 + $0x8c] sm:$0xf] %v4176
  %4361 = vst [vmem:[#allocation3 + $0xb0] sm:$0xf] %v4179
  %4362 = vst [vmem:[#allocation3 + $0xd4] sm:$0xf] %v4182
  %4363 = vst [vmem:[#allocation3 + $0xf8] sm:$0xf] %v4185
  %4364 = vst [vmem:[#allocation3 + $0x11c] sm:$0xf] %v4188
  %4365 = vst [vmem:[#allocation3 + $0x140] sm:$0xf] %v4191
  %4366 = vst [vmem:[#allocation3 + $0x164] sm:$0xf] %v4194
  %4367 = vst [vmem:[#allocation3 + $0x188] sm:$0xf] %v4197
  %4368 = vst [vmem:[#allocation3 + $0x1ac] sm:$0xf] %v4200
  %4369 = vst [vmem:[#allocation3 + $0x1d0] sm:$0xf] %v4203
  %4370 = vst [vmem:[#allocation3 + $0x1f4] sm:$0xf] %v4206
  %4371 = vst [vmem:[#allocation3 + $0x218] sm:$0xf] %v4209
  %4372 = vst [vmem:[#allocation3 + $0x23c] sm:$0xf] %v4212
  %4373 = vst [vmem:[#allocation3 + $0x260] sm:$0xf] %v4215
  %4374 = vst [vmem:[#allocation3 + $0x284] sm:$0xf] %v4218
  %4375 = vst [vmem:[#allocation3 + $0x2a8] sm:$0xf] %v4221
  %4376 = vst [vmem:[#allocation3 + $0x2cc] sm:$0xf] %v4224
  %4377 = vst [vmem:[#allocation3 + $0x2f0] sm:$0xf] %v4227
  %4378 = vst [vmem:[#allocation3 + $0x314] sm:$0xf] %v4230
  %4379 = vst [vmem:[#allocation3 + $0x338] sm:$0xf] %v4233
  %4380 = vst [vmem:[#allocation3 + $0x35c] sm:$0xf] %v4236
  %4381 = vst [vmem:[#allocation3 + $0x380] sm:$0xf] %v4239
  %4382 = vst [vmem:[#allocation3 + $0x3a4] sm:$0xf] %v4242
  %4383 = vst [vmem:[#allocation3 + $0x3c8] sm:$0xf] %v4245
  %4384 = vst [vmem:[#allocation3 + $0x3ec] sm:$0xf] %v4248
  %4385 = vst [vmem:[#allocation3 + $0x410] sm:$0xf] %v4251
  %4386 = vst [vmem:[#allocation3 + $0x434] sm:$0xf] %v4254
  %4387 = vst [vmem:[#allocation3 + $0x458] sm:$0xf] %v4257
  %4388 = vst [vmem:[#allocation3 + $0x47c] sm:$0xf] %v4260
  %4389 = vst [vmem:[#allocation3 + $0x4a0] sm:$0xf] %v4263
  %4390 = vst [vmem:[#allocation3 + $0x4c4] sm:$0xf] %v4266
  %4391 = vst [vmem:[#allocation3 + $0x4e8] sm:$0xf] %v4269
  %4392 = vst [vmem:[#allocation3 + $0x50c] sm:$0xf] %v4272
  %4393 = vst [vmem:[#allocation3 + $0x530] sm:$0xf] %v4275
  %4394 = vst [vmem:[#allocation3 + $0x554] sm:$0xf] %v4278
  %4395 = vst [vmem:[#allocation3 + $0x578] sm:$0xf] %v4281
  %4396 = vst [vmem:[#allocation3 + $0x59c] sm:$0xf] %v4284
  %4397 = vst [vmem:[#allocation3 + $0x5c0] sm:$0xf] %v4287
  %4398 = vst [vmem:[#allocation3 + $0x5e4] sm:$0xf] %v4290
  %4399 = vst [vmem:[#allocation3 + $0x608] sm:$0xf] %v4293
  %4400 = vst [vmem:[#allocation3 + $0x62c] sm:$0xf] %v4296
  %4401 = vst [vmem:[#allocation3 + $0x650] sm:$0xf] %v4299
  %4402 = vst [vmem:[#allocation3 + $0x674] sm:$0xf] %v4302
  %4403 = vst [vmem:[#allocation3 + $0x698] sm:$0xf] %v4305
  %4404 = vst [vmem:[#allocation3 + $0x6bc] sm:$0xf] %v4308
  %v4405 = vld [vmem:[#allocation2 + $0xdc] sm:$0xf]
  %v4406 = vld [vmem:[#allocation2 + $0xe0] sm:$0xf]
  %v4407 = vld [vmem:[#allocation2 + $0xe4] sm:$0xf]
  %v4408 = vld [vmem:[#allocation2 + $0xe8] sm:$0xf]
  %v4409 = vld [vmem:[#allocation2 + $0xec] sm:$0xf]
  %v4410 = vld [vmem:[#allocation2 + $0xf0] sm:$0xf]
  %v4411 = vld [vmem:[#allocation2 + $0xf4] sm:$0xf]
  %v4412 = vld [vmem:[#allocation2 + $0xf8] sm:$0xf]
  %v4413 = vld [vmem:[#allocation2 + $0xfc] sm:$0xf]
  %v4414 = vld [vmem:[#allocation2 + $0x100] sm:$0xf]
  %v4415 = vld [vmem:[#allocation2 + $0x104] sm:$0xf]
  %v4416 = vld [vmem:[#allocation2 + $0x108] sm:$0xf]
  %v4417 = vld [vmem:[#allocation2 + $0x10c] sm:$0xf]
  %v4418 = vld [vmem:[#allocation2 + $0x110] sm:$0xf]
  %v4419 = vld [vmem:[#allocation2 + $0x114] sm:$0xf]
  %v4420 = vld [vmem:[#allocation2 + $0x118] sm:$0xf]
  %v4421 = vld [vmem:[#allocation2 + $0x11c] sm:$0xf]
  %v4422 = vld [vmem:[#allocation2 + $0x120] sm:$0xf]
  %v4423 = vld [vmem:[#allocation2 + $0x124] sm:$0xf]
  %v4424 = vld [vmem:[#allocation2 + $0x128] sm:$0xf]
  %v4425 = vld [vmem:[#allocation2 + $0x12c] sm:$0xf]
  %v4426 = vld [vmem:[#allocation2 + $0x130] sm:$0xf]
  %v4427 = vld [vmem:[#allocation2 + $0x134] sm:$0xf]
  %v4428 = vld [vmem:[#allocation2 + $0x138] sm:$0xf]
  %v4429 = vld [vmem:[#allocation2 + $0x13c] sm:$0xf]
  %v4430 = vld [vmem:[#allocation2 + $0x140] sm:$0xf]
  %v4431 = vld [vmem:[#allocation2 + $0x144] sm:$0xf]
  %v4432 = vld [vmem:[#allocation2 + $0x148] sm:$0xf]
  %v4433 = vld [vmem:[#allocation2 + $0x14c] sm:$0xf]
  %v4434 = vld [vmem:[#allocation2 + $0x150] sm:$0xf]
  %v4435 = vld [vmem:[#allocation2 + $0x154] sm:$0xf]
  %v4436 = vld [vmem:[#allocation2 + $0x158] sm:$0xf]
  %v4437 = vld [vmem:[#allocation2 + $0x15c] sm:$0xf]
  %v4438 = vld [vmem:[#allocation2 + $0x160] sm:$0xf]
  %v4439 = vld [vmem:[#allocation2 + $0x164] sm:$0xf]
  %v4440 = vld [vmem:[#allocation2 + $0x168] sm:$0xf]
  %v4441 = vld [vmem:[#allocation2 + $0x16c] sm:$0xf]
  %v4442 = vld [vmem:[#allocation2 + $0x170] sm:$0xf]
  %v4443 = vld [vmem:[#allocation2 + $0x174] sm:$0xf]
  %v4444 = vld [vmem:[#allocation2 + $0x178] sm:$0xf]
  %v4445 = vld [vmem:[#allocation2 + $0x17c] sm:$0xf]
  %v4446 = vld [vmem:[#allocation2 + $0x180] sm:$0xf]
  %v4447 = vld [vmem:[#allocation2 + $0x184] sm:$0xf]
  %v4448 = vld [vmem:[#allocation2 + $0x188] sm:$0xf]
  %v4449 = vld [vmem:[#allocation2 + $0x18c] sm:$0xf]
  %v4450 = vld [vmem:[#allocation2 + $0x190] sm:$0xf]
  %v4451 = vld [vmem:[#allocation2 + $0x194] sm:$0xf]
  %v4452 = vld [vmem:[#allocation2 + $0x198] sm:$0xf]
  %4453 = vst [vmem:[#allocation3 + $0x6c0] sm:$0xf] %v4405
  %4454 = vst [vmem:[#allocation3 + $0x6e4] sm:$0xf] %v4406
  %4455 = vst [vmem:[#allocation3 + $0x708] sm:$0xf] %v4407
  %4456 = vst [vmem:[#allocation3 + $0x72c] sm:$0xf] %v4408
  %4457 = vst [vmem:[#allocation3 + $0x750] sm:$0xf] %v4409
  %4458 = vst [vmem:[#allocation3 + $0x774] sm:$0xf] %v4410
  %4459 = vst [vmem:[#allocation3 + $0x798] sm:$0xf] %v4411
  %4460 = vst [vmem:[#allocation3 + $0x7bc] sm:$0xf] %v4412
  %4461 = vst [vmem:[#allocation3 + $0x7e0] sm:$0xf] %v4413
  %4462 = vst [vmem:[#allocation3 + $0x804] sm:$0xf] %v4414
  %4463 = vst [vmem:[#allocation3 + $0x828] sm:$0xf] %v4415
  %4464 = vst [vmem:[#allocation3 + $0x84c] sm:$0xf] %v4416
  %4465 = vst [vmem:[#allocation3 + $0x870] sm:$0xf] %v4417
  %4466 = vst [vmem:[#allocation3 + $0x894] sm:$0xf] %v4418
  %4467 = vst [vmem:[#allocation3 + $0x8b8] sm:$0xf] %v4419
  %4468 = vst [vmem:[#allocation3 + $0x8dc] sm:$0xf] %v4420
  %4469 = vst [vmem:[#allocation3 + $0x900] sm:$0xf] %v4421
  %4470 = vst [vmem:[#allocation3 + $0x924] sm:$0xf] %v4422
  %4471 = vst [vmem:[#allocation3 + $0x948] sm:$0xf] %v4423
  %4472 = vst [vmem:[#allocation3 + $0x96c] sm:$0xf] %v4424
  %4473 = vst [vmem:[#allocation3 + $0x990] sm:$0xf] %v4425
  %4474 = vst [vmem:[#allocation3 + $0x9b4] sm:$0xf] %v4426
  %4475 = vst [vmem:[#allocation3 + $0x9d8] sm:$0xf] %v4427
  %4476 = vst [vmem:[#allocation3 + $0x9fc] sm:$0xf] %v4428
  %4477 = vst [vmem:[#allocation3 + $0xa20] sm:$0xf] %v4429
  %4478 = vst [vmem:[#allocation3 + $0xa44] sm:$0xf] %v4430
  %4479 = vst [vmem:[#allocation3 + $0xa68] sm:$0xf] %v4431
  %4480 = vst [vmem:[#allocation3 + $0xa8c] sm:$0xf] %v4432
  %4481 = vst [vmem:[#allocation3 + $0xab0] sm:$0xf] %v4433
  %4482 = vst [vmem:[#allocation3 + $0xad4] sm:$0xf] %v4434
  %4483 = vst [vmem:[#allocation3 + $0xaf8] sm:$0xf] %v4435
  %4484 = vst [vmem:[#allocation3 + $0xb1c] sm:$0xf] %v4436
  %4485 = vst [vmem:[#allocation3 + $0xb40] sm:$0xf] %v4437
  %4486 = vst [vmem:[#allocation3 + $0xb64] sm:$0xf] %v4438
  %4487 = vst [vmem:[#allocation3 + $0xb88] sm:$0xf] %v4439
  %4488 = vst [vmem:[#allocation3 + $0xbac] sm:$0xf] %v4440
  %4489 = vst [vmem:[#allocation3 + $0xbd0] sm:$0xf] %v4441
  %4490 = vst [vmem:[#allocation3 + $0xbf4] sm:$0xf] %v4442
  %4491 = vst [vmem:[#allocation3 + $0xc18] sm:$0xf] %v4443
  %4492 = vst [vmem:[#allocation3 + $0xc3c] sm:$0xf] %v4444
  %4493 = vst [vmem:[#allocation3 + $0xc60] sm:$0xf] %v4445
  %4494 = vst [vmem:[#allocation3 + $0xc84] sm:$0xf] %v4446
  %4495 = vst [vmem:[#allocation3 + $0xca8] sm:$0xf] %v4447
  %4496 = vst [vmem:[#allocation3 + $0xccc] sm:$0xf] %v4448
  %4497 = vst [vmem:[#allocation3 + $0xcf0] sm:$0xf] %v4449
  %4498 = vst [vmem:[#allocation3 + $0xd14] sm:$0xf] %v4450
  %4499 = vst [vmem:[#allocation3 + $0xd38] sm:$0xf] %v4451
  %4500 = vst [vmem:[#allocation3 + $0xd5c] sm:$0xf] %v4452
  %v4501 = vld [vmem:[#allocation2 + $0xdc] sm:$0xf]
  %v4502 = vld [vmem:[#allocation2 + $0xe0] sm:$0xf]
  %v4503 = vld [vmem:[#allocation2 + $0xe4] sm:$0xf]
  %v4504 = vld [vmem:[#allocation2 + $0xe8] sm:$0xf]
  %v4505 = vld [vmem:[#allocation2 + $0xec] sm:$0xf]
  %v4506 = vld [vmem:[#allocation2 + $0xf0] sm:$0xf]
  %v4507 = vld [vmem:[#allocation2 + $0xf4] sm:$0xf]
  %v4508 = vld [vmem:[#allocation2 + $0xf8] sm:$0xf]
  %v4509 = vld [vmem:[#allocation2 + $0xfc] sm:$0xf]
  %v4510 = vld [vmem:[#allocation2 + $0x100] sm:$0xf]
  %v4511 = vld [vmem:[#allocation2 + $0x104] sm:$0xf]
  %v4512 = vld [vmem:[#allocation2 + $0x108] sm:$0xf]
  %v4513 = vld [vmem:[#allocation2 + $0x10c] sm:$0xf]
  %v4514 = vld [vmem:[#allocation2 + $0x110] sm:$0xf]
  %v4515 = vld [vmem:[#allocation2 + $0x114] sm:$0xf]
  %v4516 = vld [vmem:[#allocation2 + $0x118] sm:$0xf]
  %v4517 = vld [vmem:[#allocation2 + $0x11c] sm:$0xf]
  %v4518 = vld [vmem:[#allocation2 + $0x120] sm:$0xf]
  %v4519 = vld [vmem:[#allocation2 + $0x124] sm:$0xf]
  %v4520 = vld [vmem:[#allocation2 + $0x128] sm:$0xf]
  %v4521 = vld [vmem:[#allocation2 + $0x12c] sm:$0xf]
  %v4522 = vld [vmem:[#allocation2 + $0x130] sm:$0xf]
  %v4523 = vld [vmem:[#allocation2 + $0x134] sm:$0xf]
  %v4524 = vld [vmem:[#allocation2 + $0x138] sm:$0xf]
  %v4525 = vld [vmem:[#allocation2 + $0x13c] sm:$0xf]
  %v4526 = vld [vmem:[#allocation2 + $0x140] sm:$0xf]
  %v4527 = vld [vmem:[#allocation2 + $0x144] sm:$0xf]
  %v4528 = vld [vmem:[#allocation2 + $0x148] sm:$0xf]
  %v4529 = vld [vmem:[#allocation2 + $0x14c] sm:$0xf]
  %v4530 = vld [vmem:[#allocation2 + $0x150] sm:$0xf]
  %v4531 = vld [vmem:[#allocation2 + $0x154] sm:$0xf]
  %v4532 = vld [vmem:[#allocation2 + $0x158] sm:$0xf]
  %v4533 = vld [vmem:[#allocation2 + $0x15c] sm:$0xf]
  %v4534 = vld [vmem:[#allocation2 + $0x160] sm:$0xf]
  %v4535 = vld [vmem:[#allocation2 + $0x164] sm:$0xf]
  %v4536 = vld [vmem:[#allocation2 + $0x168] sm:$0xf]
  %v4537 = vld [vmem:[#allocation2 + $0x16c] sm:$0xf]
  %v4538 = vld [vmem:[#allocation2 + $0x170] sm:$0xf]
  %v4539 = vld [vmem:[#allocation2 + $0x174] sm:$0xf]
  %v4540 = vld [vmem:[#allocation2 + $0x178] sm:$0xf]
  %v4541 = vld [vmem:[#allocation2 + $0x17c] sm:$0xf]
  %v4542 = vld [vmem:[#allocation2 + $0x180] sm:$0xf]
  %v4543 = vld [vmem:[#allocation2 + $0x184] sm:$0xf]
  %v4544 = vld [vmem:[#allocation2 + $0x188] sm:$0xf]
  %v4545 = vld [vmem:[#allocation2 + $0x18c] sm:$0xf]
  %v4546 = vld [vmem:[#allocation2 + $0x190] sm:$0xf]
  %v4547 = vld [vmem:[#allocation2 + $0x194] sm:$0xf]
  %v4548 = vld [vmem:[#allocation2 + $0x198] sm:$0xf]
  %v4549 = vld [vmem:[#allocation2 + $0x19c] sm:$0x1]
  %v4551 = vshrl.u32 %v4501, 16
  %v4553 = vrot.slane %v4551, 4
  %v4554 = vshll.u32 %v4501, 16
  %v4556 = vrot.slane %v4554, 5
  %v4557 = vor.u32 %v4553, %v4556
  %v4558 = vrot.slane %v4557, 4
  %v4560 = vshll.u32 %v4502, 16
  %v4562 = vrot.slane %v4560, 5
  %v4563 = vsel %vm1354, %v4558, %v4562
  %v4564 = vshrl.u32 %v4502, 16
  %v4566 = vrot.slane %v4564, 4
  %v4567 = vor.u32 %v4566, %v4562
  %v4568 = vrot.slane %v4567, 4
  %v4570 = vshll.u32 %v4503, 16
  %v4572 = vrot.slane %v4570, 5
  %v4573 = vsel %vm1354, %v4568, %v4572
  %v4574 = vshrl.u32 %v4503, 16
  %v4576 = vrot.slane %v4574, 4
  %v4577 = vor.u32 %v4576, %v4572
  %v4578 = vrot.slane %v4577, 4
  %v4580 = vshll.u32 %v4504, 16
  %v4582 = vrot.slane %v4580, 5
  %v4583 = vsel %vm1354, %v4578, %v4582
  %v4584 = vshrl.u32 %v4504, 16
  %v4586 = vrot.slane %v4584, 4
  %v4587 = vor.u32 %v4586, %v4582
  %v4588 = vrot.slane %v4587, 4
  %v4590 = vshll.u32 %v4505, 16
  %v4592 = vrot.slane %v4590, 5
  %v4593 = vsel %vm1354, %v4588, %v4592
  %v4594 = vshrl.u32 %v4505, 16
  %v4596 = vrot.slane %v4594, 4
  %v4597 = vor.u32 %v4596, %v4592
  %v4598 = vrot.slane %v4597, 4
  %v4600 = vshll.u32 %v4506, 16
  %v4602 = vrot.slane %v4600, 5
  %v4603 = vsel %vm1354, %v4598, %v4602
  %v4604 = vshrl.u32 %v4506, 16
  %v4606 = vrot.slane %v4604, 4
  %v4607 = vor.u32 %v4606, %v4602
  %v4608 = vrot.slane %v4607, 4
  %v4610 = vshll.u32 %v4507, 16
  %v4612 = vrot.slane %v4610, 5
  %v4613 = vsel %vm1354, %v4608, %v4612
  %v4614 = vshrl.u32 %v4507, 16
  %v4616 = vrot.slane %v4614, 4
  %v4617 = vor.u32 %v4616, %v4612
  %v4618 = vrot.slane %v4617, 4
  %v4620 = vshll.u32 %v4508, 16
  %v4622 = vrot.slane %v4620, 5
  %v4623 = vsel %vm1354, %v4618, %v4622
  %v4624 = vshrl.u32 %v4508, 16
  %v4626 = vrot.slane %v4624, 4
  %v4627 = vor.u32 %v4626, %v4622
  %v4628 = vrot.slane %v4627, 4
  %v4630 = vshll.u32 %v4509, 16
  %v4632 = vrot.slane %v4630, 5
  %v4633 = vsel %vm1354, %v4628, %v4632
  %v4634 = vshrl.u32 %v4509, 16
  %v4636 = vrot.slane %v4634, 4
  %v4637 = vor.u32 %v4636, %v4632
  %v4638 = vrot.slane %v4637, 4
  %v4640 = vshll.u32 %v4510, 16
  %v4642 = vrot.slane %v4640, 5
  %v4643 = vsel %vm1354, %v4638, %v4642
  %v4644 = vshrl.u32 %v4510, 16
  %v4646 = vrot.slane %v4644, 4
  %v4647 = vor.u32 %v4646, %v4642
  %v4648 = vrot.slane %v4647, 4
  %v4650 = vshll.u32 %v4511, 16
  %v4652 = vrot.slane %v4650, 5
  %v4653 = vsel %vm1354, %v4648, %v4652
  %v4654 = vshrl.u32 %v4511, 16
  %v4656 = vrot.slane %v4654, 4
  %v4657 = vor.u32 %v4656, %v4652
  %v4658 = vrot.slane %v4657, 4
  %v4660 = vshll.u32 %v4512, 16
  %v4662 = vrot.slane %v4660, 5
  %v4663 = vsel %vm1354, %v4658, %v4662
  %v4664 = vshrl.u32 %v4512, 16
  %v4666 = vrot.slane %v4664, 4
  %v4667 = vor.u32 %v4666, %v4662
  %v4668 = vrot.slane %v4667, 4
  %v4670 = vshll.u32 %v4513, 16
  %v4672 = vrot.slane %v4670, 5
  %v4673 = vsel %vm1354, %v4668, %v4672
  %v4674 = vshrl.u32 %v4513, 16
  %v4676 = vrot.slane %v4674, 4
  %v4677 = vor.u32 %v4676, %v4672
  %v4678 = vrot.slane %v4677, 4
  %v4680 = vshll.u32 %v4514, 16
  %v4682 = vrot.slane %v4680, 5
  %v4683 = vsel %vm1354, %v4678, %v4682
  %v4684 = vshrl.u32 %v4514, 16
  %v4686 = vrot.slane %v4684, 4
  %v4687 = vor.u32 %v4686, %v4682
  %v4688 = vrot.slane %v4687, 4
  %v4690 = vshll.u32 %v4515, 16
  %v4692 = vrot.slane %v4690, 5
  %v4693 = vsel %vm1354, %v4688, %v4692
  %v4694 = vshrl.u32 %v4515, 16
  %v4696 = vrot.slane %v4694, 4
  %v4697 = vor.u32 %v4696, %v4692
  %v4698 = vrot.slane %v4697, 4
  %v4700 = vshll.u32 %v4516, 16
  %v4702 = vrot.slane %v4700, 5
  %v4703 = vsel %vm1354, %v4698, %v4702
  %v4704 = vshrl.u32 %v4516, 16
  %v4706 = vrot.slane %v4704, 4
  %v4707 = vor.u32 %v4706, %v4702
  %v4708 = vrot.slane %v4707, 4
  %v4710 = vshll.u32 %v4517, 16
  %v4712 = vrot.slane %v4710, 5
  %v4713 = vsel %vm1354, %v4708, %v4712
  %v4714 = vshrl.u32 %v4517, 16
  %v4716 = vrot.slane %v4714, 4
  %v4717 = vor.u32 %v4716, %v4712
  %v4718 = vrot.slane %v4717, 4
  %v4720 = vshll.u32 %v4518, 16
  %v4722 = vrot.slane %v4720, 5
  %v4723 = vsel %vm1354, %v4718, %v4722
  %v4724 = vshrl.u32 %v4518, 16
  %v4726 = vrot.slane %v4724, 4
  %v4727 = vor.u32 %v4726, %v4722
  %v4728 = vrot.slane %v4727, 4
  %v4730 = vshll.u32 %v4519, 16
  %v4732 = vrot.slane %v4730, 5
  %v4733 = vsel %vm1354, %v4728, %v4732
  %v4734 = vshrl.u32 %v4519, 16
  %v4736 = vrot.slane %v4734, 4
  %v4737 = vor.u32 %v4736, %v4732
  %v4738 = vrot.slane %v4737, 4
  %v4740 = vshll.u32 %v4520, 16
  %v4742 = vrot.slane %v4740, 5
  %v4743 = vsel %vm1354, %v4738, %v4742
  %v4744 = vshrl.u32 %v4520, 16
  %v4746 = vrot.slane %v4744, 4
  %v4747 = vor.u32 %v4746, %v4742
  %v4748 = vrot.slane %v4747, 4
  %v4750 = vshll.u32 %v4521, 16
  %v4752 = vrot.slane %v4750, 5
  %v4753 = vsel %vm1354, %v4748, %v4752
  %v4754 = vshrl.u32 %v4521, 16
  %v4756 = vrot.slane %v4754, 4
  %v4757 = vor.u32 %v4756, %v4752
  %v4758 = vrot.slane %v4757, 4
  %v4760 = vshll.u32 %v4522, 16
  %v4762 = vrot.slane %v4760, 5
  %v4763 = vsel %vm1354, %v4758, %v4762
  %v4764 = vshrl.u32 %v4522, 16
  %v4766 = vrot.slane %v4764, 4
  %v4767 = vor.u32 %v4766, %v4762
  %v4768 = vrot.slane %v4767, 4
  %v4770 = vshll.u32 %v4523, 16
  %v4772 = vrot.slane %v4770, 5
  %v4773 = vsel %vm1354, %v4768, %v4772
  %v4774 = vshrl.u32 %v4523, 16
  %v4776 = vrot.slane %v4774, 4
  %v4777 = vor.u32 %v4776, %v4772
  %v4778 = vrot.slane %v4777, 4
  %v4780 = vshll.u32 %v4524, 16
  %v4782 = vrot.slane %v4780, 5
  %v4783 = vsel %vm1354, %v4778, %v4782
  %v4784 = vshrl.u32 %v4524, 16
  %v4786 = vrot.slane %v4784, 4
  %v4787 = vor.u32 %v4786, %v4782
  %v4788 = vrot.slane %v4787, 4
  %v4790 = vshll.u32 %v4525, 16
  %v4792 = vrot.slane %v4790, 5
  %v4793 = vsel %vm1354, %v4788, %v4792
  %v4794 = vshrl.u32 %v4525, 16
  %v4796 = vrot.slane %v4794, 4
  %v4797 = vor.u32 %v4796, %v4792
  %v4798 = vrot.slane %v4797, 4
  %v4800 = vshll.u32 %v4526, 16
  %v4802 = vrot.slane %v4800, 5
  %v4803 = vsel %vm1354, %v4798, %v4802
  %v4804 = vshrl.u32 %v4526, 16
  %v4806 = vrot.slane %v4804, 4
  %v4807 = vor.u32 %v4806, %v4802
  %v4808 = vrot.slane %v4807, 4
  %v4810 = vshll.u32 %v4527, 16
  %v4812 = vrot.slane %v4810, 5
  %v4813 = vsel %vm1354, %v4808, %v4812
  %v4814 = vshrl.u32 %v4527, 16
  %v4816 = vrot.slane %v4814, 4
  %v4817 = vor.u32 %v4816, %v4812
  %v4818 = vrot.slane %v4817, 4
  %v4820 = vshll.u32 %v4528, 16
  %v4822 = vrot.slane %v4820, 5
  %v4823 = vsel %vm1354, %v4818, %v4822
  %v4824 = vshrl.u32 %v4528, 16
  %v4826 = vrot.slane %v4824, 4
  %v4827 = vor.u32 %v4826, %v4822
  %v4828 = vrot.slane %v4827, 4
  %v4830 = vshll.u32 %v4529, 16
  %v4832 = vrot.slane %v4830, 5
  %v4833 = vsel %vm1354, %v4828, %v4832
  %v4834 = vshrl.u32 %v4529, 16
  %v4836 = vrot.slane %v4834, 4
  %v4837 = vor.u32 %v4836, %v4832
  %v4838 = vrot.slane %v4837, 4
  %v4840 = vshll.u32 %v4530, 16
  %v4842 = vrot.slane %v4840, 5
  %v4843 = vsel %vm1354, %v4838, %v4842
  %v4844 = vshrl.u32 %v4530, 16
  %v4846 = vrot.slane %v4844, 4
  %v4847 = vor.u32 %v4846, %v4842
  %v4848 = vrot.slane %v4847, 4
  %v4850 = vshll.u32 %v4531, 16
  %v4852 = vrot.slane %v4850, 5
  %v4853 = vsel %vm1354, %v4848, %v4852
  %v4854 = vshrl.u32 %v4531, 16
  %v4856 = vrot.slane %v4854, 4
  %v4857 = vor.u32 %v4856, %v4852
  %v4858 = vrot.slane %v4857, 4
  %v4860 = vshll.u32 %v4532, 16
  %v4862 = vrot.slane %v4860, 5
  %v4863 = vsel %vm1354, %v4858, %v4862
  %v4864 = vshrl.u32 %v4532, 16
  %v4866 = vrot.slane %v4864, 4
  %v4867 = vor.u32 %v4866, %v4862
  %v4868 = vrot.slane %v4867, 4
  %v4870 = vshll.u32 %v4533, 16
  %v4872 = vrot.slane %v4870, 5
  %v4873 = vsel %vm1354, %v4868, %v4872
  %v4874 = vshrl.u32 %v4533, 16
  %v4876 = vrot.slane %v4874, 4
  %v4877 = vor.u32 %v4876, %v4872
  %v4878 = vrot.slane %v4877, 4
  %v4880 = vshll.u32 %v4534, 16
  %v4882 = vrot.slane %v4880, 5
  %v4883 = vsel %vm1354, %v4878, %v4882
  %v4884 = vshrl.u32 %v4534, 16
  %v4886 = vrot.slane %v4884, 4
  %v4887 = vor.u32 %v4886, %v4882
  %v4888 = vrot.slane %v4887, 4
  %v4890 = vshll.u32 %v4535, 16
  %v4892 = vrot.slane %v4890, 5
  %v4893 = vsel %vm1354, %v4888, %v4892
  %v4894 = vshrl.u32 %v4535, 16
  %v4896 = vrot.slane %v4894, 4
  %v4897 = vor.u32 %v4896, %v4892
  %v4898 = vrot.slane %v4897, 4
  %v4900 = vshll.u32 %v4536, 16
  %v4902 = vrot.slane %v4900, 5
  %v4903 = vsel %vm1354, %v4898, %v4902
  %v4904 = vshrl.u32 %v4536, 16
  %v4906 = vrot.slane %v4904, 4
  %v4907 = vor.u32 %v4906, %v4902
  %v4908 = vrot.slane %v4907, 4
  %v4910 = vshll.u32 %v4537, 16
  %v4912 = vrot.slane %v4910, 5
  %v4913 = vsel %vm1354, %v4908, %v4912
  %v4914 = vshrl.u32 %v4537, 16
  %v4916 = vrot.slane %v4914, 4
  %v4917 = vor.u32 %v4916, %v4912
  %v4918 = vrot.slane %v4917, 4
  %v4920 = vshll.u32 %v4538, 16
  %v4922 = vrot.slane %v4920, 5
  %v4923 = vsel %vm1354, %v4918, %v4922
  %v4924 = vshrl.u32 %v4538, 16
  %v4926 = vrot.slane %v4924, 4
  %v4927 = vor.u32 %v4926, %v4922
  %v4928 = vrot.slane %v4927, 4
  %v4930 = vshll.u32 %v4539, 16
  %v4932 = vrot.slane %v4930, 5
  %v4933 = vsel %vm1354, %v4928, %v4932
  %v4934 = vshrl.u32 %v4539, 16
  %v4936 = vrot.slane %v4934, 4
  %v4937 = vor.u32 %v4936, %v4932
  %v4938 = vrot.slane %v4937, 4
  %v4940 = vshll.u32 %v4540, 16
  %v4942 = vrot.slane %v4940, 5
  %v4943 = vsel %vm1354, %v4938, %v4942
  %v4944 = vshrl.u32 %v4540, 16
  %v4946 = vrot.slane %v4944, 4
  %v4947 = vor.u32 %v4946, %v4942
  %v4948 = vrot.slane %v4947, 4
  %v4950 = vshll.u32 %v4541, 16
  %v4952 = vrot.slane %v4950, 5
  %v4953 = vsel %vm1354, %v4948, %v4952
  %v4954 = vshrl.u32 %v4541, 16
  %v4956 = vrot.slane %v4954, 4
  %v4957 = vor.u32 %v4956, %v4952
  %v4958 = vrot.slane %v4957, 4
  %v4960 = vshll.u32 %v4542, 16
  %v4962 = vrot.slane %v4960, 5
  %v4963 = vsel %vm1354, %v4958, %v4962
  %v4964 = vshrl.u32 %v4542, 16
  %v4966 = vrot.slane %v4964, 4
  %v4967 = vor.u32 %v4966, %v4962
  %v4968 = vrot.slane %v4967, 4
  %v4970 = vshll.u32 %v4543, 16
  %v4972 = vrot.slane %v4970, 5
  %v4973 = vsel %vm1354, %v4968, %v4972
  %v4974 = vshrl.u32 %v4543, 16
  %v4976 = vrot.slane %v4974, 4
  %v4977 = vor.u32 %v4976, %v4972
  %v4978 = vrot.slane %v4977, 4
  %v4980 = vshll.u32 %v4544, 16
  %v4982 = vrot.slane %v4980, 5
  %v4983 = vsel %vm1354, %v4978, %v4982
  %v4984 = vshrl.u32 %v4544, 16
  %v4986 = vrot.slane %v4984, 4
  %v4987 = vor.u32 %v4986, %v4982
  %v4988 = vrot.slane %v4987, 4
  %v4990 = vshll.u32 %v4545, 16
  %v4992 = vrot.slane %v4990, 5
  %v4993 = vsel %vm1354, %v4988, %v4992
  %v4994 = vshrl.u32 %v4545, 16
  %v4996 = vrot.slane %v4994, 4
  %v4997 = vor.u32 %v4996, %v4992
  %v4998 = vrot.slane %v4997, 4
  %v5000 = vshll.u32 %v4546, 16
  %v5002 = vrot.slane %v5000, 5
  %v5003 = vsel %vm1354, %v4998, %v5002
  %v5004 = vshrl.u32 %v4546, 16
  %v5006 = vrot.slane %v5004, 4
  %v5007 = vor.u32 %v5006, %v5002
  %v5008 = vrot.slane %v5007, 4
  %v5010 = vshll.u32 %v4547, 16
  %v5012 = vrot.slane %v5010, 5
  %v5013 = vsel %vm1354, %v5008, %v5012
  %v5014 = vshrl.u32 %v4547, 16
  %v5016 = vrot.slane %v5014, 4
  %v5017 = vor.u32 %v5016, %v5012
  %v5018 = vrot.slane %v5017, 4
  %v5020 = vshll.u32 %v4548, 16
  %v5022 = vrot.slane %v5020, 5
  %v5023 = vsel %vm1354, %v5018, %v5022
  %v5024 = vshrl.u32 %v4548, 16
  %v5026 = vrot.slane %v5024, 4
  %v5027 = vor.u32 %v5026, %v5022
  %v5028 = vrot.slane %v5027, 4
  %v5030 = vshll.u32 %v4549, 16
  %v5032 = vrot.slane %v5030, 5
  %v5033 = vsel %vm1354, %v5028, %v5032
  %5082 = vst [vmem:[#allocation3 + $0x6c4] sm:$0xf] %v4563
  %5083 = vst [vmem:[#allocation3 + $0x6e8] sm:$0xf] %v4573
  %5084 = vst [vmem:[#allocation3 + $0x70c] sm:$0xf] %v4583
  %5085 = vst [vmem:[#allocation3 + $0x730] sm:$0xf] %v4593
  %5086 = vst [vmem:[#allocation3 + $0x754] sm:$0xf] %v4603
  %5087 = vst [vmem:[#allocation3 + $0x778] sm:$0xf] %v4613
  %5088 = vst [vmem:[#allocation3 + $0x79c] sm:$0xf] %v4623
  %5089 = vst [vmem:[#allocation3 + $0x7c0] sm:$0xf] %v4633
  %5090 = vst [vmem:[#allocation3 + $0x7e4] sm:$0xf] %v4643
  %5091 = vst [vmem:[#allocation3 + $0x808] sm:$0xf] %v4653
  %5092 = vst [vmem:[#allocation3 + $0x82c] sm:$0xf] %v4663
  %5093 = vst [vmem:[#allocation3 + $0x850] sm:$0xf] %v4673
  %5094 = vst [vmem:[#allocation3 + $0x874] sm:$0xf] %v4683
  %5095 = vst [vmem:[#allocation3 + $0x898] sm:$0xf] %v4693
  %5096 = vst [vmem:[#allocation3 + $0x8bc] sm:$0xf] %v4703
  %5097 = vst [vmem:[#allocation3 + $0x8e0] sm:$0xf] %v4713
  %5098 = vst [vmem:[#allocation3 + $0x904] sm:$0xf] %v4723
  %5099 = vst [vmem:[#allocation3 + $0x928] sm:$0xf] %v4733
  %5100 = vst [vmem:[#allocation3 + $0x94c] sm:$0xf] %v4743
  %5101 = vst [vmem:[#allocation3 + $0x970] sm:$0xf] %v4753
  %5102 = vst [vmem:[#allocation3 + $0x994] sm:$0xf] %v4763
  %5103 = vst [vmem:[#allocation3 + $0x9b8] sm:$0xf] %v4773
  %5104 = vst [vmem:[#allocation3 + $0x9dc] sm:$0xf] %v4783
  %5105 = vst [vmem:[#allocation3 + $0xa00] sm:$0xf] %v4793
  %5106 = vst [vmem:[#allocation3 + $0xa24] sm:$0xf] %v4803
  %5107 = vst [vmem:[#allocation3 + $0xa48] sm:$0xf] %v4813
  %5108 = vst [vmem:[#allocation3 + $0xa6c] sm:$0xf] %v4823
  %5109 = vst [vmem:[#allocation3 + $0xa90] sm:$0xf] %v4833
  %5110 = vst [vmem:[#allocation3 + $0xab4] sm:$0xf] %v4843
  %5111 = vst [vmem:[#allocation3 + $0xad8] sm:$0xf] %v4853
  %5112 = vst [vmem:[#allocation3 + $0xafc] sm:$0xf] %v4863
  %5113 = vst [vmem:[#allocation3 + $0xb20] sm:$0xf] %v4873
  %5114 = vst [vmem:[#allocation3 + $0xb44] sm:$0xf] %v4883
  %5115 = vst [vmem:[#allocation3 + $0xb68] sm:$0xf] %v4893
  %5116 = vst [vmem:[#allocation3 + $0xb8c] sm:$0xf] %v4903
  %5117 = vst [vmem:[#allocation3 + $0xbb0] sm:$0xf] %v4913
  %5118 = vst [vmem:[#allocation3 + $0xbd4] sm:$0xf] %v4923
  %5119 = vst [vmem:[#allocation3 + $0xbf8] sm:$0xf] %v4933
  %5120 = vst [vmem:[#allocation3 + $0xc1c] sm:$0xf] %v4943
  %5121 = vst [vmem:[#allocation3 + $0xc40] sm:$0xf] %v4953
  %5122 = vst [vmem:[#allocation3 + $0xc64] sm:$0xf] %v4963
  %5123 = vst [vmem:[#allocation3 + $0xc88] sm:$0xf] %v4973
  %5124 = vst [vmem:[#allocation3 + $0xcac] sm:$0xf] %v4983
  %5125 = vst [vmem:[#allocation3 + $0xcd0] sm:$0xf] %v4993
  %5126 = vst [vmem:[#allocation3 + $0xcf4] sm:$0xf] %v5003
  %5127 = vst [vmem:[#allocation3 + $0xd18] sm:$0xf] %v5013
  %5128 = vst [vmem:[#allocation3 + $0xd3c] sm:$0xf] %v5023
  %5129 = vst [vmem:[#allocation3 + $0xd60] sm:$0xf] %v5033
  %v5130 = vld [vmem:[#allocation2 + $0xdc] sm:$0xe]
  %v5131 = vld [vmem:[#allocation2 + $0xe0] sm:$0xf]
  %v5132 = vld [vmem:[#allocation2 + $0xe4] sm:$0xf]
  %v5133 = vld [vmem:[#allocation2 + $0xe8] sm:$0xf]
  %v5134 = vld [vmem:[#allocation2 + $0xec] sm:$0xf]
  %v5135 = vld [vmem:[#allocation2 + $0xf0] sm:$0xf]
  %v5136 = vld [vmem:[#allocation2 + $0xf4] sm:$0xf]
  %v5137 = vld [vmem:[#allocation2 + $0xf8] sm:$0xf]
  %v5138 = vld [vmem:[#allocation2 + $0xfc] sm:$0xf]
  %v5139 = vld [vmem:[#allocation2 + $0x100] sm:$0xf]
  %v5140 = vld [vmem:[#allocation2 + $0x104] sm:$0xf]
  %v5141 = vld [vmem:[#allocation2 + $0x108] sm:$0xf]
  %v5142 = vld [vmem:[#allocation2 + $0x10c] sm:$0xf]
  %v5143 = vld [vmem:[#allocation2 + $0x110] sm:$0xf]
  %v5144 = vld [vmem:[#allocation2 + $0x114] sm:$0xf]
  %v5145 = vld [vmem:[#allocation2 + $0x118] sm:$0xf]
  %v5146 = vld [vmem:[#allocation2 + $0x11c] sm:$0xf]
  %v5147 = vld [vmem:[#allocation2 + $0x120] sm:$0xf]
  %v5148 = vld [vmem:[#allocation2 + $0x124] sm:$0xf]
  %v5149 = vld [vmem:[#allocation2 + $0x128] sm:$0xf]
  %v5150 = vld [vmem:[#allocation2 + $0x12c] sm:$0xf]
  %v5151 = vld [vmem:[#allocation2 + $0x130] sm:$0xf]
  %v5152 = vld [vmem:[#allocation2 + $0x134] sm:$0xf]
  %v5153 = vld [vmem:[#allocation2 + $0x138] sm:$0xf]
  %v5154 = vld [vmem:[#allocation2 + $0x13c] sm:$0xf]
  %v5155 = vld [vmem:[#allocation2 + $0x140] sm:$0xf]
  %v5156 = vld [vmem:[#allocation2 + $0x144] sm:$0xf]
  %v5157 = vld [vmem:[#allocation2 + $0x148] sm:$0xf]
  %v5158 = vld [vmem:[#allocation2 + $0x14c] sm:$0xf]
  %v5159 = vld [vmem:[#allocation2 + $0x150] sm:$0xf]
  %v5160 = vld [vmem:[#allocation2 + $0x154] sm:$0xf]
  %v5161 = vld [vmem:[#allocation2 + $0x158] sm:$0xf]
  %v5162 = vld [vmem:[#allocation2 + $0x15c] sm:$0xf]
  %v5163 = vld [vmem:[#allocation2 + $0x160] sm:$0xf]
  %v5164 = vld [vmem:[#allocation2 + $0x164] sm:$0xf]
  %v5165 = vld [vmem:[#allocation2 + $0x168] sm:$0xf]
  %v5166 = vld [vmem:[#allocation2 + $0x16c] sm:$0xf]
  %v5167 = vld [vmem:[#allocation2 + $0x170] sm:$0xf]
  %v5168 = vld [vmem:[#allocation2 + $0x174] sm:$0xf]
  %v5169 = vld [vmem:[#allocation2 + $0x178] sm:$0xf]
  %v5170 = vld [vmem:[#allocation2 + $0x17c] sm:$0xf]
  %v5171 = vld [vmem:[#allocation2 + $0x180] sm:$0xf]
  %v5172 = vld [vmem:[#allocation2 + $0x184] sm:$0xf]
  %v5173 = vld [vmem:[#allocation2 + $0x188] sm:$0xf]
  %v5174 = vld [vmem:[#allocation2 + $0x18c] sm:$0xf]
  %v5175 = vld [vmem:[#allocation2 + $0x190] sm:$0xf]
  %v5176 = vld [vmem:[#allocation2 + $0x194] sm:$0xf]
  %v5177 = vld [vmem:[#allocation2 + $0x198] sm:$0xf]
  %v5178 = vld [vmem:[#allocation2 + $0x19c] sm:$0x1]
  %v5228 = vrot.slane %v5130, 5
  %v5229 = vrot.slane %v5228, 4
  %v5230 = vrot.slane %v5131, 5
  %v5231 = vsel %vm2035, %v5229, %v5230
  %v5232 = vrot.slane %v5230, 4
  %v5233 = vrot.slane %v5132, 5
  %v5234 = vsel %vm2035, %v5232, %v5233
  %v5235 = vrot.slane %v5233, 4
  %v5236 = vrot.slane %v5133, 5
  %v5237 = vsel %vm2035, %v5235, %v5236
  %v5238 = vrot.slane %v5236, 4
  %v5239 = vrot.slane %v5134, 5
  %v5240 = vsel %vm2035, %v5238, %v5239
  %v5241 = vrot.slane %v5239, 4
  %v5242 = vrot.slane %v5135, 5
  %v5243 = vsel %vm2035, %v5241, %v5242
  %v5244 = vrot.slane %v5242, 4
  %v5245 = vrot.slane %v5136, 5
  %v5246 = vsel %vm2035, %v5244, %v5245
  %v5247 = vrot.slane %v5245, 4
  %v5248 = vrot.slane %v5137, 5
  %v5249 = vsel %vm2035, %v5247, %v5248
  %v5250 = vrot.slane %v5248, 4
  %v5251 = vrot.slane %v5138, 5
  %v5252 = vsel %vm2035, %v5250, %v5251
  %v5253 = vrot.slane %v5251, 4
  %v5254 = vrot.slane %v5139, 5
  %v5255 = vsel %vm2035, %v5253, %v5254
  %v5256 = vrot.slane %v5254, 4
  %v5257 = vrot.slane %v5140, 5
  %v5258 = vsel %vm2035, %v5256, %v5257
  %v5259 = vrot.slane %v5257, 4
  %v5260 = vrot.slane %v5141, 5
  %v5261 = vsel %vm2035, %v5259, %v5260
  %v5262 = vrot.slane %v5260, 4
  %v5263 = vrot.slane %v5142, 5
  %v5264 = vsel %vm2035, %v5262, %v5263
  %v5265 = vrot.slane %v5263, 4
  %v5266 = vrot.slane %v5143, 5
  %v5267 = vsel %vm2035, %v5265, %v5266
  %v5268 = vrot.slane %v5266, 4
  %v5269 = vrot.slane %v5144, 5
  %v5270 = vsel %vm2035, %v5268, %v5269
  %v5271 = vrot.slane %v5269, 4
  %v5272 = vrot.slane %v5145, 5
  %v5273 = vsel %vm2035, %v5271, %v5272
  %v5274 = vrot.slane %v5272, 4
  %v5275 = vrot.slane %v5146, 5
  %v5276 = vsel %vm2035, %v5274, %v5275
  %v5277 = vrot.slane %v5275, 4
  %v5278 = vrot.slane %v5147, 5
  %v5279 = vsel %vm2035, %v5277, %v5278
  %v5280 = vrot.slane %v5278, 4
  %v5281 = vrot.slane %v5148, 5
  %v5282 = vsel %vm2035, %v5280, %v5281
  %v5283 = vrot.slane %v5281, 4
  %v5284 = vrot.slane %v5149, 5
  %v5285 = vsel %vm2035, %v5283, %v5284
  %v5286 = vrot.slane %v5284, 4
  %v5287 = vrot.slane %v5150, 5
  %v5288 = vsel %vm2035, %v5286, %v5287
  %v5289 = vrot.slane %v5287, 4
  %v5290 = vrot.slane %v5151, 5
  %v5291 = vsel %vm2035, %v5289, %v5290
  %v5292 = vrot.slane %v5290, 4
  %v5293 = vrot.slane %v5152, 5
  %v5294 = vsel %vm2035, %v5292, %v5293
  %v5295 = vrot.slane %v5293, 4
  %v5296 = vrot.slane %v5153, 5
  %v5297 = vsel %vm2035, %v5295, %v5296
  %v5298 = vrot.slane %v5296, 4
  %v5299 = vrot.slane %v5154, 5
  %v5300 = vsel %vm2035, %v5298, %v5299
  %v5301 = vrot.slane %v5299, 4
  %v5302 = vrot.slane %v5155, 5
  %v5303 = vsel %vm2035, %v5301, %v5302
  %v5304 = vrot.slane %v5302, 4
  %v5305 = vrot.slane %v5156, 5
  %v5306 = vsel %vm2035, %v5304, %v5305
  %v5307 = vrot.slane %v5305, 4
  %v5308 = vrot.slane %v5157, 5
  %v5309 = vsel %vm2035, %v5307, %v5308
  %v5310 = vrot.slane %v5308, 4
  %v5311 = vrot.slane %v5158, 5
  %v5312 = vsel %vm2035, %v5310, %v5311
  %v5313 = vrot.slane %v5311, 4
  %v5314 = vrot.slane %v5159, 5
  %v5315 = vsel %vm2035, %v5313, %v5314
  %v5316 = vrot.slane %v5314, 4
  %v5317 = vrot.slane %v5160, 5
  %v5318 = vsel %vm2035, %v5316, %v5317
  %v5319 = vrot.slane %v5317, 4
  %v5320 = vrot.slane %v5161, 5
  %v5321 = vsel %vm2035, %v5319, %v5320
  %v5322 = vrot.slane %v5320, 4
  %v5323 = vrot.slane %v5162, 5
  %v5324 = vsel %vm2035, %v5322, %v5323
  %v5325 = vrot.slane %v5323, 4
  %v5326 = vrot.slane %v5163, 5
  %v5327 = vsel %vm2035, %v5325, %v5326
  %v5328 = vrot.slane %v5326, 4
  %v5329 = vrot.slane %v5164, 5
  %v5330 = vsel %vm2035, %v5328, %v5329
  %v5331 = vrot.slane %v5329, 4
  %v5332 = vrot.slane %v5165, 5
  %v5333 = vsel %vm2035, %v5331, %v5332
  %v5334 = vrot.slane %v5332, 4
  %v5335 = vrot.slane %v5166, 5
  %v5336 = vsel %vm2035, %v5334, %v5335
  %v5337 = vrot.slane %v5335, 4
  %v5338 = vrot.slane %v5167, 5
  %v5339 = vsel %vm2035, %v5337, %v5338
  %v5340 = vrot.slane %v5338, 4
  %v5341 = vrot.slane %v5168, 5
  %v5342 = vsel %vm2035, %v5340, %v5341
  %v5343 = vrot.slane %v5341, 4
  %v5344 = vrot.slane %v5169, 5
  %v5345 = vsel %vm2035, %v5343, %v5344
  %v5346 = vrot.slane %v5344, 4
  %v5347 = vrot.slane %v5170, 5
  %v5348 = vsel %vm2035, %v5346, %v5347
  %v5349 = vrot.slane %v5347, 4
  %v5350 = vrot.slane %v5171, 5
  %v5351 = vsel %vm2035, %v5349, %v5350
  %v5352 = vrot.slane %v5350, 4
  %v5353 = vrot.slane %v5172, 5
  %v5354 = vsel %vm2035, %v5352, %v5353
  %v5355 = vrot.slane %v5353, 4
  %v5356 = vrot.slane %v5173, 5
  %v5357 = vsel %vm2035, %v5355, %v5356
  %v5358 = vrot.slane %v5356, 4
  %v5359 = vrot.slane %v5174, 5
  %v5360 = vsel %vm2035, %v5358, %v5359
  %v5361 = vrot.slane %v5359, 4
  %v5362 = vrot.slane %v5175, 5
  %v5363 = vsel %vm2035, %v5361, %v5362
  %v5364 = vrot.slane %v5362, 4
  %v5365 = vrot.slane %v5176, 5
  %v5366 = vsel %vm2035, %v5364, %v5365
  %v5367 = vrot.slane %v5365, 4
  %v5368 = vrot.slane %v5177, 5
  %v5369 = vsel %vm2035, %v5367, %v5368
  %v5370 = vrot.slane %v5368, 4
  %v5371 = vrot.slane %v5178, 5
  %v5372 = vsel %vm2035, %v5370, %v5371
  %5421 = vst [vmem:[#allocation3 + $0x6c8] sm:$0xf] %v5231
  %5422 = vst [vmem:[#allocation3 + $0x6ec] sm:$0xf] %v5234
  %5423 = vst [vmem:[#allocation3 + $0x710] sm:$0xf] %v5237
  %5424 = vst [vmem:[#allocation3 + $0x734] sm:$0xf] %v5240
  %5425 = vst [vmem:[#allocation3 + $0x758] sm:$0xf] %v5243
  %5426 = vst [vmem:[#allocation3 + $0x77c] sm:$0xf] %v5246
  %5427 = vst [vmem:[#allocation3 + $0x7a0] sm:$0xf] %v5249
  %5428 = vst [vmem:[#allocation3 + $0x7c4] sm:$0xf] %v5252
  %5429 = vst [vmem:[#allocation3 + $0x7e8] sm:$0xf] %v5255
  %5430 = vst [vmem:[#allocation3 + $0x80c] sm:$0xf] %v5258
  %5431 = vst [vmem:[#allocation3 + $0x830] sm:$0xf] %v5261
  %5432 = vst [vmem:[#allocation3 + $0x854] sm:$0xf] %v5264
  %5433 = vst [vmem:[#allocation3 + $0x878] sm:$0xf] %v5267
  %5434 = vst [vmem:[#allocation3 + $0x89c] sm:$0xf] %v5270
  %5435 = vst [vmem:[#allocation3 + $0x8c0] sm:$0xf] %v5273
  %5436 = vst [vmem:[#allocation3 + $0x8e4] sm:$0xf] %v5276
  %5437 = vst [vmem:[#allocation3 + $0x908] sm:$0xf] %v5279
  %5438 = vst [vmem:[#allocation3 + $0x92c] sm:$0xf] %v5282
  %5439 = vst [vmem:[#allocation3 + $0x950] sm:$0xf] %v5285
  %5440 = vst [vmem:[#allocation3 + $0x974] sm:$0xf] %v5288
  %5441 = vst [vmem:[#allocation3 + $0x998] sm:$0xf] %v5291
  %5442 = vst [vmem:[#allocation3 + $0x9bc] sm:$0xf] %v5294
  %5443 = vst [vmem:[#allocation3 + $0x9e0] sm:$0xf] %v5297
  %5444 = vst [vmem:[#allocation3 + $0xa04] sm:$0xf] %v5300
  %5445 = vst [vmem:[#allocation3 + $0xa28] sm:$0xf] %v5303
  %5446 = vst [vmem:[#allocation3 + $0xa4c] sm:$0xf] %v5306
  %5447 = vst [vmem:[#allocation3 + $0xa70] sm:$0xf] %v5309
  %5448 = vst [vmem:[#allocation3 + $0xa94] sm:$0xf] %v5312
  %5449 = vst [vmem:[#allocation3 + $0xab8] sm:$0xf] %v5315
  %5450 = vst [vmem:[#allocation3 + $0xadc] sm:$0xf] %v5318
  %5451 = vst [vmem:[#allocation3 + $0xb00] sm:$0xf] %v5321
  %5452 = vst [vmem:[#allocation3 + $0xb24] sm:$0xf] %v5324
  %5453 = vst [vmem:[#allocation3 + $0xb48] sm:$0xf] %v5327
  %5454 = vst [vmem:[#allocation3 + $0xb6c] sm:$0xf] %v5330
  %5455 = vst [vmem:[#allocation3 + $0xb90] sm:$0xf] %v5333
  %5456 = vst [vmem:[#allocation3 + $0xbb4] sm:$0xf] %v5336
  %5457 = vst [vmem:[#allocation3 + $0xbd8] sm:$0xf] %v5339
  %5458 = vst [vmem:[#allocation3 + $0xbfc] sm:$0xf] %v5342
  %5459 = vst [vmem:[#allocation3 + $0xc20] sm:$0xf] %v5345
  %5460 = vst [vmem:[#allocation3 + $0xc44] sm:$0xf] %v5348
  %5461 = vst [vmem:[#allocation3 + $0xc68] sm:$0xf] %v5351
  %5462 = vst [vmem:[#allocation3 + $0xc8c] sm:$0xf] %v5354
  %5463 = vst [vmem:[#allocation3 + $0xcb0] sm:$0xf] %v5357
  %5464 = vst [vmem:[#allocation3 + $0xcd4] sm:$0xf] %v5360
  %5465 = vst [vmem:[#allocation3 + $0xcf8] sm:$0xf] %v5363
  %5466 = vst [vmem:[#allocation3 + $0xd1c] sm:$0xf] %v5366
  %5467 = vst [vmem:[#allocation3 + $0xd40] sm:$0xf] %v5369
  %5468 = vst [vmem:[#allocation3 + $0xd64] sm:$0xf] %v5372
  %v5469 = vld [vmem:[#allocation2 + $0xe8] sm:$0xf]
  %v5470 = vld [vmem:[#allocation2 + $0xec] sm:$0xf]
  %v5471 = vld [vmem:[#allocation2 + $0xf0] sm:$0xf]
  %v5472 = vld [vmem:[#allocation2 + $0xf4] sm:$0xf]
  %v5473 = vld [vmem:[#allocation2 + $0xf8] sm:$0xf]
  %v5474 = vld [vmem:[#allocation2 + $0xfc] sm:$0xf]
  %v5475 = vld [vmem:[#allocation2 + $0x100] sm:$0xf]
  %v5476 = vld [vmem:[#allocation2 + $0x104] sm:$0xf]
  %v5477 = vld [vmem:[#allocation2 + $0x108] sm:$0xf]
  %v5478 = vld [vmem:[#allocation2 + $0x10c] sm:$0xf]
  %v5479 = vld [vmem:[#allocation2 + $0x110] sm:$0xf]
  %v5480 = vld [vmem:[#allocation2 + $0x114] sm:$0xf]
  %v5481 = vld [vmem:[#allocation2 + $0x118] sm:$0xf]
  %v5482 = vld [vmem:[#allocation2 + $0x11c] sm:$0xf]
  %v5483 = vld [vmem:[#allocation2 + $0x120] sm:$0xf]
  %v5484 = vld [vmem:[#allocation2 + $0x124] sm:$0xf]
  %v5485 = vld [vmem:[#allocation2 + $0x128] sm:$0xf]
  %v5486 = vld [vmem:[#allocation2 + $0x12c] sm:$0xf]
  %v5487 = vld [vmem:[#allocation2 + $0x130] sm:$0xf]
  %v5488 = vld [vmem:[#allocation2 + $0x134] sm:$0xf]
  %v5489 = vld [vmem:[#allocation2 + $0x138] sm:$0xf]
  %v5490 = vld [vmem:[#allocation2 + $0x13c] sm:$0xf]
  %v5491 = vld [vmem:[#allocation2 + $0x140] sm:$0xf]
  %v5492 = vld [vmem:[#allocation2 + $0x144] sm:$0xf]
  %v5493 = vld [vmem:[#allocation2 + $0x148] sm:$0xf]
  %v5494 = vld [vmem:[#allocation2 + $0x14c] sm:$0xf]
  %v5495 = vld [vmem:[#allocation2 + $0x150] sm:$0xf]
  %v5496 = vld [vmem:[#allocation2 + $0x154] sm:$0xf]
  %v5497 = vld [vmem:[#allocation2 + $0x158] sm:$0xf]
  %v5498 = vld [vmem:[#allocation2 + $0x15c] sm:$0xf]
  %v5499 = vld [vmem:[#allocation2 + $0x160] sm:$0xf]
  %v5500 = vld [vmem:[#allocation2 + $0x164] sm:$0xf]
  %v5501 = vld [vmem:[#allocation2 + $0x168] sm:$0xf]
  %v5502 = vld [vmem:[#allocation2 + $0x16c] sm:$0xf]
  %v5503 = vld [vmem:[#allocation2 + $0x170] sm:$0xf]
  %v5504 = vld [vmem:[#allocation2 + $0x174] sm:$0xf]
  %v5505 = vld [vmem:[#allocation2 + $0x178] sm:$0xf]
  %v5506 = vld [vmem:[#allocation2 + $0x17c] sm:$0xf]
  %v5507 = vld [vmem:[#allocation2 + $0x180] sm:$0xf]
  %v5508 = vld [vmem:[#allocation2 + $0x184] sm:$0xf]
  %v5509 = vld [vmem:[#allocation2 + $0x188] sm:$0xf]
  %v5510 = vld [vmem:[#allocation2 + $0x18c] sm:$0xf]
  %v5511 = vld [vmem:[#allocation2 + $0x190] sm:$0xf]
  %v5512 = vld [vmem:[#allocation2 + $0x194] sm:$0xf]
  %v5513 = vld [vmem:[#allocation2 + $0x198] sm:$0xf]
  %v5514 = vld [vmem:[#allocation2 + $0x19c] sm:$0xf]
  %v5515 = vld [vmem:[#allocation2 + $0x1a0] sm:$0xf]
  %v5516 = vld [vmem:[#allocation2 + $0x1a4] sm:$0xf]
  %5517 = vst [vmem:[#allocation3 + $0x6cc] sm:$0xf] %v5469
  %5518 = vst [vmem:[#allocation3 + $0x6f0] sm:$0xf] %v5470
  %5519 = vst [vmem:[#allocation3 + $0x714] sm:$0xf] %v5471
  %5520 = vst [vmem:[#allocation3 + $0x738] sm:$0xf] %v5472
  %5521 = vst [vmem:[#allocation3 + $0x75c] sm:$0xf] %v5473
  %5522 = vst [vmem:[#allocation3 + $0x780] sm:$0xf] %v5474
  %5523 = vst [vmem:[#allocation3 + $0x7a4] sm:$0xf] %v5475
  %5524 = vst [vmem:[#allocation3 + $0x7c8] sm:$0xf] %v5476
  %5525 = vst [vmem:[#allocation3 + $0x7ec] sm:$0xf] %v5477
  %5526 = vst [vmem:[#allocation3 + $0x810] sm:$0xf] %v5478
  %5527 = vst [vmem:[#allocation3 + $0x834] sm:$0xf] %v5479
  %5528 = vst [vmem:[#allocation3 + $0x858] sm:$0xf] %v5480
  %5529 = vst [vmem:[#allocation3 + $0x87c] sm:$0xf] %v5481
  %5530 = vst [vmem:[#allocation3 + $0x8a0] sm:$0xf] %v5482
  %5531 = vst [vmem:[#allocation3 + $0x8c4] sm:$0xf] %v5483
  %5532 = vst [vmem:[#allocation3 + $0x8e8] sm:$0xf] %v5484
  %5533 = vst [vmem:[#allocation3 + $0x90c] sm:$0xf] %v5485
  %5534 = vst [vmem:[#allocation3 + $0x930] sm:$0xf] %v5486
  %5535 = vst [vmem:[#allocation3 + $0x954] sm:$0xf] %v5487
  %5536 = vst [vmem:[#allocation3 + $0x978] sm:$0xf] %v5488
  %5537 = vst [vmem:[#allocation3 + $0x99c] sm:$0xf] %v5489
  %5538 = vst [vmem:[#allocation3 + $0x9c0] sm:$0xf] %v5490
  %5539 = vst [vmem:[#allocation3 + $0x9e4] sm:$0xf] %v5491
  %5540 = vst [vmem:[#allocation3 + $0xa08] sm:$0xf] %v5492
  %5541 = vst [vmem:[#allocation3 + $0xa2c] sm:$0xf] %v5493
  %5542 = vst [vmem:[#allocation3 + $0xa50] sm:$0xf] %v5494
  %5543 = vst [vmem:[#allocation3 + $0xa74] sm:$0xf] %v5495
  %5544 = vst [vmem:[#allocation3 + $0xa98] sm:$0xf] %v5496
  %5545 = vst [vmem:[#allocation3 + $0xabc] sm:$0xf] %v5497
  %5546 = vst [vmem:[#allocation3 + $0xae0] sm:$0xf] %v5498
  %5547 = vst [vmem:[#allocation3 + $0xb04] sm:$0xf] %v5499
  %5548 = vst [vmem:[#allocation3 + $0xb28] sm:$0xf] %v5500
  %5549 = vst [vmem:[#allocation3 + $0xb4c] sm:$0xf] %v5501
  %5550 = vst [vmem:[#allocation3 + $0xb70] sm:$0xf] %v5502
  %5551 = vst [vmem:[#allocation3 + $0xb94] sm:$0xf] %v5503
  %5552 = vst [vmem:[#allocation3 + $0xbb8] sm:$0xf] %v5504
  %5553 = vst [vmem:[#allocation3 + $0xbdc] sm:$0xf] %v5505
  %5554 = vst [vmem:[#allocation3 + $0xc00] sm:$0xf] %v5506
  %5555 = vst [vmem:[#allocation3 + $0xc24] sm:$0xf] %v5507
  %5556 = vst [vmem:[#allocation3 + $0xc48] sm:$0xf] %v5508
  %5557 = vst [vmem:[#allocation3 + $0xc6c] sm:$0xf] %v5509
  %5558 = vst [vmem:[#allocation3 + $0xc90] sm:$0xf] %v5510
  %5559 = vst [vmem:[#allocation3 + $0xcb4] sm:$0xf] %v5511
  %5560 = vst [vmem:[#allocation3 + $0xcd8] sm:$0xf] %v5512
  %5561 = vst [vmem:[#allocation3 + $0xcfc] sm:$0xf] %v5513
  %5562 = vst [vmem:[#allocation3 + $0xd20] sm:$0xf] %v5514
  %5563 = vst [vmem:[#allocation3 + $0xd44] sm:$0xf] %v5515
  %5564 = vst [vmem:[#allocation3 + $0xd68] sm:$0xf] %v5516
  %v5565 = vld [vmem:[#allocation2 + $0xe8] sm:$0xf]
  %v5566 = vld [vmem:[#allocation2 + $0xec] sm:$0xf]
  %v5567 = vld [vmem:[#allocation2 + $0xf0] sm:$0xf]
  %v5568 = vld [vmem:[#allocation2 + $0xf4] sm:$0xf]
  %v5569 = vld [vmem:[#allocation2 + $0xf8] sm:$0xf]
  %v5570 = vld [vmem:[#allocation2 + $0xfc] sm:$0xf]
  %v5571 = vld [vmem:[#allocation2 + $0x100] sm:$0xf]
  %v5572 = vld [vmem:[#allocation2 + $0x104] sm:$0xf]
  %v5573 = vld [vmem:[#allocation2 + $0x108] sm:$0xf]
  %v5574 = vld [vmem:[#allocation2 + $0x10c] sm:$0xf]
  %v5575 = vld [vmem:[#allocation2 + $0x110] sm:$0xf]
  %v5576 = vld [vmem:[#allocation2 + $0x114] sm:$0xf]
  %v5577 = vld [vmem:[#allocation2 + $0x118] sm:$0xf]
  %v5578 = vld [vmem:[#allocation2 + $0x11c] sm:$0xf]
  %v5579 = vld [vmem:[#allocation2 + $0x120] sm:$0xf]
  %v5580 = vld [vmem:[#allocation2 + $0x124] sm:$0xf]
  %v5581 = vld [vmem:[#allocation2 + $0x128] sm:$0xf]
  %v5582 = vld [vmem:[#allocation2 + $0x12c] sm:$0xf]
  %v5583 = vld [vmem:[#allocation2 + $0x130] sm:$0xf]
  %v5584 = vld [vmem:[#allocation2 + $0x134] sm:$0xf]
  %v5585 = vld [vmem:[#allocation2 + $0x138] sm:$0xf]
  %v5586 = vld [vmem:[#allocation2 + $0x13c] sm:$0xf]
  %v5587 = vld [vmem:[#allocation2 + $0x140] sm:$0xf]
  %v5588 = vld [vmem:[#allocation2 + $0x144] sm:$0xf]
  %v5589 = vld [vmem:[#allocation2 + $0x148] sm:$0xf]
  %v5590 = vld [vmem:[#allocation2 + $0x14c] sm:$0xf]
  %v5591 = vld [vmem:[#allocation2 + $0x150] sm:$0xf]
  %v5592 = vld [vmem:[#allocation2 + $0x154] sm:$0xf]
  %v5593 = vld [vmem:[#allocation2 + $0x158] sm:$0xf]
  %v5594 = vld [vmem:[#allocation2 + $0x15c] sm:$0xf]
  %v5595 = vld [vmem:[#allocation2 + $0x160] sm:$0xf]
  %v5596 = vld [vmem:[#allocation2 + $0x164] sm:$0xf]
  %v5597 = vld [vmem:[#allocation2 + $0x168] sm:$0xf]
  %v5598 = vld [vmem:[#allocation2 + $0x16c] sm:$0xf]
  %v5599 = vld [vmem:[#allocation2 + $0x170] sm:$0xf]
  %v5600 = vld [vmem:[#allocation2 + $0x174] sm:$0xf]
  %v5601 = vld [vmem:[#allocation2 + $0x178] sm:$0xf]
  %v5602 = vld [vmem:[#allocation2 + $0x17c] sm:$0xf]
  %v5603 = vld [vmem:[#allocation2 + $0x180] sm:$0xf]
  %v5604 = vld [vmem:[#allocation2 + $0x184] sm:$0xf]
  %v5605 = vld [vmem:[#allocation2 + $0x188] sm:$0xf]
  %v5606 = vld [vmem:[#allocation2 + $0x18c] sm:$0xf]
  %v5607 = vld [vmem:[#allocation2 + $0x190] sm:$0xf]
  %v5608 = vld [vmem:[#allocation2 + $0x194] sm:$0xf]
  %v5609 = vld [vmem:[#allocation2 + $0x198] sm:$0xf]
  %v5610 = vld [vmem:[#allocation2 + $0x19c] sm:$0xf]
  %v5611 = vld [vmem:[#allocation2 + $0x1a0] sm:$0xf]
  %v5612 = vld [vmem:[#allocation2 + $0x1a4] sm:$0xf]
  %v5613 = vld [vmem:[#allocation2 + $0x1a8] sm:$0x1]
  %v5615 = vshrl.u32 %v5565, 16
  %v5617 = vrot.slane %v5615, 4
  %v5618 = vshll.u32 %v5565, 16
  %v5620 = vrot.slane %v5618, 5
  %v5621 = vor.u32 %v5617, %v5620
  %v5622 = vrot.slane %v5621, 4
  %v5624 = vshll.u32 %v5566, 16
  %v5626 = vrot.slane %v5624, 5
  %v5627 = vsel %vm1354, %v5622, %v5626
  %v5628 = vshrl.u32 %v5566, 16
  %v5630 = vrot.slane %v5628, 4
  %v5631 = vor.u32 %v5630, %v5626
  %v5632 = vrot.slane %v5631, 4
  %v5634 = vshll.u32 %v5567, 16
  %v5636 = vrot.slane %v5634, 5
  %v5637 = vsel %vm1354, %v5632, %v5636
  %v5638 = vshrl.u32 %v5567, 16
  %v5640 = vrot.slane %v5638, 4
  %v5641 = vor.u32 %v5640, %v5636
  %v5642 = vrot.slane %v5641, 4
  %v5644 = vshll.u32 %v5568, 16
  %v5646 = vrot.slane %v5644, 5
  %v5647 = vsel %vm1354, %v5642, %v5646
  %v5648 = vshrl.u32 %v5568, 16
  %v5650 = vrot.slane %v5648, 4
  %v5651 = vor.u32 %v5650, %v5646
  %v5652 = vrot.slane %v5651, 4
  %v5654 = vshll.u32 %v5569, 16
  %v5656 = vrot.slane %v5654, 5
  %v5657 = vsel %vm1354, %v5652, %v5656
  %v5658 = vshrl.u32 %v5569, 16
  %v5660 = vrot.slane %v5658, 4
  %v5661 = vor.u32 %v5660, %v5656
  %v5662 = vrot.slane %v5661, 4
  %v5664 = vshll.u32 %v5570, 16
  %v5666 = vrot.slane %v5664, 5
  %v5667 = vsel %vm1354, %v5662, %v5666
  %v5668 = vshrl.u32 %v5570, 16
  %v5670 = vrot.slane %v5668, 4
  %v5671 = vor.u32 %v5670, %v5666
  %v5672 = vrot.slane %v5671, 4
  %v5674 = vshll.u32 %v5571, 16
  %v5676 = vrot.slane %v5674, 5
  %v5677 = vsel %vm1354, %v5672, %v5676
  %v5678 = vshrl.u32 %v5571, 16
  %v5680 = vrot.slane %v5678, 4
  %v5681 = vor.u32 %v5680, %v5676
  %v5682 = vrot.slane %v5681, 4
  %v5684 = vshll.u32 %v5572, 16
  %v5686 = vrot.slane %v5684, 5
  %v5687 = vsel %vm1354, %v5682, %v5686
  %v5688 = vshrl.u32 %v5572, 16
  %v5690 = vrot.slane %v5688, 4
  %v5691 = vor.u32 %v5690, %v5686
  %v5692 = vrot.slane %v5691, 4
  %v5694 = vshll.u32 %v5573, 16
  %v5696 = vrot.slane %v5694, 5
  %v5697 = vsel %vm1354, %v5692, %v5696
  %v5698 = vshrl.u32 %v5573, 16
  %v5700 = vrot.slane %v5698, 4
  %v5701 = vor.u32 %v5700, %v5696
  %v5702 = vrot.slane %v5701, 4
  %v5704 = vshll.u32 %v5574, 16
  %v5706 = vrot.slane %v5704, 5
  %v5707 = vsel %vm1354, %v5702, %v5706
  %v5708 = vshrl.u32 %v5574, 16
  %v5710 = vrot.slane %v5708, 4
  %v5711 = vor.u32 %v5710, %v5706
  %v5712 = vrot.slane %v5711, 4
  %v5714 = vshll.u32 %v5575, 16
  %v5716 = vrot.slane %v5714, 5
  %v5717 = vsel %vm1354, %v5712, %v5716
  %v5718 = vshrl.u32 %v5575, 16
  %v5720 = vrot.slane %v5718, 4
  %v5721 = vor.u32 %v5720, %v5716
  %v5722 = vrot.slane %v5721, 4
  %v5724 = vshll.u32 %v5576, 16
  %v5726 = vrot.slane %v5724, 5
  %v5727 = vsel %vm1354, %v5722, %v5726
  %v5728 = vshrl.u32 %v5576, 16
  %v5730 = vrot.slane %v5728, 4
  %v5731 = vor.u32 %v5730, %v5726
  %v5732 = vrot.slane %v5731, 4
  %v5734 = vshll.u32 %v5577, 16
  %v5736 = vrot.slane %v5734, 5
  %v5737 = vsel %vm1354, %v5732, %v5736
  %v5738 = vshrl.u32 %v5577, 16
  %v5740 = vrot.slane %v5738, 4
  %v5741 = vor.u32 %v5740, %v5736
  %v5742 = vrot.slane %v5741, 4
  %v5744 = vshll.u32 %v5578, 16
  %v5746 = vrot.slane %v5744, 5
  %v5747 = vsel %vm1354, %v5742, %v5746
  %v5748 = vshrl.u32 %v5578, 16
  %v5750 = vrot.slane %v5748, 4
  %v5751 = vor.u32 %v5750, %v5746
  %v5752 = vrot.slane %v5751, 4
  %v5754 = vshll.u32 %v5579, 16
  %v5756 = vrot.slane %v5754, 5
  %v5757 = vsel %vm1354, %v5752, %v5756
  %v5758 = vshrl.u32 %v5579, 16
  %v5760 = vrot.slane %v5758, 4
  %v5761 = vor.u32 %v5760, %v5756
  %v5762 = vrot.slane %v5761, 4
  %v5764 = vshll.u32 %v5580, 16
  %v5766 = vrot.slane %v5764, 5
  %v5767 = vsel %vm1354, %v5762, %v5766
  %v5768 = vshrl.u32 %v5580, 16
  %v5770 = vrot.slane %v5768, 4
  %v5771 = vor.u32 %v5770, %v5766
  %v5772 = vrot.slane %v5771, 4
  %v5774 = vshll.u32 %v5581, 16
  %v5776 = vrot.slane %v5774, 5
  %v5777 = vsel %vm1354, %v5772, %v5776
  %v5778 = vshrl.u32 %v5581, 16
  %v5780 = vrot.slane %v5778, 4
  %v5781 = vor.u32 %v5780, %v5776
  %v5782 = vrot.slane %v5781, 4
  %v5784 = vshll.u32 %v5582, 16
  %v5786 = vrot.slane %v5784, 5
  %v5787 = vsel %vm1354, %v5782, %v5786
  %v5788 = vshrl.u32 %v5582, 16
  %v5790 = vrot.slane %v5788, 4
  %v5791 = vor.u32 %v5790, %v5786
  %v5792 = vrot.slane %v5791, 4
  %v5794 = vshll.u32 %v5583, 16
  %v5796 = vrot.slane %v5794, 5
  %v5797 = vsel %vm1354, %v5792, %v5796
  %v5798 = vshrl.u32 %v5583, 16
  %v5800 = vrot.slane %v5798, 4
  %v5801 = vor.u32 %v5800, %v5796
  %v5802 = vrot.slane %v5801, 4
  %v5804 = vshll.u32 %v5584, 16
  %v5806 = vrot.slane %v5804, 5
  %v5807 = vsel %vm1354, %v5802, %v5806
  %v5808 = vshrl.u32 %v5584, 16
  %v5810 = vrot.slane %v5808, 4
  %v5811 = vor.u32 %v5810, %v5806
  %v5812 = vrot.slane %v5811, 4
  %v5814 = vshll.u32 %v5585, 16
  %v5816 = vrot.slane %v5814, 5
  %v5817 = vsel %vm1354, %v5812, %v5816
  %v5818 = vshrl.u32 %v5585, 16
  %v5820 = vrot.slane %v5818, 4
  %v5821 = vor.u32 %v5820, %v5816
  %v5822 = vrot.slane %v5821, 4
  %v5824 = vshll.u32 %v5586, 16
  %v5826 = vrot.slane %v5824, 5
  %v5827 = vsel %vm1354, %v5822, %v5826
  %v5828 = vshrl.u32 %v5586, 16
  %v5830 = vrot.slane %v5828, 4
  %v5831 = vor.u32 %v5830, %v5826
  %v5832 = vrot.slane %v5831, 4
  %v5834 = vshll.u32 %v5587, 16
  %v5836 = vrot.slane %v5834, 5
  %v5837 = vsel %vm1354, %v5832, %v5836
  %v5838 = vshrl.u32 %v5587, 16
  %v5840 = vrot.slane %v5838, 4
  %v5841 = vor.u32 %v5840, %v5836
  %v5842 = vrot.slane %v5841, 4
  %v5844 = vshll.u32 %v5588, 16
  %v5846 = vrot.slane %v5844, 5
  %v5847 = vsel %vm1354, %v5842, %v5846
  %v5848 = vshrl.u32 %v5588, 16
  %v5850 = vrot.slane %v5848, 4
  %v5851 = vor.u32 %v5850, %v5846
  %v5852 = vrot.slane %v5851, 4
  %v5854 = vshll.u32 %v5589, 16
  %v5856 = vrot.slane %v5854, 5
  %v5857 = vsel %vm1354, %v5852, %v5856
  %v5858 = vshrl.u32 %v5589, 16
  %v5860 = vrot.slane %v5858, 4
  %v5861 = vor.u32 %v5860, %v5856
  %v5862 = vrot.slane %v5861, 4
  %v5864 = vshll.u32 %v5590, 16
  %v5866 = vrot.slane %v5864, 5
  %v5867 = vsel %vm1354, %v5862, %v5866
  %v5868 = vshrl.u32 %v5590, 16
  %v5870 = vrot.slane %v5868, 4
  %v5871 = vor.u32 %v5870, %v5866
  %v5872 = vrot.slane %v5871, 4
  %v5874 = vshll.u32 %v5591, 16
  %v5876 = vrot.slane %v5874, 5
  %v5877 = vsel %vm1354, %v5872, %v5876
  %v5878 = vshrl.u32 %v5591, 16
  %v5880 = vrot.slane %v5878, 4
  %v5881 = vor.u32 %v5880, %v5876
  %v5882 = vrot.slane %v5881, 4
  %v5884 = vshll.u32 %v5592, 16
  %v5886 = vrot.slane %v5884, 5
  %v5887 = vsel %vm1354, %v5882, %v5886
  %v5888 = vshrl.u32 %v5592, 16
  %v5890 = vrot.slane %v5888, 4
  %v5891 = vor.u32 %v5890, %v5886
  %v5892 = vrot.slane %v5891, 4
  %v5894 = vshll.u32 %v5593, 16
  %v5896 = vrot.slane %v5894, 5
  %v5897 = vsel %vm1354, %v5892, %v5896
  %v5898 = vshrl.u32 %v5593, 16
  %v5900 = vrot.slane %v5898, 4
  %v5901 = vor.u32 %v5900, %v5896
  %v5902 = vrot.slane %v5901, 4
  %v5904 = vshll.u32 %v5594, 16
  %v5906 = vrot.slane %v5904, 5
  %v5907 = vsel %vm1354, %v5902, %v5906
  %v5908 = vshrl.u32 %v5594, 16
  %v5910 = vrot.slane %v5908, 4
  %v5911 = vor.u32 %v5910, %v5906
  %v5912 = vrot.slane %v5911, 4
  %v5914 = vshll.u32 %v5595, 16
  %v5916 = vrot.slane %v5914, 5
  %v5917 = vsel %vm1354, %v5912, %v5916
  %v5918 = vshrl.u32 %v5595, 16
  %v5920 = vrot.slane %v5918, 4
  %v5921 = vor.u32 %v5920, %v5916
  %v5922 = vrot.slane %v5921, 4
  %v5924 = vshll.u32 %v5596, 16
  %v5926 = vrot.slane %v5924, 5
  %v5927 = vsel %vm1354, %v5922, %v5926
  %v5928 = vshrl.u32 %v5596, 16
  %v5930 = vrot.slane %v5928, 4
  %v5931 = vor.u32 %v5930, %v5926
  %v5932 = vrot.slane %v5931, 4
  %v5934 = vshll.u32 %v5597, 16
  %v5936 = vrot.slane %v5934, 5
  %v5937 = vsel %vm1354, %v5932, %v5936
  %v5938 = vshrl.u32 %v5597, 16
  %v5940 = vrot.slane %v5938, 4
  %v5941 = vor.u32 %v5940, %v5936
  %v5942 = vrot.slane %v5941, 4
  %v5944 = vshll.u32 %v5598, 16
  %v5946 = vrot.slane %v5944, 5
  %v5947 = vsel %vm1354, %v5942, %v5946
  %v5948 = vshrl.u32 %v5598, 16
  %v5950 = vrot.slane %v5948, 4
  %v5951 = vor.u32 %v5950, %v5946
  %v5952 = vrot.slane %v5951, 4
  %v5954 = vshll.u32 %v5599, 16
  %v5956 = vrot.slane %v5954, 5
  %v5957 = vsel %vm1354, %v5952, %v5956
  %v5958 = vshrl.u32 %v5599, 16
  %v5960 = vrot.slane %v5958, 4
  %v5961 = vor.u32 %v5960, %v5956
  %v5962 = vrot.slane %v5961, 4
  %v5964 = vshll.u32 %v5600, 16
  %v5966 = vrot.slane %v5964, 5
  %v5967 = vsel %vm1354, %v5962, %v5966
  %v5968 = vshrl.u32 %v5600, 16
  %v5970 = vrot.slane %v5968, 4
  %v5971 = vor.u32 %v5970, %v5966
  %v5972 = vrot.slane %v5971, 4
  %v5974 = vshll.u32 %v5601, 16
  %v5976 = vrot.slane %v5974, 5
  %v5977 = vsel %vm1354, %v5972, %v5976
  %v5978 = vshrl.u32 %v5601, 16
  %v5980 = vrot.slane %v5978, 4
  %v5981 = vor.u32 %v5980, %v5976
  %v5982 = vrot.slane %v5981, 4
  %v5984 = vshll.u32 %v5602, 16
  %v5986 = vrot.slane %v5984, 5
  %v5987 = vsel %vm1354, %v5982, %v5986
  %v5988 = vshrl.u32 %v5602, 16
  %v5990 = vrot.slane %v5988, 4
  %v5991 = vor.u32 %v5990, %v5986
  %v5992 = vrot.slane %v5991, 4
  %v5994 = vshll.u32 %v5603, 16
  %v5996 = vrot.slane %v5994, 5
  %v5997 = vsel %vm1354, %v5992, %v5996
  %v5998 = vshrl.u32 %v5603, 16
  %v6000 = vrot.slane %v5998, 4
  %v6001 = vor.u32 %v6000, %v5996
  %v6002 = vrot.slane %v6001, 4
  %v6004 = vshll.u32 %v5604, 16
  %v6006 = vrot.slane %v6004, 5
  %v6007 = vsel %vm1354, %v6002, %v6006
  %v6008 = vshrl.u32 %v5604, 16
  %v6010 = vrot.slane %v6008, 4
  %v6011 = vor.u32 %v6010, %v6006
  %v6012 = vrot.slane %v6011, 4
  %v6014 = vshll.u32 %v5605, 16
  %v6016 = vrot.slane %v6014, 5
  %v6017 = vsel %vm1354, %v6012, %v6016
  %v6018 = vshrl.u32 %v5605, 16
  %v6020 = vrot.slane %v6018, 4
  %v6021 = vor.u32 %v6020, %v6016
  %v6022 = vrot.slane %v6021, 4
  %v6024 = vshll.u32 %v5606, 16
  %v6026 = vrot.slane %v6024, 5
  %v6027 = vsel %vm1354, %v6022, %v6026
  %v6028 = vshrl.u32 %v5606, 16
  %v6030 = vrot.slane %v6028, 4
  %v6031 = vor.u32 %v6030, %v6026
  %v6032 = vrot.slane %v6031, 4
  %v6034 = vshll.u32 %v5607, 16
  %v6036 = vrot.slane %v6034, 5
  %v6037 = vsel %vm1354, %v6032, %v6036
  %v6038 = vshrl.u32 %v5607, 16
  %v6040 = vrot.slane %v6038, 4
  %v6041 = vor.u32 %v6040, %v6036
  %v6042 = vrot.slane %v6041, 4
  %v6044 = vshll.u32 %v5608, 16
  %v6046 = vrot.slane %v6044, 5
  %v6047 = vsel %vm1354, %v6042, %v6046
  %v6048 = vshrl.u32 %v5608, 16
  %v6050 = vrot.slane %v6048, 4
  %v6051 = vor.u32 %v6050, %v6046
  %v6052 = vrot.slane %v6051, 4
  %v6054 = vshll.u32 %v5609, 16
  %v6056 = vrot.slane %v6054, 5
  %v6057 = vsel %vm1354, %v6052, %v6056
  %v6058 = vshrl.u32 %v5609, 16
  %v6060 = vrot.slane %v6058, 4
  %v6061 = vor.u32 %v6060, %v6056
  %v6062 = vrot.slane %v6061, 4
  %v6064 = vshll.u32 %v5610, 16
  %v6066 = vrot.slane %v6064, 5
  %v6067 = vsel %vm1354, %v6062, %v6066
  %v6068 = vshrl.u32 %v5610, 16
  %v6070 = vrot.slane %v6068, 4
  %v6071 = vor.u32 %v6070, %v6066
  %v6072 = vrot.slane %v6071, 4
  %v6074 = vshll.u32 %v5611, 16
  %v6076 = vrot.slane %v6074, 5
  %v6077 = vsel %vm1354, %v6072, %v6076
  %v6078 = vshrl.u32 %v5611, 16
  %v6080 = vrot.slane %v6078, 4
  %v6081 = vor.u32 %v6080, %v6076
  %v6082 = vrot.slane %v6081, 4
  %v6084 = vshll.u32 %v5612, 16
  %v6086 = vrot.slane %v6084, 5
  %v6087 = vsel %vm1354, %v6082, %v6086
  %v6088 = vshrl.u32 %v5612, 16
  %v6090 = vrot.slane %v6088, 4
  %v6091 = vor.u32 %v6090, %v6086
  %v6092 = vrot.slane %v6091, 4
  %v6094 = vshll.u32 %v5613, 16
  %v6096 = vrot.slane %v6094, 5
  %v6097 = vsel %vm1354, %v6092, %v6096
  %6146 = vst [vmem:[#allocation3 + $0x6d0] sm:$0xf] %v5627
  %6147 = vst [vmem:[#allocation3 + $0x6f4] sm:$0xf] %v5637
  %6148 = vst [vmem:[#allocation3 + $0x718] sm:$0xf] %v5647
  %6149 = vst [vmem:[#allocation3 + $0x73c] sm:$0xf] %v5657
  %6150 = vst [vmem:[#allocation3 + $0x760] sm:$0xf] %v5667
  %6151 = vst [vmem:[#allocation3 + $0x784] sm:$0xf] %v5677
  %6152 = vst [vmem:[#allocation3 + $0x7a8] sm:$0xf] %v5687
  %6153 = vst [vmem:[#allocation3 + $0x7cc] sm:$0xf] %v5697
  %6154 = vst [vmem:[#allocation3 + $0x7f0] sm:$0xf] %v5707
  %6155 = vst [vmem:[#allocation3 + $0x814] sm:$0xf] %v5717
  %6156 = vst [vmem:[#allocation3 + $0x838] sm:$0xf] %v5727
  %6157 = vst [vmem:[#allocation3 + $0x85c] sm:$0xf] %v5737
  %6158 = vst [vmem:[#allocation3 + $0x880] sm:$0xf] %v5747
  %6159 = vst [vmem:[#allocation3 + $0x8a4] sm:$0xf] %v5757
  %6160 = vst [vmem:[#allocation3 + $0x8c8] sm:$0xf] %v5767
  %6161 = vst [vmem:[#allocation3 + $0x8ec] sm:$0xf] %v5777
  %6162 = vst [vmem:[#allocation3 + $0x910] sm:$0xf] %v5787
  %6163 = vst [vmem:[#allocation3 + $0x934] sm:$0xf] %v5797
  %6164 = vst [vmem:[#allocation3 + $0x958] sm:$0xf] %v5807
  %6165 = vst [vmem:[#allocation3 + $0x97c] sm:$0xf] %v5817
  %6166 = vst [vmem:[#allocation3 + $0x9a0] sm:$0xf] %v5827
  %6167 = vst [vmem:[#allocation3 + $0x9c4] sm:$0xf] %v5837
  %6168 = vst [vmem:[#allocation3 + $0x9e8] sm:$0xf] %v5847
  %6169 = vst [vmem:[#allocation3 + $0xa0c] sm:$0xf] %v5857
  %6170 = vst [vmem:[#allocation3 + $0xa30] sm:$0xf] %v5867
  %6171 = vst [vmem:[#allocation3 + $0xa54] sm:$0xf] %v5877
  %6172 = vst [vmem:[#allocation3 + $0xa78] sm:$0xf] %v5887
  %6173 = vst [vmem:[#allocation3 + $0xa9c] sm:$0xf] %v5897
  %6174 = vst [vmem:[#allocation3 + $0xac0] sm:$0xf] %v5907
  %6175 = vst [vmem:[#allocation3 + $0xae4] sm:$0xf] %v5917
  %6176 = vst [vmem:[#allocation3 + $0xb08] sm:$0xf] %v5927
  %6177 = vst [vmem:[#allocation3 + $0xb2c] sm:$0xf] %v5937
  %6178 = vst [vmem:[#allocation3 + $0xb50] sm:$0xf] %v5947
  %6179 = vst [vmem:[#allocation3 + $0xb74] sm:$0xf] %v5957
  %6180 = vst [vmem:[#allocation3 + $0xb98] sm:$0xf] %v5967
  %6181 = vst [vmem:[#allocation3 + $0xbbc] sm:$0xf] %v5977
  %6182 = vst [vmem:[#allocation3 + $0xbe0] sm:$0xf] %v5987
  %6183 = vst [vmem:[#allocation3 + $0xc04] sm:$0xf] %v5997
  %6184 = vst [vmem:[#allocation3 + $0xc28] sm:$0xf] %v6007
  %6185 = vst [vmem:[#allocation3 + $0xc4c] sm:$0xf] %v6017
  %6186 = vst [vmem:[#allocation3 + $0xc70] sm:$0xf] %v6027
  %6187 = vst [vmem:[#allocation3 + $0xc94] sm:$0xf] %v6037
  %6188 = vst [vmem:[#allocation3 + $0xcb8] sm:$0xf] %v6047
  %6189 = vst [vmem:[#allocation3 + $0xcdc] sm:$0xf] %v6057
  %6190 = vst [vmem:[#allocation3 + $0xd00] sm:$0xf] %v6067
  %6191 = vst [vmem:[#allocation3 + $0xd24] sm:$0xf] %v6077
  %6192 = vst [vmem:[#allocation3 + $0xd48] sm:$0xf] %v6087
  %6193 = vst [vmem:[#allocation3 + $0xd6c] sm:$0xf] %v6097
  %v6194 = vld [vmem:[#allocation2 + $0xe8] sm:$0xe]
  %v6195 = vld [vmem:[#allocation2 + $0xec] sm:$0xf]
  %v6196 = vld [vmem:[#allocation2 + $0xf0] sm:$0xf]
  %v6197 = vld [vmem:[#allocation2 + $0xf4] sm:$0xf]
  %v6198 = vld [vmem:[#allocation2 + $0xf8] sm:$0xf]
  %v6199 = vld [vmem:[#allocation2 + $0xfc] sm:$0xf]
  %v6200 = vld [vmem:[#allocation2 + $0x100] sm:$0xf]
  %v6201 = vld [vmem:[#allocation2 + $0x104] sm:$0xf]
  %v6202 = vld [vmem:[#allocation2 + $0x108] sm:$0xf]
  %v6203 = vld [vmem:[#allocation2 + $0x10c] sm:$0xf]
  %v6204 = vld [vmem:[#allocation2 + $0x110] sm:$0xf]
  %v6205 = vld [vmem:[#allocation2 + $0x114] sm:$0xf]
  %v6206 = vld [vmem:[#allocation2 + $0x118] sm:$0xf]
  %v6207 = vld [vmem:[#allocation2 + $0x11c] sm:$0xf]
  %v6208 = vld [vmem:[#allocation2 + $0x120] sm:$0xf]
  %v6209 = vld [vmem:[#allocation2 + $0x124] sm:$0xf]
  %v6210 = vld [vmem:[#allocation2 + $0x128] sm:$0xf]
  %v6211 = vld [vmem:[#allocation2 + $0x12c] sm:$0xf]
  %v6212 = vld [vmem:[#allocation2 + $0x130] sm:$0xf]
  %v6213 = vld [vmem:[#allocation2 + $0x134] sm:$0xf]
  %v6214 = vld [vmem:[#allocation2 + $0x138] sm:$0xf]
  %v6215 = vld [vmem:[#allocation2 + $0x13c] sm:$0xf]
  %v6216 = vld [vmem:[#allocation2 + $0x140] sm:$0xf]
  %v6217 = vld [vmem:[#allocation2 + $0x144] sm:$0xf]
  %v6218 = vld [vmem:[#allocation2 + $0x148] sm:$0xf]
  %v6219 = vld [vmem:[#allocation2 + $0x14c] sm:$0xf]
  %v6220 = vld [vmem:[#allocation2 + $0x150] sm:$0xf]
  %v6221 = vld [vmem:[#allocation2 + $0x154] sm:$0xf]
  %v6222 = vld [vmem:[#allocation2 + $0x158] sm:$0xf]
  %v6223 = vld [vmem:[#allocation2 + $0x15c] sm:$0xf]
  %v6224 = vld [vmem:[#allocation2 + $0x160] sm:$0xf]
  %v6225 = vld [vmem:[#allocation2 + $0x164] sm:$0xf]
  %v6226 = vld [vmem:[#allocation2 + $0x168] sm:$0xf]
  %v6227 = vld [vmem:[#allocation2 + $0x16c] sm:$0xf]
  %v6228 = vld [vmem:[#allocation2 + $0x170] sm:$0xf]
  %v6229 = vld [vmem:[#allocation2 + $0x174] sm:$0xf]
  %v6230 = vld [vmem:[#allocation2 + $0x178] sm:$0xf]
  %v6231 = vld [vmem:[#allocation2 + $0x17c] sm:$0xf]
  %v6232 = vld [vmem:[#allocation2 + $0x180] sm:$0xf]
  %v6233 = vld [vmem:[#allocation2 + $0x184] sm:$0xf]
  %v6234 = vld [vmem:[#allocation2 + $0x188] sm:$0xf]
  %v6235 = vld [vmem:[#allocation2 + $0x18c] sm:$0xf]
  %v6236 = vld [vmem:[#allocation2 + $0x190] sm:$0xf]
  %v6237 = vld [vmem:[#allocation2 + $0x194] sm:$0xf]
  %v6238 = vld [vmem:[#allocation2 + $0x198] sm:$0xf]
  %v6239 = vld [vmem:[#allocation2 + $0x19c] sm:$0xf]
  %v6240 = vld [vmem:[#allocation2 + $0x1a0] sm:$0xf]
  %v6241 = vld [vmem:[#allocation2 + $0x1a4] sm:$0xf]
  %v6242 = vld [vmem:[#allocation2 + $0x1a8] sm:$0x1]
  %v6292 = vrot.slane %v6194, 5
  %v6293 = vrot.slane %v6292, 4
  %v6294 = vrot.slane %v6195, 5
  %v6295 = vsel %vm2035, %v6293, %v6294
  %v6296 = vrot.slane %v6294, 4
  %v6297 = vrot.slane %v6196, 5
  %v6298 = vsel %vm2035, %v6296, %v6297
  %v6299 = vrot.slane %v6297, 4
  %v6300 = vrot.slane %v6197, 5
  %v6301 = vsel %vm2035, %v6299, %v6300
  %v6302 = vrot.slane %v6300, 4
  %v6303 = vrot.slane %v6198, 5
  %v6304 = vsel %vm2035, %v6302, %v6303
  %v6305 = vrot.slane %v6303, 4
  %v6306 = vrot.slane %v6199, 5
  %v6307 = vsel %vm2035, %v6305, %v6306
  %v6308 = vrot.slane %v6306, 4
  %v6309 = vrot.slane %v6200, 5
  %v6310 = vsel %vm2035, %v6308, %v6309
  %v6311 = vrot.slane %v6309, 4
  %v6312 = vrot.slane %v6201, 5
  %v6313 = vsel %vm2035, %v6311, %v6312
  %v6314 = vrot.slane %v6312, 4
  %v6315 = vrot.slane %v6202, 5
  %v6316 = vsel %vm2035, %v6314, %v6315
  %v6317 = vrot.slane %v6315, 4
  %v6318 = vrot.slane %v6203, 5
  %v6319 = vsel %vm2035, %v6317, %v6318
  %v6320 = vrot.slane %v6318, 4
  %v6321 = vrot.slane %v6204, 5
  %v6322 = vsel %vm2035, %v6320, %v6321
  %v6323 = vrot.slane %v6321, 4
  %v6324 = vrot.slane %v6205, 5
  %v6325 = vsel %vm2035, %v6323, %v6324
  %v6326 = vrot.slane %v6324, 4
  %v6327 = vrot.slane %v6206, 5
  %v6328 = vsel %vm2035, %v6326, %v6327
  %v6329 = vrot.slane %v6327, 4
  %v6330 = vrot.slane %v6207, 5
  %v6331 = vsel %vm2035, %v6329, %v6330
  %v6332 = vrot.slane %v6330, 4
  %v6333 = vrot.slane %v6208, 5
  %v6334 = vsel %vm2035, %v6332, %v6333
  %v6335 = vrot.slane %v6333, 4
  %v6336 = vrot.slane %v6209, 5
  %v6337 = vsel %vm2035, %v6335, %v6336
  %v6338 = vrot.slane %v6336, 4
  %v6339 = vrot.slane %v6210, 5
  %v6340 = vsel %vm2035, %v6338, %v6339
  %v6341 = vrot.slane %v6339, 4
  %v6342 = vrot.slane %v6211, 5
  %v6343 = vsel %vm2035, %v6341, %v6342
  %v6344 = vrot.slane %v6342, 4
  %v6345 = vrot.slane %v6212, 5
  %v6346 = vsel %vm2035, %v6344, %v6345
  %v6347 = vrot.slane %v6345, 4
  %v6348 = vrot.slane %v6213, 5
  %v6349 = vsel %vm2035, %v6347, %v6348
  %v6350 = vrot.slane %v6348, 4
  %v6351 = vrot.slane %v6214, 5
  %v6352 = vsel %vm2035, %v6350, %v6351
  %v6353 = vrot.slane %v6351, 4
  %v6354 = vrot.slane %v6215, 5
  %v6355 = vsel %vm2035, %v6353, %v6354
  %v6356 = vrot.slane %v6354, 4
  %v6357 = vrot.slane %v6216, 5
  %v6358 = vsel %vm2035, %v6356, %v6357
  %v6359 = vrot.slane %v6357, 4
  %v6360 = vrot.slane %v6217, 5
  %v6361 = vsel %vm2035, %v6359, %v6360
  %v6362 = vrot.slane %v6360, 4
  %v6363 = vrot.slane %v6218, 5
  %v6364 = vsel %vm2035, %v6362, %v6363
  %v6365 = vrot.slane %v6363, 4
  %v6366 = vrot.slane %v6219, 5
  %v6367 = vsel %vm2035, %v6365, %v6366
  %v6368 = vrot.slane %v6366, 4
  %v6369 = vrot.slane %v6220, 5
  %v6370 = vsel %vm2035, %v6368, %v6369
  %v6371 = vrot.slane %v6369, 4
  %v6372 = vrot.slane %v6221, 5
  %v6373 = vsel %vm2035, %v6371, %v6372
  %v6374 = vrot.slane %v6372, 4
  %v6375 = vrot.slane %v6222, 5
  %v6376 = vsel %vm2035, %v6374, %v6375
  %v6377 = vrot.slane %v6375, 4
  %v6378 = vrot.slane %v6223, 5
  %v6379 = vsel %vm2035, %v6377, %v6378
  %v6380 = vrot.slane %v6378, 4
  %v6381 = vrot.slane %v6224, 5
  %v6382 = vsel %vm2035, %v6380, %v6381
  %v6383 = vrot.slane %v6381, 4
  %v6384 = vrot.slane %v6225, 5
  %v6385 = vsel %vm2035, %v6383, %v6384
  %v6386 = vrot.slane %v6384, 4
  %v6387 = vrot.slane %v6226, 5
  %v6388 = vsel %vm2035, %v6386, %v6387
  %v6389 = vrot.slane %v6387, 4
  %v6390 = vrot.slane %v6227, 5
  %v6391 = vsel %vm2035, %v6389, %v6390
  %v6392 = vrot.slane %v6390, 4
  %v6393 = vrot.slane %v6228, 5
  %v6394 = vsel %vm2035, %v6392, %v6393
  %v6395 = vrot.slane %v6393, 4
  %v6396 = vrot.slane %v6229, 5
  %v6397 = vsel %vm2035, %v6395, %v6396
  %v6398 = vrot.slane %v6396, 4
  %v6399 = vrot.slane %v6230, 5
  %v6400 = vsel %vm2035, %v6398, %v6399
  %v6401 = vrot.slane %v6399, 4
  %v6402 = vrot.slane %v6231, 5
  %v6403 = vsel %vm2035, %v6401, %v6402
  %v6404 = vrot.slane %v6402, 4
  %v6405 = vrot.slane %v6232, 5
  %v6406 = vsel %vm2035, %v6404, %v6405
  %v6407 = vrot.slane %v6405, 4
  %v6408 = vrot.slane %v6233, 5
  %v6409 = vsel %vm2035, %v6407, %v6408
  %v6410 = vrot.slane %v6408, 4
  %v6411 = vrot.slane %v6234, 5
  %v6412 = vsel %vm2035, %v6410, %v6411
  %v6413 = vrot.slane %v6411, 4
  %v6414 = vrot.slane %v6235, 5
  %v6415 = vsel %vm2035, %v6413, %v6414
  %v6416 = vrot.slane %v6414, 4
  %v6417 = vrot.slane %v6236, 5
  %v6418 = vsel %vm2035, %v6416, %v6417
  %v6419 = vrot.slane %v6417, 4
  %v6420 = vrot.slane %v6237, 5
  %v6421 = vsel %vm2035, %v6419, %v6420
  %v6422 = vrot.slane %v6420, 4
  %v6423 = vrot.slane %v6238, 5
  %v6424 = vsel %vm2035, %v6422, %v6423
  %v6425 = vrot.slane %v6423, 4
  %v6426 = vrot.slane %v6239, 5
  %v6427 = vsel %vm2035, %v6425, %v6426
  %v6428 = vrot.slane %v6426, 4
  %v6429 = vrot.slane %v6240, 5
  %v6430 = vsel %vm2035, %v6428, %v6429
  %v6431 = vrot.slane %v6429, 4
  %v6432 = vrot.slane %v6241, 5
  %v6433 = vsel %vm2035, %v6431, %v6432
  %v6434 = vrot.slane %v6432, 4
  %v6435 = vrot.slane %v6242, 5
  %v6436 = vsel %vm2035, %v6434, %v6435
  %6485 = vst [vmem:[#allocation3 + $0x6d4] sm:$0xf] %v6295
  %6486 = vst [vmem:[#allocation3 + $0x6f8] sm:$0xf] %v6298
  %6487 = vst [vmem:[#allocation3 + $0x71c] sm:$0xf] %v6301
  %6488 = vst [vmem:[#allocation3 + $0x740] sm:$0xf] %v6304
  %6489 = vst [vmem:[#allocation3 + $0x764] sm:$0xf] %v6307
  %6490 = vst [vmem:[#allocation3 + $0x788] sm:$0xf] %v6310
  %6491 = vst [vmem:[#allocation3 + $0x7ac] sm:$0xf] %v6313
  %6492 = vst [vmem:[#allocation3 + $0x7d0] sm:$0xf] %v6316
  %6493 = vst [vmem:[#allocation3 + $0x7f4] sm:$0xf] %v6319
  %6494 = vst [vmem:[#allocation3 + $0x818] sm:$0xf] %v6322
  %6495 = vst [vmem:[#allocation3 + $0x83c] sm:$0xf] %v6325
  %6496 = vst [vmem:[#allocation3 + $0x860] sm:$0xf] %v6328
  %6497 = vst [vmem:[#allocation3 + $0x884] sm:$0xf] %v6331
  %6498 = vst [vmem:[#allocation3 + $0x8a8] sm:$0xf] %v6334
  %6499 = vst [vmem:[#allocation3 + $0x8cc] sm:$0xf] %v6337
  %6500 = vst [vmem:[#allocation3 + $0x8f0] sm:$0xf] %v6340
  %6501 = vst [vmem:[#allocation3 + $0x914] sm:$0xf] %v6343
  %6502 = vst [vmem:[#allocation3 + $0x938] sm:$0xf] %v6346
  %6503 = vst [vmem:[#allocation3 + $0x95c] sm:$0xf] %v6349
  %6504 = vst [vmem:[#allocation3 + $0x980] sm:$0xf] %v6352
  %6505 = vst [vmem:[#allocation3 + $0x9a4] sm:$0xf] %v6355
  %6506 = vst [vmem:[#allocation3 + $0x9c8] sm:$0xf] %v6358
  %6507 = vst [vmem:[#allocation3 + $0x9ec] sm:$0xf] %v6361
  %6508 = vst [vmem:[#allocation3 + $0xa10] sm:$0xf] %v6364
  %6509 = vst [vmem:[#allocation3 + $0xa34] sm:$0xf] %v6367
  %6510 = vst [vmem:[#allocation3 + $0xa58] sm:$0xf] %v6370
  %6511 = vst [vmem:[#allocation3 + $0xa7c] sm:$0xf] %v6373
  %6512 = vst [vmem:[#allocation3 + $0xaa0] sm:$0xf] %v6376
  %6513 = vst [vmem:[#allocation3 + $0xac4] sm:$0xf] %v6379
  %6514 = vst [vmem:[#allocation3 + $0xae8] sm:$0xf] %v6382
  %6515 = vst [vmem:[#allocation3 + $0xb0c] sm:$0xf] %v6385
  %6516 = vst [vmem:[#allocation3 + $0xb30] sm:$0xf] %v6388
  %6517 = vst [vmem:[#allocation3 + $0xb54] sm:$0xf] %v6391
  %6518 = vst [vmem:[#allocation3 + $0xb78] sm:$0xf] %v6394
  %6519 = vst [vmem:[#allocation3 + $0xb9c] sm:$0xf] %v6397
  %6520 = vst [vmem:[#allocation3 + $0xbc0] sm:$0xf] %v6400
  %6521 = vst [vmem:[#allocation3 + $0xbe4] sm:$0xf] %v6403
  %6522 = vst [vmem:[#allocation3 + $0xc08] sm:$0xf] %v6406
  %6523 = vst [vmem:[#allocation3 + $0xc2c] sm:$0xf] %v6409
  %6524 = vst [vmem:[#allocation3 + $0xc50] sm:$0xf] %v6412
  %6525 = vst [vmem:[#allocation3 + $0xc74] sm:$0xf] %v6415
  %6526 = vst [vmem:[#allocation3 + $0xc98] sm:$0xf] %v6418
  %6527 = vst [vmem:[#allocation3 + $0xcbc] sm:$0xf] %v6421
  %6528 = vst [vmem:[#allocation3 + $0xce0] sm:$0xf] %v6424
  %6529 = vst [vmem:[#allocation3 + $0xd04] sm:$0xf] %v6427
  %6530 = vst [vmem:[#allocation3 + $0xd28] sm:$0xf] %v6430
  %6531 = vst [vmem:[#allocation3 + $0xd4c] sm:$0xf] %v6433
  %6532 = vst [vmem:[#allocation3 + $0xd70] sm:$0xf] %v6436
  %v6533 = vld [vmem:[#allocation2 + $0xf4] sm:$0xf]
  %v6534 = vld [vmem:[#allocation2 + $0xf8] sm:$0xf]
  %v6535 = vld [vmem:[#allocation2 + $0xfc] sm:$0xf]
  %v6536 = vld [vmem:[#allocation2 + $0x100] sm:$0xf]
  %v6537 = vld [vmem:[#allocation2 + $0x104] sm:$0xf]
  %v6538 = vld [vmem:[#allocation2 + $0x108] sm:$0xf]
  %v6539 = vld [vmem:[#allocation2 + $0x10c] sm:$0xf]
  %v6540 = vld [vmem:[#allocation2 + $0x110] sm:$0xf]
  %v6541 = vld [vmem:[#allocation2 + $0x114] sm:$0xf]
  %v6542 = vld [vmem:[#allocation2 + $0x118] sm:$0xf]
  %v6543 = vld [vmem:[#allocation2 + $0x11c] sm:$0xf]
  %v6544 = vld [vmem:[#allocation2 + $0x120] sm:$0xf]
  %v6545 = vld [vmem:[#allocation2 + $0x124] sm:$0xf]
  %v6546 = vld [vmem:[#allocation2 + $0x128] sm:$0xf]
  %v6547 = vld [vmem:[#allocation2 + $0x12c] sm:$0xf]
  %v6548 = vld [vmem:[#allocation2 + $0x130] sm:$0xf]
  %v6549 = vld [vmem:[#allocation2 + $0x134] sm:$0xf]
  %v6550 = vld [vmem:[#allocation2 + $0x138] sm:$0xf]
  %v6551 = vld [vmem:[#allocation2 + $0x13c] sm:$0xf]
  %v6552 = vld [vmem:[#allocation2 + $0x140] sm:$0xf]
  %v6553 = vld [vmem:[#allocation2 + $0x144] sm:$0xf]
  %v6554 = vld [vmem:[#allocation2 + $0x148] sm:$0xf]
  %v6555 = vld [vmem:[#allocation2 + $0x14c] sm:$0xf]
  %v6556 = vld [vmem:[#allocation2 + $0x150] sm:$0xf]
  %v6557 = vld [vmem:[#allocation2 + $0x154] sm:$0xf]
  %v6558 = vld [vmem:[#allocation2 + $0x158] sm:$0xf]
  %v6559 = vld [vmem:[#allocation2 + $0x15c] sm:$0xf]
  %v6560 = vld [vmem:[#allocation2 + $0x160] sm:$0xf]
  %v6561 = vld [vmem:[#allocation2 + $0x164] sm:$0xf]
  %v6562 = vld [vmem:[#allocation2 + $0x168] sm:$0xf]
  %v6563 = vld [vmem:[#allocation2 + $0x16c] sm:$0xf]
  %v6564 = vld [vmem:[#allocation2 + $0x170] sm:$0xf]
  %v6565 = vld [vmem:[#allocation2 + $0x174] sm:$0xf]
  %v6566 = vld [vmem:[#allocation2 + $0x178] sm:$0xf]
  %v6567 = vld [vmem:[#allocation2 + $0x17c] sm:$0xf]
  %v6568 = vld [vmem:[#allocation2 + $0x180] sm:$0xf]
  %v6569 = vld [vmem:[#allocation2 + $0x184] sm:$0xf]
  %v6570 = vld [vmem:[#allocation2 + $0x188] sm:$0xf]
  %v6571 = vld [vmem:[#allocation2 + $0x18c] sm:$0xf]
  %v6572 = vld [vmem:[#allocation2 + $0x190] sm:$0xf]
  %v6573 = vld [vmem:[#allocation2 + $0x194] sm:$0xf]
  %v6574 = vld [vmem:[#allocation2 + $0x198] sm:$0xf]
  %v6575 = vld [vmem:[#allocation2 + $0x19c] sm:$0xf]
  %v6576 = vld [vmem:[#allocation2 + $0x1a0] sm:$0xf]
  %v6577 = vld [vmem:[#allocation2 + $0x1a4] sm:$0xf]
  %v6578 = vld [vmem:[#allocation2 + $0x1a8] sm:$0xf]
  %v6579 = vld [vmem:[#allocation2 + $0x1ac] sm:$0xf]
  %v6580 = vld [vmem:[#allocation2 + $0x1b0] sm:$0xf]
  %6581 = vst [vmem:[#allocation3 + $0x6d8] sm:$0xf] %v6533
  %6582 = vst [vmem:[#allocation3 + $0x6fc] sm:$0xf] %v6534
  %6583 = vst [vmem:[#allocation3 + $0x720] sm:$0xf] %v6535
  %6584 = vst [vmem:[#allocation3 + $0x744] sm:$0xf] %v6536
  %6585 = vst [vmem:[#allocation3 + $0x768] sm:$0xf] %v6537
  %6586 = vst [vmem:[#allocation3 + $0x78c] sm:$0xf] %v6538
  %6587 = vst [vmem:[#allocation3 + $0x7b0] sm:$0xf] %v6539
  %6588 = vst [vmem:[#allocation3 + $0x7d4] sm:$0xf] %v6540
  %6589 = vst [vmem:[#allocation3 + $0x7f8] sm:$0xf] %v6541
  %6590 = vst [vmem:[#allocation3 + $0x81c] sm:$0xf] %v6542
  %6591 = vst [vmem:[#allocation3 + $0x840] sm:$0xf] %v6543
  %6592 = vst [vmem:[#allocation3 + $0x864] sm:$0xf] %v6544
  %6593 = vst [vmem:[#allocation3 + $0x888] sm:$0xf] %v6545
  %6594 = vst [vmem:[#allocation3 + $0x8ac] sm:$0xf] %v6546
  %6595 = vst [vmem:[#allocation3 + $0x8d0] sm:$0xf] %v6547
  %6596 = vst [vmem:[#allocation3 + $0x8f4] sm:$0xf] %v6548
  %6597 = vst [vmem:[#allocation3 + $0x918] sm:$0xf] %v6549
  %6598 = vst [vmem:[#allocation3 + $0x93c] sm:$0xf] %v6550
  %6599 = vst [vmem:[#allocation3 + $0x960] sm:$0xf] %v6551
  %6600 = vst [vmem:[#allocation3 + $0x984] sm:$0xf] %v6552
  %6601 = vst [vmem:[#allocation3 + $0x9a8] sm:$0xf] %v6553
  %6602 = vst [vmem:[#allocation3 + $0x9cc] sm:$0xf] %v6554
  %6603 = vst [vmem:[#allocation3 + $0x9f0] sm:$0xf] %v6555
  %6604 = vst [vmem:[#allocation3 + $0xa14] sm:$0xf] %v6556
  %6605 = vst [vmem:[#allocation3 + $0xa38] sm:$0xf] %v6557
  %6606 = vst [vmem:[#allocation3 + $0xa5c] sm:$0xf] %v6558
  %6607 = vst [vmem:[#allocation3 + $0xa80] sm:$0xf] %v6559
  %6608 = vst [vmem:[#allocation3 + $0xaa4] sm:$0xf] %v6560
  %6609 = vst [vmem:[#allocation3 + $0xac8] sm:$0xf] %v6561
  %6610 = vst [vmem:[#allocation3 + $0xaec] sm:$0xf] %v6562
  %6611 = vst [vmem:[#allocation3 + $0xb10] sm:$0xf] %v6563
  %6612 = vst [vmem:[#allocation3 + $0xb34] sm:$0xf] %v6564
  %6613 = vst [vmem:[#allocation3 + $0xb58] sm:$0xf] %v6565
  %6614 = vst [vmem:[#allocation3 + $0xb7c] sm:$0xf] %v6566
  %6615 = vst [vmem:[#allocation3 + $0xba0] sm:$0xf] %v6567
  %6616 = vst [vmem:[#allocation3 + $0xbc4] sm:$0xf] %v6568
  %6617 = vst [vmem:[#allocation3 + $0xbe8] sm:$0xf] %v6569
  %6618 = vst [vmem:[#allocation3 + $0xc0c] sm:$0xf] %v6570
  %6619 = vst [vmem:[#allocation3 + $0xc30] sm:$0xf] %v6571
  %6620 = vst [vmem:[#allocation3 + $0xc54] sm:$0xf] %v6572
  %6621 = vst [vmem:[#allocation3 + $0xc78] sm:$0xf] %v6573
  %6622 = vst [vmem:[#allocation3 + $0xc9c] sm:$0xf] %v6574
  %6623 = vst [vmem:[#allocation3 + $0xcc0] sm:$0xf] %v6575
  %6624 = vst [vmem:[#allocation3 + $0xce4] sm:$0xf] %v6576
  %6625 = vst [vmem:[#allocation3 + $0xd08] sm:$0xf] %v6577
  %6626 = vst [vmem:[#allocation3 + $0xd2c] sm:$0xf] %v6578
  %6627 = vst [vmem:[#allocation3 + $0xd50] sm:$0xf] %v6579
  %6628 = vst [vmem:[#allocation3 + $0xd74] sm:$0xf] %v6580
  %v6629 = vld [vmem:[#allocation2 + $0xf4] sm:$0xf]
  %v6630 = vld [vmem:[#allocation2 + $0xf8] sm:$0xf]
  %v6631 = vld [vmem:[#allocation2 + $0xfc] sm:$0xf]
  %v6632 = vld [vmem:[#allocation2 + $0x100] sm:$0xf]
  %v6633 = vld [vmem:[#allocation2 + $0x104] sm:$0xf]
  %v6634 = vld [vmem:[#allocation2 + $0x108] sm:$0xf]
  %v6635 = vld [vmem:[#allocation2 + $0x10c] sm:$0xf]
  %v6636 = vld [vmem:[#allocation2 + $0x110] sm:$0xf]
  %v6637 = vld [vmem:[#allocation2 + $0x114] sm:$0xf]
  %v6638 = vld [vmem:[#allocation2 + $0x118] sm:$0xf]
  %v6639 = vld [vmem:[#allocation2 + $0x11c] sm:$0xf]
  %v6640 = vld [vmem:[#allocation2 + $0x120] sm:$0xf]
  %v6641 = vld [vmem:[#allocation2 + $0x124] sm:$0xf]
  %v6642 = vld [vmem:[#allocation2 + $0x128] sm:$0xf]
  %v6643 = vld [vmem:[#allocation2 + $0x12c] sm:$0xf]
  %v6644 = vld [vmem:[#allocation2 + $0x130] sm:$0xf]
  %v6645 = vld [vmem:[#allocation2 + $0x134] sm:$0xf]
  %v6646 = vld [vmem:[#allocation2 + $0x138] sm:$0xf]
  %v6647 = vld [vmem:[#allocation2 + $0x13c] sm:$0xf]
  %v6648 = vld [vmem:[#allocation2 + $0x140] sm:$0xf]
  %v6649 = vld [vmem:[#allocation2 + $0x144] sm:$0xf]
  %v6650 = vld [vmem:[#allocation2 + $0x148] sm:$0xf]
  %v6651 = vld [vmem:[#allocation2 + $0x14c] sm:$0xf]
  %v6652 = vld [vmem:[#allocation2 + $0x150] sm:$0xf]
  %v6653 = vld [vmem:[#allocation2 + $0x154] sm:$0xf]
  %v6654 = vld [vmem:[#allocation2 + $0x158] sm:$0xf]
  %v6655 = vld [vmem:[#allocation2 + $0x15c] sm:$0xf]
  %v6656 = vld [vmem:[#allocation2 + $0x160] sm:$0xf]
  %v6657 = vld [vmem:[#allocation2 + $0x164] sm:$0xf]
  %v6658 = vld [vmem:[#allocation2 + $0x168] sm:$0xf]
  %v6659 = vld [vmem:[#allocation2 + $0x16c] sm:$0xf]
  %v6660 = vld [vmem:[#allocation2 + $0x170] sm:$0xf]
  %v6661 = vld [vmem:[#allocation2 + $0x174] sm:$0xf]
  %v6662 = vld [vmem:[#allocation2 + $0x178] sm:$0xf]
  %v6663 = vld [vmem:[#allocation2 + $0x17c] sm:$0xf]
  %v6664 = vld [vmem:[#allocation2 + $0x180] sm:$0xf]
  %v6665 = vld [vmem:[#allocation2 + $0x184] sm:$0xf]
  %v6666 = vld [vmem:[#allocation2 + $0x188] sm:$0xf]
  %v6667 = vld [vmem:[#allocation2 + $0x18c] sm:$0xf]
  %v6668 = vld [vmem:[#allocation2 + $0x190] sm:$0xf]
  %v6669 = vld [vmem:[#allocation2 + $0x194] sm:$0xf]
  %v6670 = vld [vmem:[#allocation2 + $0x198] sm:$0xf]
  %v6671 = vld [vmem:[#allocation2 + $0x19c] sm:$0xf]
  %v6672 = vld [vmem:[#allocation2 + $0x1a0] sm:$0xf]
  %v6673 = vld [vmem:[#allocation2 + $0x1a4] sm:$0xf]
  %v6674 = vld [vmem:[#allocation2 + $0x1a8] sm:$0xf]
  %v6675 = vld [vmem:[#allocation2 + $0x1ac] sm:$0xf]
  %v6676 = vld [vmem:[#allocation2 + $0x1b0] sm:$0xf]
  %v6677 = vld [vmem:[#allocation2 + $0x1b4] sm:$0x1]
  %v6679 = vshrl.u32 %v6629, 16
  %v6681 = vrot.slane %v6679, 4
  %v6682 = vshll.u32 %v6629, 16
  %v6684 = vrot.slane %v6682, 5
  %v6685 = vor.u32 %v6681, %v6684
  %v6686 = vrot.slane %v6685, 4
  %v6688 = vshll.u32 %v6630, 16
  %v6690 = vrot.slane %v6688, 5
  %v6691 = vsel %vm1354, %v6686, %v6690
  %v6692 = vshrl.u32 %v6630, 16
  %v6694 = vrot.slane %v6692, 4
  %v6695 = vor.u32 %v6694, %v6690
  %v6696 = vrot.slane %v6695, 4
  %v6698 = vshll.u32 %v6631, 16
  %v6700 = vrot.slane %v6698, 5
  %v6701 = vsel %vm1354, %v6696, %v6700
  %v6702 = vshrl.u32 %v6631, 16
  %v6704 = vrot.slane %v6702, 4
  %v6705 = vor.u32 %v6704, %v6700
  %v6706 = vrot.slane %v6705, 4
  %v6708 = vshll.u32 %v6632, 16
  %v6710 = vrot.slane %v6708, 5
  %v6711 = vsel %vm1354, %v6706, %v6710
  %v6712 = vshrl.u32 %v6632, 16
  %v6714 = vrot.slane %v6712, 4
  %v6715 = vor.u32 %v6714, %v6710
  %v6716 = vrot.slane %v6715, 4
  %v6718 = vshll.u32 %v6633, 16
  %v6720 = vrot.slane %v6718, 5
  %v6721 = vsel %vm1354, %v6716, %v6720
  %v6722 = vshrl.u32 %v6633, 16
  %v6724 = vrot.slane %v6722, 4
  %v6725 = vor.u32 %v6724, %v6720
  %v6726 = vrot.slane %v6725, 4
  %v6728 = vshll.u32 %v6634, 16
  %v6730 = vrot.slane %v6728, 5
  %v6731 = vsel %vm1354, %v6726, %v6730
  %v6732 = vshrl.u32 %v6634, 16
  %v6734 = vrot.slane %v6732, 4
  %v6735 = vor.u32 %v6734, %v6730
  %v6736 = vrot.slane %v6735, 4
  %v6738 = vshll.u32 %v6635, 16
  %v6740 = vrot.slane %v6738, 5
  %v6741 = vsel %vm1354, %v6736, %v6740
  %v6742 = vshrl.u32 %v6635, 16
  %v6744 = vrot.slane %v6742, 4
  %v6745 = vor.u32 %v6744, %v6740
  %v6746 = vrot.slane %v6745, 4
  %v6748 = vshll.u32 %v6636, 16
  %v6750 = vrot.slane %v6748, 5
  %v6751 = vsel %vm1354, %v6746, %v6750
  %v6752 = vshrl.u32 %v6636, 16
  %v6754 = vrot.slane %v6752, 4
  %v6755 = vor.u32 %v6754, %v6750
  %v6756 = vrot.slane %v6755, 4
  %v6758 = vshll.u32 %v6637, 16
  %v6760 = vrot.slane %v6758, 5
  %v6761 = vsel %vm1354, %v6756, %v6760
  %v6762 = vshrl.u32 %v6637, 16
  %v6764 = vrot.slane %v6762, 4
  %v6765 = vor.u32 %v6764, %v6760
  %v6766 = vrot.slane %v6765, 4
  %v6768 = vshll.u32 %v6638, 16
  %v6770 = vrot.slane %v6768, 5
  %v6771 = vsel %vm1354, %v6766, %v6770
  %v6772 = vshrl.u32 %v6638, 16
  %v6774 = vrot.slane %v6772, 4
  %v6775 = vor.u32 %v6774, %v6770
  %v6776 = vrot.slane %v6775, 4
  %v6778 = vshll.u32 %v6639, 16
  %v6780 = vrot.slane %v6778, 5
  %v6781 = vsel %vm1354, %v6776, %v6780
  %v6782 = vshrl.u32 %v6639, 16
  %v6784 = vrot.slane %v6782, 4
  %v6785 = vor.u32 %v6784, %v6780
  %v6786 = vrot.slane %v6785, 4
  %v6788 = vshll.u32 %v6640, 16
  %v6790 = vrot.slane %v6788, 5
  %v6791 = vsel %vm1354, %v6786, %v6790
  %v6792 = vshrl.u32 %v6640, 16
  %v6794 = vrot.slane %v6792, 4
  %v6795 = vor.u32 %v6794, %v6790
  %v6796 = vrot.slane %v6795, 4
  %v6798 = vshll.u32 %v6641, 16
  %v6800 = vrot.slane %v6798, 5
  %v6801 = vsel %vm1354, %v6796, %v6800
  %v6802 = vshrl.u32 %v6641, 16
  %v6804 = vrot.slane %v6802, 4
  %v6805 = vor.u32 %v6804, %v6800
  %v6806 = vrot.slane %v6805, 4
  %v6808 = vshll.u32 %v6642, 16
  %v6810 = vrot.slane %v6808, 5
  %v6811 = vsel %vm1354, %v6806, %v6810
  %v6812 = vshrl.u32 %v6642, 16
  %v6814 = vrot.slane %v6812, 4
  %v6815 = vor.u32 %v6814, %v6810
  %v6816 = vrot.slane %v6815, 4
  %v6818 = vshll.u32 %v6643, 16
  %v6820 = vrot.slane %v6818, 5
  %v6821 = vsel %vm1354, %v6816, %v6820
  %v6822 = vshrl.u32 %v6643, 16
  %v6824 = vrot.slane %v6822, 4
  %v6825 = vor.u32 %v6824, %v6820
  %v6826 = vrot.slane %v6825, 4
  %v6828 = vshll.u32 %v6644, 16
  %v6830 = vrot.slane %v6828, 5
  %v6831 = vsel %vm1354, %v6826, %v6830
  %v6832 = vshrl.u32 %v6644, 16
  %v6834 = vrot.slane %v6832, 4
  %v6835 = vor.u32 %v6834, %v6830
  %v6836 = vrot.slane %v6835, 4
  %v6838 = vshll.u32 %v6645, 16
  %v6840 = vrot.slane %v6838, 5
  %v6841 = vsel %vm1354, %v6836, %v6840
  %v6842 = vshrl.u32 %v6645, 16
  %v6844 = vrot.slane %v6842, 4
  %v6845 = vor.u32 %v6844, %v6840
  %v6846 = vrot.slane %v6845, 4
  %v6848 = vshll.u32 %v6646, 16
  %v6850 = vrot.slane %v6848, 5
  %v6851 = vsel %vm1354, %v6846, %v6850
  %v6852 = vshrl.u32 %v6646, 16
  %v6854 = vrot.slane %v6852, 4
  %v6855 = vor.u32 %v6854, %v6850
  %v6856 = vrot.slane %v6855, 4
  %v6858 = vshll.u32 %v6647, 16
  %v6860 = vrot.slane %v6858, 5
  %v6861 = vsel %vm1354, %v6856, %v6860
  %v6862 = vshrl.u32 %v6647, 16
  %v6864 = vrot.slane %v6862, 4
  %v6865 = vor.u32 %v6864, %v6860
  %v6866 = vrot.slane %v6865, 4
  %v6868 = vshll.u32 %v6648, 16
  %v6870 = vrot.slane %v6868, 5
  %v6871 = vsel %vm1354, %v6866, %v6870
  %v6872 = vshrl.u32 %v6648, 16
  %v6874 = vrot.slane %v6872, 4
  %v6875 = vor.u32 %v6874, %v6870
  %v6876 = vrot.slane %v6875, 4
  %v6878 = vshll.u32 %v6649, 16
  %v6880 = vrot.slane %v6878, 5
  %v6881 = vsel %vm1354, %v6876, %v6880
  %v6882 = vshrl.u32 %v6649, 16
  %v6884 = vrot.slane %v6882, 4
  %v6885 = vor.u32 %v6884, %v6880
  %v6886 = vrot.slane %v6885, 4
  %v6888 = vshll.u32 %v6650, 16
  %v6890 = vrot.slane %v6888, 5
  %v6891 = vsel %vm1354, %v6886, %v6890
  %v6892 = vshrl.u32 %v6650, 16
  %v6894 = vrot.slane %v6892, 4
  %v6895 = vor.u32 %v6894, %v6890
  %v6896 = vrot.slane %v6895, 4
  %v6898 = vshll.u32 %v6651, 16
  %v6900 = vrot.slane %v6898, 5
  %v6901 = vsel %vm1354, %v6896, %v6900
  %v6902 = vshrl.u32 %v6651, 16
  %v6904 = vrot.slane %v6902, 4
  %v6905 = vor.u32 %v6904, %v6900
  %v6906 = vrot.slane %v6905, 4
  %v6908 = vshll.u32 %v6652, 16
  %v6910 = vrot.slane %v6908, 5
  %v6911 = vsel %vm1354, %v6906, %v6910
  %v6912 = vshrl.u32 %v6652, 16
  %v6914 = vrot.slane %v6912, 4
  %v6915 = vor.u32 %v6914, %v6910
  %v6916 = vrot.slane %v6915, 4
  %v6918 = vshll.u32 %v6653, 16
  %v6920 = vrot.slane %v6918, 5
  %v6921 = vsel %vm1354, %v6916, %v6920
  %v6922 = vshrl.u32 %v6653, 16
  %v6924 = vrot.slane %v6922, 4
  %v6925 = vor.u32 %v6924, %v6920
  %v6926 = vrot.slane %v6925, 4
  %v6928 = vshll.u32 %v6654, 16
  %v6930 = vrot.slane %v6928, 5
  %v6931 = vsel %vm1354, %v6926, %v6930
  %v6932 = vshrl.u32 %v6654, 16
  %v6934 = vrot.slane %v6932, 4
  %v6935 = vor.u32 %v6934, %v6930
  %v6936 = vrot.slane %v6935, 4
  %v6938 = vshll.u32 %v6655, 16
  %v6940 = vrot.slane %v6938, 5
  %v6941 = vsel %vm1354, %v6936, %v6940
  %v6942 = vshrl.u32 %v6655, 16
  %v6944 = vrot.slane %v6942, 4
  %v6945 = vor.u32 %v6944, %v6940
  %v6946 = vrot.slane %v6945, 4
  %v6948 = vshll.u32 %v6656, 16
  %v6950 = vrot.slane %v6948, 5
  %v6951 = vsel %vm1354, %v6946, %v6950
  %v6952 = vshrl.u32 %v6656, 16
  %v6954 = vrot.slane %v6952, 4
  %v6955 = vor.u32 %v6954, %v6950
  %v6956 = vrot.slane %v6955, 4
  %v6958 = vshll.u32 %v6657, 16
  %v6960 = vrot.slane %v6958, 5
  %v6961 = vsel %vm1354, %v6956, %v6960
  %v6962 = vshrl.u32 %v6657, 16
  %v6964 = vrot.slane %v6962, 4
  %v6965 = vor.u32 %v6964, %v6960
  %v6966 = vrot.slane %v6965, 4
  %v6968 = vshll.u32 %v6658, 16
  %v6970 = vrot.slane %v6968, 5
  %v6971 = vsel %vm1354, %v6966, %v6970
  %v6972 = vshrl.u32 %v6658, 16
  %v6974 = vrot.slane %v6972, 4
  %v6975 = vor.u32 %v6974, %v6970
  %v6976 = vrot.slane %v6975, 4
  %v6978 = vshll.u32 %v6659, 16
  %v6980 = vrot.slane %v6978, 5
  %v6981 = vsel %vm1354, %v6976, %v6980
  %v6982 = vshrl.u32 %v6659, 16
  %v6984 = vrot.slane %v6982, 4
  %v6985 = vor.u32 %v6984, %v6980
  %v6986 = vrot.slane %v6985, 4
  %v6988 = vshll.u32 %v6660, 16
  %v6990 = vrot.slane %v6988, 5
  %v6991 = vsel %vm1354, %v6986, %v6990
  %v6992 = vshrl.u32 %v6660, 16
  %v6994 = vrot.slane %v6992, 4
  %v6995 = vor.u32 %v6994, %v6990
  %v6996 = vrot.slane %v6995, 4
  %v6998 = vshll.u32 %v6661, 16
  %v7000 = vrot.slane %v6998, 5
  %v7001 = vsel %vm1354, %v6996, %v7000
  %v7002 = vshrl.u32 %v6661, 16
  %v7004 = vrot.slane %v7002, 4
  %v7005 = vor.u32 %v7004, %v7000
  %v7006 = vrot.slane %v7005, 4
  %v7008 = vshll.u32 %v6662, 16
  %v7010 = vrot.slane %v7008, 5
  %v7011 = vsel %vm1354, %v7006, %v7010
  %v7012 = vshrl.u32 %v6662, 16
  %v7014 = vrot.slane %v7012, 4
  %v7015 = vor.u32 %v7014, %v7010
  %v7016 = vrot.slane %v7015, 4
  %v7018 = vshll.u32 %v6663, 16
  %v7020 = vrot.slane %v7018, 5
  %v7021 = vsel %vm1354, %v7016, %v7020
  %v7022 = vshrl.u32 %v6663, 16
  %v7024 = vrot.slane %v7022, 4
  %v7025 = vor.u32 %v7024, %v7020
  %v7026 = vrot.slane %v7025, 4
  %v7028 = vshll.u32 %v6664, 16
  %v7030 = vrot.slane %v7028, 5
  %v7031 = vsel %vm1354, %v7026, %v7030
  %v7032 = vshrl.u32 %v6664, 16
  %v7034 = vrot.slane %v7032, 4
  %v7035 = vor.u32 %v7034, %v7030
  %v7036 = vrot.slane %v7035, 4
  %v7038 = vshll.u32 %v6665, 16
  %v7040 = vrot.slane %v7038, 5
  %v7041 = vsel %vm1354, %v7036, %v7040
  %v7042 = vshrl.u32 %v6665, 16
  %v7044 = vrot.slane %v7042, 4
  %v7045 = vor.u32 %v7044, %v7040
  %v7046 = vrot.slane %v7045, 4
  %v7048 = vshll.u32 %v6666, 16
  %v7050 = vrot.slane %v7048, 5
  %v7051 = vsel %vm1354, %v7046, %v7050
  %v7052 = vshrl.u32 %v6666, 16
  %v7054 = vrot.slane %v7052, 4
  %v7055 = vor.u32 %v7054, %v7050
  %v7056 = vrot.slane %v7055, 4
  %v7058 = vshll.u32 %v6667, 16
  %v7060 = vrot.slane %v7058, 5
  %v7061 = vsel %vm1354, %v7056, %v7060
  %v7062 = vshrl.u32 %v6667, 16
  %v7064 = vrot.slane %v7062, 4
  %v7065 = vor.u32 %v7064, %v7060
  %v7066 = vrot.slane %v7065, 4
  %v7068 = vshll.u32 %v6668, 16
  %v7070 = vrot.slane %v7068, 5
  %v7071 = vsel %vm1354, %v7066, %v7070
  %v7072 = vshrl.u32 %v6668, 16
  %v7074 = vrot.slane %v7072, 4
  %v7075 = vor.u32 %v7074, %v7070
  %v7076 = vrot.slane %v7075, 4
  %v7078 = vshll.u32 %v6669, 16
  %v7080 = vrot.slane %v7078, 5
  %v7081 = vsel %vm1354, %v7076, %v7080
  %v7082 = vshrl.u32 %v6669, 16
  %v7084 = vrot.slane %v7082, 4
  %v7085 = vor.u32 %v7084, %v7080
  %v7086 = vrot.slane %v7085, 4
  %v7088 = vshll.u32 %v6670, 16
  %v7090 = vrot.slane %v7088, 5
  %v7091 = vsel %vm1354, %v7086, %v7090
  %v7092 = vshrl.u32 %v6670, 16
  %v7094 = vrot.slane %v7092, 4
  %v7095 = vor.u32 %v7094, %v7090
  %v7096 = vrot.slane %v7095, 4
  %v7098 = vshll.u32 %v6671, 16
  %v7100 = vrot.slane %v7098, 5
  %v7101 = vsel %vm1354, %v7096, %v7100
  %v7102 = vshrl.u32 %v6671, 16
  %v7104 = vrot.slane %v7102, 4
  %v7105 = vor.u32 %v7104, %v7100
  %v7106 = vrot.slane %v7105, 4
  %v7108 = vshll.u32 %v6672, 16
  %v7110 = vrot.slane %v7108, 5
  %v7111 = vsel %vm1354, %v7106, %v7110
  %v7112 = vshrl.u32 %v6672, 16
  %v7114 = vrot.slane %v7112, 4
  %v7115 = vor.u32 %v7114, %v7110
  %v7116 = vrot.slane %v7115, 4
  %v7118 = vshll.u32 %v6673, 16
  %v7120 = vrot.slane %v7118, 5
  %v7121 = vsel %vm1354, %v7116, %v7120
  %v7122 = vshrl.u32 %v6673, 16
  %v7124 = vrot.slane %v7122, 4
  %v7125 = vor.u32 %v7124, %v7120
  %v7126 = vrot.slane %v7125, 4
  %v7128 = vshll.u32 %v6674, 16
  %v7130 = vrot.slane %v7128, 5
  %v7131 = vsel %vm1354, %v7126, %v7130
  %v7132 = vshrl.u32 %v6674, 16
  %v7134 = vrot.slane %v7132, 4
  %v7135 = vor.u32 %v7134, %v7130
  %v7136 = vrot.slane %v7135, 4
  %v7138 = vshll.u32 %v6675, 16
  %v7140 = vrot.slane %v7138, 5
  %v7141 = vsel %vm1354, %v7136, %v7140
  %v7142 = vshrl.u32 %v6675, 16
  %v7144 = vrot.slane %v7142, 4
  %v7145 = vor.u32 %v7144, %v7140
  %v7146 = vrot.slane %v7145, 4
  %v7148 = vshll.u32 %v6676, 16
  %v7150 = vrot.slane %v7148, 5
  %v7151 = vsel %vm1354, %v7146, %v7150
  %v7152 = vshrl.u32 %v6676, 16
  %v7154 = vrot.slane %v7152, 4
  %v7155 = vor.u32 %v7154, %v7150
  %v7156 = vrot.slane %v7155, 4
  %v7158 = vshll.u32 %v6677, 16
  %v7160 = vrot.slane %v7158, 5
  %v7161 = vsel %vm1354, %v7156, %v7160
  %7210 = vst [vmem:[#allocation3 + $0x6dc] sm:$0xf] %v6691
  %7211 = vst [vmem:[#allocation3 + $0x700] sm:$0xf] %v6701
  %7212 = vst [vmem:[#allocation3 + $0x724] sm:$0xf] %v6711
  %7213 = vst [vmem:[#allocation3 + $0x748] sm:$0xf] %v6721
  %7214 = vst [vmem:[#allocation3 + $0x76c] sm:$0xf] %v6731
  %7215 = vst [vmem:[#allocation3 + $0x790] sm:$0xf] %v6741
  %7216 = vst [vmem:[#allocation3 + $0x7b4] sm:$0xf] %v6751
  %7217 = vst [vmem:[#allocation3 + $0x7d8] sm:$0xf] %v6761
  %7218 = vst [vmem:[#allocation3 + $0x7fc] sm:$0xf] %v6771
  %7219 = vst [vmem:[#allocation3 + $0x820] sm:$0xf] %v6781
  %7220 = vst [vmem:[#allocation3 + $0x844] sm:$0xf] %v6791
  %7221 = vst [vmem:[#allocation3 + $0x868] sm:$0xf] %v6801
  %7222 = vst [vmem:[#allocation3 + $0x88c] sm:$0xf] %v6811
  %7223 = vst [vmem:[#allocation3 + $0x8b0] sm:$0xf] %v6821
  %7224 = vst [vmem:[#allocation3 + $0x8d4] sm:$0xf] %v6831
  %7225 = vst [vmem:[#allocation3 + $0x8f8] sm:$0xf] %v6841
  %7226 = vst [vmem:[#allocation3 + $0x91c] sm:$0xf] %v6851
  %7227 = vst [vmem:[#allocation3 + $0x940] sm:$0xf] %v6861
  %7228 = vst [vmem:[#allocation3 + $0x964] sm:$0xf] %v6871
  %7229 = vst [vmem:[#allocation3 + $0x988] sm:$0xf] %v6881
  %7230 = vst [vmem:[#allocation3 + $0x9ac] sm:$0xf] %v6891
  %7231 = vst [vmem:[#allocation3 + $0x9d0] sm:$0xf] %v6901
  %7232 = vst [vmem:[#allocation3 + $0x9f4] sm:$0xf] %v6911
  %7233 = vst [vmem:[#allocation3 + $0xa18] sm:$0xf] %v6921
  %7234 = vst [vmem:[#allocation3 + $0xa3c] sm:$0xf] %v6931
  %7235 = vst [vmem:[#allocation3 + $0xa60] sm:$0xf] %v6941
  %7236 = vst [vmem:[#allocation3 + $0xa84] sm:$0xf] %v6951
  %7237 = vst [vmem:[#allocation3 + $0xaa8] sm:$0xf] %v6961
  %7238 = vst [vmem:[#allocation3 + $0xacc] sm:$0xf] %v6971
  %7239 = vst [vmem:[#allocation3 + $0xaf0] sm:$0xf] %v6981
  %7240 = vst [vmem:[#allocation3 + $0xb14] sm:$0xf] %v6991
  %7241 = vst [vmem:[#allocation3 + $0xb38] sm:$0xf] %v7001
  %7242 = vst [vmem:[#allocation3 + $0xb5c] sm:$0xf] %v7011
  %7243 = vst [vmem:[#allocation3 + $0xb80] sm:$0xf] %v7021
  %7244 = vst [vmem:[#allocation3 + $0xba4] sm:$0xf] %v7031
  %7245 = vst [vmem:[#allocation3 + $0xbc8] sm:$0xf] %v7041
  %7246 = vst [vmem:[#allocation3 + $0xbec] sm:$0xf] %v7051
  %7247 = vst [vmem:[#allocation3 + $0xc10] sm:$0xf] %v7061
  %7248 = vst [vmem:[#allocation3 + $0xc34] sm:$0xf] %v7071
  %7249 = vst [vmem:[#allocation3 + $0xc58] sm:$0xf] %v7081
  %7250 = vst [vmem:[#allocation3 + $0xc7c] sm:$0xf] %v7091
  %7251 = vst [vmem:[#allocation3 + $0xca0] sm:$0xf] %v7101
  %7252 = vst [vmem:[#allocation3 + $0xcc4] sm:$0xf] %v7111
  %7253 = vst [vmem:[#allocation3 + $0xce8] sm:$0xf] %v7121
  %7254 = vst [vmem:[#allocation3 + $0xd0c] sm:$0xf] %v7131
  %7255 = vst [vmem:[#allocation3 + $0xd30] sm:$0xf] %v7141
  %7256 = vst [vmem:[#allocation3 + $0xd54] sm:$0xf] %v7151
  %7257 = vst [vmem:[#allocation3 + $0xd78] sm:$0xf] %v7161
  %v7258 = vld [vmem:[#allocation2 + $0xf4] sm:$0xe]
  %v7259 = vld [vmem:[#allocation2 + $0xf8] sm:$0xf]
  %v7260 = vld [vmem:[#allocation2 + $0xfc] sm:$0xf]
  %v7261 = vld [vmem:[#allocation2 + $0x100] sm:$0xf]
  %v7262 = vld [vmem:[#allocation2 + $0x104] sm:$0xf]
  %v7263 = vld [vmem:[#allocation2 + $0x108] sm:$0xf]
  %v7264 = vld [vmem:[#allocation2 + $0x10c] sm:$0xf]
  %v7265 = vld [vmem:[#allocation2 + $0x110] sm:$0xf]
  %v7266 = vld [vmem:[#allocation2 + $0x114] sm:$0xf]
  %v7267 = vld [vmem:[#allocation2 + $0x118] sm:$0xf]
  %v7268 = vld [vmem:[#allocation2 + $0x11c] sm:$0xf]
  %v7269 = vld [vmem:[#allocation2 + $0x120] sm:$0xf]
  %v7270 = vld [vmem:[#allocation2 + $0x124] sm:$0xf]
  %v7271 = vld [vmem:[#allocation2 + $0x128] sm:$0xf]
  %v7272 = vld [vmem:[#allocation2 + $0x12c] sm:$0xf]
  %v7273 = vld [vmem:[#allocation2 + $0x130] sm:$0xf]
  %v7274 = vld [vmem:[#allocation2 + $0x134] sm:$0xf]
  %v7275 = vld [vmem:[#allocation2 + $0x138] sm:$0xf]
  %v7276 = vld [vmem:[#allocation2 + $0x13c] sm:$0xf]
  %v7277 = vld [vmem:[#allocation2 + $0x140] sm:$0xf]
  %v7278 = vld [vmem:[#allocation2 + $0x144] sm:$0xf]
  %v7279 = vld [vmem:[#allocation2 + $0x148] sm:$0xf]
  %v7280 = vld [vmem:[#allocation2 + $0x14c] sm:$0xf]
  %v7281 = vld [vmem:[#allocation2 + $0x150] sm:$0xf]
  %v7282 = vld [vmem:[#allocation2 + $0x154] sm:$0xf]
  %v7283 = vld [vmem:[#allocation2 + $0x158] sm:$0xf]
  %v7284 = vld [vmem:[#allocation2 + $0x15c] sm:$0xf]
  %v7285 = vld [vmem:[#allocation2 + $0x160] sm:$0xf]
  %v7286 = vld [vmem:[#allocation2 + $0x164] sm:$0xf]
  %v7287 = vld [vmem:[#allocation2 + $0x168] sm:$0xf]
  %v7288 = vld [vmem:[#allocation2 + $0x16c] sm:$0xf]
  %v7289 = vld [vmem:[#allocation2 + $0x170] sm:$0xf]
  %v7290 = vld [vmem:[#allocation2 + $0x174] sm:$0xf]
  %v7291 = vld [vmem:[#allocation2 + $0x178] sm:$0xf]
  %v7292 = vld [vmem:[#allocation2 + $0x17c] sm:$0xf]
  %v7293 = vld [vmem:[#allocation2 + $0x180] sm:$0xf]
  %v7294 = vld [vmem:[#allocation2 + $0x184] sm:$0xf]
  %v7295 = vld [vmem:[#allocation2 + $0x188] sm:$0xf]
  %v7296 = vld [vmem:[#allocation2 + $0x18c] sm:$0xf]
  %v7297 = vld [vmem:[#allocation2 + $0x190] sm:$0xf]
  %v7298 = vld [vmem:[#allocation2 + $0x194] sm:$0xf]
  %v7299 = vld [vmem:[#allocation2 + $0x198] sm:$0xf]
  %v7300 = vld [vmem:[#allocation2 + $0x19c] sm:$0xf]
  %v7301 = vld [vmem:[#allocation2 + $0x1a0] sm:$0xf]
  %v7302 = vld [vmem:[#allocation2 + $0x1a4] sm:$0xf]
  %v7303 = vld [vmem:[#allocation2 + $0x1a8] sm:$0xf]
  %v7304 = vld [vmem:[#allocation2 + $0x1ac] sm:$0xf]
  %v7305 = vld [vmem:[#allocation2 + $0x1b0] sm:$0xf]
  %v7306 = vld [vmem:[#allocation2 + $0x1b4] sm:$0x1]
  %v7356 = vrot.slane %v7258, 5
  %v7357 = vrot.slane %v7356, 4
  %v7358 = vrot.slane %v7259, 5
  %v7359 = vsel %vm2035, %v7357, %v7358
  %v7360 = vrot.slane %v7358, 4
  %v7361 = vrot.slane %v7260, 5
  %v7362 = vsel %vm2035, %v7360, %v7361
  %v7363 = vrot.slane %v7361, 4
  %v7364 = vrot.slane %v7261, 5
  %v7365 = vsel %vm2035, %v7363, %v7364
  %v7366 = vrot.slane %v7364, 4
  %v7367 = vrot.slane %v7262, 5
  %v7368 = vsel %vm2035, %v7366, %v7367
  %v7369 = vrot.slane %v7367, 4
  %v7370 = vrot.slane %v7263, 5
  %v7371 = vsel %vm2035, %v7369, %v7370
  %v7372 = vrot.slane %v7370, 4
  %v7373 = vrot.slane %v7264, 5
  %v7374 = vsel %vm2035, %v7372, %v7373
  %v7375 = vrot.slane %v7373, 4
  %v7376 = vrot.slane %v7265, 5
  %v7377 = vsel %vm2035, %v7375, %v7376
  %v7378 = vrot.slane %v7376, 4
  %v7379 = vrot.slane %v7266, 5
  %v7380 = vsel %vm2035, %v7378, %v7379
  %v7381 = vrot.slane %v7379, 4
  %v7382 = vrot.slane %v7267, 5
  %v7383 = vsel %vm2035, %v7381, %v7382
  %v7384 = vrot.slane %v7382, 4
  %v7385 = vrot.slane %v7268, 5
  %v7386 = vsel %vm2035, %v7384, %v7385
  %v7387 = vrot.slane %v7385, 4
  %v7388 = vrot.slane %v7269, 5
  %v7389 = vsel %vm2035, %v7387, %v7388
  %v7390 = vrot.slane %v7388, 4
  %v7391 = vrot.slane %v7270, 5
  %v7392 = vsel %vm2035, %v7390, %v7391
  %v7393 = vrot.slane %v7391, 4
  %v7394 = vrot.slane %v7271, 5
  %v7395 = vsel %vm2035, %v7393, %v7394
  %v7396 = vrot.slane %v7394, 4
  %v7397 = vrot.slane %v7272, 5
  %v7398 = vsel %vm2035, %v7396, %v7397
  %v7399 = vrot.slane %v7397, 4
  %v7400 = vrot.slane %v7273, 5
  %v7401 = vsel %vm2035, %v7399, %v7400
  %v7402 = vrot.slane %v7400, 4
  %v7403 = vrot.slane %v7274, 5
  %v7404 = vsel %vm2035, %v7402, %v7403
  %v7405 = vrot.slane %v7403, 4
  %v7406 = vrot.slane %v7275, 5
  %v7407 = vsel %vm2035, %v7405, %v7406
  %v7408 = vrot.slane %v7406, 4
  %v7409 = vrot.slane %v7276, 5
  %v7410 = vsel %vm2035, %v7408, %v7409
  %v7411 = vrot.slane %v7409, 4
  %v7412 = vrot.slane %v7277, 5
  %v7413 = vsel %vm2035, %v7411, %v7412
  %v7414 = vrot.slane %v7412, 4
  %v7415 = vrot.slane %v7278, 5
  %v7416 = vsel %vm2035, %v7414, %v7415
  %v7417 = vrot.slane %v7415, 4
  %v7418 = vrot.slane %v7279, 5
  %v7419 = vsel %vm2035, %v7417, %v7418
  %v7420 = vrot.slane %v7418, 4
  %v7421 = vrot.slane %v7280, 5
  %v7422 = vsel %vm2035, %v7420, %v7421
  %v7423 = vrot.slane %v7421, 4
  %v7424 = vrot.slane %v7281, 5
  %v7425 = vsel %vm2035, %v7423, %v7424
  %v7426 = vrot.slane %v7424, 4
  %v7427 = vrot.slane %v7282, 5
  %v7428 = vsel %vm2035, %v7426, %v7427
  %v7429 = vrot.slane %v7427, 4
  %v7430 = vrot.slane %v7283, 5
  %v7431 = vsel %vm2035, %v7429, %v7430
  %v7432 = vrot.slane %v7430, 4
  %v7433 = vrot.slane %v7284, 5
  %v7434 = vsel %vm2035, %v7432, %v7433
  %v7435 = vrot.slane %v7433, 4
  %v7436 = vrot.slane %v7285, 5
  %v7437 = vsel %vm2035, %v7435, %v7436
  %v7438 = vrot.slane %v7436, 4
  %v7439 = vrot.slane %v7286, 5
  %v7440 = vsel %vm2035, %v7438, %v7439
  %v7441 = vrot.slane %v7439, 4
  %v7442 = vrot.slane %v7287, 5
  %v7443 = vsel %vm2035, %v7441, %v7442
  %v7444 = vrot.slane %v7442, 4
  %v7445 = vrot.slane %v7288, 5
  %v7446 = vsel %vm2035, %v7444, %v7445
  %v7447 = vrot.slane %v7445, 4
  %v7448 = vrot.slane %v7289, 5
  %v7449 = vsel %vm2035, %v7447, %v7448
  %v7450 = vrot.slane %v7448, 4
  %v7451 = vrot.slane %v7290, 5
  %v7452 = vsel %vm2035, %v7450, %v7451
  %v7453 = vrot.slane %v7451, 4
  %v7454 = vrot.slane %v7291, 5
  %v7455 = vsel %vm2035, %v7453, %v7454
  %v7456 = vrot.slane %v7454, 4
  %v7457 = vrot.slane %v7292, 5
  %v7458 = vsel %vm2035, %v7456, %v7457
  %v7459 = vrot.slane %v7457, 4
  %v7460 = vrot.slane %v7293, 5
  %v7461 = vsel %vm2035, %v7459, %v7460
  %v7462 = vrot.slane %v7460, 4
  %v7463 = vrot.slane %v7294, 5
  %v7464 = vsel %vm2035, %v7462, %v7463
  %v7465 = vrot.slane %v7463, 4
  %v7466 = vrot.slane %v7295, 5
  %v7467 = vsel %vm2035, %v7465, %v7466
  %v7468 = vrot.slane %v7466, 4
  %v7469 = vrot.slane %v7296, 5
  %v7470 = vsel %vm2035, %v7468, %v7469
  %v7471 = vrot.slane %v7469, 4
  %v7472 = vrot.slane %v7297, 5
  %v7473 = vsel %vm2035, %v7471, %v7472
  %v7474 = vrot.slane %v7472, 4
  %v7475 = vrot.slane %v7298, 5
  %v7476 = vsel %vm2035, %v7474, %v7475
  %v7477 = vrot.slane %v7475, 4
  %v7478 = vrot.slane %v7299, 5
  %v7479 = vsel %vm2035, %v7477, %v7478
  %v7480 = vrot.slane %v7478, 4
  %v7481 = vrot.slane %v7300, 5
  %v7482 = vsel %vm2035, %v7480, %v7481
  %v7483 = vrot.slane %v7481, 4
  %v7484 = vrot.slane %v7301, 5
  %v7485 = vsel %vm2035, %v7483, %v7484
  %v7486 = vrot.slane %v7484, 4
  %v7487 = vrot.slane %v7302, 5
  %v7488 = vsel %vm2035, %v7486, %v7487
  %v7489 = vrot.slane %v7487, 4
  %v7490 = vrot.slane %v7303, 5
  %v7491 = vsel %vm2035, %v7489, %v7490
  %v7492 = vrot.slane %v7490, 4
  %v7493 = vrot.slane %v7304, 5
  %v7494 = vsel %vm2035, %v7492, %v7493
  %v7495 = vrot.slane %v7493, 4
  %v7496 = vrot.slane %v7305, 5
  %v7497 = vsel %vm2035, %v7495, %v7496
  %v7498 = vrot.slane %v7496, 4
  %v7499 = vrot.slane %v7306, 5
  %v7500 = vsel %vm2035, %v7498, %v7499
  %7549 = vst [vmem:[#allocation3 + $0x6e0] sm:$0xf] %v7359
  %7550 = vst [vmem:[#allocation3 + $0x704] sm:$0xf] %v7362
  %7551 = vst [vmem:[#allocation3 + $0x728] sm:$0xf] %v7365
  %7552 = vst [vmem:[#allocation3 + $0x74c] sm:$0xf] %v7368
  %7553 = vst [vmem:[#allocation3 + $0x770] sm:$0xf] %v7371
  %7554 = vst [vmem:[#allocation3 + $0x794] sm:$0xf] %v7374
  %7555 = vst [vmem:[#allocation3 + $0x7b8] sm:$0xf] %v7377
  %7556 = vst [vmem:[#allocation3 + $0x7dc] sm:$0xf] %v7380
  %7557 = vst [vmem:[#allocation3 + $0x800] sm:$0xf] %v7383
  %7558 = vst [vmem:[#allocation3 + $0x824] sm:$0xf] %v7386
  %7559 = vst [vmem:[#allocation3 + $0x848] sm:$0xf] %v7389
  %7560 = vst [vmem:[#allocation3 + $0x86c] sm:$0xf] %v7392
  %7561 = vst [vmem:[#allocation3 + $0x890] sm:$0xf] %v7395
  %7562 = vst [vmem:[#allocation3 + $0x8b4] sm:$0xf] %v7398
  %7563 = vst [vmem:[#allocation3 + $0x8d8] sm:$0xf] %v7401
  %7564 = vst [vmem:[#allocation3 + $0x8fc] sm:$0xf] %v7404
  %7565 = vst [vmem:[#allocation3 + $0x920] sm:$0xf] %v7407
  %7566 = vst [vmem:[#allocation3 + $0x944] sm:$0xf] %v7410
  %7567 = vst [vmem:[#allocation3 + $0x968] sm:$0xf] %v7413
  %7568 = vst [vmem:[#allocation3 + $0x98c] sm:$0xf] %v7416
  %7569 = vst [vmem:[#allocation3 + $0x9b0] sm:$0xf] %v7419
  %7570 = vst [vmem:[#allocation3 + $0x9d4] sm:$0xf] %v7422
  %7571 = vst [vmem:[#allocation3 + $0x9f8] sm:$0xf] %v7425
  %7572 = vst [vmem:[#allocation3 + $0xa1c] sm:$0xf] %v7428
  %7573 = vst [vmem:[#allocation3 + $0xa40] sm:$0xf] %v7431
  %7574 = vst [vmem:[#allocation3 + $0xa64] sm:$0xf] %v7434
  %7575 = vst [vmem:[#allocation3 + $0xa88] sm:$0xf] %v7437
  %7576 = vst [vmem:[#allocation3 + $0xaac] sm:$0xf] %v7440
  %7577 = vst [vmem:[#allocation3 + $0xad0] sm:$0xf] %v7443
  %7578 = vst [vmem:[#allocation3 + $0xaf4] sm:$0xf] %v7446
  %7579 = vst [vmem:[#allocation3 + $0xb18] sm:$0xf] %v7449
  %7580 = vst [vmem:[#allocation3 + $0xb3c] sm:$0xf] %v7452
  %7581 = vst [vmem:[#allocation3 + $0xb60] sm:$0xf] %v7455
  %7582 = vst [vmem:[#allocation3 + $0xb84] sm:$0xf] %v7458
  %7583 = vst [vmem:[#allocation3 + $0xba8] sm:$0xf] %v7461
  %7584 = vst [vmem:[#allocation3 + $0xbcc] sm:$0xf] %v7464
  %7585 = vst [vmem:[#allocation3 + $0xbf0] sm:$0xf] %v7467
  %7586 = vst [vmem:[#allocation3 + $0xc14] sm:$0xf] %v7470
  %7587 = vst [vmem:[#allocation3 + $0xc38] sm:$0xf] %v7473
  %7588 = vst [vmem:[#allocation3 + $0xc5c] sm:$0xf] %v7476
  %7589 = vst [vmem:[#allocation3 + $0xc80] sm:$0xf] %v7479
  %7590 = vst [vmem:[#allocation3 + $0xca4] sm:$0xf] %v7482
  %7591 = vst [vmem:[#allocation3 + $0xcc8] sm:$0xf] %v7485
  %7592 = vst [vmem:[#allocation3 + $0xcec] sm:$0xf] %v7488
  %7593 = vst [vmem:[#allocation3 + $0xd10] sm:$0xf] %v7491
  %7594 = vst [vmem:[#allocation3 + $0xd34] sm:$0xf] %v7494
  %7595 = vst [vmem:[#allocation3 + $0xd58] sm:$0xf] %v7497
  %7596 = vst [vmem:[#allocation3 + $0xd7c] sm:$0xf] %v7500
  %v7597 = vld [vmem:[#allocation3] sm:$0xff]
  %v7598 = vld [vmem:[#allocation3 + $0x8] sm:$0xff]
  %v7599 = vld [vmem:[#allocation3 + $0x10] sm:$0xff]
  %v7600 = vld [vmem:[#allocation3 + $0x18] sm:$0xff]
  %v7601 = vld [vmem:[#allocation3 + $0x20] sm:$0xf]
  %v7602 = vld [vmem:[#allocation3 + $0x24] sm:$0xff]
  %v7603 = vld [vmem:[#allocation3 + $0x2c] sm:$0xff]
  %v7604 = vld [vmem:[#allocation3 + $0x34] sm:$0xff]
  %v7605 = vld [vmem:[#allocation3 + $0x3c] sm:$0xff]
  %v7606 = vld [vmem:[#allocation3 + $0x44] sm:$0xf]
  %v7607 = vld [vmem:[#allocation3 + $0x48] sm:$0xff]
  %v7608 = vld [vmem:[#allocation3 + $0x50] sm:$0xff]
  %v7609 = vld [vmem:[#allocation3 + $0x58] sm:$0xff]
  %v7610 = vld [vmem:[#allocation3 + $0x60] sm:$0xff]
  %v7611 = vld [vmem:[#allocation3 + $0x68] sm:$0xf]
  %v7612 = vld [vmem:[#allocation3 + $0x6c] sm:$0xff]
  %v7613 = vld [vmem:[#allocation3 + $0x74] sm:$0xff]
  %v7614 = vld [vmem:[#allocation3 + $0x7c] sm:$0xff]
  %v7615 = vld [vmem:[#allocation3 + $0x84] sm:$0xff]
  %v7616 = vld [vmem:[#allocation3 + $0x8c] sm:$0xf]
  %v7617 = vld [vmem:[#allocation3 + $0x90] sm:$0xff]
  %v7618 = vld [vmem:[#allocation3 + $0x98] sm:$0xff]
  %v7619 = vld [vmem:[#allocation3 + $0xa0] sm:$0xff]
  %v7620 = vld [vmem:[#allocation3 + $0xa8] sm:$0xff]
  %v7621 = vld [vmem:[#allocation3 + $0xb0] sm:$0xf]
  %v7622 = vld [vmem:[#allocation3 + $0xb4] sm:$0xff]
  %v7623 = vld [vmem:[#allocation3 + $0xbc] sm:$0xff]
  %v7624 = vld [vmem:[#allocation3 + $0xc4] sm:$0xff]
  %v7625 = vld [vmem:[#allocation3 + $0xcc] sm:$0xff]
  %v7626 = vld [vmem:[#allocation3 + $0xd4] sm:$0xf]
  %v7627 = vld [vmem:[#allocation3 + $0xd8] sm:$0xff]
  %v7628 = vld [vmem:[#allocation3 + $0xe0] sm:$0xff]
  %v7629 = vld [vmem:[#allocation3 + $0xe8] sm:$0xff]
  %v7630 = vld [vmem:[#allocation3 + $0xf0] sm:$0xff]
  %v7631 = vld [vmem:[#allocation3 + $0xf8] sm:$0xf]
  %v7632 = vld [vmem:[#allocation3 + $0xfc] sm:$0xff]
  %v7633 = vld [vmem:[#allocation3 + $0x104] sm:$0xff]
  %v7634 = vld [vmem:[#allocation3 + $0x10c] sm:$0xff]
  %v7635 = vld [vmem:[#allocation3 + $0x114] sm:$0xff]
  %v7636 = vld [vmem:[#allocation3 + $0x11c] sm:$0xf]
  %v7637 = vld [vmem:[#allocation3 + $0x120] sm:$0xff]
  %v7638 = vld [vmem:[#allocation3 + $0x128] sm:$0xff]
  %v7639 = vld [vmem:[#allocation3 + $0x130] sm:$0xff]
  %v7640 = vld [vmem:[#allocation3 + $0x138] sm:$0xff]
  %v7641 = vld [vmem:[#allocation3 + $0x140] sm:$0xf]
  %v7642 = vld [vmem:[#allocation3 + $0x144] sm:$0xff]
  %v7643 = vld [vmem:[#allocation3 + $0x14c] sm:$0xff]
  %v7644 = vld [vmem:[#allocation3 + $0x154] sm:$0xff]
  %v7645 = vld [vmem:[#allocation3 + $0x15c] sm:$0xff]
  %v7646 = vld [vmem:[#allocation3 + $0x164] sm:$0xf]
  %v7647 = vld [vmem:[#allocation3 + $0x168] sm:$0xff]
  %v7648 = vld [vmem:[#allocation3 + $0x170] sm:$0xff]
  %v7649 = vld [vmem:[#allocation3 + $0x178] sm:$0xff]
  %v7650 = vld [vmem:[#allocation3 + $0x180] sm:$0xff]
  %v7651 = vld [vmem:[#allocation3 + $0x188] sm:$0xf]
  %v7652 = vld [vmem:[#allocation3 + $0x18c] sm:$0xff]
  %v7653 = vld [vmem:[#allocation3 + $0x194] sm:$0xff]
  %v7654 = vld [vmem:[#allocation3 + $0x19c] sm:$0xff]
  %v7655 = vld [vmem:[#allocation3 + $0x1a4] sm:$0xff]
  %v7656 = vld [vmem:[#allocation3 + $0x1ac] sm:$0xf]
  %v7657 = vld [vmem:[#allocation3 + $0x1b0] sm:$0xff]
  %v7658 = vld [vmem:[#allocation3 + $0x1b8] sm:$0xff]
  %v7659 = vld [vmem:[#allocation3 + $0x1c0] sm:$0xff]
  %v7660 = vld [vmem:[#allocation3 + $0x1c8] sm:$0xff]
  %v7661 = vld [vmem:[#allocation3 + $0x1d0] sm:$0xf]
  %v7662 = vld [vmem:[#allocation3 + $0x1d4] sm:$0xff]
  %v7663 = vld [vmem:[#allocation3 + $0x1dc] sm:$0xff]
  %v7664 = vld [vmem:[#allocation3 + $0x1e4] sm:$0xff]
  %v7665 = vld [vmem:[#allocation3 + $0x1ec] sm:$0xff]
  %v7666 = vld [vmem:[#allocation3 + $0x1f4] sm:$0xf]
  %v7667 = vld [vmem:[#allocation3 + $0x1f8] sm:$0xff]
  %v7668 = vld [vmem:[#allocation3 + $0x200] sm:$0xff]
  %v7669 = vld [vmem:[#allocation3 + $0x208] sm:$0xff]
  %v7670 = vld [vmem:[#allocation3 + $0x210] sm:$0xff]
  %v7671 = vld [vmem:[#allocation3 + $0x218] sm:$0xf]
  %v7672 = vld [vmem:[#allocation3 + $0x21c] sm:$0xff]
  %v7673 = vld [vmem:[#allocation3 + $0x224] sm:$0xff]
  %v7674 = vld [vmem:[#allocation3 + $0x22c] sm:$0xff]
  %v7675 = vld [vmem:[#allocation3 + $0x234] sm:$0xff]
  %v7676 = vld [vmem:[#allocation3 + $0x23c] sm:$0xf]
  %v7677 = vld [vmem:[#allocation3 + $0x240] sm:$0xff]
  %v7678 = vld [vmem:[#allocation3 + $0x248] sm:$0xff]
  %v7679 = vld [vmem:[#allocation3 + $0x250] sm:$0xff]
  %v7680 = vld [vmem:[#allocation3 + $0x258] sm:$0xff]
  %v7681 = vld [vmem:[#allocation3 + $0x260] sm:$0xf]
  %v7682 = vld [vmem:[#allocation3 + $0x264] sm:$0xff]
  %v7683 = vld [vmem:[#allocation3 + $0x26c] sm:$0xff]
  %v7684 = vld [vmem:[#allocation3 + $0x274] sm:$0xff]
  %v7685 = vld [vmem:[#allocation3 + $0x27c] sm:$0xff]
  %v7686 = vld [vmem:[#allocation3 + $0x284] sm:$0xf]
  %v7687 = vld [vmem:[#allocation3 + $0x288] sm:$0xff]
  %v7688 = vld [vmem:[#allocation3 + $0x290] sm:$0xff]
  %v7689 = vld [vmem:[#allocation3 + $0x298] sm:$0xff]
  %v7690 = vld [vmem:[#allocation3 + $0x2a0] sm:$0xff]
  %v7691 = vld [vmem:[#allocation3 + $0x2a8] sm:$0xf]
  %v7692 = vld [vmem:[#allocation3 + $0x2ac] sm:$0xff]
  %v7693 = vld [vmem:[#allocation3 + $0x2b4] sm:$0xff]
  %v7694 = vld [vmem:[#allocation3 + $0x2bc] sm:$0xff]
  %v7695 = vld [vmem:[#allocation3 + $0x2c4] sm:$0xff]
  %v7696 = vld [vmem:[#allocation3 + $0x2cc] sm:$0xf]
  %v7697 = vld [vmem:[#allocation3 + $0x2d0] sm:$0xff]
  %v7698 = vld [vmem:[#allocation3 + $0x2d8] sm:$0xff]
  %v7699 = vld [vmem:[#allocation3 + $0x2e0] sm:$0xff]
  %v7700 = vld [vmem:[#allocation3 + $0x2e8] sm:$0xff]
  %v7701 = vld [vmem:[#allocation3 + $0x2f0] sm:$0xf]
  %v7702 = vld [vmem:[#allocation3 + $0x2f4] sm:$0xff]
  %v7703 = vld [vmem:[#allocation3 + $0x2fc] sm:$0xff]
  %v7704 = vld [vmem:[#allocation3 + $0x304] sm:$0xff]
  %v7705 = vld [vmem:[#allocation3 + $0x30c] sm:$0xff]
  %v7706 = vld [vmem:[#allocation3 + $0x314] sm:$0xf]
  %v7707 = vld [vmem:[#allocation3 + $0x318] sm:$0xff]
  %v7708 = vld [vmem:[#allocation3 + $0x320] sm:$0xff]
  %v7709 = vld [vmem:[#allocation3 + $0x328] sm:$0xff]
  %v7710 = vld [vmem:[#allocation3 + $0x330] sm:$0xff]
  %v7711 = vld [vmem:[#allocation3 + $0x338] sm:$0xf]
  %v7712 = vld [vmem:[#allocation3 + $0x33c] sm:$0xff]
  %v7713 = vld [vmem:[#allocation3 + $0x344] sm:$0xff]
  %v7714 = vld [vmem:[#allocation3 + $0x34c] sm:$0xff]
  %v7715 = vld [vmem:[#allocation3 + $0x354] sm:$0xff]
  %v7716 = vld [vmem:[#allocation3 + $0x35c] sm:$0xf]
  %v7717 = vld [vmem:[#allocation3 + $0x360] sm:$0xff]
  %v7718 = vld [vmem:[#allocation3 + $0x368] sm:$0xff]
  %v7719 = vld [vmem:[#allocation3 + $0x370] sm:$0xff]
  %v7720 = vld [vmem:[#allocation3 + $0x378] sm:$0xff]
  %v7721 = vld [vmem:[#allocation3 + $0x380] sm:$0xf]
  %v7722 = vld [vmem:[#allocation3 + $0x384] sm:$0xff]
  %v7723 = vld [vmem:[#allocation3 + $0x38c] sm:$0xff]
  %v7724 = vld [vmem:[#allocation3 + $0x394] sm:$0xff]
  %v7725 = vld [vmem:[#allocation3 + $0x39c] sm:$0xff]
  %v7726 = vld [vmem:[#allocation3 + $0x3a4] sm:$0xf]
  %v7727 = vld [vmem:[#allocation3 + $0x3a8] sm:$0xff]
  %v7728 = vld [vmem:[#allocation3 + $0x3b0] sm:$0xff]
  %v7729 = vld [vmem:[#allocation3 + $0x3b8] sm:$0xff]
  %v7730 = vld [vmem:[#allocation3 + $0x3c0] sm:$0xff]
  %v7731 = vld [vmem:[#allocation3 + $0x3c8] sm:$0xf]
  %v7732 = vld [vmem:[#allocation3 + $0x3cc] sm:$0xff]
  %v7733 = vld [vmem:[#allocation3 + $0x3d4] sm:$0xff]
  %v7734 = vld [vmem:[#allocation3 + $0x3dc] sm:$0xff]
  %v7735 = vld [vmem:[#allocation3 + $0x3e4] sm:$0xff]
  %v7736 = vld [vmem:[#allocation3 + $0x3ec] sm:$0xf]
  %v7737 = vld [vmem:[#allocation3 + $0x3f0] sm:$0xff]
  %v7738 = vld [vmem:[#allocation3 + $0x3f8] sm:$0xff]
  %v7739 = vld [vmem:[#allocation3 + $0x400] sm:$0xff]
  %v7740 = vld [vmem:[#allocation3 + $0x408] sm:$0xff]
  %v7741 = vld [vmem:[#allocation3 + $0x410] sm:$0xf]
  %v7742 = vld [vmem:[#allocation3 + $0x414] sm:$0xff]
  %v7743 = vld [vmem:[#allocation3 + $0x41c] sm:$0xff]
  %v7744 = vld [vmem:[#allocation3 + $0x424] sm:$0xff]
  %v7745 = vld [vmem:[#allocation3 + $0x42c] sm:$0xff]
  %v7746 = vld [vmem:[#allocation3 + $0x434] sm:$0xf]
  %v7747 = vld [vmem:[#allocation3 + $0x438] sm:$0xff]
  %v7748 = vld [vmem:[#allocation3 + $0x440] sm:$0xff]
  %v7749 = vld [vmem:[#allocation3 + $0x448] sm:$0xff]
  %v7750 = vld [vmem:[#allocation3 + $0x450] sm:$0xff]
  %v7751 = vld [vmem:[#allocation3 + $0x458] sm:$0xf]
  %v7752 = vld [vmem:[#allocation3 + $0x45c] sm:$0xff]
  %v7753 = vld [vmem:[#allocation3 + $0x464] sm:$0xff]
  %v7754 = vld [vmem:[#allocation3 + $0x46c] sm:$0xff]
  %v7755 = vld [vmem:[#allocation3 + $0x474] sm:$0xff]
  %v7756 = vld [vmem:[#allocation3 + $0x47c] sm:$0xf]
  %v7757 = vld [vmem:[#allocation3 + $0x480] sm:$0xff]
  %v7758 = vld [vmem:[#allocation3 + $0x488] sm:$0xff]
  %v7759 = vld [vmem:[#allocation3 + $0x490] sm:$0xff]
  %v7760 = vld [vmem:[#allocation3 + $0x498] sm:$0xff]
  %v7761 = vld [vmem:[#allocation3 + $0x4a0] sm:$0xf]
  %v7762 = vld [vmem:[#allocation3 + $0x4a4] sm:$0xff]
  %v7763 = vld [vmem:[#allocation3 + $0x4ac] sm:$0xff]
  %v7764 = vld [vmem:[#allocation3 + $0x4b4] sm:$0xff]
  %v7765 = vld [vmem:[#allocation3 + $0x4bc] sm:$0xff]
  %v7766 = vld [vmem:[#allocation3 + $0x4c4] sm:$0xf]
  %v7767 = vld [vmem:[#allocation3 + $0x4c8] sm:$0xff]
  %v7768 = vld [vmem:[#allocation3 + $0x4d0] sm:$0xff]
  %v7769 = vld [vmem:[#allocation3 + $0x4d8] sm:$0xff]
  %v7770 = vld [vmem:[#allocation3 + $0x4e0] sm:$0xff]
  %v7771 = vld [vmem:[#allocation3 + $0x4e8] sm:$0xf]
  %v7772 = vld [vmem:[#allocation3 + $0x4ec] sm:$0xff]
  %v7773 = vld [vmem:[#allocation3 + $0x4f4] sm:$0xff]
  %v7774 = vld [vmem:[#allocation3 + $0x4fc] sm:$0xff]
  %v7775 = vld [vmem:[#allocation3 + $0x504] sm:$0xff]
  %v7776 = vld [vmem:[#allocation3 + $0x50c] sm:$0xf]
  %v7777 = vld [vmem:[#allocation3 + $0x510] sm:$0xff]
  %v7778 = vld [vmem:[#allocation3 + $0x518] sm:$0xff]
  %v7779 = vld [vmem:[#allocation3 + $0x520] sm:$0xff]
  %v7780 = vld [vmem:[#allocation3 + $0x528] sm:$0xff]
  %v7781 = vld [vmem:[#allocation3 + $0x530] sm:$0xf]
  %v7782 = vld [vmem:[#allocation3 + $0x534] sm:$0xff]
  %v7783 = vld [vmem:[#allocation3 + $0x53c] sm:$0xff]
  %v7784 = vld [vmem:[#allocation3 + $0x544] sm:$0xff]
  %v7785 = vld [vmem:[#allocation3 + $0x54c] sm:$0xff]
  %v7786 = vld [vmem:[#allocation3 + $0x554] sm:$0xf]
  %v7787 = vld [vmem:[#allocation3 + $0x558] sm:$0xff]
  %v7788 = vld [vmem:[#allocation3 + $0x560] sm:$0xff]
  %v7789 = vld [vmem:[#allocation3 + $0x568] sm:$0xff]
  %v7790 = vld [vmem:[#allocation3 + $0x570] sm:$0xff]
  %v7791 = vld [vmem:[#allocation3 + $0x578] sm:$0xf]
  %v7792 = vld [vmem:[#allocation3 + $0x57c] sm:$0xff]
  %v7793 = vld [vmem:[#allocation3 + $0x584] sm:$0xff]
  %v7794 = vld [vmem:[#allocation3 + $0x58c] sm:$0xff]
  %v7795 = vld [vmem:[#allocation3 + $0x594] sm:$0xff]
  %v7796 = vld [vmem:[#allocation3 + $0x59c] sm:$0xf]
  %v7797 = vld [vmem:[#allocation3 + $0x5a0] sm:$0xff]
  %v7798 = vld [vmem:[#allocation3 + $0x5a8] sm:$0xff]
  %v7799 = vld [vmem:[#allocation3 + $0x5b0] sm:$0xff]
  %v7800 = vld [vmem:[#allocation3 + $0x5b8] sm:$0xff]
  %v7801 = vld [vmem:[#allocation3 + $0x5c0] sm:$0xf]
  %v7802 = vld [vmem:[#allocation3 + $0x5c4] sm:$0xff]
  %v7803 = vld [vmem:[#allocation3 + $0x5cc] sm:$0xff]
  %v7804 = vld [vmem:[#allocation3 + $0x5d4] sm:$0xff]
  %v7805 = vld [vmem:[#allocation3 + $0x5dc] sm:$0xff]
  %v7806 = vld [vmem:[#allocation3 + $0x5e4] sm:$0xf]
  %v7807 = vld [vmem:[#allocation3 + $0x5e8] sm:$0xff]
  %v7808 = vld [vmem:[#allocation3 + $0x5f0] sm:$0xff]
  %v7809 = vld [vmem:[#allocation3 + $0x5f8] sm:$0xff]
  %v7810 = vld [vmem:[#allocation3 + $0x600] sm:$0xff]
  %v7811 = vld [vmem:[#allocation3 + $0x608] sm:$0xf]
  %v7812 = vld [vmem:[#allocation3 + $0x60c] sm:$0xff]
  %v7813 = vld [vmem:[#allocation3 + $0x614] sm:$0xff]
  %v7814 = vld [vmem:[#allocation3 + $0x61c] sm:$0xff]
  %v7815 = vld [vmem:[#allocation3 + $0x624] sm:$0xff]
  %v7816 = vld [vmem:[#allocation3 + $0x62c] sm:$0xf]
  %v7817 = vld [vmem:[#allocation3 + $0x630] sm:$0xff]
  %v7818 = vld [vmem:[#allocation3 + $0x638] sm:$0xff]
  %v7819 = vld [vmem:[#allocation3 + $0x640] sm:$0xff]
  %v7820 = vld [vmem:[#allocation3 + $0x648] sm:$0xff]
  %v7821 = vld [vmem:[#allocation3 + $0x650] sm:$0xf]
  %v7822 = vld [vmem:[#allocation3 + $0x654] sm:$0xff]
  %v7823 = vld [vmem:[#allocation3 + $0x65c] sm:$0xff]
  %v7824 = vld [vmem:[#allocation3 + $0x664] sm:$0xff]
  %v7825 = vld [vmem:[#allocation3 + $0x66c] sm:$0xff]
  %v7826 = vld [vmem:[#allocation3 + $0x674] sm:$0xf]
  %v7827 = vld [vmem:[#allocation3 + $0x678] sm:$0xff]
  %v7828 = vld [vmem:[#allocation3 + $0x680] sm:$0xff]
  %v7829 = vld [vmem:[#allocation3 + $0x688] sm:$0xff]
  %v7830 = vld [vmem:[#allocation3 + $0x690] sm:$0xff]
  %v7831 = vld [vmem:[#allocation3 + $0x698] sm:$0xf]
  %v7832 = vld [vmem:[#allocation3 + $0x69c] sm:$0xff]
  %v7833 = vld [vmem:[#allocation3 + $0x6a4] sm:$0xff]
  %v7834 = vld [vmem:[#allocation3 + $0x6ac] sm:$0xff]
  %v7835 = vld [vmem:[#allocation3 + $0x6b4] sm:$0xff]
  %v7836 = vld [vmem:[#allocation3 + $0x6bc] sm:$0xf]
  %v7837 = vld [vmem:[#allocation3 + $0x6c0] sm:$0xff]
  %v7838 = vld [vmem:[#allocation3 + $0x6c8] sm:$0xff]
  %v7839 = vld [vmem:[#allocation3 + $0x6d0] sm:$0xff]
  %v7840 = vld [vmem:[#allocation3 + $0x6d8] sm:$0xff]
  %v7841 = vld [vmem:[#allocation3 + $0x6e0] sm:$0xf]
  %v7842 = vld [vmem:[#allocation3 + $0x6e4] sm:$0xff]
  %v7843 = vld [vmem:[#allocation3 + $0x6ec] sm:$0xff]
  %v7844 = vld [vmem:[#allocation3 + $0x6f4] sm:$0xff]
  %v7845 = vld [vmem:[#allocation3 + $0x6fc] sm:$0xff]
  %v7846 = vld [vmem:[#allocation3 + $0x704] sm:$0xf]
  %v7847 = vld [vmem:[#allocation3 + $0x708] sm:$0xff]
  %v7848 = vld [vmem:[#allocation3 + $0x710] sm:$0xff]
  %v7849 = vld [vmem:[#allocation3 + $0x718] sm:$0xff]
  %v7850 = vld [vmem:[#allocation3 + $0x720] sm:$0xff]
  %v7851 = vld [vmem:[#allocation3 + $0x728] sm:$0xf]
  %v7852 = vld [vmem:[#allocation3 + $0x72c] sm:$0xff]
  %v7853 = vld [vmem:[#allocation3 + $0x734] sm:$0xff]
  %v7854 = vld [vmem:[#allocation3 + $0x73c] sm:$0xff]
  %v7855 = vld [vmem:[#allocation3 + $0x744] sm:$0xff]
  %v7856 = vld [vmem:[#allocation3 + $0x74c] sm:$0xf]
  %v7857 = vld [vmem:[#allocation3 + $0x750] sm:$0xff]
  %v7858 = vld [vmem:[#allocation3 + $0x758] sm:$0xff]
  %v7859 = vld [vmem:[#allocation3 + $0x760] sm:$0xff]
  %v7860 = vld [vmem:[#allocation3 + $0x768] sm:$0xff]
  %v7861 = vld [vmem:[#allocation3 + $0x770] sm:$0xf]
  %v7862 = vld [vmem:[#allocation3 + $0x774] sm:$0xff]
  %v7863 = vld [vmem:[#allocation3 + $0x77c] sm:$0xff]
  %v7864 = vld [vmem:[#allocation3 + $0x784] sm:$0xff]
  %v7865 = vld [vmem:[#allocation3 + $0x78c] sm:$0xff]
  %v7866 = vld [vmem:[#allocation3 + $0x794] sm:$0xf]
  %v7867 = vld [vmem:[#allocation3 + $0x798] sm:$0xff]
  %v7868 = vld [vmem:[#allocation3 + $0x7a0] sm:$0xff]
  %v7869 = vld [vmem:[#allocation3 + $0x7a8] sm:$0xff]
  %v7870 = vld [vmem:[#allocation3 + $0x7b0] sm:$0xff]
  %v7871 = vld [vmem:[#allocation3 + $0x7b8] sm:$0xf]
  %v7872 = vld [vmem:[#allocation3 + $0x7bc] sm:$0xff]
  %v7873 = vld [vmem:[#allocation3 + $0x7c4] sm:$0xff]
  %v7874 = vld [vmem:[#allocation3 + $0x7cc] sm:$0xff]
  %v7875 = vld [vmem:[#allocation3 + $0x7d4] sm:$0xff]
  %v7876 = vld [vmem:[#allocation3 + $0x7dc] sm:$0xf]
  %v7877 = vld [vmem:[#allocation3 + $0x7e0] sm:$0xff]
  %v7878 = vld [vmem:[#allocation3 + $0x7e8] sm:$0xff]
  %v7879 = vld [vmem:[#allocation3 + $0x7f0] sm:$0xff]
  %v7880 = vld [vmem:[#allocation3 + $0x7f8] sm:$0xff]
  %v7881 = vld [vmem:[#allocation3 + $0x800] sm:$0xf]
  %v7882 = vld [vmem:[#allocation3 + $0x804] sm:$0xff]
  %v7883 = vld [vmem:[#allocation3 + $0x80c] sm:$0xff]
  %v7884 = vld [vmem:[#allocation3 + $0x814] sm:$0xff]
  %v7885 = vld [vmem:[#allocation3 + $0x81c] sm:$0xff]
  %v7886 = vld [vmem:[#allocation3 + $0x824] sm:$0xf]
  %v7887 = vld [vmem:[#allocation3 + $0x828] sm:$0xff]
  %v7888 = vld [vmem:[#allocation3 + $0x830] sm:$0xff]
  %v7889 = vld [vmem:[#allocation3 + $0x838] sm:$0xff]
  %v7890 = vld [vmem:[#allocation3 + $0x840] sm:$0xff]
  %v7891 = vld [vmem:[#allocation3 + $0x848] sm:$0xf]
  %v7892 = vld [vmem:[#allocation3 + $0x84c] sm:$0xff]
  %v7893 = vld [vmem:[#allocation3 + $0x854] sm:$0xff]
  %v7894 = vld [vmem:[#allocation3 + $0x85c] sm:$0xff]
  %v7895 = vld [vmem:[#allocation3 + $0x864] sm:$0xff]
  %v7896 = vld [vmem:[#allocation3 + $0x86c] sm:$0xf]
  %v7897 = vld [vmem:[#allocation3 + $0x870] sm:$0xff]
  %v7898 = vld [vmem:[#allocation3 + $0x878] sm:$0xff]
  %v7899 = vld [vmem:[#allocation3 + $0x880] sm:$0xff]
  %v7900 = vld [vmem:[#allocation3 + $0x888] sm:$0xff]
  %v7901 = vld [vmem:[#allocation3 + $0x890] sm:$0xf]
  %v7902 = vld [vmem:[#allocation3 + $0x894] sm:$0xff]
  %v7903 = vld [vmem:[#allocation3 + $0x89c] sm:$0xff]
  %v7904 = vld [vmem:[#allocation3 + $0x8a4] sm:$0xff]
  %v7905 = vld [vmem:[#allocation3 + $0x8ac] sm:$0xff]
  %v7906 = vld [vmem:[#allocation3 + $0x8b4] sm:$0xf]
  %v7907 = vld [vmem:[#allocation3 + $0x8b8] sm:$0xff]
  %v7908 = vld [vmem:[#allocation3 + $0x8c0] sm:$0xff]
  %v7909 = vld [vmem:[#allocation3 + $0x8c8] sm:$0xff]
  %v7910 = vld [vmem:[#allocation3 + $0x8d0] sm:$0xff]
  %v7911 = vld [vmem:[#allocation3 + $0x8d8] sm:$0xf]
  %v7912 = vld [vmem:[#allocation3 + $0x8dc] sm:$0xff]
  %v7913 = vld [vmem:[#allocation3 + $0x8e4] sm:$0xff]
  %v7914 = vld [vmem:[#allocation3 + $0x8ec] sm:$0xff]
  %v7915 = vld [vmem:[#allocation3 + $0x8f4] sm:$0xff]
  %v7916 = vld [vmem:[#allocation3 + $0x8fc] sm:$0xf]
  %v7917 = vld [vmem:[#allocation3 + $0x900] sm:$0xff]
  %v7918 = vld [vmem:[#allocation3 + $0x908] sm:$0xff]
  %v7919 = vld [vmem:[#allocation3 + $0x910] sm:$0xff]
  %v7920 = vld [vmem:[#allocation3 + $0x918] sm:$0xff]
  %v7921 = vld [vmem:[#allocation3 + $0x920] sm:$0xf]
  %v7922 = vld [vmem:[#allocation3 + $0x924] sm:$0xff]
  %v7923 = vld [vmem:[#allocation3 + $0x92c] sm:$0xff]
  %v7924 = vld [vmem:[#allocation3 + $0x934] sm:$0xff]
  %v7925 = vld [vmem:[#allocation3 + $0x93c] sm:$0xff]
  %v7926 = vld [vmem:[#allocation3 + $0x944] sm:$0xf]
  %v7927 = vld [vmem:[#allocation3 + $0x948] sm:$0xff]
  %v7928 = vld [vmem:[#allocation3 + $0x950] sm:$0xff]
  %v7929 = vld [vmem:[#allocation3 + $0x958] sm:$0xff]
  %v7930 = vld [vmem:[#allocation3 + $0x960] sm:$0xff]
  %v7931 = vld [vmem:[#allocation3 + $0x968] sm:$0xf]
  %v7932 = vld [vmem:[#allocation3 + $0x96c] sm:$0xff]
  %v7933 = vld [vmem:[#allocation3 + $0x974] sm:$0xff]
  %v7934 = vld [vmem:[#allocation3 + $0x97c] sm:$0xff]
  %v7935 = vld [vmem:[#allocation3 + $0x984] sm:$0xff]
  %v7936 = vld [vmem:[#allocation3 + $0x98c] sm:$0xf]
  %v7937 = vld [vmem:[#allocation3 + $0x990] sm:$0xff]
  %v7938 = vld [vmem:[#allocation3 + $0x998] sm:$0xff]
  %v7939 = vld [vmem:[#allocation3 + $0x9a0] sm:$0xff]
  %v7940 = vld [vmem:[#allocation3 + $0x9a8] sm:$0xff]
  %v7941 = vld [vmem:[#allocation3 + $0x9b0] sm:$0xf]
  %v7942 = vld [vmem:[#allocation3 + $0x9b4] sm:$0xff]
  %v7943 = vld [vmem:[#allocation3 + $0x9bc] sm:$0xff]
  %v7944 = vld [vmem:[#allocation3 + $0x9c4] sm:$0xff]
  %v7945 = vld [vmem:[#allocation3 + $0x9cc] sm:$0xff]
  %v7946 = vld [vmem:[#allocation3 + $0x9d4] sm:$0xf]
  %v7947 = vld [vmem:[#allocation3 + $0x9d8] sm:$0xff]
  %v7948 = vld [vmem:[#allocation3 + $0x9e0] sm:$0xff]
  %v7949 = vld [vmem:[#allocation3 + $0x9e8] sm:$0xff]
  %v7950 = vld [vmem:[#allocation3 + $0x9f0] sm:$0xff]
  %v7951 = vld [vmem:[#allocation3 + $0x9f8] sm:$0xf]
  %v7952 = vld [vmem:[#allocation3 + $0x9fc] sm:$0xff]
  %v7953 = vld [vmem:[#allocation3 + $0xa04] sm:$0xff]
  %v7954 = vld [vmem:[#allocation3 + $0xa0c] sm:$0xff]
  %v7955 = vld [vmem:[#allocation3 + $0xa14] sm:$0xff]
  %v7956 = vld [vmem:[#allocation3 + $0xa1c] sm:$0xf]
  %v7957 = vld [vmem:[#allocation3 + $0xa20] sm:$0xff]
  %v7958 = vld [vmem:[#allocation3 + $0xa28] sm:$0xff]
  %v7959 = vld [vmem:[#allocation3 + $0xa30] sm:$0xff]
  %v7960 = vld [vmem:[#allocation3 + $0xa38] sm:$0xff]
  %v7961 = vld [vmem:[#allocation3 + $0xa40] sm:$0xf]
  %v7962 = vld [vmem:[#allocation3 + $0xa44] sm:$0xff]
  %v7963 = vld [vmem:[#allocation3 + $0xa4c] sm:$0xff]
  %v7964 = vld [vmem:[#allocation3 + $0xa54] sm:$0xff]
  %v7965 = vld [vmem:[#allocation3 + $0xa5c] sm:$0xff]
  %v7966 = vld [vmem:[#allocation3 + $0xa64] sm:$0xf]
  %v7967 = vld [vmem:[#allocation3 + $0xa68] sm:$0xff]
  %v7968 = vld [vmem:[#allocation3 + $0xa70] sm:$0xff]
  %v7969 = vld [vmem:[#allocation3 + $0xa78] sm:$0xff]
  %v7970 = vld [vmem:[#allocation3 + $0xa80] sm:$0xff]
  %v7971 = vld [vmem:[#allocation3 + $0xa88] sm:$0xf]
  %v7972 = vld [vmem:[#allocation3 + $0xa8c] sm:$0xff]
  %v7973 = vld [vmem:[#allocation3 + $0xa94] sm:$0xff]
  %v7974 = vld [vmem:[#allocation3 + $0xa9c] sm:$0xff]
  %v7975 = vld [vmem:[#allocation3 + $0xaa4] sm:$0xff]
  %v7976 = vld [vmem:[#allocation3 + $0xaac] sm:$0xf]
  %v7977 = vld [vmem:[#allocation3 + $0xab0] sm:$0xff]
  %v7978 = vld [vmem:[#allocation3 + $0xab8] sm:$0xff]
  %v7979 = vld [vmem:[#allocation3 + $0xac0] sm:$0xff]
  %v7980 = vld [vmem:[#allocation3 + $0xac8] sm:$0xff]
  %v7981 = vld [vmem:[#allocation3 + $0xad0] sm:$0xf]
  %v7982 = vld [vmem:[#allocation3 + $0xad4] sm:$0xff]
  %v7983 = vld [vmem:[#allocation3 + $0xadc] sm:$0xff]
  %v7984 = vld [vmem:[#allocation3 + $0xae4] sm:$0xff]
  %v7985 = vld [vmem:[#allocation3 + $0xaec] sm:$0xff]
  %v7986 = vld [vmem:[#allocation3 + $0xaf4] sm:$0xf]
  %v7987 = vld [vmem:[#allocation3 + $0xaf8] sm:$0xff]
  %v7988 = vld [vmem:[#allocation3 + $0xb00] sm:$0xff]
  %v7989 = vld [vmem:[#allocation3 + $0xb08] sm:$0xff]
  %v7990 = vld [vmem:[#allocation3 + $0xb10] sm:$0xff]
  %v7991 = vld [vmem:[#allocation3 + $0xb18] sm:$0xf]
  %v7992 = vld [vmem:[#allocation3 + $0xb1c] sm:$0xff]
  %v7993 = vld [vmem:[#allocation3 + $0xb24] sm:$0xff]
  %v7994 = vld [vmem:[#allocation3 + $0xb2c] sm:$0xff]
  %v7995 = vld [vmem:[#allocation3 + $0xb34] sm:$0xff]
  %v7996 = vld [vmem:[#allocation3 + $0xb3c] sm:$0xf]
  %v7997 = vld [vmem:[#allocation3 + $0xb40] sm:$0xff]
  %v7998 = vld [vmem:[#allocation3 + $0xb48] sm:$0xff]
  %v7999 = vld [vmem:[#allocation3 + $0xb50] sm:$0xff]
  %v8000 = vld [vmem:[#allocation3 + $0xb58] sm:$0xff]
  %v8001 = vld [vmem:[#allocation3 + $0xb60] sm:$0xf]
  %v8002 = vld [vmem:[#allocation3 + $0xb64] sm:$0xff]
  %v8003 = vld [vmem:[#allocation3 + $0xb6c] sm:$0xff]
  %v8004 = vld [vmem:[#allocation3 + $0xb74] sm:$0xff]
  %v8005 = vld [vmem:[#allocation3 + $0xb7c] sm:$0xff]
  %v8006 = vld [vmem:[#allocation3 + $0xb84] sm:$0xf]
  %v8007 = vld [vmem:[#allocation3 + $0xb88] sm:$0xff]
  %v8008 = vld [vmem:[#allocation3 + $0xb90] sm:$0xff]
  %v8009 = vld [vmem:[#allocation3 + $0xb98] sm:$0xff]
  %v8010 = vld [vmem:[#allocation3 + $0xba0] sm:$0xff]
  %v8011 = vld [vmem:[#allocation3 + $0xba8] sm:$0xf]
  %v8012 = vld [vmem:[#allocation3 + $0xbac] sm:$0xff]
  %v8013 = vld [vmem:[#allocation3 + $0xbb4] sm:$0xff]
  %v8014 = vld [vmem:[#allocation3 + $0xbbc] sm:$0xff]
  %v8015 = vld [vmem:[#allocation3 + $0xbc4] sm:$0xff]
  %v8016 = vld [vmem:[#allocation3 + $0xbcc] sm:$0xf]
  %v8017 = vld [vmem:[#allocation3 + $0xbd0] sm:$0xff]
  %v8018 = vld [vmem:[#allocation3 + $0xbd8] sm:$0xff]
  %v8019 = vld [vmem:[#allocation3 + $0xbe0] sm:$0xff]
  %v8020 = vld [vmem:[#allocation3 + $0xbe8] sm:$0xff]
  %v8021 = vld [vmem:[#allocation3 + $0xbf0] sm:$0xf]
  %v8022 = vld [vmem:[#allocation3 + $0xbf4] sm:$0xff]
  %v8023 = vld [vmem:[#allocation3 + $0xbfc] sm:$0xff]
  %v8024 = vld [vmem:[#allocation3 + $0xc04] sm:$0xff]
  %v8025 = vld [vmem:[#allocation3 + $0xc0c] sm:$0xff]
  %v8026 = vld [vmem:[#allocation3 + $0xc14] sm:$0xf]
  %v8027 = vld [vmem:[#allocation3 + $0xc18] sm:$0xff]
  %v8028 = vld [vmem:[#allocation3 + $0xc20] sm:$0xff]
  %v8029 = vld [vmem:[#allocation3 + $0xc28] sm:$0xff]
  %v8030 = vld [vmem:[#allocation3 + $0xc30] sm:$0xff]
  %v8031 = vld [vmem:[#allocation3 + $0xc38] sm:$0xf]
  %v8032 = vld [vmem:[#allocation3 + $0xc3c] sm:$0xff]
  %v8033 = vld [vmem:[#allocation3 + $0xc44] sm:$0xff]
  %v8034 = vld [vmem:[#allocation3 + $0xc4c] sm:$0xff]
  %v8035 = vld [vmem:[#allocation3 + $0xc54] sm:$0xff]
  %v8036 = vld [vmem:[#allocation3 + $0xc5c] sm:$0xf]
  %v8037 = vld [vmem:[#allocation3 + $0xc60] sm:$0xff]
  %v8038 = vld [vmem:[#allocation3 + $0xc68] sm:$0xff]
  %v8039 = vld [vmem:[#allocation3 + $0xc70] sm:$0xff]
  %v8040 = vld [vmem:[#allocation3 + $0xc78] sm:$0xff]
  %v8041 = vld [vmem:[#allocation3 + $0xc80] sm:$0xf]
  %v8042 = vld [vmem:[#allocation3 + $0xc84] sm:$0xff]
  %v8043 = vld [vmem:[#allocation3 + $0xc8c] sm:$0xff]
  %v8044 = vld [vmem:[#allocation3 + $0xc94] sm:$0xff]
  %v8045 = vld [vmem:[#allocation3 + $0xc9c] sm:$0xff]
  %v8046 = vld [vmem:[#allocation3 + $0xca4] sm:$0xf]
  %v8047 = vld [vmem:[#allocation3 + $0xca8] sm:$0xff]
  %v8048 = vld [vmem:[#allocation3 + $0xcb0] sm:$0xff]
  %v8049 = vld [vmem:[#allocation3 + $0xcb8] sm:$0xff]
  %v8050 = vld [vmem:[#allocation3 + $0xcc0] sm:$0xff]
  %v8051 = vld [vmem:[#allocation3 + $0xcc8] sm:$0xf]
  %v8052 = vld [vmem:[#allocation3 + $0xccc] sm:$0xff]
  %v8053 = vld [vmem:[#allocation3 + $0xcd4] sm:$0xff]
  %v8054 = vld [vmem:[#allocation3 + $0xcdc] sm:$0xff]
  %v8055 = vld [vmem:[#allocation3 + $0xce4] sm:$0xff]
  %v8056 = vld [vmem:[#allocation3 + $0xcec] sm:$0xf]
  %v8057 = vld [vmem:[#allocation3 + $0xcf0] sm:$0xff]
  %v8058 = vld [vmem:[#allocation3 + $0xcf8] sm:$0xff]
  %v8059 = vld [vmem:[#allocation3 + $0xd00] sm:$0xff]
  %v8060 = vld [vmem:[#allocation3 + $0xd08] sm:$0xff]
  %v8061 = vld [vmem:[#allocation3 + $0xd10] sm:$0xf]
  %v8062 = vld [vmem:[#allocation3 + $0xd14] sm:$0xff]
  %v8063 = vld [vmem:[#allocation3 + $0xd1c] sm:$0xff]
  %v8064 = vld [vmem:[#allocation3 + $0xd24] sm:$0xff]
  %v8065 = vld [vmem:[#allocation3 + $0xd2c] sm:$0xff]
  %v8066 = vld [vmem:[#allocation3 + $0xd34] sm:$0xf]
  %v8067 = vld [vmem:[#allocation3 + $0xd38] sm:$0xff]
  %v8068 = vld [vmem:[#allocation3 + $0xd40] sm:$0xff]
  %v8069 = vld [vmem:[#allocation3 + $0xd48] sm:$0xff]
  %v8070 = vld [vmem:[#allocation3 + $0xd50] sm:$0xff]
  %v8071 = vld [vmem:[#allocation3 + $0xd58] sm:$0xf]
  %v8072 = vld [vmem:[#allocation3 + $0xd5c] sm:$0xff]
  %v8073 = vld [vmem:[#allocation3 + $0xd64] sm:$0xff]
  %v8074 = vld [vmem:[#allocation3 + $0xd6c] sm:$0xff]
  %v8075 = vld [vmem:[#allocation3 + $0xd74] sm:$0xff]
  %v8076 = vld [vmem:[#allocation3 + $0xd7c] sm:$0xf]
  %v8077 = vld [vmem:[%s2] sm:$0xf]
  %v8078 = vld [vmem:[%s2 + $0x4] sm:$0xf]
  %v8079 = vld [vmem:[%s2 + $0x8] sm:$0xf]
  %v8080 = vld [vmem:[%s2 + $0xc] sm:$0xf]
  %v8081 = vld [vmem:[%s2 + $0x10] sm:$0xf]
  %v8082 = vld [vmem:[%s2 + $0x14] sm:$0xf]
  %v8083 = vld [vmem:[%s2 + $0x18] sm:$0xf]
  %v8084 = vld [vmem:[%s2 + $0x1c] sm:$0xf]
  %v8085 = vld [vmem:[%s2 + $0x20] sm:$0xf]
  %v8086 = vld [vmem:[%s2 + $0x24] sm:$0xf]
  %v8087 = vld [vmem:[%s2 + $0x28] sm:$0xf]
  %v8088 = vld [vmem:[%s2 + $0x2c] sm:$0xf]
  %v8089 = vld [vmem:[%s2 + $0x30] sm:$0xf]
  %v8090 = vld [vmem:[%s2 + $0x34] sm:$0xf]
  %v8091 = vld [vmem:[%s2 + $0x38] sm:$0xf]
  %v8092 = vld [vmem:[%s2 + $0x3c] sm:$0xf]
  %v8093 = vld [vmem:[%s2 + $0x40] sm:$0xf]
  %v8094 = vld [vmem:[%s2 + $0x44] sm:$0xf]
  %v8095 = vld [vmem:[%s2 + $0x48] sm:$0xf]
  %v8096 = vld [vmem:[%s2 + $0x4c] sm:$0xf]
  %v8097 = vld [vmem:[%s2 + $0x50] sm:$0xf]
  %v8098 = vld [vmem:[%s2 + $0x54] sm:$0xf]
  %v8099 = vld [vmem:[%s2 + $0x58] sm:$0xf]
  %v8100 = vld [vmem:[%s2 + $0x5c] sm:$0xf]
  %v8101 = vld [vmem:[%s2 + $0x60] sm:$0xf]
  %v8102 = vld [vmem:[%s2 + $0x64] sm:$0xf]
  %v8103 = vld [vmem:[%s2 + $0x68] sm:$0xf]
  %v8104 = vld [vmem:[%s2 + $0x6c] sm:$0xf]
  %v8105 = vld [vmem:[%s2 + $0x70] sm:$0xf]
  %v8106 = vld [vmem:[%s2 + $0x74] sm:$0xf]
  %v8107 = vld [vmem:[%s2 + $0x78] sm:$0xf]
  %v8108 = vld [vmem:[%s2 + $0x7c] sm:$0xf]
  %v8109 = vld [vmem:[%s2 + $0x80] sm:$0xf]
  %v8110 = vld [vmem:[%s2 + $0x84] sm:$0xf]
  %v8111 = vld [vmem:[%s2 + $0x88] sm:$0xf]
  %v8112 = vld [vmem:[%s2 + $0x8c] sm:$0xf]
  %v8113 = vld [vmem:[%s2 + $0x90] sm:$0xf]
  %v8114 = vld [vmem:[%s2 + $0x94] sm:$0xf]
  %v8115 = vld [vmem:[%s2 + $0x98] sm:$0xf]
  %v8116 = vld [vmem:[%s2 + $0x9c] sm:$0xf]
  %v8117 = vld [vmem:[%s2 + $0xa0] sm:$0xf]
  %v8118 = vld [vmem:[%s2 + $0xa4] sm:$0xf]
  %v8119 = vld [vmem:[%s2 + $0xa8] sm:$0xf]
  %v8120 = vld [vmem:[%s2 + $0xac] sm:$0xf]
  %v8121 = vld [vmem:[%s2 + $0xb0] sm:$0xf]
  %v8122 = vld [vmem:[%s2 + $0xb4] sm:$0xf]
  %v8123 = vld [vmem:[%s2 + $0xb8] sm:$0xf]
  %v8124 = vld [vmem:[%s2 + $0xbc] sm:$0xf]
  %v8125 = vld [vmem:[%s2 + $0xc0] sm:$0xf]
  %v8126 = vld [vmem:[%s2 + $0xc4] sm:$0xf]
  %v8127 = vld [vmem:[%s2 + $0xc8] sm:$0xf]
  %v8128 = vld [vmem:[%s2 + $0xcc] sm:$0xf]
  %v8129 = vld [vmem:[%s2 + $0xd0] sm:$0xf]
  %v8130 = vld [vmem:[%s2 + $0xd4] sm:$0xf]
  %v8131 = vld [vmem:[%s2 + $0xd8] sm:$0xf]
  %v8132 = vld [vmem:[%s2 + $0xdc] sm:$0xf]
  %v8133 = vld [vmem:[%s2 + $0xe0] sm:$0xf]
  %v8134 = vld [vmem:[%s2 + $0xe4] sm:$0xf]
  %v8135 = vld [vmem:[%s2 + $0xe8] sm:$0xf]
  %v8136 = vld [vmem:[%s2 + $0xec] sm:$0xf]
  %v8137 = vld [vmem:[%s2 + $0xf0] sm:$0xf]
  %v8138 = vld [vmem:[%s2 + $0xf4] sm:$0xf]
  %v8139 = vld [vmem:[%s2 + $0xf8] sm:$0xf]
  %v8140 = vld [vmem:[%s2 + $0xfc] sm:$0xf]
  %v8141 = vld [vmem:[%s2 + $0x100] sm:$0xf]
  %v8142 = vld [vmem:[%s2 + $0x104] sm:$0xf]
  %v8143 = vld [vmem:[%s2 + $0x108] sm:$0xf]
  %v8144 = vld [vmem:[%s2 + $0x10c] sm:$0xf]
  %v8145 = vld [vmem:[%s2 + $0x110] sm:$0xf]
  %v8146 = vld [vmem:[%s2 + $0x114] sm:$0xf]
  %v8147 = vld [vmem:[%s2 + $0x118] sm:$0xf]
  %v8148 = vld [vmem:[%s2 + $0x11c] sm:$0xf]
  %v8149 = vld [vmem:[%s2 + $0x120] sm:$0xf]
  %v8150 = vld [vmem:[%s2 + $0x124] sm:$0xf]
  %v8151 = vld [vmem:[%s2 + $0x128] sm:$0xf]
  %v8152 = vld [vmem:[%s2 + $0x12c] sm:$0xf]
  %v8153 = vld [vmem:[%s2 + $0x130] sm:$0xf]
  %v8154 = vld [vmem:[%s2 + $0x134] sm:$0xf]
  %v8155 = vld [vmem:[%s2 + $0x138] sm:$0xf]
  %v8156 = vld [vmem:[%s2 + $0x13c] sm:$0xf]
  %v8157 = vld [vmem:[%s2 + $0x140] sm:$0xf]
  %v8158 = vld [vmem:[%s2 + $0x144] sm:$0xf]
  %v8159 = vld [vmem:[%s2 + $0x148] sm:$0xf]
  %v8160 = vld [vmem:[%s2 + $0x14c] sm:$0xf]
  %v8161 = vld [vmem:[%s2 + $0x150] sm:$0xf]
  %v8162 = vld [vmem:[%s2 + $0x154] sm:$0xf]
  %v8163 = vld [vmem:[%s2 + $0x158] sm:$0xf]
  %v8164 = vld [vmem:[%s2 + $0x15c] sm:$0xf]
  %v8165 = vld [vmem:[%s2 + $0x160] sm:$0xf]
  %v8166 = vld [vmem:[%s2 + $0x164] sm:$0xf]
  %v8167 = vld [vmem:[%s2 + $0x168] sm:$0xf]
  %v8168 = vld [vmem:[%s2 + $0x16c] sm:$0xf]
  %v8169 = vld [vmem:[%s2 + $0x170] sm:$0xf]
  %v8170 = vld [vmem:[%s2 + $0x174] sm:$0xf]
  %v8171 = vld [vmem:[%s2 + $0x178] sm:$0xf]
  %v8172 = vld [vmem:[%s2 + $0x17c] sm:$0xf]
  %v8173 = vld [vmem:[%s2 + $0x180] sm:$0xf]
  %v8174 = vld [vmem:[%s2 + $0x184] sm:$0xf]
  %v8175 = vld [vmem:[%s2 + $0x188] sm:$0xf]
  %v8176 = vld [vmem:[%s2 + $0x18c] sm:$0xf]
  %v8177 = vld [vmem:[%s2 + $0x190] sm:$0xf]
  %v8178 = vld [vmem:[%s2 + $0x194] sm:$0xf]
  %v8179 = vld [vmem:[%s2 + $0x198] sm:$0xf]
  %v8180 = vld [vmem:[%s2 + $0x19c] sm:$0xf]
  %v8181 = vld [vmem:[%s2 + $0x1a0] sm:$0xf]
  %v8182 = vld [vmem:[%s2 + $0x1a4] sm:$0xf]
  %v8183 = vld [vmem:[%s2 + $0x1a8] sm:$0xf]
  %v8184 = vld [vmem:[%s2 + $0x1ac] sm:$0xf]
  %v8185 = vld [vmem:[%s2 + $0x1b0] sm:$0xf]
  %v8186 = vld [vmem:[%s2 + $0x1b4] sm:$0xf]
  %v8187 = vld [vmem:[%s2 + $0x1b8] sm:$0xf]
  %v8188 = vld [vmem:[%s2 + $0x1bc] sm:$0xf]
  %v8189 = vld [vmem:[%s2 + $0x1c0] sm:$0xf]
  %v8190 = vld [vmem:[%s2 + $0x1c4] sm:$0xf]
  %v8191 = vld [vmem:[%s2 + $0x1c8] sm:$0xf]
  %v8192 = vld [vmem:[%s2 + $0x1cc] sm:$0xf]
  %v8193 = vld [vmem:[%s2 + $0x1d0] sm:$0xf]
  %v8194 = vld [vmem:[%s2 + $0x1d4] sm:$0xf]
  %v8195 = vld [vmem:[%s2 + $0x1d8] sm:$0xf]
  %v8196 = vld [vmem:[%s2 + $0x1dc] sm:$0xf]
  %v8197 = vld [vmem:[%s2 + $0x1e0] sm:$0xf]
  %v8198 = vld [vmem:[%s2 + $0x1e4] sm:$0xf]
  %v8199 = vld [vmem:[%s2 + $0x1e8] sm:$0xf]
  %v8200 = vld [vmem:[%s2 + $0x1ec] sm:$0xf]
  %v8201 = vld [vmem:[%s2 + $0x1f0] sm:$0xf]
  %v8202 = vld [vmem:[%s2 + $0x1f4] sm:$0xf]
  %v8203 = vld [vmem:[%s2 + $0x1f8] sm:$0xf]
  %v8204 = vld [vmem:[%s2 + $0x1fc] sm:$0xf]
  %v8205 = vld [vmem:[%s2 + $0x200] sm:$0xf]
  %v8206 = vld [vmem:[%s2 + $0x204] sm:$0xf]
  %v8207 = vld [vmem:[%s2 + $0x208] sm:$0xf]
  %v8208 = vld [vmem:[%s2 + $0x20c] sm:$0xf]
  %v8209 = vld [vmem:[%s2 + $0x210] sm:$0xf]
  %v8210 = vld [vmem:[%s2 + $0x214] sm:$0xf]
  %v8211 = vld [vmem:[%s2 + $0x218] sm:$0xf]
  %v8212 = vld [vmem:[%s2 + $0x21c] sm:$0xf]
  %v8213 = vld [vmem:[%s2 + $0x220] sm:$0xf]
  %v8214 = vld [vmem:[%s2 + $0x224] sm:$0xf]
  %v8215 = vld [vmem:[%s2 + $0x228] sm:$0xf]
  %v8216 = vld [vmem:[%s2 + $0x22c] sm:$0xf]
  %v8217 = vld [vmem:[%s2 + $0x230] sm:$0xf]
  %v8218 = vld [vmem:[%s2 + $0x234] sm:$0xf]
  %v8219 = vld [vmem:[%s2 + $0x238] sm:$0xf]
  %v8220 = vld [vmem:[%s2 + $0x23c] sm:$0xf]
  %v8221 = vld [vmem:[%s3] sm:$0x1]
  %v8223 = vperm.slane %v8221, 0
  %v8705 = vunpack.c.l.b16 %v7597
  %v8706 = vunpack.c.h.b16 %v7597
  %v8707 = vunpack.c.l.b16 %v7598
  %v8708 = vunpack.c.h.b16 %v7598
  %v8709 = vunpack.c.l.b16 %v7599
  %v8710 = vunpack.c.h.b16 %v7599
  %v8711 = vunpack.c.l.b16 %v7600
  %v8712 = vunpack.c.h.b16 %v7600
  %v8713 = vunpack.c.l.b16 %v7601
  %v8714 = vunpack.c.l.b16 %v7602
  %v8715 = vunpack.c.h.b16 %v7602
  %v8716 = vunpack.c.l.b16 %v7603
  %v8717 = vunpack.c.h.b16 %v7603
  %v8718 = vunpack.c.l.b16 %v7604
  %v8719 = vunpack.c.h.b16 %v7604
  %v8720 = vunpack.c.l.b16 %v7605
  %v8721 = vunpack.c.h.b16 %v7605
  %v8722 = vunpack.c.l.b16 %v7606
  %v8723 = vunpack.c.l.b16 %v7607
  %v8724 = vunpack.c.h.b16 %v7607
  %v8725 = vunpack.c.l.b16 %v7608
  %v8726 = vunpack.c.h.b16 %v7608
  %v8727 = vunpack.c.l.b16 %v7609
  %v8728 = vunpack.c.h.b16 %v7609
  %v8729 = vunpack.c.l.b16 %v7610
  %v8730 = vunpack.c.h.b16 %v7610
  %v8731 = vunpack.c.l.b16 %v7611
  %v8732 = vunpack.c.l.b16 %v7612
  %v8733 = vunpack.c.h.b16 %v7612
  %v8734 = vunpack.c.l.b16 %v7613
  %v8735 = vunpack.c.h.b16 %v7613
  %v8736 = vunpack.c.l.b16 %v7614
  %v8737 = vunpack.c.h.b16 %v7614
  %v8738 = vunpack.c.l.b16 %v7615
  %v8739 = vunpack.c.h.b16 %v7615
  %v8740 = vunpack.c.l.b16 %v7616
  %v8741 = vunpack.c.l.b16 %v7617
  %v8742 = vunpack.c.h.b16 %v7617
  %v8743 = vunpack.c.l.b16 %v7618
  %v8744 = vunpack.c.h.b16 %v7618
  %v8745 = vunpack.c.l.b16 %v7619
  %v8746 = vunpack.c.h.b16 %v7619
  %v8747 = vunpack.c.l.b16 %v7620
  %v8748 = vunpack.c.h.b16 %v7620
  %v8749 = vunpack.c.l.b16 %v7621
  %v8750 = vunpack.c.l.b16 %v7622
  %v8751 = vunpack.c.h.b16 %v7622
  %v8752 = vunpack.c.l.b16 %v7623
  %v8753 = vunpack.c.h.b16 %v7623
  %v8754 = vunpack.c.l.b16 %v7624
  %v8755 = vunpack.c.h.b16 %v7624
  %v8756 = vunpack.c.l.b16 %v7625
  %v8757 = vunpack.c.h.b16 %v7625
  %v8758 = vunpack.c.l.b16 %v7626
  %v8759 = vunpack.c.l.b16 %v7627
  %v8760 = vunpack.c.h.b16 %v7627
  %v8761 = vunpack.c.l.b16 %v7628
  %v8762 = vunpack.c.h.b16 %v7628
  %v8763 = vunpack.c.l.b16 %v7629
  %v8764 = vunpack.c.h.b16 %v7629
  %v8765 = vunpack.c.l.b16 %v7630
  %v8766 = vunpack.c.h.b16 %v7630
  %v8767 = vunpack.c.l.b16 %v7631
  %v8768 = vunpack.c.l.b16 %v7632
  %v8769 = vunpack.c.h.b16 %v7632
  %v8770 = vunpack.c.l.b16 %v7633
  %v8771 = vunpack.c.h.b16 %v7633
  %v8772 = vunpack.c.l.b16 %v7634
  %v8773 = vunpack.c.h.b16 %v7634
  %v8774 = vunpack.c.l.b16 %v7635
  %v8775 = vunpack.c.h.b16 %v7635
  %v8776 = vunpack.c.l.b16 %v7636
  %v8777 = vunpack.c.l.b16 %v7637
  %v8778 = vunpack.c.h.b16 %v7637
  %v8779 = vunpack.c.l.b16 %v7638
  %v8780 = vunpack.c.h.b16 %v7638
  %v8781 = vunpack.c.l.b16 %v7639
  %v8782 = vunpack.c.h.b16 %v7639
  %v8783 = vunpack.c.l.b16 %v7640
  %v8784 = vunpack.c.h.b16 %v7640
  %v8785 = vunpack.c.l.b16 %v7641
  %v8786 = vunpack.c.l.b16 %v7642
  %v8787 = vunpack.c.h.b16 %v7642
  %v8788 = vunpack.c.l.b16 %v7643
  %v8789 = vunpack.c.h.b16 %v7643
  %v8790 = vunpack.c.l.b16 %v7644
  %v8791 = vunpack.c.h.b16 %v7644
  %v8792 = vunpack.c.l.b16 %v7645
  %v8793 = vunpack.c.h.b16 %v7645
  %v8794 = vunpack.c.l.b16 %v7646
  %v8795 = vunpack.c.l.b16 %v7647
  %v8796 = vunpack.c.h.b16 %v7647
  %v8797 = vunpack.c.l.b16 %v7648
  %v8798 = vunpack.c.h.b16 %v7648
  %v8799 = vunpack.c.l.b16 %v7649
  %v8800 = vunpack.c.h.b16 %v7649
  %v8801 = vunpack.c.l.b16 %v7650
  %v8802 = vunpack.c.h.b16 %v7650
  %v8803 = vunpack.c.l.b16 %v7651
  %v8804 = vunpack.c.l.b16 %v7652
  %v8805 = vunpack.c.h.b16 %v7652
  %v8806 = vunpack.c.l.b16 %v7653
  %v8807 = vunpack.c.h.b16 %v7653
  %v8808 = vunpack.c.l.b16 %v7654
  %v8809 = vunpack.c.h.b16 %v7654
  %v8810 = vunpack.c.l.b16 %v7655
  %v8811 = vunpack.c.h.b16 %v7655
  %v8812 = vunpack.c.l.b16 %v7656
  %v8813 = vunpack.c.l.b16 %v7657
  %v8814 = vunpack.c.h.b16 %v7657
  %v8815 = vunpack.c.l.b16 %v7658
  %v8816 = vunpack.c.h.b16 %v7658
  %v8817 = vunpack.c.l.b16 %v7659
  %v8818 = vunpack.c.h.b16 %v7659
  %v8819 = vunpack.c.l.b16 %v7660
  %v8820 = vunpack.c.h.b16 %v7660
  %v8821 = vunpack.c.l.b16 %v7661
  %v8822 = vunpack.c.l.b16 %v7662
  %v8823 = vunpack.c.h.b16 %v7662
  %v8824 = vunpack.c.l.b16 %v7663
  %v8825 = vunpack.c.h.b16 %v7663
  %v8826 = vunpack.c.l.b16 %v7664
  %v8827 = vunpack.c.h.b16 %v7664
  %v8828 = vunpack.c.l.b16 %v7665
  %v8829 = vunpack.c.h.b16 %v7665
  %v8830 = vunpack.c.l.b16 %v7666
  %v8831 = vunpack.c.l.b16 %v7667
  %v8832 = vunpack.c.h.b16 %v7667
  %v8833 = vunpack.c.l.b16 %v7668
  %v8834 = vunpack.c.h.b16 %v7668
  %v8835 = vunpack.c.l.b16 %v7669
  %v8836 = vunpack.c.h.b16 %v7669
  %v8837 = vunpack.c.l.b16 %v7670
  %v8838 = vunpack.c.h.b16 %v7670
  %v8839 = vunpack.c.l.b16 %v7671
  %v8840 = vunpack.c.l.b16 %v7672
  %v8841 = vunpack.c.h.b16 %v7672
  %v8842 = vunpack.c.l.b16 %v7673
  %v8843 = vunpack.c.h.b16 %v7673
  %v8844 = vunpack.c.l.b16 %v7674
  %v8845 = vunpack.c.h.b16 %v7674
  %v8846 = vunpack.c.l.b16 %v7675
  %v8847 = vunpack.c.h.b16 %v7675
  %v8848 = vunpack.c.l.b16 %v7676
  %v8849 = vunpack.c.l.b16 %v7677
  %v8850 = vunpack.c.h.b16 %v7677
  %v8851 = vunpack.c.l.b16 %v7678
  %v8852 = vunpack.c.h.b16 %v7678
  %v8853 = vunpack.c.l.b16 %v7679
  %v8854 = vunpack.c.h.b16 %v7679
  %v8855 = vunpack.c.l.b16 %v7680
  %v8856 = vunpack.c.h.b16 %v7680
  %v8857 = vunpack.c.l.b16 %v7681
  %v8858 = vunpack.c.l.b16 %v7682
  %v8859 = vunpack.c.h.b16 %v7682
  %v8860 = vunpack.c.l.b16 %v7683
  %v8861 = vunpack.c.h.b16 %v7683
  %v8862 = vunpack.c.l.b16 %v7684
  %v8863 = vunpack.c.h.b16 %v7684
  %v8864 = vunpack.c.l.b16 %v7685
  %v8865 = vunpack.c.h.b16 %v7685
  %v8866 = vunpack.c.l.b16 %v7686
  %v8867 = vunpack.c.l.b16 %v7687
  %v8868 = vunpack.c.h.b16 %v7687
  %v8869 = vunpack.c.l.b16 %v7688
  %v8870 = vunpack.c.h.b16 %v7688
  %v8871 = vunpack.c.l.b16 %v7689
  %v8872 = vunpack.c.h.b16 %v7689
  %v8873 = vunpack.c.l.b16 %v7690
  %v8874 = vunpack.c.h.b16 %v7690
  %v8875 = vunpack.c.l.b16 %v7691
  %v8876 = vunpack.c.l.b16 %v7692
  %v8877 = vunpack.c.h.b16 %v7692
  %v8878 = vunpack.c.l.b16 %v7693
  %v8879 = vunpack.c.h.b16 %v7693
  %v8880 = vunpack.c.l.b16 %v7694
  %v8881 = vunpack.c.h.b16 %v7694
  %v8882 = vunpack.c.l.b16 %v7695
  %v8883 = vunpack.c.h.b16 %v7695
  %v8884 = vunpack.c.l.b16 %v7696
  %v8885 = vunpack.c.l.b16 %v7697
  %v8886 = vunpack.c.h.b16 %v7697
  %v8887 = vunpack.c.l.b16 %v7698
  %v8888 = vunpack.c.h.b16 %v7698
  %v8889 = vunpack.c.l.b16 %v7699
  %v8890 = vunpack.c.h.b16 %v7699
  %v8891 = vunpack.c.l.b16 %v7700
  %v8892 = vunpack.c.h.b16 %v7700
  %v8893 = vunpack.c.l.b16 %v7701
  %v8894 = vunpack.c.l.b16 %v7702
  %v8895 = vunpack.c.h.b16 %v7702
  %v8896 = vunpack.c.l.b16 %v7703
  %v8897 = vunpack.c.h.b16 %v7703
  %v8898 = vunpack.c.l.b16 %v7704
  %v8899 = vunpack.c.h.b16 %v7704
  %v8900 = vunpack.c.l.b16 %v7705
  %v8901 = vunpack.c.h.b16 %v7705
  %v8902 = vunpack.c.l.b16 %v7706
  %v8903 = vunpack.c.l.b16 %v7707
  %v8904 = vunpack.c.h.b16 %v7707
  %v8905 = vunpack.c.l.b16 %v7708
  %v8906 = vunpack.c.h.b16 %v7708
  %v8907 = vunpack.c.l.b16 %v7709
  %v8908 = vunpack.c.h.b16 %v7709
  %v8909 = vunpack.c.l.b16 %v7710
  %v8910 = vunpack.c.h.b16 %v7710
  %v8911 = vunpack.c.l.b16 %v7711
  %v8912 = vunpack.c.l.b16 %v7712
  %v8913 = vunpack.c.h.b16 %v7712
  %v8914 = vunpack.c.l.b16 %v7713
  %v8915 = vunpack.c.h.b16 %v7713
  %v8916 = vunpack.c.l.b16 %v7714
  %v8917 = vunpack.c.h.b16 %v7714
  %v8918 = vunpack.c.l.b16 %v7715
  %v8919 = vunpack.c.h.b16 %v7715
  %v8920 = vunpack.c.l.b16 %v7716
  %v8921 = vunpack.c.l.b16 %v7717
  %v8922 = vunpack.c.h.b16 %v7717
  %v8923 = vunpack.c.l.b16 %v7718
  %v8924 = vunpack.c.h.b16 %v7718
  %v8925 = vunpack.c.l.b16 %v7719
  %v8926 = vunpack.c.h.b16 %v7719
  %v8927 = vunpack.c.l.b16 %v7720
  %v8928 = vunpack.c.h.b16 %v7720
  %v8929 = vunpack.c.l.b16 %v7721
  %v8930 = vunpack.c.l.b16 %v7722
  %v8931 = vunpack.c.h.b16 %v7722
  %v8932 = vunpack.c.l.b16 %v7723
  %v8933 = vunpack.c.h.b16 %v7723
  %v8934 = vunpack.c.l.b16 %v7724
  %v8935 = vunpack.c.h.b16 %v7724
  %v8936 = vunpack.c.l.b16 %v7725
  %v8937 = vunpack.c.h.b16 %v7725
  %v8938 = vunpack.c.l.b16 %v7726
  %v8939 = vunpack.c.l.b16 %v7727
  %v8940 = vunpack.c.h.b16 %v7727
  %v8941 = vunpack.c.l.b16 %v7728
  %v8942 = vunpack.c.h.b16 %v7728
  %v8943 = vunpack.c.l.b16 %v7729
  %v8944 = vunpack.c.h.b16 %v7729
  %v8945 = vunpack.c.l.b16 %v7730
  %v8946 = vunpack.c.h.b16 %v7730
  %v8947 = vunpack.c.l.b16 %v7731
  %v8948 = vunpack.c.l.b16 %v7732
  %v8949 = vunpack.c.h.b16 %v7732
  %v8950 = vunpack.c.l.b16 %v7733
  %v8951 = vunpack.c.h.b16 %v7733
  %v8952 = vunpack.c.l.b16 %v7734
  %v8953 = vunpack.c.h.b16 %v7734
  %v8954 = vunpack.c.l.b16 %v7735
  %v8955 = vunpack.c.h.b16 %v7735
  %v8956 = vunpack.c.l.b16 %v7736
  %v8957 = vunpack.c.l.b16 %v7737
  %v8958 = vunpack.c.h.b16 %v7737
  %v8959 = vunpack.c.l.b16 %v7738
  %v8960 = vunpack.c.h.b16 %v7738
  %v8961 = vunpack.c.l.b16 %v7739
  %v8962 = vunpack.c.h.b16 %v7739
  %v8963 = vunpack.c.l.b16 %v7740
  %v8964 = vunpack.c.h.b16 %v7740
  %v8965 = vunpack.c.l.b16 %v7741
  %v8966 = vunpack.c.l.b16 %v7742
  %v8967 = vunpack.c.h.b16 %v7742
  %v8968 = vunpack.c.l.b16 %v7743
  %v8969 = vunpack.c.h.b16 %v7743
  %v8970 = vunpack.c.l.b16 %v7744
  %v8971 = vunpack.c.h.b16 %v7744
  %v8972 = vunpack.c.l.b16 %v7745
  %v8973 = vunpack.c.h.b16 %v7745
  %v8974 = vunpack.c.l.b16 %v7746
  %v8975 = vunpack.c.l.b16 %v7747
  %v8976 = vunpack.c.h.b16 %v7747
  %v8977 = vunpack.c.l.b16 %v7748
  %v8978 = vunpack.c.h.b16 %v7748
  %v8979 = vunpack.c.l.b16 %v7749
  %v8980 = vunpack.c.h.b16 %v7749
  %v8981 = vunpack.c.l.b16 %v7750
  %v8982 = vunpack.c.h.b16 %v7750
  %v8983 = vunpack.c.l.b16 %v7751
  %v8984 = vunpack.c.l.b16 %v7752
  %v8985 = vunpack.c.h.b16 %v7752
  %v8986 = vunpack.c.l.b16 %v7753
  %v8987 = vunpack.c.h.b16 %v7753
  %v8988 = vunpack.c.l.b16 %v7754
  %v8989 = vunpack.c.h.b16 %v7754
  %v8990 = vunpack.c.l.b16 %v7755
  %v8991 = vunpack.c.h.b16 %v7755
  %v8992 = vunpack.c.l.b16 %v7756
  %v8993 = vunpack.c.l.b16 %v7757
  %v8994 = vunpack.c.h.b16 %v7757
  %v8995 = vunpack.c.l.b16 %v7758
  %v8996 = vunpack.c.h.b16 %v7758
  %v8997 = vunpack.c.l.b16 %v7759
  %v8998 = vunpack.c.h.b16 %v7759
  %v8999 = vunpack.c.l.b16 %v7760
  %v9000 = vunpack.c.h.b16 %v7760
  %v9001 = vunpack.c.l.b16 %v7761
  %v9002 = vunpack.c.l.b16 %v7762
  %v9003 = vunpack.c.h.b16 %v7762
  %v9004 = vunpack.c.l.b16 %v7763
  %v9005 = vunpack.c.h.b16 %v7763
  %v9006 = vunpack.c.l.b16 %v7764
  %v9007 = vunpack.c.h.b16 %v7764
  %v9008 = vunpack.c.l.b16 %v7765
  %v9009 = vunpack.c.h.b16 %v7765
  %v9010 = vunpack.c.l.b16 %v7766
  %v9011 = vunpack.c.l.b16 %v7767
  %v9012 = vunpack.c.h.b16 %v7767
  %v9013 = vunpack.c.l.b16 %v7768
  %v9014 = vunpack.c.h.b16 %v7768
  %v9015 = vunpack.c.l.b16 %v7769
  %v9016 = vunpack.c.h.b16 %v7769
  %v9017 = vunpack.c.l.b16 %v7770
  %v9018 = vunpack.c.h.b16 %v7770
  %v9019 = vunpack.c.l.b16 %v7771
  %v9020 = vunpack.c.l.b16 %v7772
  %v9021 = vunpack.c.h.b16 %v7772
  %v9022 = vunpack.c.l.b16 %v7773
  %v9023 = vunpack.c.h.b16 %v7773
  %v9024 = vunpack.c.l.b16 %v7774
  %v9025 = vunpack.c.h.b16 %v7774
  %v9026 = vunpack.c.l.b16 %v7775
  %v9027 = vunpack.c.h.b16 %v7775
  %v9028 = vunpack.c.l.b16 %v7776
  %v9029 = vunpack.c.l.b16 %v7777
  %v9030 = vunpack.c.h.b16 %v7777
  %v9031 = vunpack.c.l.b16 %v7778
  %v9032 = vunpack.c.h.b16 %v7778
  %v9033 = vunpack.c.l.b16 %v7779
  %v9034 = vunpack.c.h.b16 %v7779
  %v9035 = vunpack.c.l.b16 %v7780
  %v9036 = vunpack.c.h.b16 %v7780
  %v9037 = vunpack.c.l.b16 %v7781
  %v9038 = vunpack.c.l.b16 %v7782
  %v9039 = vunpack.c.h.b16 %v7782
  %v9040 = vunpack.c.l.b16 %v7783
  %v9041 = vunpack.c.h.b16 %v7783
  %v9042 = vunpack.c.l.b16 %v7784
  %v9043 = vunpack.c.h.b16 %v7784
  %v9044 = vunpack.c.l.b16 %v7785
  %v9045 = vunpack.c.h.b16 %v7785
  %v9046 = vunpack.c.l.b16 %v7786
  %v9047 = vunpack.c.l.b16 %v7787
  %v9048 = vunpack.c.h.b16 %v7787
  %v9049 = vunpack.c.l.b16 %v7788
  %v9050 = vunpack.c.h.b16 %v7788
  %v9051 = vunpack.c.l.b16 %v7789
  %v9052 = vunpack.c.h.b16 %v7789
  %v9053 = vunpack.c.l.b16 %v7790
  %v9054 = vunpack.c.h.b16 %v7790
  %v9055 = vunpack.c.l.b16 %v7791
  %v9056 = vunpack.c.l.b16 %v7792
  %v9057 = vunpack.c.h.b16 %v7792
  %v9058 = vunpack.c.l.b16 %v7793
  %v9059 = vunpack.c.h.b16 %v7793
  %v9060 = vunpack.c.l.b16 %v7794
  %v9061 = vunpack.c.h.b16 %v7794
  %v9062 = vunpack.c.l.b16 %v7795
  %v9063 = vunpack.c.h.b16 %v7795
  %v9064 = vunpack.c.l.b16 %v7796
  %v9065 = vunpack.c.l.b16 %v7797
  %v9066 = vunpack.c.h.b16 %v7797
  %v9067 = vunpack.c.l.b16 %v7798
  %v9068 = vunpack.c.h.b16 %v7798
  %v9069 = vunpack.c.l.b16 %v7799
  %v9070 = vunpack.c.h.b16 %v7799
  %v9071 = vunpack.c.l.b16 %v7800
  %v9072 = vunpack.c.h.b16 %v7800
  %v9073 = vunpack.c.l.b16 %v7801
  %v9074 = vunpack.c.l.b16 %v7802
  %v9075 = vunpack.c.h.b16 %v7802
  %v9076 = vunpack.c.l.b16 %v7803
  %v9077 = vunpack.c.h.b16 %v7803
  %v9078 = vunpack.c.l.b16 %v7804
  %v9079 = vunpack.c.h.b16 %v7804
  %v9080 = vunpack.c.l.b16 %v7805
  %v9081 = vunpack.c.h.b16 %v7805
  %v9082 = vunpack.c.l.b16 %v7806
  %v9083 = vunpack.c.l.b16 %v7807
  %v9084 = vunpack.c.h.b16 %v7807
  %v9085 = vunpack.c.l.b16 %v7808
  %v9086 = vunpack.c.h.b16 %v7808
  %v9087 = vunpack.c.l.b16 %v7809
  %v9088 = vunpack.c.h.b16 %v7809
  %v9089 = vunpack.c.l.b16 %v7810
  %v9090 = vunpack.c.h.b16 %v7810
  %v9091 = vunpack.c.l.b16 %v7811
  %v9092 = vunpack.c.l.b16 %v7812
  %v9093 = vunpack.c.h.b16 %v7812
  %v9094 = vunpack.c.l.b16 %v7813
  %v9095 = vunpack.c.h.b16 %v7813
  %v9096 = vunpack.c.l.b16 %v7814
  %v9097 = vunpack.c.h.b16 %v7814
  %v9098 = vunpack.c.l.b16 %v7815
  %v9099 = vunpack.c.h.b16 %v7815
  %v9100 = vunpack.c.l.b16 %v7816
  %v9101 = vunpack.c.l.b16 %v7817
  %v9102 = vunpack.c.h.b16 %v7817
  %v9103 = vunpack.c.l.b16 %v7818
  %v9104 = vunpack.c.h.b16 %v7818
  %v9105 = vunpack.c.l.b16 %v7819
  %v9106 = vunpack.c.h.b16 %v7819
  %v9107 = vunpack.c.l.b16 %v7820
  %v9108 = vunpack.c.h.b16 %v7820
  %v9109 = vunpack.c.l.b16 %v7821
  %v9110 = vunpack.c.l.b16 %v7822
  %v9111 = vunpack.c.h.b16 %v7822
  %v9112 = vunpack.c.l.b16 %v7823
  %v9113 = vunpack.c.h.b16 %v7823
  %v9114 = vunpack.c.l.b16 %v7824
  %v9115 = vunpack.c.h.b16 %v7824
  %v9116 = vunpack.c.l.b16 %v7825
  %v9117 = vunpack.c.h.b16 %v7825
  %v9118 = vunpack.c.l.b16 %v7826
  %v9119 = vunpack.c.l.b16 %v7827
  %v9120 = vunpack.c.h.b16 %v7827
  %v9121 = vunpack.c.l.b16 %v7828
  %v9122 = vunpack.c.h.b16 %v7828
  %v9123 = vunpack.c.l.b16 %v7829
  %v9124 = vunpack.c.h.b16 %v7829
  %v9125 = vunpack.c.l.b16 %v7830
  %v9126 = vunpack.c.h.b16 %v7830
  %v9127 = vunpack.c.l.b16 %v7831
  %v9128 = vunpack.c.l.b16 %v7832
  %v9129 = vunpack.c.h.b16 %v7832
  %v9130 = vunpack.c.l.b16 %v7833
  %v9131 = vunpack.c.h.b16 %v7833
  %v9132 = vunpack.c.l.b16 %v7834
  %v9133 = vunpack.c.h.b16 %v7834
  %v9134 = vunpack.c.l.b16 %v7835
  %v9135 = vunpack.c.h.b16 %v7835
  %v9136 = vunpack.c.l.b16 %v7836
  %v9137 = vunpack.c.l.b16 %v7837
  %v9138 = vunpack.c.h.b16 %v7837
  %v9139 = vunpack.c.l.b16 %v7838
  %v9140 = vunpack.c.h.b16 %v7838
  %v9141 = vunpack.c.l.b16 %v7839
  %v9142 = vunpack.c.h.b16 %v7839
  %v9143 = vunpack.c.l.b16 %v7840
  %v9144 = vunpack.c.h.b16 %v7840
  %v9145 = vunpack.c.l.b16 %v7841
  %v9146 = vunpack.c.l.b16 %v7842
  %v9147 = vunpack.c.h.b16 %v7842
  %v9148 = vunpack.c.l.b16 %v7843
  %v9149 = vunpack.c.h.b16 %v7843
  %v9150 = vunpack.c.l.b16 %v7844
  %v9151 = vunpack.c.h.b16 %v7844
  %v9152 = vunpack.c.l.b16 %v7845
  %v9153 = vunpack.c.h.b16 %v7845
  %v9154 = vunpack.c.l.b16 %v7846
  %v9155 = vunpack.c.l.b16 %v7847
  %v9156 = vunpack.c.h.b16 %v7847
  %v9157 = vunpack.c.l.b16 %v7848
  %v9158 = vunpack.c.h.b16 %v7848
  %v9159 = vunpack.c.l.b16 %v7849
  %v9160 = vunpack.c.h.b16 %v7849
  %v9161 = vunpack.c.l.b16 %v7850
  %v9162 = vunpack.c.h.b16 %v7850
  %v9163 = vunpack.c.l.b16 %v7851
  %v9164 = vunpack.c.l.b16 %v7852
  %v9165 = vunpack.c.h.b16 %v7852
  %v9166 = vunpack.c.l.b16 %v7853
  %v9167 = vunpack.c.h.b16 %v7853
  %v9168 = vunpack.c.l.b16 %v7854
  %v9169 = vunpack.c.h.b16 %v7854
  %v9170 = vunpack.c.l.b16 %v7855
  %v9171 = vunpack.c.h.b16 %v7855
  %v9172 = vunpack.c.l.b16 %v7856
  %v9173 = vunpack.c.l.b16 %v7857
  %v9174 = vunpack.c.h.b16 %v7857
  %v9175 = vunpack.c.l.b16 %v7858
  %v9176 = vunpack.c.h.b16 %v7858
  %v9177 = vunpack.c.l.b16 %v7859
  %v9178 = vunpack.c.h.b16 %v7859
  %v9179 = vunpack.c.l.b16 %v7860
  %v9180 = vunpack.c.h.b16 %v7860
  %v9181 = vunpack.c.l.b16 %v7861
  %v9182 = vunpack.c.l.b16 %v7862
  %v9183 = vunpack.c.h.b16 %v7862
  %v9184 = vunpack.c.l.b16 %v7863
  %v9185 = vunpack.c.h.b16 %v7863
  %v9186 = vunpack.c.l.b16 %v7864
  %v9187 = vunpack.c.h.b16 %v7864
  %v9188 = vunpack.c.l.b16 %v7865
  %v9189 = vunpack.c.h.b16 %v7865
  %v9190 = vunpack.c.l.b16 %v7866
  %v9191 = vunpack.c.l.b16 %v7867
  %v9192 = vunpack.c.h.b16 %v7867
  %v9193 = vunpack.c.l.b16 %v7868
  %v9194 = vunpack.c.h.b16 %v7868
  %v9195 = vunpack.c.l.b16 %v7869
  %v9196 = vunpack.c.h.b16 %v7869
  %v9197 = vunpack.c.l.b16 %v7870
  %v9198 = vunpack.c.h.b16 %v7870
  %v9199 = vunpack.c.l.b16 %v7871
  %v9200 = vunpack.c.l.b16 %v7872
  %v9201 = vunpack.c.h.b16 %v7872
  %v9202 = vunpack.c.l.b16 %v7873
  %v9203 = vunpack.c.h.b16 %v7873
  %v9204 = vunpack.c.l.b16 %v7874
  %v9205 = vunpack.c.h.b16 %v7874
  %v9206 = vunpack.c.l.b16 %v7875
  %v9207 = vunpack.c.h.b16 %v7875
  %v9208 = vunpack.c.l.b16 %v7876
  %v9209 = vunpack.c.l.b16 %v7877
  %v9210 = vunpack.c.h.b16 %v7877
  %v9211 = vunpack.c.l.b16 %v7878
  %v9212 = vunpack.c.h.b16 %v7878
  %v9213 = vunpack.c.l.b16 %v7879
  %v9214 = vunpack.c.h.b16 %v7879
  %v9215 = vunpack.c.l.b16 %v7880
  %v9216 = vunpack.c.h.b16 %v7880
  %v9217 = vunpack.c.l.b16 %v7881
  %v9218 = vunpack.c.l.b16 %v7882
  %v9219 = vunpack.c.h.b16 %v7882
  %v9220 = vunpack.c.l.b16 %v7883
  %v9221 = vunpack.c.h.b16 %v7883
  %v9222 = vunpack.c.l.b16 %v7884
  %v9223 = vunpack.c.h.b16 %v7884
  %v9224 = vunpack.c.l.b16 %v7885
  %v9225 = vunpack.c.h.b16 %v7885
  %v9226 = vunpack.c.l.b16 %v7886
  %v9227 = vunpack.c.l.b16 %v7887
  %v9228 = vunpack.c.h.b16 %v7887
  %v9229 = vunpack.c.l.b16 %v7888
  %v9230 = vunpack.c.h.b16 %v7888
  %v9231 = vunpack.c.l.b16 %v7889
  %v9232 = vunpack.c.h.b16 %v7889
  %v9233 = vunpack.c.l.b16 %v7890
  %v9234 = vunpack.c.h.b16 %v7890
  %v9235 = vunpack.c.l.b16 %v7891
  %v9236 = vunpack.c.l.b16 %v7892
  %v9237 = vunpack.c.h.b16 %v7892
  %v9238 = vunpack.c.l.b16 %v7893
  %v9239 = vunpack.c.h.b16 %v7893
  %v9240 = vunpack.c.l.b16 %v7894
  %v9241 = vunpack.c.h.b16 %v7894
  %v9242 = vunpack.c.l.b16 %v7895
  %v9243 = vunpack.c.h.b16 %v7895
  %v9244 = vunpack.c.l.b16 %v7896
  %v9245 = vunpack.c.l.b16 %v7897
  %v9246 = vunpack.c.h.b16 %v7897
  %v9247 = vunpack.c.l.b16 %v7898
  %v9248 = vunpack.c.h.b16 %v7898
  %v9249 = vunpack.c.l.b16 %v7899
  %v9250 = vunpack.c.h.b16 %v7899
  %v9251 = vunpack.c.l.b16 %v7900
  %v9252 = vunpack.c.h.b16 %v7900
  %v9253 = vunpack.c.l.b16 %v7901
  %v9254 = vunpack.c.l.b16 %v7902
  %v9255 = vunpack.c.h.b16 %v7902
  %v9256 = vunpack.c.l.b16 %v7903
  %v9257 = vunpack.c.h.b16 %v7903
  %v9258 = vunpack.c.l.b16 %v7904
  %v9259 = vunpack.c.h.b16 %v7904
  %v9260 = vunpack.c.l.b16 %v7905
  %v9261 = vunpack.c.h.b16 %v7905
  %v9262 = vunpack.c.l.b16 %v7906
  %v9263 = vunpack.c.l.b16 %v7907
  %v9264 = vunpack.c.h.b16 %v7907
  %v9265 = vunpack.c.l.b16 %v7908
  %v9266 = vunpack.c.h.b16 %v7908
  %v9267 = vunpack.c.l.b16 %v7909
  %v9268 = vunpack.c.h.b16 %v7909
  %v9269 = vunpack.c.l.b16 %v7910
  %v9270 = vunpack.c.h.b16 %v7910
  %v9271 = vunpack.c.l.b16 %v7911
  %v9272 = vunpack.c.l.b16 %v7912
  %v9273 = vunpack.c.h.b16 %v7912
  %v9274 = vunpack.c.l.b16 %v7913
  %v9275 = vunpack.c.h.b16 %v7913
  %v9276 = vunpack.c.l.b16 %v7914
  %v9277 = vunpack.c.h.b16 %v7914
  %v9278 = vunpack.c.l.b16 %v7915
  %v9279 = vunpack.c.h.b16 %v7915
  %v9280 = vunpack.c.l.b16 %v7916
  %v9281 = vunpack.c.l.b16 %v7917
  %v9282 = vunpack.c.h.b16 %v7917
  %v9283 = vunpack.c.l.b16 %v7918
  %v9284 = vunpack.c.h.b16 %v7918
  %v9285 = vunpack.c.l.b16 %v7919
  %v9286 = vunpack.c.h.b16 %v7919
  %v9287 = vunpack.c.l.b16 %v7920
  %v9288 = vunpack.c.h.b16 %v7920
  %v9289 = vunpack.c.l.b16 %v7921
  %v9290 = vunpack.c.l.b16 %v7922
  %v9291 = vunpack.c.h.b16 %v7922
  %v9292 = vunpack.c.l.b16 %v7923
  %v9293 = vunpack.c.h.b16 %v7923
  %v9294 = vunpack.c.l.b16 %v7924
  %v9295 = vunpack.c.h.b16 %v7924
  %v9296 = vunpack.c.l.b16 %v7925
  %v9297 = vunpack.c.h.b16 %v7925
  %v9298 = vunpack.c.l.b16 %v7926
  %v9299 = vunpack.c.l.b16 %v7927
  %v9300 = vunpack.c.h.b16 %v7927
  %v9301 = vunpack.c.l.b16 %v7928
  %v9302 = vunpack.c.h.b16 %v7928
  %v9303 = vunpack.c.l.b16 %v7929
  %v9304 = vunpack.c.h.b16 %v7929
  %v9305 = vunpack.c.l.b16 %v7930
  %v9306 = vunpack.c.h.b16 %v7930
  %v9307 = vunpack.c.l.b16 %v7931
  %v9308 = vunpack.c.l.b16 %v7932
  %v9309 = vunpack.c.h.b16 %v7932
  %v9310 = vunpack.c.l.b16 %v7933
  %v9311 = vunpack.c.h.b16 %v7933
  %v9312 = vunpack.c.l.b16 %v7934
  %v9313 = vunpack.c.h.b16 %v7934
  %v9314 = vunpack.c.l.b16 %v7935
  %v9315 = vunpack.c.h.b16 %v7935
  %v9316 = vunpack.c.l.b16 %v7936
  %v9317 = vunpack.c.l.b16 %v7937
  %v9318 = vunpack.c.h.b16 %v7937
  %v9319 = vunpack.c.l.b16 %v7938
  %v9320 = vunpack.c.h.b16 %v7938
  %v9321 = vunpack.c.l.b16 %v7939
  %v9322 = vunpack.c.h.b16 %v7939
  %v9323 = vunpack.c.l.b16 %v7940
  %v9324 = vunpack.c.h.b16 %v7940
  %v9325 = vunpack.c.l.b16 %v7941
  %v9326 = vunpack.c.l.b16 %v7942
  %v9327 = vunpack.c.h.b16 %v7942
  %v9328 = vunpack.c.l.b16 %v7943
  %v9329 = vunpack.c.h.b16 %v7943
  %v9330 = vunpack.c.l.b16 %v7944
  %v9331 = vunpack.c.h.b16 %v7944
  %v9332 = vunpack.c.l.b16 %v7945
  %v9333 = vunpack.c.h.b16 %v7945
  %v9334 = vunpack.c.l.b16 %v7946
  %v9335 = vunpack.c.l.b16 %v7947
  %v9336 = vunpack.c.h.b16 %v7947
  %v9337 = vunpack.c.l.b16 %v7948
  %v9338 = vunpack.c.h.b16 %v7948
  %v9339 = vunpack.c.l.b16 %v7949
  %v9340 = vunpack.c.h.b16 %v7949
  %v9341 = vunpack.c.l.b16 %v7950
  %v9342 = vunpack.c.h.b16 %v7950
  %v9343 = vunpack.c.l.b16 %v7951
  %v9344 = vunpack.c.l.b16 %v7952
  %v9345 = vunpack.c.h.b16 %v7952
  %v9346 = vunpack.c.l.b16 %v7953
  %v9347 = vunpack.c.h.b16 %v7953
  %v9348 = vunpack.c.l.b16 %v7954
  %v9349 = vunpack.c.h.b16 %v7954
  %v9350 = vunpack.c.l.b16 %v7955
  %v9351 = vunpack.c.h.b16 %v7955
  %v9352 = vunpack.c.l.b16 %v7956
  %v9353 = vunpack.c.l.b16 %v7957
  %v9354 = vunpack.c.h.b16 %v7957
  %v9355 = vunpack.c.l.b16 %v7958
  %v9356 = vunpack.c.h.b16 %v7958
  %v9357 = vunpack.c.l.b16 %v7959
  %v9358 = vunpack.c.h.b16 %v7959
  %v9359 = vunpack.c.l.b16 %v7960
  %v9360 = vunpack.c.h.b16 %v7960
  %v9361 = vunpack.c.l.b16 %v7961
  %v9362 = vunpack.c.l.b16 %v7962
  %v9363 = vunpack.c.h.b16 %v7962
  %v9364 = vunpack.c.l.b16 %v7963
  %v9365 = vunpack.c.h.b16 %v7963
  %v9366 = vunpack.c.l.b16 %v7964
  %v9367 = vunpack.c.h.b16 %v7964
  %v9368 = vunpack.c.l.b16 %v7965
  %v9369 = vunpack.c.h.b16 %v7965
  %v9370 = vunpack.c.l.b16 %v7966
  %v9371 = vunpack.c.l.b16 %v7967
  %v9372 = vunpack.c.h.b16 %v7967
  %v9373 = vunpack.c.l.b16 %v7968
  %v9374 = vunpack.c.h.b16 %v7968
  %v9375 = vunpack.c.l.b16 %v7969
  %v9376 = vunpack.c.h.b16 %v7969
  %v9377 = vunpack.c.l.b16 %v7970
  %v9378 = vunpack.c.h.b16 %v7970
  %v9379 = vunpack.c.l.b16 %v7971
  %v9380 = vunpack.c.l.b16 %v7972
  %v9381 = vunpack.c.h.b16 %v7972
  %v9382 = vunpack.c.l.b16 %v7973
  %v9383 = vunpack.c.h.b16 %v7973
  %v9384 = vunpack.c.l.b16 %v7974
  %v9385 = vunpack.c.h.b16 %v7974
  %v9386 = vunpack.c.l.b16 %v7975
  %v9387 = vunpack.c.h.b16 %v7975
  %v9388 = vunpack.c.l.b16 %v7976
  %v9389 = vunpack.c.l.b16 %v7977
  %v9390 = vunpack.c.h.b16 %v7977
  %v9391 = vunpack.c.l.b16 %v7978
  %v9392 = vunpack.c.h.b16 %v7978
  %v9393 = vunpack.c.l.b16 %v7979
  %v9394 = vunpack.c.h.b16 %v7979
  %v9395 = vunpack.c.l.b16 %v7980
  %v9396 = vunpack.c.h.b16 %v7980
  %v9397 = vunpack.c.l.b16 %v7981
  %v9398 = vunpack.c.l.b16 %v7982
  %v9399 = vunpack.c.h.b16 %v7982
  %v9400 = vunpack.c.l.b16 %v7983
  %v9401 = vunpack.c.h.b16 %v7983
  %v9402 = vunpack.c.l.b16 %v7984
  %v9403 = vunpack.c.h.b16 %v7984
  %v9404 = vunpack.c.l.b16 %v7985
  %v9405 = vunpack.c.h.b16 %v7985
  %v9406 = vunpack.c.l.b16 %v7986
  %v9407 = vunpack.c.l.b16 %v7987
  %v9408 = vunpack.c.h.b16 %v7987
  %v9409 = vunpack.c.l.b16 %v7988
  %v9410 = vunpack.c.h.b16 %v7988
  %v9411 = vunpack.c.l.b16 %v7989
  %v9412 = vunpack.c.h.b16 %v7989
  %v9413 = vunpack.c.l.b16 %v7990
  %v9414 = vunpack.c.h.b16 %v7990
  %v9415 = vunpack.c.l.b16 %v7991
  %v9416 = vunpack.c.l.b16 %v7992
  %v9417 = vunpack.c.h.b16 %v7992
  %v9418 = vunpack.c.l.b16 %v7993
  %v9419 = vunpack.c.h.b16 %v7993
  %v9420 = vunpack.c.l.b16 %v7994
  %v9421 = vunpack.c.h.b16 %v7994
  %v9422 = vunpack.c.l.b16 %v7995
  %v9423 = vunpack.c.h.b16 %v7995
  %v9424 = vunpack.c.l.b16 %v7996
  %v9425 = vunpack.c.l.b16 %v7997
  %v9426 = vunpack.c.h.b16 %v7997
  %v9427 = vunpack.c.l.b16 %v7998
  %v9428 = vunpack.c.h.b16 %v7998
  %v9429 = vunpack.c.l.b16 %v7999
  %v9430 = vunpack.c.h.b16 %v7999
  %v9431 = vunpack.c.l.b16 %v8000
  %v9432 = vunpack.c.h.b16 %v8000
  %v9433 = vunpack.c.l.b16 %v8001
  %v9434 = vunpack.c.l.b16 %v8002
  %v9435 = vunpack.c.h.b16 %v8002
  %v9436 = vunpack.c.l.b16 %v8003
  %v9437 = vunpack.c.h.b16 %v8003
  %v9438 = vunpack.c.l.b16 %v8004
  %v9439 = vunpack.c.h.b16 %v8004
  %v9440 = vunpack.c.l.b16 %v8005
  %v9441 = vunpack.c.h.b16 %v8005
  %v9442 = vunpack.c.l.b16 %v8006
  %v9443 = vunpack.c.l.b16 %v8007
  %v9444 = vunpack.c.h.b16 %v8007
  %v9445 = vunpack.c.l.b16 %v8008
  %v9446 = vunpack.c.h.b16 %v8008
  %v9447 = vunpack.c.l.b16 %v8009
  %v9448 = vunpack.c.h.b16 %v8009
  %v9449 = vunpack.c.l.b16 %v8010
  %v9450 = vunpack.c.h.b16 %v8010
  %v9451 = vunpack.c.l.b16 %v8011
  %v9452 = vunpack.c.l.b16 %v8012
  %v9453 = vunpack.c.h.b16 %v8012
  %v9454 = vunpack.c.l.b16 %v8013
  %v9455 = vunpack.c.h.b16 %v8013
  %v9456 = vunpack.c.l.b16 %v8014
  %v9457 = vunpack.c.h.b16 %v8014
  %v9458 = vunpack.c.l.b16 %v8015
  %v9459 = vunpack.c.h.b16 %v8015
  %v9460 = vunpack.c.l.b16 %v8016
  %v9461 = vunpack.c.l.b16 %v8017
  %v9462 = vunpack.c.h.b16 %v8017
  %v9463 = vunpack.c.l.b16 %v8018
  %v9464 = vunpack.c.h.b16 %v8018
  %v9465 = vunpack.c.l.b16 %v8019
  %v9466 = vunpack.c.h.b16 %v8019
  %v9467 = vunpack.c.l.b16 %v8020
  %v9468 = vunpack.c.h.b16 %v8020
  %v9469 = vunpack.c.l.b16 %v8021
  %v9470 = vunpack.c.l.b16 %v8022
  %v9471 = vunpack.c.h.b16 %v8022
  %v9472 = vunpack.c.l.b16 %v8023
  %v9473 = vunpack.c.h.b16 %v8023
  %v9474 = vunpack.c.l.b16 %v8024
  %v9475 = vunpack.c.h.b16 %v8024
  %v9476 = vunpack.c.l.b16 %v8025
  %v9477 = vunpack.c.h.b16 %v8025
  %v9478 = vunpack.c.l.b16 %v8026
  %v9479 = vunpack.c.l.b16 %v8027
  %v9480 = vunpack.c.h.b16 %v8027
  %v9481 = vunpack.c.l.b16 %v8028
  %v9482 = vunpack.c.h.b16 %v8028
  %v9483 = vunpack.c.l.b16 %v8029
  %v9484 = vunpack.c.h.b16 %v8029
  %v9485 = vunpack.c.l.b16 %v8030
  %v9486 = vunpack.c.h.b16 %v8030
  %v9487 = vunpack.c.l.b16 %v8031
  %v9488 = vunpack.c.l.b16 %v8032
  %v9489 = vunpack.c.h.b16 %v8032
  %v9490 = vunpack.c.l.b16 %v8033
  %v9491 = vunpack.c.h.b16 %v8033
  %v9492 = vunpack.c.l.b16 %v8034
  %v9493 = vunpack.c.h.b16 %v8034
  %v9494 = vunpack.c.l.b16 %v8035
  %v9495 = vunpack.c.h.b16 %v8035
  %v9496 = vunpack.c.l.b16 %v8036
  %v9497 = vunpack.c.l.b16 %v8037
  %v9498 = vunpack.c.h.b16 %v8037
  %v9499 = vunpack.c.l.b16 %v8038
  %v9500 = vunpack.c.h.b16 %v8038
  %v9501 = vunpack.c.l.b16 %v8039
  %v9502 = vunpack.c.h.b16 %v8039
  %v9503 = vunpack.c.l.b16 %v8040
  %v9504 = vunpack.c.h.b16 %v8040
  %v9505 = vunpack.c.l.b16 %v8041
  %v9506 = vunpack.c.l.b16 %v8042
  %v9507 = vunpack.c.h.b16 %v8042
  %v9508 = vunpack.c.l.b16 %v8043
  %v9509 = vunpack.c.h.b16 %v8043
  %v9510 = vunpack.c.l.b16 %v8044
  %v9511 = vunpack.c.h.b16 %v8044
  %v9512 = vunpack.c.l.b16 %v8045
  %v9513 = vunpack.c.h.b16 %v8045
  %v9514 = vunpack.c.l.b16 %v8046
  %v9515 = vunpack.c.l.b16 %v8047
  %v9516 = vunpack.c.h.b16 %v8047
  %v9517 = vunpack.c.l.b16 %v8048
  %v9518 = vunpack.c.h.b16 %v8048
  %v9519 = vunpack.c.l.b16 %v8049
  %v9520 = vunpack.c.h.b16 %v8049
  %v9521 = vunpack.c.l.b16 %v8050
  %v9522 = vunpack.c.h.b16 %v8050
  %v9523 = vunpack.c.l.b16 %v8051
  %v9524 = vunpack.c.l.b16 %v8052
  %v9525 = vunpack.c.h.b16 %v8052
  %v9526 = vunpack.c.l.b16 %v8053
  %v9527 = vunpack.c.h.b16 %v8053
  %v9528 = vunpack.c.l.b16 %v8054
  %v9529 = vunpack.c.h.b16 %v8054
  %v9530 = vunpack.c.l.b16 %v8055
  %v9531 = vunpack.c.h.b16 %v8055
  %v9532 = vunpack.c.l.b16 %v8056
  %v9533 = vunpack.c.l.b16 %v8057
  %v9534 = vunpack.c.h.b16 %v8057
  %v9535 = vunpack.c.l.b16 %v8058
  %v9536 = vunpack.c.h.b16 %v8058
  %v9537 = vunpack.c.l.b16 %v8059
  %v9538 = vunpack.c.h.b16 %v8059
  %v9539 = vunpack.c.l.b16 %v8060
  %v9540 = vunpack.c.h.b16 %v8060
  %v9541 = vunpack.c.l.b16 %v8061
  %v9542 = vunpack.c.l.b16 %v8062
  %v9543 = vunpack.c.h.b16 %v8062
  %v9544 = vunpack.c.l.b16 %v8063
  %v9545 = vunpack.c.h.b16 %v8063
  %v9546 = vunpack.c.l.b16 %v8064
  %v9547 = vunpack.c.h.b16 %v8064
  %v9548 = vunpack.c.l.b16 %v8065
  %v9549 = vunpack.c.h.b16 %v8065
  %v9550 = vunpack.c.l.b16 %v8066
  %v9551 = vunpack.c.l.b16 %v8067
  %v9552 = vunpack.c.h.b16 %v8067
  %v9553 = vunpack.c.l.b16 %v8068
  %v9554 = vunpack.c.h.b16 %v8068
  %v9555 = vunpack.c.l.b16 %v8069
  %v9556 = vunpack.c.h.b16 %v8069
  %v9557 = vunpack.c.l.b16 %v8070
  %v9558 = vunpack.c.h.b16 %v8070
  %v9559 = vunpack.c.l.b16 %v8071
  %v9560 = vunpack.c.l.b16 %v8072
  %v9561 = vunpack.c.h.b16 %v8072
  %v9562 = vunpack.c.l.b16 %v8073
  %v9563 = vunpack.c.h.b16 %v8073
  %v9564 = vunpack.c.l.b16 %v8074
  %v9565 = vunpack.c.h.b16 %v8074
  %v9566 = vunpack.c.l.b16 %v8075
  %v9567 = vunpack.c.h.b16 %v8075
  %v9568 = vunpack.c.l.b16 %v8076
  %v9569 = vpack.c.b16 %v8714, %v8705
  %v9570 = vpack.c.b16 %v8715, %v8706
  %v9571 = vpack.c.b16 %v8716, %v8707
  %v9572 = vpack.c.b16 %v8717, %v8708
  %v9573 = vpack.c.b16 %v8718, %v8709
  %v9574 = vpack.c.b16 %v8719, %v8710
  %v9575 = vpack.c.b16 %v8720, %v8711
  %v9576 = vpack.c.b16 %v8721, %v8712
  %v9577 = vpack.c.b16 %v8722, %v8713
  %v9578 = vpack.c.b16 %v8732, %v8723
  %v9579 = vpack.c.b16 %v8733, %v8724
  %v9580 = vpack.c.b16 %v8734, %v8725
  %v9581 = vpack.c.b16 %v8735, %v8726
  %v9582 = vpack.c.b16 %v8736, %v8727
  %v9583 = vpack.c.b16 %v8737, %v8728
  %v9584 = vpack.c.b16 %v8738, %v8729
  %v9585 = vpack.c.b16 %v8739, %v8730
  %v9586 = vpack.c.b16 %v8740, %v8731
  %v9587 = vpack.c.b16 %v8750, %v8741
  %v9588 = vpack.c.b16 %v8751, %v8742
  %v9589 = vpack.c.b16 %v8752, %v8743
  %v9590 = vpack.c.b16 %v8753, %v8744
  %v9591 = vpack.c.b16 %v8754, %v8745
  %v9592 = vpack.c.b16 %v8755, %v8746
  %v9593 = vpack.c.b16 %v8756, %v8747
  %v9594 = vpack.c.b16 %v8757, %v8748
  %v9595 = vpack.c.b16 %v8758, %v8749
  %v9596 = vpack.c.b16 %v8768, %v8759
  %v9597 = vpack.c.b16 %v8769, %v8760
  %v9598 = vpack.c.b16 %v8770, %v8761
  %v9599 = vpack.c.b16 %v8771, %v8762
  %v9600 = vpack.c.b16 %v8772, %v8763
  %v9601 = vpack.c.b16 %v8773, %v8764
  %v9602 = vpack.c.b16 %v8774, %v8765
  %v9603 = vpack.c.b16 %v8775, %v8766
  %v9604 = vpack.c.b16 %v8776, %v8767
  %v9605 = vpack.c.b16 %v8786, %v8777
  %v9606 = vpack.c.b16 %v8787, %v8778
  %v9607 = vpack.c.b16 %v8788, %v8779
  %v9608 = vpack.c.b16 %v8789, %v8780
  %v9609 = vpack.c.b16 %v8790, %v8781
  %v9610 = vpack.c.b16 %v8791, %v8782
  %v9611 = vpack.c.b16 %v8792, %v8783
  %v9612 = vpack.c.b16 %v8793, %v8784
  %v9613 = vpack.c.b16 %v8794, %v8785
  %v9614 = vpack.c.b16 %v8804, %v8795
  %v9615 = vpack.c.b16 %v8805, %v8796
  %v9616 = vpack.c.b16 %v8806, %v8797
  %v9617 = vpack.c.b16 %v8807, %v8798
  %v9618 = vpack.c.b16 %v8808, %v8799
  %v9619 = vpack.c.b16 %v8809, %v8800
  %v9620 = vpack.c.b16 %v8810, %v8801
  %v9621 = vpack.c.b16 %v8811, %v8802
  %v9622 = vpack.c.b16 %v8812, %v8803
  %v9623 = vpack.c.b16 %v8822, %v8813
  %v9624 = vpack.c.b16 %v8823, %v8814
  %v9625 = vpack.c.b16 %v8824, %v8815
  %v9626 = vpack.c.b16 %v8825, %v8816
  %v9627 = vpack.c.b16 %v8826, %v8817
  %v9628 = vpack.c.b16 %v8827, %v8818
  %v9629 = vpack.c.b16 %v8828, %v8819
  %v9630 = vpack.c.b16 %v8829, %v8820
  %v9631 = vpack.c.b16 %v8830, %v8821
  %v9632 = vpack.c.b16 %v8840, %v8831
  %v9633 = vpack.c.b16 %v8841, %v8832
  %v9634 = vpack.c.b16 %v8842, %v8833
  %v9635 = vpack.c.b16 %v8843, %v8834
  %v9636 = vpack.c.b16 %v8844, %v8835
  %v9637 = vpack.c.b16 %v8845, %v8836
  %v9638 = vpack.c.b16 %v8846, %v8837
  %v9639 = vpack.c.b16 %v8847, %v8838
  %v9640 = vpack.c.b16 %v8848, %v8839
  %v9641 = vpack.c.b16 %v8858, %v8849
  %v9642 = vpack.c.b16 %v8859, %v8850
  %v9643 = vpack.c.b16 %v8860, %v8851
  %v9644 = vpack.c.b16 %v8861, %v8852
  %v9645 = vpack.c.b16 %v8862, %v8853
  %v9646 = vpack.c.b16 %v8863, %v8854
  %v9647 = vpack.c.b16 %v8864, %v8855
  %v9648 = vpack.c.b16 %v8865, %v8856
  %v9649 = vpack.c.b16 %v8866, %v8857
  %v9650 = vpack.c.b16 %v8876, %v8867
  %v9651 = vpack.c.b16 %v8877, %v8868
  %v9652 = vpack.c.b16 %v8878, %v8869
  %v9653 = vpack.c.b16 %v8879, %v8870
  %v9654 = vpack.c.b16 %v8880, %v8871
  %v9655 = vpack.c.b16 %v8881, %v8872
  %v9656 = vpack.c.b16 %v8882, %v8873
  %v9657 = vpack.c.b16 %v8883, %v8874
  %v9658 = vpack.c.b16 %v8884, %v8875
  %v9659 = vpack.c.b16 %v8894, %v8885
  %v9660 = vpack.c.b16 %v8895, %v8886
  %v9661 = vpack.c.b16 %v8896, %v8887
  %v9662 = vpack.c.b16 %v8897, %v8888
  %v9663 = vpack.c.b16 %v8898, %v8889
  %v9664 = vpack.c.b16 %v8899, %v8890
  %v9665 = vpack.c.b16 %v8900, %v8891
  %v9666 = vpack.c.b16 %v8901, %v8892
  %v9667 = vpack.c.b16 %v8902, %v8893
  %v9668 = vpack.c.b16 %v8912, %v8903
  %v9669 = vpack.c.b16 %v8913, %v8904
  %v9670 = vpack.c.b16 %v8914, %v8905
  %v9671 = vpack.c.b16 %v8915, %v8906
  %v9672 = vpack.c.b16 %v8916, %v8907
  %v9673 = vpack.c.b16 %v8917, %v8908
  %v9674 = vpack.c.b16 %v8918, %v8909
  %v9675 = vpack.c.b16 %v8919, %v8910
  %v9676 = vpack.c.b16 %v8920, %v8911
  %v9677 = vpack.c.b16 %v8930, %v8921
  %v9678 = vpack.c.b16 %v8931, %v8922
  %v9679 = vpack.c.b16 %v8932, %v8923
  %v9680 = vpack.c.b16 %v8933, %v8924
  %v9681 = vpack.c.b16 %v8934, %v8925
  %v9682 = vpack.c.b16 %v8935, %v8926
  %v9683 = vpack.c.b16 %v8936, %v8927
  %v9684 = vpack.c.b16 %v8937, %v8928
  %v9685 = vpack.c.b16 %v8938, %v8929
  %v9686 = vpack.c.b16 %v8948, %v8939
  %v9687 = vpack.c.b16 %v8949, %v8940
  %v9688 = vpack.c.b16 %v8950, %v8941
  %v9689 = vpack.c.b16 %v8951, %v8942
  %v9690 = vpack.c.b16 %v8952, %v8943
  %v9691 = vpack.c.b16 %v8953, %v8944
  %v9692 = vpack.c.b16 %v8954, %v8945
  %v9693 = vpack.c.b16 %v8955, %v8946
  %v9694 = vpack.c.b16 %v8956, %v8947
  %v9695 = vpack.c.b16 %v8966, %v8957
  %v9696 = vpack.c.b16 %v8967, %v8958
  %v9697 = vpack.c.b16 %v8968, %v8959
  %v9698 = vpack.c.b16 %v8969, %v8960
  %v9699 = vpack.c.b16 %v8970, %v8961
  %v9700 = vpack.c.b16 %v8971, %v8962
  %v9701 = vpack.c.b16 %v8972, %v8963
  %v9702 = vpack.c.b16 %v8973, %v8964
  %v9703 = vpack.c.b16 %v8974, %v8965
  %v9704 = vpack.c.b16 %v8984, %v8975
  %v9705 = vpack.c.b16 %v8985, %v8976
  %v9706 = vpack.c.b16 %v8986, %v8977
  %v9707 = vpack.c.b16 %v8987, %v8978
  %v9708 = vpack.c.b16 %v8988, %v8979
  %v9709 = vpack.c.b16 %v8989, %v8980
  %v9710 = vpack.c.b16 %v8990, %v8981
  %v9711 = vpack.c.b16 %v8991, %v8982
  %v9712 = vpack.c.b16 %v8992, %v8983
  %v9713 = vpack.c.b16 %v9002, %v8993
  %v9714 = vpack.c.b16 %v9003, %v8994
  %v9715 = vpack.c.b16 %v9004, %v8995
  %v9716 = vpack.c.b16 %v9005, %v8996
  %v9717 = vpack.c.b16 %v9006, %v8997
  %v9718 = vpack.c.b16 %v9007, %v8998
  %v9719 = vpack.c.b16 %v9008, %v8999
  %v9720 = vpack.c.b16 %v9009, %v9000
  %v9721 = vpack.c.b16 %v9010, %v9001
  %v9722 = vpack.c.b16 %v9020, %v9011
  %v9723 = vpack.c.b16 %v9021, %v9012
  %v9724 = vpack.c.b16 %v9022, %v9013
  %v9725 = vpack.c.b16 %v9023, %v9014
  %v9726 = vpack.c.b16 %v9024, %v9015
  %v9727 = vpack.c.b16 %v9025, %v9016
  %v9728 = vpack.c.b16 %v9026, %v9017
  %v9729 = vpack.c.b16 %v9027, %v9018
  %v9730 = vpack.c.b16 %v9028, %v9019
  %v9731 = vpack.c.b16 %v9038, %v9029
  %v9732 = vpack.c.b16 %v9039, %v9030
  %v9733 = vpack.c.b16 %v9040, %v9031
  %v9734 = vpack.c.b16 %v9041, %v9032
  %v9735 = vpack.c.b16 %v9042, %v9033
  %v9736 = vpack.c.b16 %v9043, %v9034
  %v9737 = vpack.c.b16 %v9044, %v9035
  %v9738 = vpack.c.b16 %v9045, %v9036
  %v9739 = vpack.c.b16 %v9046, %v9037
  %v9740 = vpack.c.b16 %v9056, %v9047
  %v9741 = vpack.c.b16 %v9057, %v9048
  %v9742 = vpack.c.b16 %v9058, %v9049
  %v9743 = vpack.c.b16 %v9059, %v9050
  %v9744 = vpack.c.b16 %v9060, %v9051
  %v9745 = vpack.c.b16 %v9061, %v9052
  %v9746 = vpack.c.b16 %v9062, %v9053
  %v9747 = vpack.c.b16 %v9063, %v9054
  %v9748 = vpack.c.b16 %v9064, %v9055
  %v9749 = vpack.c.b16 %v9074, %v9065
  %v9750 = vpack.c.b16 %v9075, %v9066
  %v9751 = vpack.c.b16 %v9076, %v9067
  %v9752 = vpack.c.b16 %v9077, %v9068
  %v9753 = vpack.c.b16 %v9078, %v9069
  %v9754 = vpack.c.b16 %v9079, %v9070
  %v9755 = vpack.c.b16 %v9080, %v9071
  %v9756 = vpack.c.b16 %v9081, %v9072
  %v9757 = vpack.c.b16 %v9082, %v9073
  %v9758 = vpack.c.b16 %v9092, %v9083
  %v9759 = vpack.c.b16 %v9093, %v9084
  %v9760 = vpack.c.b16 %v9094, %v9085
  %v9761 = vpack.c.b16 %v9095, %v9086
  %v9762 = vpack.c.b16 %v9096, %v9087
  %v9763 = vpack.c.b16 %v9097, %v9088
  %v9764 = vpack.c.b16 %v9098, %v9089
  %v9765 = vpack.c.b16 %v9099, %v9090
  %v9766 = vpack.c.b16 %v9100, %v9091
  %v9767 = vpack.c.b16 %v9110, %v9101
  %v9768 = vpack.c.b16 %v9111, %v9102
  %v9769 = vpack.c.b16 %v9112, %v9103
  %v9770 = vpack.c.b16 %v9113, %v9104
  %v9771 = vpack.c.b16 %v9114, %v9105
  %v9772 = vpack.c.b16 %v9115, %v9106
  %v9773 = vpack.c.b16 %v9116, %v9107
  %v9774 = vpack.c.b16 %v9117, %v9108
  %v9775 = vpack.c.b16 %v9118, %v9109
  %v9776 = vpack.c.b16 %v9128, %v9119
  %v9777 = vpack.c.b16 %v9129, %v9120
  %v9778 = vpack.c.b16 %v9130, %v9121
  %v9779 = vpack.c.b16 %v9131, %v9122
  %v9780 = vpack.c.b16 %v9132, %v9123
  %v9781 = vpack.c.b16 %v9133, %v9124
  %v9782 = vpack.c.b16 %v9134, %v9125
  %v9783 = vpack.c.b16 %v9135, %v9126
  %v9784 = vpack.c.b16 %v9136, %v9127
  %v9785 = vpack.c.b16 %v9146, %v9137
  %v9786 = vpack.c.b16 %v9147, %v9138
  %v9787 = vpack.c.b16 %v9148, %v9139
  %v9788 = vpack.c.b16 %v9149, %v9140
  %v9789 = vpack.c.b16 %v9150, %v9141
  %v9790 = vpack.c.b16 %v9151, %v9142
  %v9791 = vpack.c.b16 %v9152, %v9143
  %v9792 = vpack.c.b16 %v9153, %v9144
  %v9793 = vpack.c.b16 %v9154, %v9145
  %v9794 = vpack.c.b16 %v9164, %v9155
  %v9795 = vpack.c.b16 %v9165, %v9156
  %v9796 = vpack.c.b16 %v9166, %v9157
  %v9797 = vpack.c.b16 %v9167, %v9158
  %v9798 = vpack.c.b16 %v9168, %v9159
  %v9799 = vpack.c.b16 %v9169, %v9160
  %v9800 = vpack.c.b16 %v9170, %v9161
  %v9801 = vpack.c.b16 %v9171, %v9162
  %v9802 = vpack.c.b16 %v9172, %v9163
  %v9803 = vpack.c.b16 %v9182, %v9173
  %v9804 = vpack.c.b16 %v9183, %v9174
  %v9805 = vpack.c.b16 %v9184, %v9175
  %v9806 = vpack.c.b16 %v9185, %v9176
  %v9807 = vpack.c.b16 %v9186, %v9177
  %v9808 = vpack.c.b16 %v9187, %v9178
  %v9809 = vpack.c.b16 %v9188, %v9179
  %v9810 = vpack.c.b16 %v9189, %v9180
  %v9811 = vpack.c.b16 %v9190, %v9181
  %v9812 = vpack.c.b16 %v9200, %v9191
  %v9813 = vpack.c.b16 %v9201, %v9192
  %v9814 = vpack.c.b16 %v9202, %v9193
  %v9815 = vpack.c.b16 %v9203, %v9194
  %v9816 = vpack.c.b16 %v9204, %v9195
  %v9817 = vpack.c.b16 %v9205, %v9196
  %v9818 = vpack.c.b16 %v9206, %v9197
  %v9819 = vpack.c.b16 %v9207, %v9198
  %v9820 = vpack.c.b16 %v9208, %v9199
  %v9821 = vpack.c.b16 %v9218, %v9209
  %v9822 = vpack.c.b16 %v9219, %v9210
  %v9823 = vpack.c.b16 %v9220, %v9211
  %v9824 = vpack.c.b16 %v9221, %v9212
  %v9825 = vpack.c.b16 %v9222, %v9213
  %v9826 = vpack.c.b16 %v9223, %v9214
  %v9827 = vpack.c.b16 %v9224, %v9215
  %v9828 = vpack.c.b16 %v9225, %v9216
  %v9829 = vpack.c.b16 %v9226, %v9217
  %v9830 = vpack.c.b16 %v9236, %v9227
  %v9831 = vpack.c.b16 %v9237, %v9228
  %v9832 = vpack.c.b16 %v9238, %v9229
  %v9833 = vpack.c.b16 %v9239, %v9230
  %v9834 = vpack.c.b16 %v9240, %v9231
  %v9835 = vpack.c.b16 %v9241, %v9232
  %v9836 = vpack.c.b16 %v9242, %v9233
  %v9837 = vpack.c.b16 %v9243, %v9234
  %v9838 = vpack.c.b16 %v9244, %v9235
  %v9839 = vpack.c.b16 %v9254, %v9245
  %v9840 = vpack.c.b16 %v9255, %v9246
  %v9841 = vpack.c.b16 %v9256, %v9247
  %v9842 = vpack.c.b16 %v9257, %v9248
  %v9843 = vpack.c.b16 %v9258, %v9249
  %v9844 = vpack.c.b16 %v9259, %v9250
  %v9845 = vpack.c.b16 %v9260, %v9251
  %v9846 = vpack.c.b16 %v9261, %v9252
  %v9847 = vpack.c.b16 %v9262, %v9253
  %v9848 = vpack.c.b16 %v9272, %v9263
  %v9849 = vpack.c.b16 %v9273, %v9264
  %v9850 = vpack.c.b16 %v9274, %v9265
  %v9851 = vpack.c.b16 %v9275, %v9266
  %v9852 = vpack.c.b16 %v9276, %v9267
  %v9853 = vpack.c.b16 %v9277, %v9268
  %v9854 = vpack.c.b16 %v9278, %v9269
  %v9855 = vpack.c.b16 %v9279, %v9270
  %v9856 = vpack.c.b16 %v9280, %v9271
  %v9857 = vpack.c.b16 %v9290, %v9281
  %v9858 = vpack.c.b16 %v9291, %v9282
  %v9859 = vpack.c.b16 %v9292, %v9283
  %v9860 = vpack.c.b16 %v9293, %v9284
  %v9861 = vpack.c.b16 %v9294, %v9285
  %v9862 = vpack.c.b16 %v9295, %v9286
  %v9863 = vpack.c.b16 %v9296, %v9287
  %v9864 = vpack.c.b16 %v9297, %v9288
  %v9865 = vpack.c.b16 %v9298, %v9289
  %v9866 = vpack.c.b16 %v9308, %v9299
  %v9867 = vpack.c.b16 %v9309, %v9300
  %v9868 = vpack.c.b16 %v9310, %v9301
  %v9869 = vpack.c.b16 %v9311, %v9302
  %v9870 = vpack.c.b16 %v9312, %v9303
  %v9871 = vpack.c.b16 %v9313, %v9304
  %v9872 = vpack.c.b16 %v9314, %v9305
  %v9873 = vpack.c.b16 %v9315, %v9306
  %v9874 = vpack.c.b16 %v9316, %v9307
  %v9875 = vpack.c.b16 %v9326, %v9317
  %v9876 = vpack.c.b16 %v9327, %v9318
  %v9877 = vpack.c.b16 %v9328, %v9319
  %v9878 = vpack.c.b16 %v9329, %v9320
  %v9879 = vpack.c.b16 %v9330, %v9321
  %v9880 = vpack.c.b16 %v9331, %v9322
  %v9881 = vpack.c.b16 %v9332, %v9323
  %v9882 = vpack.c.b16 %v9333, %v9324
  %v9883 = vpack.c.b16 %v9334, %v9325
  %v9884 = vpack.c.b16 %v9344, %v9335
  %v9885 = vpack.c.b16 %v9345, %v9336
  %v9886 = vpack.c.b16 %v9346, %v9337
  %v9887 = vpack.c.b16 %v9347, %v9338
  %v9888 = vpack.c.b16 %v9348, %v9339
  %v9889 = vpack.c.b16 %v9349, %v9340
  %v9890 = vpack.c.b16 %v9350, %v9341
  %v9891 = vpack.c.b16 %v9351, %v9342
  %v9892 = vpack.c.b16 %v9352, %v9343
  %v9893 = vpack.c.b16 %v9362, %v9353
  %v9894 = vpack.c.b16 %v9363, %v9354
  %v9895 = vpack.c.b16 %v9364, %v9355
  %v9896 = vpack.c.b16 %v9365, %v9356
  %v9897 = vpack.c.b16 %v9366, %v9357
  %v9898 = vpack.c.b16 %v9367, %v9358
  %v9899 = vpack.c.b16 %v9368, %v9359
  %v9900 = vpack.c.b16 %v9369, %v9360
  %v9901 = vpack.c.b16 %v9370, %v9361
  %v9902 = vpack.c.b16 %v9380, %v9371
  %v9903 = vpack.c.b16 %v9381, %v9372
  %v9904 = vpack.c.b16 %v9382, %v9373
  %v9905 = vpack.c.b16 %v9383, %v9374
  %v9906 = vpack.c.b16 %v9384, %v9375
  %v9907 = vpack.c.b16 %v9385, %v9376
  %v9908 = vpack.c.b16 %v9386, %v9377
  %v9909 = vpack.c.b16 %v9387, %v9378
  %v9910 = vpack.c.b16 %v9388, %v9379
  %v9911 = vpack.c.b16 %v9398, %v9389
  %v9912 = vpack.c.b16 %v9399, %v9390
  %v9913 = vpack.c.b16 %v9400, %v9391
  %v9914 = vpack.c.b16 %v9401, %v9392
  %v9915 = vpack.c.b16 %v9402, %v9393
  %v9916 = vpack.c.b16 %v9403, %v9394
  %v9917 = vpack.c.b16 %v9404, %v9395
  %v9918 = vpack.c.b16 %v9405, %v9396
  %v9919 = vpack.c.b16 %v9406, %v9397
  %v9920 = vpack.c.b16 %v9416, %v9407
  %v9921 = vpack.c.b16 %v9417, %v9408
  %v9922 = vpack.c.b16 %v9418, %v9409
  %v9923 = vpack.c.b16 %v9419, %v9410
  %v9924 = vpack.c.b16 %v9420, %v9411
  %v9925 = vpack.c.b16 %v9421, %v9412
  %v9926 = vpack.c.b16 %v9422, %v9413
  %v9927 = vpack.c.b16 %v9423, %v9414
  %v9928 = vpack.c.b16 %v9424, %v9415
  %v9929 = vpack.c.b16 %v9434, %v9425
  %v9930 = vpack.c.b16 %v9435, %v9426
  %v9931 = vpack.c.b16 %v9436, %v9427
  %v9932 = vpack.c.b16 %v9437, %v9428
  %v9933 = vpack.c.b16 %v9438, %v9429
  %v9934 = vpack.c.b16 %v9439, %v9430
  %v9935 = vpack.c.b16 %v9440, %v9431
  %v9936 = vpack.c.b16 %v9441, %v9432
  %v9937 = vpack.c.b16 %v9442, %v9433
  %v9938 = vpack.c.b16 %v9452, %v9443
  %v9939 = vpack.c.b16 %v9453, %v9444
  %v9940 = vpack.c.b16 %v9454, %v9445
  %v9941 = vpack.c.b16 %v9455, %v9446
  %v9942 = vpack.c.b16 %v9456, %v9447
  %v9943 = vpack.c.b16 %v9457, %v9448
  %v9944 = vpack.c.b16 %v9458, %v9449
  %v9945 = vpack.c.b16 %v9459, %v9450
  %v9946 = vpack.c.b16 %v9460, %v9451
  %v9947 = vpack.c.b16 %v9470, %v9461
  %v9948 = vpack.c.b16 %v9471, %v9462
  %v9949 = vpack.c.b16 %v9472, %v9463
  %v9950 = vpack.c.b16 %v9473, %v9464
  %v9951 = vpack.c.b16 %v9474, %v9465
  %v9952 = vpack.c.b16 %v9475, %v9466
  %v9953 = vpack.c.b16 %v9476, %v9467
  %v9954 = vpack.c.b16 %v9477, %v9468
  %v9955 = vpack.c.b16 %v9478, %v9469
  %v9956 = vpack.c.b16 %v9488, %v9479
  %v9957 = vpack.c.b16 %v9489, %v9480
  %v9958 = vpack.c.b16 %v9490, %v9481
  %v9959 = vpack.c.b16 %v9491, %v9482
  %v9960 = vpack.c.b16 %v9492, %v9483
  %v9961 = vpack.c.b16 %v9493, %v9484
  %v9962 = vpack.c.b16 %v9494, %v9485
  %v9963 = vpack.c.b16 %v9495, %v9486
  %v9964 = vpack.c.b16 %v9496, %v9487
  %v9965 = vpack.c.b16 %v9506, %v9497
  %v9966 = vpack.c.b16 %v9507, %v9498
  %v9967 = vpack.c.b16 %v9508, %v9499
  %v9968 = vpack.c.b16 %v9509, %v9500
  %v9969 = vpack.c.b16 %v9510, %v9501
  %v9970 = vpack.c.b16 %v9511, %v9502
  %v9971 = vpack.c.b16 %v9512, %v9503
  %v9972 = vpack.c.b16 %v9513, %v9504
  %v9973 = vpack.c.b16 %v9514, %v9505
  %v9974 = vpack.c.b16 %v9524, %v9515
  %v9975 = vpack.c.b16 %v9525, %v9516
  %v9976 = vpack.c.b16 %v9526, %v9517
  %v9977 = vpack.c.b16 %v9527, %v9518
  %v9978 = vpack.c.b16 %v9528, %v9519
  %v9979 = vpack.c.b16 %v9529, %v9520
  %v9980 = vpack.c.b16 %v9530, %v9521
  %v9981 = vpack.c.b16 %v9531, %v9522
  %v9982 = vpack.c.b16 %v9532, %v9523
  %v9983 = vpack.c.b16 %v9542, %v9533
  %v9984 = vpack.c.b16 %v9543, %v9534
  %v9985 = vpack.c.b16 %v9544, %v9535
  %v9986 = vpack.c.b16 %v9545, %v9536
  %v9987 = vpack.c.b16 %v9546, %v9537
  %v9988 = vpack.c.b16 %v9547, %v9538
  %v9989 = vpack.c.b16 %v9548, %v9539
  %v9990 = vpack.c.b16 %v9549, %v9540
  %v9991 = vpack.c.b16 %v9550, %v9541
  %v9992 = vpack.c.b16 %v9560, %v9551
  %v9993 = vpack.c.b16 %v9561, %v9552
  %v9994 = vpack.c.b16 %v9562, %v9553
  %v9995 = vpack.c.b16 %v9563, %v9554
  %v9996 = vpack.c.b16 %v9564, %v9555
  %v9997 = vpack.c.b16 %v9565, %v9556
  %v9998 = vpack.c.b16 %v9566, %v9557
  %v9999 = vpack.c.b16 %v9567, %v9558
  %v10000 = vpack.c.b16 %v9568, %v9559
  %v10577 = vunpack.c.l.b16 %v8077
  %v10578 = vunpack.c.l.b16 %v8078
  %v10579 = vunpack.c.l.b16 %v8079
  %v10580 = vunpack.c.l.b16 %v8080
  %v10581 = vunpack.c.l.b16 %v8081
  %v10582 = vunpack.c.l.b16 %v8082
  %v10583 = vunpack.c.l.b16 %v8083
  %v10584 = vunpack.c.l.b16 %v8084
  %v10585 = vunpack.c.l.b16 %v8085
  %v10586 = vunpack.c.l.b16 %v8086
  %v10587 = vunpack.c.l.b16 %v8087
  %v10588 = vunpack.c.l.b16 %v8088
  %v10589 = vunpack.c.l.b16 %v8089
  %v10590 = vunpack.c.l.b16 %v8090
  %v10591 = vunpack.c.l.b16 %v8091
  %v10592 = vunpack.c.l.b16 %v8092
  %v10593 = vunpack.c.l.b16 %v8093
  %v10594 = vunpack.c.l.b16 %v8094
  %v10595 = vunpack.c.l.b16 %v8095
  %v10596 = vunpack.c.l.b16 %v8096
  %v10597 = vunpack.c.l.b16 %v8097
  %v10598 = vunpack.c.l.b16 %v8098
  %v10599 = vunpack.c.l.b16 %v8099
  %v10600 = vunpack.c.l.b16 %v8100
  %v10601 = vunpack.c.l.b16 %v8101
  %v10602 = vunpack.c.l.b16 %v8102
  %v10603 = vunpack.c.l.b16 %v8103
  %v10604 = vunpack.c.l.b16 %v8104
  %v10605 = vunpack.c.l.b16 %v8105
  %v10606 = vunpack.c.l.b16 %v8106
  %v10607 = vunpack.c.l.b16 %v8107
  %v10608 = vunpack.c.l.b16 %v8108
  %v10609 = vunpack.c.l.b16 %v8109
  %v10610 = vunpack.c.l.b16 %v8110
  %v10611 = vunpack.c.l.b16 %v8111
  %v10612 = vunpack.c.l.b16 %v8112
  %v10613 = vunpack.c.l.b16 %v8113
  %v10614 = vunpack.c.l.b16 %v8114
  %v10615 = vunpack.c.l.b16 %v8115
  %v10616 = vunpack.c.l.b16 %v8116
  %v10617 = vunpack.c.l.b16 %v8117
  %v10618 = vunpack.c.l.b16 %v8118
  %v10619 = vunpack.c.l.b16 %v8119
  %v10620 = vunpack.c.l.b16 %v8120
  %v10621 = vunpack.c.l.b16 %v8121
  %v10622 = vunpack.c.l.b16 %v8122
  %v10623 = vunpack.c.l.b16 %v8123
  %v10624 = vunpack.c.l.b16 %v8124
  %v10625 = vunpack.c.l.b16 %v8125
  %v10626 = vunpack.c.l.b16 %v8126
  %v10627 = vunpack.c.l.b16 %v8127
  %v10628 = vunpack.c.l.b16 %v8128
  %v10629 = vunpack.c.l.b16 %v8129
  %v10630 = vunpack.c.l.b16 %v8130
  %v10631 = vunpack.c.l.b16 %v8131
  %v10632 = vunpack.c.l.b16 %v8132
  %v10633 = vunpack.c.l.b16 %v8133
  %v10634 = vunpack.c.l.b16 %v8134
  %v10635 = vunpack.c.l.b16 %v8135
  %v10636 = vunpack.c.l.b16 %v8136
  %v10637 = vunpack.c.l.b16 %v8137
  %v10638 = vunpack.c.l.b16 %v8138
  %v10639 = vunpack.c.l.b16 %v8139
  %v10640 = vunpack.c.l.b16 %v8140
  %v10641 = vunpack.c.l.b16 %v8141
  %v10642 = vunpack.c.l.b16 %v8142
  %v10643 = vunpack.c.l.b16 %v8143
  %v10644 = vunpack.c.l.b16 %v8144
  %v10645 = vunpack.c.l.b16 %v8145
  %v10646 = vunpack.c.l.b16 %v8146
  %v10647 = vunpack.c.l.b16 %v8147
  %v10648 = vunpack.c.l.b16 %v8148
  %v10649 = vunpack.c.l.b16 %v8149
  %v10650 = vunpack.c.l.b16 %v8150
  %v10651 = vunpack.c.l.b16 %v8151
  %v10652 = vunpack.c.l.b16 %v8152
  %v10653 = vunpack.c.l.b16 %v8153
  %v10654 = vunpack.c.l.b16 %v8154
  %v10655 = vunpack.c.l.b16 %v8155
  %v10656 = vunpack.c.l.b16 %v8156
  %v10657 = vunpack.c.l.b16 %v8157
  %v10658 = vunpack.c.l.b16 %v8158
  %v10659 = vunpack.c.l.b16 %v8159
  %v10660 = vunpack.c.l.b16 %v8160
  %v10661 = vunpack.c.l.b16 %v8161
  %v10662 = vunpack.c.l.b16 %v8162
  %v10663 = vunpack.c.l.b16 %v8163
  %v10664 = vunpack.c.l.b16 %v8164
  %v10665 = vunpack.c.l.b16 %v8165
  %v10666 = vunpack.c.l.b16 %v8166
  %v10667 = vunpack.c.l.b16 %v8167
  %v10668 = vunpack.c.l.b16 %v8168
  %v10669 = vunpack.c.l.b16 %v8169
  %v10670 = vunpack.c.l.b16 %v8170
  %v10671 = vunpack.c.l.b16 %v8171
  %v10672 = vunpack.c.l.b16 %v8172
  %v10673 = vunpack.c.l.b16 %v8173
  %v10674 = vunpack.c.l.b16 %v8174
  %v10675 = vunpack.c.l.b16 %v8175
  %v10676 = vunpack.c.l.b16 %v8176
  %v10677 = vunpack.c.l.b16 %v8177
  %v10678 = vunpack.c.l.b16 %v8178
  %v10679 = vunpack.c.l.b16 %v8179
  %v10680 = vunpack.c.l.b16 %v8180
  %v10681 = vunpack.c.l.b16 %v8181
  %v10682 = vunpack.c.l.b16 %v8182
  %v10683 = vunpack.c.l.b16 %v8183
  %v10684 = vunpack.c.l.b16 %v8184
  %v10685 = vunpack.c.l.b16 %v8185
  %v10686 = vunpack.c.l.b16 %v8186
  %v10687 = vunpack.c.l.b16 %v8187
  %v10688 = vunpack.c.l.b16 %v8188
  %v10689 = vunpack.c.l.b16 %v8189
  %v10690 = vunpack.c.l.b16 %v8190
  %v10691 = vunpack.c.l.b16 %v8191
  %v10692 = vunpack.c.l.b16 %v8192
  %v10693 = vunpack.c.l.b16 %v8193
  %v10694 = vunpack.c.l.b16 %v8194
  %v10695 = vunpack.c.l.b16 %v8195
  %v10696 = vunpack.c.l.b16 %v8196
  %v10697 = vunpack.c.l.b16 %v8197
  %v10698 = vunpack.c.l.b16 %v8198
  %v10699 = vunpack.c.l.b16 %v8199
  %v10700 = vunpack.c.l.b16 %v8200
  %v10701 = vunpack.c.l.b16 %v8201
  %v10702 = vunpack.c.l.b16 %v8202
  %v10703 = vunpack.c.l.b16 %v8203
  %v10704 = vunpack.c.l.b16 %v8204
  %v10705 = vunpack.c.l.b16 %v8205
  %v10706 = vunpack.c.l.b16 %v8206
  %v10707 = vunpack.c.l.b16 %v8207
  %v10708 = vunpack.c.l.b16 %v8208
  %v10709 = vunpack.c.l.b16 %v8209
  %v10710 = vunpack.c.l.b16 %v8210
  %v10711 = vunpack.c.l.b16 %v8211
  %v10712 = vunpack.c.l.b16 %v8212
  %v10713 = vunpack.c.l.b16 %v8213
  %v10714 = vunpack.c.l.b16 %v8214
  %v10715 = vunpack.c.l.b16 %v8215
  %v10716 = vunpack.c.l.b16 %v8216
  %v10717 = vunpack.c.l.b16 %v8217
  %v10718 = vunpack.c.l.b16 %v8218
  %v10719 = vunpack.c.l.b16 %v8219
  %v10720 = vunpack.c.l.b16 %v8220
  %v10721 = vpack.c.b16 %v10578, %v10577
  %v10722 = vpack.c.b16 %v10580, %v10579
  %v10723 = vpack.c.b16 %v10582, %v10581
  %v10724 = vpack.c.b16 %v10584, %v10583
  %v10725 = vpack.c.b16 %v10586, %v10585
  %v10726 = vpack.c.b16 %v10588, %v10587
  %v10727 = vpack.c.b16 %v10590, %v10589
  %v10728 = vpack.c.b16 %v10592, %v10591
  %v10729 = vpack.c.b16 %v10594, %v10593
  %v10730 = vpack.c.b16 %v10596, %v10595
  %v10731 = vpack.c.b16 %v10598, %v10597
  %v10732 = vpack.c.b16 %v10600, %v10599
  %v10733 = vpack.c.b16 %v10602, %v10601
  %v10734 = vpack.c.b16 %v10604, %v10603
  %v10735 = vpack.c.b16 %v10606, %v10605
  %v10736 = vpack.c.b16 %v10608, %v10607
  %v10737 = vpack.c.b16 %v10610, %v10609
  %v10738 = vpack.c.b16 %v10612, %v10611
  %v10739 = vpack.c.b16 %v10614, %v10613
  %v10740 = vpack.c.b16 %v10616, %v10615
  %v10741 = vpack.c.b16 %v10618, %v10617
  %v10742 = vpack.c.b16 %v10620, %v10619
  %v10743 = vpack.c.b16 %v10622, %v10621
  %v10744 = vpack.c.b16 %v10624, %v10623
  %v10745 = vpack.c.b16 %v10626, %v10625
  %v10746 = vpack.c.b16 %v10628, %v10627
  %v10747 = vpack.c.b16 %v10630, %v10629
  %v10748 = vpack.c.b16 %v10632, %v10631
  %v10749 = vpack.c.b16 %v10634, %v10633
  %v10750 = vpack.c.b16 %v10636, %v10635
  %v10751 = vpack.c.b16 %v10638, %v10637
  %v10752 = vpack.c.b16 %v10640, %v10639
  %v10753 = vpack.c.b16 %v10642, %v10641
  %v10754 = vpack.c.b16 %v10644, %v10643
  %v10755 = vpack.c.b16 %v10646, %v10645
  %v10756 = vpack.c.b16 %v10648, %v10647
  %v10757 = vpack.c.b16 %v10650, %v10649
  %v10758 = vpack.c.b16 %v10652, %v10651
  %v10759 = vpack.c.b16 %v10654, %v10653
  %v10760 = vpack.c.b16 %v10656, %v10655
  %v10761 = vpack.c.b16 %v10658, %v10657
  %v10762 = vpack.c.b16 %v10660, %v10659
  %v10763 = vpack.c.b16 %v10662, %v10661
  %v10764 = vpack.c.b16 %v10664, %v10663
  %v10765 = vpack.c.b16 %v10666, %v10665
  %v10766 = vpack.c.b16 %v10668, %v10667
  %v10767 = vpack.c.b16 %v10670, %v10669
  %v10768 = vpack.c.b16 %v10672, %v10671
  %v10769 = vpack.c.b16 %v10674, %v10673
  %v10770 = vpack.c.b16 %v10676, %v10675
  %v10771 = vpack.c.b16 %v10678, %v10677
  %v10772 = vpack.c.b16 %v10680, %v10679
  %v10773 = vpack.c.b16 %v10682, %v10681
  %v10774 = vpack.c.b16 %v10684, %v10683
  %v10775 = vpack.c.b16 %v10686, %v10685
  %v10776 = vpack.c.b16 %v10688, %v10687
  %v10777 = vpack.c.b16 %v10690, %v10689
  %v10778 = vpack.c.b16 %v10692, %v10691
  %v10779 = vpack.c.b16 %v10694, %v10693
  %v10780 = vpack.c.b16 %v10696, %v10695
  %v10781 = vpack.c.b16 %v10698, %v10697
  %v10782 = vpack.c.b16 %v10700, %v10699
  %v10783 = vpack.c.b16 %v10702, %v10701
  %v10784 = vpack.c.b16 %v10704, %v10703
  %v10785 = vpack.c.b16 %v10706, %v10705
  %v10786 = vpack.c.b16 %v10708, %v10707
  %v10787 = vpack.c.b16 %v10710, %v10709
  %v10788 = vpack.c.b16 %v10712, %v10711
  %v10789 = vpack.c.b16 %v10714, %v10713
  %v10790 = vpack.c.b16 %v10716, %v10715
  %v10791 = vpack.c.b16 %v10718, %v10717
  %v10792 = vpack.c.b16 %v10720, %v10719
  %10865 = vmatpush.bf16.msra.mxu0 %v10728
  %10866 = vmatpush.bf16.msra.mxu0 %v10727
  %10867 = vmatpush.bf16.msra.mxu0 %v10726
  %10868 = vmatpush.bf16.msra.mxu0 %v10725
  %10869 = vmatpush.bf16.msra.mxu0 %v10724
  %10870 = vmatpush.bf16.msra.mxu0 %v10723
  %10871 = vmatpush.bf16.msra.mxu0 %v10722
  %10872 = vmatpush.bf16.msra.mxu0 %v10721
  %10873 = vmatmul.bf16.gmra.mxu0 %v9569
  %v10874 = vpop.f32.mrf.mxu0
  %v10875 = vadd.f32 %v8223, %v10874
  %v10876 = vpop.f32.mrf.mxu0
  %v10877 = vadd.f32 %v8223, %v10876
  %10878 = vmatmul.bf16.gmra.mxu0 %v9578
  %v10879 = vpop.f32.mrf.mxu0
  %v10880 = vadd.f32 %v8223, %v10879
  %v10881 = vpop.f32.mrf.mxu0
  %v10882 = vadd.f32 %v8223, %v10881
  %10883 = vmatmul.bf16.gmra.mxu0 %v9587
  %v10884 = vpop.f32.mrf.mxu0
  %v10885 = vadd.f32 %v8223, %v10884
  %v10886 = vpop.f32.mrf.mxu0
  %v10887 = vadd.f32 %v8223, %v10886
  %10888 = vmatmul.bf16.gmra.mxu0 %v9596
  %v10889 = vpop.f32.mrf.mxu0
  %v10890 = vadd.f32 %v8223, %v10889
  %v10891 = vpop.f32.mrf.mxu0
  %v10892 = vadd.f32 %v8223, %v10891
  %10893 = vmatmul.bf16.gmra.mxu0 %v9605
  %v10894 = vpop.f32.mrf.mxu0
  %v10895 = vadd.f32 %v8223, %v10894
  %v10896 = vpop.f32.mrf.mxu0
  %v10897 = vadd.f32 %v8223, %v10896
  %10898 = vmatmul.bf16.gmra.mxu0 %v9614
  %v10899 = vpop.f32.mrf.mxu0
  %v10900 = vadd.f32 %v8223, %v10899
  %v10901 = vpop.f32.mrf.mxu0
  %v10902 = vadd.f32 %v8223, %v10901
  %10903 = vmatmul.bf16.gmra.mxu0 %v9623
  %v10904 = vpop.f32.mrf.mxu0
  %v10905 = vadd.f32 %v8223, %v10904
  %v10906 = vpop.f32.mrf.mxu0
  %v10907 = vadd.f32 %v8223, %v10906
  %10908 = vmatmul.bf16.gmra.mxu0 %v9632
  %v10909 = vpop.f32.mrf.mxu0
  %v10910 = vadd.f32 %v8223, %v10909
  %v10911 = vpop.f32.mrf.mxu0
  %v10912 = vadd.f32 %v8223, %v10911
  %10913 = vmatmul.bf16.gmra.mxu0 %v9641
  %v10914 = vpop.f32.mrf.mxu0
  %v10915 = vadd.f32 %v8223, %v10914
  %v10916 = vpop.f32.mrf.mxu0
  %v10917 = vadd.f32 %v8223, %v10916
  %10918 = vmatmul.bf16.gmra.mxu0 %v9650
  %v10919 = vpop.f32.mrf.mxu0
  %v10920 = vadd.f32 %v8223, %v10919
  %v10921 = vpop.f32.mrf.mxu0
  %v10922 = vadd.f32 %v8223, %v10921
  %10923 = vmatmul.bf16.gmra.mxu0 %v9659
  %v10924 = vpop.f32.mrf.mxu0
  %v10925 = vadd.f32 %v8223, %v10924
  %v10926 = vpop.f32.mrf.mxu0
  %v10927 = vadd.f32 %v8223, %v10926
  %10928 = vmatmul.bf16.gmra.mxu0 %v9668
  %v10929 = vpop.f32.mrf.mxu0
  %v10930 = vadd.f32 %v8223, %v10929
  %v10931 = vpop.f32.mrf.mxu0
  %v10932 = vadd.f32 %v8223, %v10931
  %10933 = vmatmul.bf16.gmra.mxu0 %v9677
  %v10934 = vpop.f32.mrf.mxu0
  %v10935 = vadd.f32 %v8223, %v10934
  %v10936 = vpop.f32.mrf.mxu0
  %v10937 = vadd.f32 %v8223, %v10936
  %10938 = vmatmul.bf16.gmra.mxu0 %v9686
  %v10939 = vpop.f32.mrf.mxu0
  %v10940 = vadd.f32 %v8223, %v10939
  %v10941 = vpop.f32.mrf.mxu0
  %v10942 = vadd.f32 %v8223, %v10941
  %10943 = vmatmul.bf16.gmra.mxu0 %v9695
  %v10944 = vpop.f32.mrf.mxu0
  %v10945 = vadd.f32 %v8223, %v10944
  %v10946 = vpop.f32.mrf.mxu0
  %v10947 = vadd.f32 %v8223, %v10946
  %10948 = vmatmul.bf16.gmra.mxu0 %v9704
  %v10949 = vpop.f32.mrf.mxu0
  %v10950 = vadd.f32 %v8223, %v10949
  %v10951 = vpop.f32.mrf.mxu0
  %v10952 = vadd.f32 %v8223, %v10951
  %10953 = vmatmul.bf16.gmra.mxu0 %v9713
  %v10954 = vpop.f32.mrf.mxu0
  %v10955 = vadd.f32 %v8223, %v10954
  %v10956 = vpop.f32.mrf.mxu0
  %v10957 = vadd.f32 %v8223, %v10956
  %10958 = vmatmul.bf16.gmra.mxu0 %v9722
  %v10959 = vpop.f32.mrf.mxu0
  %v10960 = vadd.f32 %v8223, %v10959
  %v10961 = vpop.f32.mrf.mxu0
  %v10962 = vadd.f32 %v8223, %v10961
  %10963 = vmatmul.bf16.gmra.mxu0 %v9731
  %v10964 = vpop.f32.mrf.mxu0
  %v10965 = vadd.f32 %v8223, %v10964
  %v10966 = vpop.f32.mrf.mxu0
  %v10967 = vadd.f32 %v8223, %v10966
  %10968 = vmatmul.bf16.gmra.mxu0 %v9740
  %v10969 = vpop.f32.mrf.mxu0
  %v10970 = vadd.f32 %v8223, %v10969
  %v10971 = vpop.f32.mrf.mxu0
  %v10972 = vadd.f32 %v8223, %v10971
  %10973 = vmatmul.bf16.gmra.mxu0 %v9749
  %v10974 = vpop.f32.mrf.mxu0
  %v10975 = vadd.f32 %v8223, %v10974
  %v10976 = vpop.f32.mrf.mxu0
  %v10977 = vadd.f32 %v8223, %v10976
  %10978 = vmatmul.bf16.gmra.mxu0 %v9758
  %v10979 = vpop.f32.mrf.mxu0
  %v10980 = vadd.f32 %v8223, %v10979
  %v10981 = vpop.f32.mrf.mxu0
  %v10982 = vadd.f32 %v8223, %v10981
  %10983 = vmatmul.bf16.gmra.mxu0 %v9767
  %v10984 = vpop.f32.mrf.mxu0
  %v10985 = vadd.f32 %v8223, %v10984
  %v10986 = vpop.f32.mrf.mxu0
  %v10987 = vadd.f32 %v8223, %v10986
  %10988 = vmatmul.bf16.gmra.mxu0 %v9776
  %v10989 = vpop.f32.mrf.mxu0
  %v10990 = vadd.f32 %v8223, %v10989
  %v10991 = vpop.f32.mrf.mxu0
  %v10992 = vadd.f32 %v8223, %v10991
  %10993 = vmatmul.bf16.gmra.mxu0 %v9785
  %v10994 = vpop.f32.mrf.mxu0
  %v10995 = vadd.f32 %v8223, %v10994
  %v10996 = vpop.f32.mrf.mxu0
  %v10997 = vadd.f32 %v8223, %v10996
  %10998 = vmatmul.bf16.gmra.mxu0 %v9794
  %v10999 = vpop.f32.mrf.mxu0
  %v11000 = vadd.f32 %v8223, %v10999
  %v11001 = vpop.f32.mrf.mxu0
  %v11002 = vadd.f32 %v8223, %v11001
  %11003 = vmatmul.bf16.gmra.mxu0 %v9803
  %v11004 = vpop.f32.mrf.mxu0
  %v11005 = vadd.f32 %v8223, %v11004
  %v11006 = vpop.f32.mrf.mxu0
  %v11007 = vadd.f32 %v8223, %v11006
  %11008 = vmatmul.bf16.gmra.mxu0 %v9812
  %v11009 = vpop.f32.mrf.mxu0
  %v11010 = vadd.f32 %v8223, %v11009
  %v11011 = vpop.f32.mrf.mxu0
  %v11012 = vadd.f32 %v8223, %v11011
  %11013 = vmatmul.bf16.gmra.mxu0 %v9821
  %v11014 = vpop.f32.mrf.mxu0
  %v11015 = vadd.f32 %v8223, %v11014
  %v11016 = vpop.f32.mrf.mxu0
  %v11017 = vadd.f32 %v8223, %v11016
  %11018 = vmatmul.bf16.gmra.mxu0 %v9830
  %v11019 = vpop.f32.mrf.mxu0
  %v11020 = vadd.f32 %v8223, %v11019
  %v11021 = vpop.f32.mrf.mxu0
  %v11022 = vadd.f32 %v8223, %v11021
  %11023 = vmatmul.bf16.gmra.mxu0 %v9839
  %v11024 = vpop.f32.mrf.mxu0
  %v11025 = vadd.f32 %v8223, %v11024
  %v11026 = vpop.f32.mrf.mxu0
  %v11027 = vadd.f32 %v8223, %v11026
  %11028 = vmatmul.bf16.gmra.mxu0 %v9848
  %v11029 = vpop.f32.mrf.mxu0
  %v11030 = vadd.f32 %v8223, %v11029
  %v11031 = vpop.f32.mrf.mxu0
  %v11032 = vadd.f32 %v8223, %v11031
  %11033 = vmatmul.bf16.gmra.mxu0 %v9857
  %v11034 = vpop.f32.mrf.mxu0
  %v11035 = vadd.f32 %v8223, %v11034
  %v11036 = vpop.f32.mrf.mxu0
  %v11037 = vadd.f32 %v8223, %v11036
  %11038 = vmatmul.bf16.gmra.mxu0 %v9866
  %v11039 = vpop.f32.mrf.mxu0
  %v11040 = vadd.f32 %v8223, %v11039
  %v11041 = vpop.f32.mrf.mxu0
  %v11042 = vadd.f32 %v8223, %v11041
  %11043 = vmatmul.bf16.gmra.mxu0 %v9875
  %v11044 = vpop.f32.mrf.mxu0
  %v11045 = vadd.f32 %v8223, %v11044
  %v11046 = vpop.f32.mrf.mxu0
  %v11047 = vadd.f32 %v8223, %v11046
  %11048 = vmatmul.bf16.gmra.mxu0 %v9884
  %v11049 = vpop.f32.mrf.mxu0
  %v11050 = vadd.f32 %v8223, %v11049
  %v11051 = vpop.f32.mrf.mxu0
  %v11052 = vadd.f32 %v8223, %v11051
  %11053 = vmatmul.bf16.gmra.mxu0 %v9893
  %v11054 = vpop.f32.mrf.mxu0
  %v11055 = vadd.f32 %v8223, %v11054
  %v11056 = vpop.f32.mrf.mxu0
  %v11057 = vadd.f32 %v8223, %v11056
  %11058 = vmatmul.bf16.gmra.mxu0 %v9902
  %v11059 = vpop.f32.mrf.mxu0
  %v11060 = vadd.f32 %v8223, %v11059
  %v11061 = vpop.f32.mrf.mxu0
  %v11062 = vadd.f32 %v8223, %v11061
  %11063 = vmatmul.bf16.gmra.mxu0 %v9911
  %v11064 = vpop.f32.mrf.mxu0
  %v11065 = vadd.f32 %v8223, %v11064
  %v11066 = vpop.f32.mrf.mxu0
  %v11067 = vadd.f32 %v8223, %v11066
  %11068 = vmatmul.bf16.gmra.mxu0 %v9920
  %v11069 = vpop.f32.mrf.mxu0
  %v11070 = vadd.f32 %v8223, %v11069
  %v11071 = vpop.f32.mrf.mxu0
  %v11072 = vadd.f32 %v8223, %v11071
  %11073 = vmatmul.bf16.gmra.mxu0 %v9929
  %v11074 = vpop.f32.mrf.mxu0
  %v11075 = vadd.f32 %v8223, %v11074
  %v11076 = vpop.f32.mrf.mxu0
  %v11077 = vadd.f32 %v8223, %v11076
  %11078 = vmatmul.bf16.gmra.mxu0 %v9938
  %v11079 = vpop.f32.mrf.mxu0
  %v11080 = vadd.f32 %v8223, %v11079
  %v11081 = vpop.f32.mrf.mxu0
  %v11082 = vadd.f32 %v8223, %v11081
  %11083 = vmatmul.bf16.gmra.mxu0 %v9947
  %v11084 = vpop.f32.mrf.mxu0
  %v11085 = vadd.f32 %v8223, %v11084
  %v11086 = vpop.f32.mrf.mxu0
  %v11087 = vadd.f32 %v8223, %v11086
  %11088 = vmatmul.bf16.gmra.mxu0 %v9956
  %v11089 = vpop.f32.mrf.mxu0
  %v11090 = vadd.f32 %v8223, %v11089
  %v11091 = vpop.f32.mrf.mxu0
  %v11092 = vadd.f32 %v8223, %v11091
  %11093 = vmatmul.bf16.gmra.mxu0 %v9965
  %v11094 = vpop.f32.mrf.mxu0
  %v11095 = vadd.f32 %v8223, %v11094
  %v11096 = vpop.f32.mrf.mxu0
  %v11097 = vadd.f32 %v8223, %v11096
  %11098 = vmatmul.bf16.gmra.mxu0 %v9974
  %v11099 = vpop.f32.mrf.mxu0
  %v11100 = vadd.f32 %v8223, %v11099
  %v11101 = vpop.f32.mrf.mxu0
  %v11102 = vadd.f32 %v8223, %v11101
  %11103 = vmatmul.bf16.gmra.mxu0 %v9983
  %v11104 = vpop.f32.mrf.mxu0
  %v11105 = vadd.f32 %v8223, %v11104
  %v11106 = vpop.f32.mrf.mxu0
  %v11107 = vadd.f32 %v8223, %v11106
  %11108 = vmatmul.bf16.gmra.mxu0 %v9992
  %v11109 = vpop.f32.mrf.mxu0
  %v11110 = vadd.f32 %v8223, %v11109
  %v11111 = vpop.f32.mrf.mxu0
  %v11112 = vadd.f32 %v8223, %v11111
  %11113 = vdwg.mxu0
  %11114 = vmatpush.bf16.msra.mxu0 %v10736
  %11115 = vmatpush.bf16.msra.mxu0 %v10735
  %11116 = vmatpush.bf16.msra.mxu0 %v10734
  %11117 = vmatpush.bf16.msra.mxu0 %v10733
  %11118 = vmatpush.bf16.msra.mxu0 %v10732
  %11119 = vmatpush.bf16.msra.mxu0 %v10731
  %11120 = vmatpush.bf16.msra.mxu0 %v10730
  %11121 = vmatpush.bf16.msra.mxu0 %v10729
  %11122 = vmatmul.bf16.gmra.mxu0 %v9570
  %v11123 = vpop.f32.mrf.mxu0
  %v11124 = vadd.f32 %v10875, %v11123
  %v11125 = vpop.f32.mrf.mxu0
  %v11126 = vadd.f32 %v10877, %v11125
  %11127 = vmatmul.bf16.gmra.mxu0 %v9579
  %v11128 = vpop.f32.mrf.mxu0
  %v11129 = vadd.f32 %v10880, %v11128
  %v11130 = vpop.f32.mrf.mxu0
  %v11131 = vadd.f32 %v10882, %v11130
  %11132 = vmatmul.bf16.gmra.mxu0 %v9588
  %v11133 = vpop.f32.mrf.mxu0
  %v11134 = vadd.f32 %v10885, %v11133
  %v11135 = vpop.f32.mrf.mxu0
  %v11136 = vadd.f32 %v10887, %v11135
  %11137 = vmatmul.bf16.gmra.mxu0 %v9597
  %v11138 = vpop.f32.mrf.mxu0
  %v11139 = vadd.f32 %v10890, %v11138
  %v11140 = vpop.f32.mrf.mxu0
  %v11141 = vadd.f32 %v10892, %v11140
  %11142 = vmatmul.bf16.gmra.mxu0 %v9606
  %v11143 = vpop.f32.mrf.mxu0
  %v11144 = vadd.f32 %v10895, %v11143
  %v11145 = vpop.f32.mrf.mxu0
  %v11146 = vadd.f32 %v10897, %v11145
  %11147 = vmatmul.bf16.gmra.mxu0 %v9615
  %v11148 = vpop.f32.mrf.mxu0
  %v11149 = vadd.f32 %v10900, %v11148
  %v11150 = vpop.f32.mrf.mxu0
  %v11151 = vadd.f32 %v10902, %v11150
  %11152 = vmatmul.bf16.gmra.mxu0 %v9624
  %v11153 = vpop.f32.mrf.mxu0
  %v11154 = vadd.f32 %v10905, %v11153
  %v11155 = vpop.f32.mrf.mxu0
  %v11156 = vadd.f32 %v10907, %v11155
  %11157 = vmatmul.bf16.gmra.mxu0 %v9633
  %v11158 = vpop.f32.mrf.mxu0
  %v11159 = vadd.f32 %v10910, %v11158
  %v11160 = vpop.f32.mrf.mxu0
  %v11161 = vadd.f32 %v10912, %v11160
  %11162 = vmatmul.bf16.gmra.mxu0 %v9642
  %v11163 = vpop.f32.mrf.mxu0
  %v11164 = vadd.f32 %v10915, %v11163
  %v11165 = vpop.f32.mrf.mxu0
  %v11166 = vadd.f32 %v10917, %v11165
  %11167 = vmatmul.bf16.gmra.mxu0 %v9651
  %v11168 = vpop.f32.mrf.mxu0
  %v11169 = vadd.f32 %v10920, %v11168
  %v11170 = vpop.f32.mrf.mxu0
  %v11171 = vadd.f32 %v10922, %v11170
  %11172 = vmatmul.bf16.gmra.mxu0 %v9660
  %v11173 = vpop.f32.mrf.mxu0
  %v11174 = vadd.f32 %v10925, %v11173
  %v11175 = vpop.f32.mrf.mxu0
  %v11176 = vadd.f32 %v10927, %v11175
  %11177 = vmatmul.bf16.gmra.mxu0 %v9669
  %v11178 = vpop.f32.mrf.mxu0
  %v11179 = vadd.f32 %v10930, %v11178
  %v11180 = vpop.f32.mrf.mxu0
  %v11181 = vadd.f32 %v10932, %v11180
  %11182 = vmatmul.bf16.gmra.mxu0 %v9678
  %v11183 = vpop.f32.mrf.mxu0
  %v11184 = vadd.f32 %v10935, %v11183
  %v11185 = vpop.f32.mrf.mxu0
  %v11186 = vadd.f32 %v10937, %v11185
  %11187 = vmatmul.bf16.gmra.mxu0 %v9687
  %v11188 = vpop.f32.mrf.mxu0
  %v11189 = vadd.f32 %v10940, %v11188
  %v11190 = vpop.f32.mrf.mxu0
  %v11191 = vadd.f32 %v10942, %v11190
  %11192 = vmatmul.bf16.gmra.mxu0 %v9696
  %v11193 = vpop.f32.mrf.mxu0
  %v11194 = vadd.f32 %v10945, %v11193
  %v11195 = vpop.f32.mrf.mxu0
  %v11196 = vadd.f32 %v10947, %v11195
  %11197 = vmatmul.bf16.gmra.mxu0 %v9705
  %v11198 = vpop.f32.mrf.mxu0
  %v11199 = vadd.f32 %v10950, %v11198
  %v11200 = vpop.f32.mrf.mxu0
  %v11201 = vadd.f32 %v10952, %v11200
  %11202 = vmatmul.bf16.gmra.mxu0 %v9714
  %v11203 = vpop.f32.mrf.mxu0
  %v11204 = vadd.f32 %v10955, %v11203
  %v11205 = vpop.f32.mrf.mxu0
  %v11206 = vadd.f32 %v10957, %v11205
  %11207 = vmatmul.bf16.gmra.mxu0 %v9723
  %v11208 = vpop.f32.mrf.mxu0
  %v11209 = vadd.f32 %v10960, %v11208
  %v11210 = vpop.f32.mrf.mxu0
  %v11211 = vadd.f32 %v10962, %v11210
  %11212 = vmatmul.bf16.gmra.mxu0 %v9732
  %v11213 = vpop.f32.mrf.mxu0
  %v11214 = vadd.f32 %v10965, %v11213
  %v11215 = vpop.f32.mrf.mxu0
  %v11216 = vadd.f32 %v10967, %v11215
  %11217 = vmatmul.bf16.gmra.mxu0 %v9741
  %v11218 = vpop.f32.mrf.mxu0
  %v11219 = vadd.f32 %v10970, %v11218
  %v11220 = vpop.f32.mrf.mxu0
  %v11221 = vadd.f32 %v10972, %v11220
  %11222 = vmatmul.bf16.gmra.mxu0 %v9750
  %v11223 = vpop.f32.mrf.mxu0
  %v11224 = vadd.f32 %v10975, %v11223
  %v11225 = vpop.f32.mrf.mxu0
  %v11226 = vadd.f32 %v10977, %v11225
  %11227 = vmatmul.bf16.gmra.mxu0 %v9759
  %v11228 = vpop.f32.mrf.mxu0
  %v11229 = vadd.f32 %v10980, %v11228
  %v11230 = vpop.f32.mrf.mxu0
  %v11231 = vadd.f32 %v10982, %v11230
  %11232 = vmatmul.bf16.gmra.mxu0 %v9768
  %v11233 = vpop.f32.mrf.mxu0
  %v11234 = vadd.f32 %v10985, %v11233
  %v11235 = vpop.f32.mrf.mxu0
  %v11236 = vadd.f32 %v10987, %v11235
  %11237 = vmatmul.bf16.gmra.mxu0 %v9777
  %v11238 = vpop.f32.mrf.mxu0
  %v11239 = vadd.f32 %v10990, %v11238
  %v11240 = vpop.f32.mrf.mxu0
  %v11241 = vadd.f32 %v10992, %v11240
  %11242 = vmatmul.bf16.gmra.mxu0 %v9786
  %v11243 = vpop.f32.mrf.mxu0
  %v11244 = vadd.f32 %v10995, %v11243
  %v11245 = vpop.f32.mrf.mxu0
  %v11246 = vadd.f32 %v10997, %v11245
  %11247 = vmatmul.bf16.gmra.mxu0 %v9795
  %v11248 = vpop.f32.mrf.mxu0
  %v11249 = vadd.f32 %v11000, %v11248
  %v11250 = vpop.f32.mrf.mxu0
  %v11251 = vadd.f32 %v11002, %v11250
  %11252 = vmatmul.bf16.gmra.mxu0 %v9804
  %v11253 = vpop.f32.mrf.mxu0
  %v11254 = vadd.f32 %v11005, %v11253
  %v11255 = vpop.f32.mrf.mxu0
  %v11256 = vadd.f32 %v11007, %v11255
  %11257 = vmatmul.bf16.gmra.mxu0 %v9813
  %v11258 = vpop.f32.mrf.mxu0
  %v11259 = vadd.f32 %v11010, %v11258
  %v11260 = vpop.f32.mrf.mxu0
  %v11261 = vadd.f32 %v11012, %v11260
  %11262 = vmatmul.bf16.gmra.mxu0 %v9822
  %v11263 = vpop.f32.mrf.mxu0
  %v11264 = vadd.f32 %v11015, %v11263
  %v11265 = vpop.f32.mrf.mxu0
  %v11266 = vadd.f32 %v11017, %v11265
  %11267 = vmatmul.bf16.gmra.mxu0 %v9831
  %v11268 = vpop.f32.mrf.mxu0
  %v11269 = vadd.f32 %v11020, %v11268
  %v11270 = vpop.f32.mrf.mxu0
  %v11271 = vadd.f32 %v11022, %v11270
  %11272 = vmatmul.bf16.gmra.mxu0 %v9840
  %v11273 = vpop.f32.mrf.mxu0
  %v11274 = vadd.f32 %v11025, %v11273
  %v11275 = vpop.f32.mrf.mxu0
  %v11276 = vadd.f32 %v11027, %v11275
  %11277 = vmatmul.bf16.gmra.mxu0 %v9849
  %v11278 = vpop.f32.mrf.mxu0
  %v11279 = vadd.f32 %v11030, %v11278
  %v11280 = vpop.f32.mrf.mxu0
  %v11281 = vadd.f32 %v11032, %v11280
  %11282 = vmatmul.bf16.gmra.mxu0 %v9858
  %v11283 = vpop.f32.mrf.mxu0
  %v11284 = vadd.f32 %v11035, %v11283
  %v11285 = vpop.f32.mrf.mxu0
  %v11286 = vadd.f32 %v11037, %v11285
  %11287 = vmatmul.bf16.gmra.mxu0 %v9867
  %v11288 = vpop.f32.mrf.mxu0
  %v11289 = vadd.f32 %v11040, %v11288
  %v11290 = vpop.f32.mrf.mxu0
  %v11291 = vadd.f32 %v11042, %v11290
  %11292 = vmatmul.bf16.gmra.mxu0 %v9876
  %v11293 = vpop.f32.mrf.mxu0
  %v11294 = vadd.f32 %v11045, %v11293
  %v11295 = vpop.f32.mrf.mxu0
  %v11296 = vadd.f32 %v11047, %v11295
  %11297 = vmatmul.bf16.gmra.mxu0 %v9885
  %v11298 = vpop.f32.mrf.mxu0
  %v11299 = vadd.f32 %v11050, %v11298
  %v11300 = vpop.f32.mrf.mxu0
  %v11301 = vadd.f32 %v11052, %v11300
  %11302 = vmatmul.bf16.gmra.mxu0 %v9894
  %v11303 = vpop.f32.mrf.mxu0
  %v11304 = vadd.f32 %v11055, %v11303
  %v11305 = vpop.f32.mrf.mxu0
  %v11306 = vadd.f32 %v11057, %v11305
  %11307 = vmatmul.bf16.gmra.mxu0 %v9903
  %v11308 = vpop.f32.mrf.mxu0
  %v11309 = vadd.f32 %v11060, %v11308
  %v11310 = vpop.f32.mrf.mxu0
  %v11311 = vadd.f32 %v11062, %v11310
  %11312 = vmatmul.bf16.gmra.mxu0 %v9912
  %v11313 = vpop.f32.mrf.mxu0
  %v11314 = vadd.f32 %v11065, %v11313
  %v11315 = vpop.f32.mrf.mxu0
  %v11316 = vadd.f32 %v11067, %v11315
  %11317 = vmatmul.bf16.gmra.mxu0 %v9921
  %v11318 = vpop.f32.mrf.mxu0
  %v11319 = vadd.f32 %v11070, %v11318
  %v11320 = vpop.f32.mrf.mxu0
  %v11321 = vadd.f32 %v11072, %v11320
  %11322 = vmatmul.bf16.gmra.mxu0 %v9930
  %v11323 = vpop.f32.mrf.mxu0
  %v11324 = vadd.f32 %v11075, %v11323
  %v11325 = vpop.f32.mrf.mxu0
  %v11326 = vadd.f32 %v11077, %v11325
  %11327 = vmatmul.bf16.gmra.mxu0 %v9939
  %v11328 = vpop.f32.mrf.mxu0
  %v11329 = vadd.f32 %v11080, %v11328
  %v11330 = vpop.f32.mrf.mxu0
  %v11331 = vadd.f32 %v11082, %v11330
  %11332 = vmatmul.bf16.gmra.mxu0 %v9948
  %v11333 = vpop.f32.mrf.mxu0
  %v11334 = vadd.f32 %v11085, %v11333
  %v11335 = vpop.f32.mrf.mxu0
  %v11336 = vadd.f32 %v11087, %v11335
  %11337 = vmatmul.bf16.gmra.mxu0 %v9957
  %v11338 = vpop.f32.mrf.mxu0
  %v11339 = vadd.f32 %v11090, %v11338
  %v11340 = vpop.f32.mrf.mxu0
  %v11341 = vadd.f32 %v11092, %v11340
  %11342 = vmatmul.bf16.gmra.mxu0 %v9966
  %v11343 = vpop.f32.mrf.mxu0
  %v11344 = vadd.f32 %v11095, %v11343
  %v11345 = vpop.f32.mrf.mxu0
  %v11346 = vadd.f32 %v11097, %v11345
  %11347 = vmatmul.bf16.gmra.mxu0 %v9975
  %v11348 = vpop.f32.mrf.mxu0
  %v11349 = vadd.f32 %v11100, %v11348
  %v11350 = vpop.f32.mrf.mxu0
  %v11351 = vadd.f32 %v11102, %v11350
  %11352 = vmatmul.bf16.gmra.mxu0 %v9984
  %v11353 = vpop.f32.mrf.mxu0
  %v11354 = vadd.f32 %v11105, %v11353
  %v11355 = vpop.f32.mrf.mxu0
  %v11356 = vadd.f32 %v11107, %v11355
  %11357 = vmatmul.bf16.gmra.mxu0 %v9993
  %v11358 = vpop.f32.mrf.mxu0
  %v11359 = vadd.f32 %v11110, %v11358
  %v11360 = vpop.f32.mrf.mxu0
  %v11361 = vadd.f32 %v11112, %v11360
  %11362 = vdwg.mxu0
  %11363 = vmatpush.bf16.msra.mxu0 %v10744
  %11364 = vmatpush.bf16.msra.mxu0 %v10743
  %11365 = vmatpush.bf16.msra.mxu0 %v10742
  %11366 = vmatpush.bf16.msra.mxu0 %v10741
  %11367 = vmatpush.bf16.msra.mxu0 %v10740
  %11368 = vmatpush.bf16.msra.mxu0 %v10739
  %11369 = vmatpush.bf16.msra.mxu0 %v10738
  %11370 = vmatpush.bf16.msra.mxu0 %v10737
  %11371 = vmatmul.bf16.gmra.mxu0 %v9571
  %v11372 = vpop.f32.mrf.mxu0
  %v11373 = vadd.f32 %v11124, %v11372
  %v11374 = vpop.f32.mrf.mxu0
  %v11375 = vadd.f32 %v11126, %v11374
  %11376 = vmatmul.bf16.gmra.mxu0 %v9580
  %v11377 = vpop.f32.mrf.mxu0
  %v11378 = vadd.f32 %v11129, %v11377
  %v11379 = vpop.f32.mrf.mxu0
  %v11380 = vadd.f32 %v11131, %v11379
  %11381 = vmatmul.bf16.gmra.mxu0 %v9589
  %v11382 = vpop.f32.mrf.mxu0
  %v11383 = vadd.f32 %v11134, %v11382
  %v11384 = vpop.f32.mrf.mxu0
  %v11385 = vadd.f32 %v11136, %v11384
  %11386 = vmatmul.bf16.gmra.mxu0 %v9598
  %v11387 = vpop.f32.mrf.mxu0
  %v11388 = vadd.f32 %v11139, %v11387
  %v11389 = vpop.f32.mrf.mxu0
  %v11390 = vadd.f32 %v11141, %v11389
  %11391 = vmatmul.bf16.gmra.mxu0 %v9607
  %v11392 = vpop.f32.mrf.mxu0
  %v11393 = vadd.f32 %v11144, %v11392
  %v11394 = vpop.f32.mrf.mxu0
  %v11395 = vadd.f32 %v11146, %v11394
  %11396 = vmatmul.bf16.gmra.mxu0 %v9616
  %v11397 = vpop.f32.mrf.mxu0
  %v11398 = vadd.f32 %v11149, %v11397
  %v11399 = vpop.f32.mrf.mxu0
  %v11400 = vadd.f32 %v11151, %v11399
  %11401 = vmatmul.bf16.gmra.mxu0 %v9625
  %v11402 = vpop.f32.mrf.mxu0
  %v11403 = vadd.f32 %v11154, %v11402
  %v11404 = vpop.f32.mrf.mxu0
  %v11405 = vadd.f32 %v11156, %v11404
  %11406 = vmatmul.bf16.gmra.mxu0 %v9634
  %v11407 = vpop.f32.mrf.mxu0
  %v11408 = vadd.f32 %v11159, %v11407
  %v11409 = vpop.f32.mrf.mxu0
  %v11410 = vadd.f32 %v11161, %v11409
  %11411 = vmatmul.bf16.gmra.mxu0 %v9643
  %v11412 = vpop.f32.mrf.mxu0
  %v11413 = vadd.f32 %v11164, %v11412
  %v11414 = vpop.f32.mrf.mxu0
  %v11415 = vadd.f32 %v11166, %v11414
  %11416 = vmatmul.bf16.gmra.mxu0 %v9652
  %v11417 = vpop.f32.mrf.mxu0
  %v11418 = vadd.f32 %v11169, %v11417
  %v11419 = vpop.f32.mrf.mxu0
  %v11420 = vadd.f32 %v11171, %v11419
  %11421 = vmatmul.bf16.gmra.mxu0 %v9661
  %v11422 = vpop.f32.mrf.mxu0
  %v11423 = vadd.f32 %v11174, %v11422
  %v11424 = vpop.f32.mrf.mxu0
  %v11425 = vadd.f32 %v11176, %v11424
  %11426 = vmatmul.bf16.gmra.mxu0 %v9670
  %v11427 = vpop.f32.mrf.mxu0
  %v11428 = vadd.f32 %v11179, %v11427
  %v11429 = vpop.f32.mrf.mxu0
  %v11430 = vadd.f32 %v11181, %v11429
  %11431 = vmatmul.bf16.gmra.mxu0 %v9679
  %v11432 = vpop.f32.mrf.mxu0
  %v11433 = vadd.f32 %v11184, %v11432
  %v11434 = vpop.f32.mrf.mxu0
  %v11435 = vadd.f32 %v11186, %v11434
  %11436 = vmatmul.bf16.gmra.mxu0 %v9688
  %v11437 = vpop.f32.mrf.mxu0
  %v11438 = vadd.f32 %v11189, %v11437
  %v11439 = vpop.f32.mrf.mxu0
  %v11440 = vadd.f32 %v11191, %v11439
  %11441 = vmatmul.bf16.gmra.mxu0 %v9697
  %v11442 = vpop.f32.mrf.mxu0
  %v11443 = vadd.f32 %v11194, %v11442
  %v11444 = vpop.f32.mrf.mxu0
  %v11445 = vadd.f32 %v11196, %v11444
  %11446 = vmatmul.bf16.gmra.mxu0 %v9706
  %v11447 = vpop.f32.mrf.mxu0
  %v11448 = vadd.f32 %v11199, %v11447
  %v11449 = vpop.f32.mrf.mxu0
  %v11450 = vadd.f32 %v11201, %v11449
  %11451 = vmatmul.bf16.gmra.mxu0 %v9715
  %v11452 = vpop.f32.mrf.mxu0
  %v11453 = vadd.f32 %v11204, %v11452
  %v11454 = vpop.f32.mrf.mxu0
  %v11455 = vadd.f32 %v11206, %v11454
  %11456 = vmatmul.bf16.gmra.mxu0 %v9724
  %v11457 = vpop.f32.mrf.mxu0
  %v11458 = vadd.f32 %v11209, %v11457
  %v11459 = vpop.f32.mrf.mxu0
  %v11460 = vadd.f32 %v11211, %v11459
  %11461 = vmatmul.bf16.gmra.mxu0 %v9733
  %v11462 = vpop.f32.mrf.mxu0
  %v11463 = vadd.f32 %v11214, %v11462
  %v11464 = vpop.f32.mrf.mxu0
  %v11465 = vadd.f32 %v11216, %v11464
  %11466 = vmatmul.bf16.gmra.mxu0 %v9742
  %v11467 = vpop.f32.mrf.mxu0
  %v11468 = vadd.f32 %v11219, %v11467
  %v11469 = vpop.f32.mrf.mxu0
  %v11470 = vadd.f32 %v11221, %v11469
  %11471 = vmatmul.bf16.gmra.mxu0 %v9751
  %v11472 = vpop.f32.mrf.mxu0
  %v11473 = vadd.f32 %v11224, %v11472
  %v11474 = vpop.f32.mrf.mxu0
  %v11475 = vadd.f32 %v11226, %v11474
  %11476 = vmatmul.bf16.gmra.mxu0 %v9760
  %v11477 = vpop.f32.mrf.mxu0
  %v11478 = vadd.f32 %v11229, %v11477
  %v11479 = vpop.f32.mrf.mxu0
  %v11480 = vadd.f32 %v11231, %v11479
  %11481 = vmatmul.bf16.gmra.mxu0 %v9769
  %v11482 = vpop.f32.mrf.mxu0
  %v11483 = vadd.f32 %v11234, %v11482
  %v11484 = vpop.f32.mrf.mxu0
  %v11485 = vadd.f32 %v11236, %v11484
  %11486 = vmatmul.bf16.gmra.mxu0 %v9778
  %v11487 = vpop.f32.mrf.mxu0
  %v11488 = vadd.f32 %v11239, %v11487
  %v11489 = vpop.f32.mrf.mxu0
  %v11490 = vadd.f32 %v11241, %v11489
  %11491 = vmatmul.bf16.gmra.mxu0 %v9787
  %v11492 = vpop.f32.mrf.mxu0
  %v11493 = vadd.f32 %v11244, %v11492
  %v11494 = vpop.f32.mrf.mxu0
  %v11495 = vadd.f32 %v11246, %v11494
  %11496 = vmatmul.bf16.gmra.mxu0 %v9796
  %v11497 = vpop.f32.mrf.mxu0
  %v11498 = vadd.f32 %v11249, %v11497
  %v11499 = vpop.f32.mrf.mxu0
  %v11500 = vadd.f32 %v11251, %v11499
  %11501 = vmatmul.bf16.gmra.mxu0 %v9805
  %v11502 = vpop.f32.mrf.mxu0
  %v11503 = vadd.f32 %v11254, %v11502
  %v11504 = vpop.f32.mrf.mxu0
  %v11505 = vadd.f32 %v11256, %v11504
  %11506 = vmatmul.bf16.gmra.mxu0 %v9814
  %v11507 = vpop.f32.mrf.mxu0
  %v11508 = vadd.f32 %v11259, %v11507
  %v11509 = vpop.f32.mrf.mxu0
  %v11510 = vadd.f32 %v11261, %v11509
  %11511 = vmatmul.bf16.gmra.mxu0 %v9823
  %v11512 = vpop.f32.mrf.mxu0
  %v11513 = vadd.f32 %v11264, %v11512
  %v11514 = vpop.f32.mrf.mxu0
  %v11515 = vadd.f32 %v11266, %v11514
  %11516 = vmatmul.bf16.gmra.mxu0 %v9832
  %v11517 = vpop.f32.mrf.mxu0
  %v11518 = vadd.f32 %v11269, %v11517
  %v11519 = vpop.f32.mrf.mxu0
  %v11520 = vadd.f32 %v11271, %v11519
  %11521 = vmatmul.bf16.gmra.mxu0 %v9841
  %v11522 = vpop.f32.mrf.mxu0
  %v11523 = vadd.f32 %v11274, %v11522
  %v11524 = vpop.f32.mrf.mxu0
  %v11525 = vadd.f32 %v11276, %v11524
  %11526 = vmatmul.bf16.gmra.mxu0 %v9850
  %v11527 = vpop.f32.mrf.mxu0
  %v11528 = vadd.f32 %v11279, %v11527
  %v11529 = vpop.f32.mrf.mxu0
  %v11530 = vadd.f32 %v11281, %v11529
  %11531 = vmatmul.bf16.gmra.mxu0 %v9859
  %v11532 = vpop.f32.mrf.mxu0
  %v11533 = vadd.f32 %v11284, %v11532
  %v11534 = vpop.f32.mrf.mxu0
  %v11535 = vadd.f32 %v11286, %v11534
  %11536 = vmatmul.bf16.gmra.mxu0 %v9868
  %v11537 = vpop.f32.mrf.mxu0
  %v11538 = vadd.f32 %v11289, %v11537
  %v11539 = vpop.f32.mrf.mxu0
  %v11540 = vadd.f32 %v11291, %v11539
  %11541 = vmatmul.bf16.gmra.mxu0 %v9877
  %v11542 = vpop.f32.mrf.mxu0
  %v11543 = vadd.f32 %v11294, %v11542
  %v11544 = vpop.f32.mrf.mxu0
  %v11545 = vadd.f32 %v11296, %v11544
  %11546 = vmatmul.bf16.gmra.mxu0 %v9886
  %v11547 = vpop.f32.mrf.mxu0
  %v11548 = vadd.f32 %v11299, %v11547
  %v11549 = vpop.f32.mrf.mxu0
  %v11550 = vadd.f32 %v11301, %v11549
  %11551 = vmatmul.bf16.gmra.mxu0 %v9895
  %v11552 = vpop.f32.mrf.mxu0
  %v11553 = vadd.f32 %v11304, %v11552
  %v11554 = vpop.f32.mrf.mxu0
  %v11555 = vadd.f32 %v11306, %v11554
  %11556 = vmatmul.bf16.gmra.mxu0 %v9904
  %v11557 = vpop.f32.mrf.mxu0
  %v11558 = vadd.f32 %v11309, %v11557
  %v11559 = vpop.f32.mrf.mxu0
  %v11560 = vadd.f32 %v11311, %v11559
  %11561 = vmatmul.bf16.gmra.mxu0 %v9913
  %v11562 = vpop.f32.mrf.mxu0
  %v11563 = vadd.f32 %v11314, %v11562
  %v11564 = vpop.f32.mrf.mxu0
  %v11565 = vadd.f32 %v11316, %v11564
  %11566 = vmatmul.bf16.gmra.mxu0 %v9922
  %v11567 = vpop.f32.mrf.mxu0
  %v11568 = vadd.f32 %v11319, %v11567
  %v11569 = vpop.f32.mrf.mxu0
  %v11570 = vadd.f32 %v11321, %v11569
  %11571 = vmatmul.bf16.gmra.mxu0 %v9931
  %v11572 = vpop.f32.mrf.mxu0
  %v11573 = vadd.f32 %v11324, %v11572
  %v11574 = vpop.f32.mrf.mxu0
  %v11575 = vadd.f32 %v11326, %v11574
  %11576 = vmatmul.bf16.gmra.mxu0 %v9940
  %v11577 = vpop.f32.mrf.mxu0
  %v11578 = vadd.f32 %v11329, %v11577
  %v11579 = vpop.f32.mrf.mxu0
  %v11580 = vadd.f32 %v11331, %v11579
  %11581 = vmatmul.bf16.gmra.mxu0 %v9949
  %v11582 = vpop.f32.mrf.mxu0
  %v11583 = vadd.f32 %v11334, %v11582
  %v11584 = vpop.f32.mrf.mxu0
  %v11585 = vadd.f32 %v11336, %v11584
  %11586 = vmatmul.bf16.gmra.mxu0 %v9958
  %v11587 = vpop.f32.mrf.mxu0
  %v11588 = vadd.f32 %v11339, %v11587
  %v11589 = vpop.f32.mrf.mxu0
  %v11590 = vadd.f32 %v11341, %v11589
  %11591 = vmatmul.bf16.gmra.mxu0 %v9967
  %v11592 = vpop.f32.mrf.mxu0
  %v11593 = vadd.f32 %v11344, %v11592
  %v11594 = vpop.f32.mrf.mxu0
  %v11595 = vadd.f32 %v11346, %v11594
  %11596 = vmatmul.bf16.gmra.mxu0 %v9976
  %v11597 = vpop.f32.mrf.mxu0
  %v11598 = vadd.f32 %v11349, %v11597
  %v11599 = vpop.f32.mrf.mxu0
  %v11600 = vadd.f32 %v11351, %v11599
  %11601 = vmatmul.bf16.gmra.mxu0 %v9985
  %v11602 = vpop.f32.mrf.mxu0
  %v11603 = vadd.f32 %v11354, %v11602
  %v11604 = vpop.f32.mrf.mxu0
  %v11605 = vadd.f32 %v11356, %v11604
  %11606 = vmatmul.bf16.gmra.mxu0 %v9994
  %v11607 = vpop.f32.mrf.mxu0
  %v11608 = vadd.f32 %v11359, %v11607
  %v11609 = vpop.f32.mrf.mxu0
  %v11610 = vadd.f32 %v11361, %v11609
  %11611 = vdwg.mxu0
  %11612 = vmatpush.bf16.msra.mxu0 %v10752
  %11613 = vmatpush.bf16.msra.mxu0 %v10751
  %11614 = vmatpush.bf16.msra.mxu0 %v10750
  %11615 = vmatpush.bf16.msra.mxu0 %v10749
  %11616 = vmatpush.bf16.msra.mxu0 %v10748
  %11617 = vmatpush.bf16.msra.mxu0 %v10747
  %11618 = vmatpush.bf16.msra.mxu0 %v10746
  %11619 = vmatpush.bf16.msra.mxu0 %v10745
  %11620 = vmatmul.bf16.gmra.mxu0 %v9572
  %v11621 = vpop.f32.mrf.mxu0
  %v11622 = vadd.f32 %v11373, %v11621
  %v11623 = vpop.f32.mrf.mxu0
  %v11624 = vadd.f32 %v11375, %v11623
  %11625 = vmatmul.bf16.gmra.mxu0 %v9581
  %v11626 = vpop.f32.mrf.mxu0
  %v11627 = vadd.f32 %v11378, %v11626
  %v11628 = vpop.f32.mrf.mxu0
  %v11629 = vadd.f32 %v11380, %v11628
  %11630 = vmatmul.bf16.gmra.mxu0 %v9590
  %v11631 = vpop.f32.mrf.mxu0
  %v11632 = vadd.f32 %v11383, %v11631
  %v11633 = vpop.f32.mrf.mxu0
  %v11634 = vadd.f32 %v11385, %v11633
  %11635 = vmatmul.bf16.gmra.mxu0 %v9599
  %v11636 = vpop.f32.mrf.mxu0
  %v11637 = vadd.f32 %v11388, %v11636
  %v11638 = vpop.f32.mrf.mxu0
  %v11639 = vadd.f32 %v11390, %v11638
  %11640 = vmatmul.bf16.gmra.mxu0 %v9608
  %v11641 = vpop.f32.mrf.mxu0
  %v11642 = vadd.f32 %v11393, %v11641
  %v11643 = vpop.f32.mrf.mxu0
  %v11644 = vadd.f32 %v11395, %v11643
  %11645 = vmatmul.bf16.gmra.mxu0 %v9617
  %v11646 = vpop.f32.mrf.mxu0
  %v11647 = vadd.f32 %v11398, %v11646
  %v11648 = vpop.f32.mrf.mxu0
  %v11649 = vadd.f32 %v11400, %v11648
  %11650 = vmatmul.bf16.gmra.mxu0 %v9626
  %v11651 = vpop.f32.mrf.mxu0
  %v11652 = vadd.f32 %v11403, %v11651
  %v11653 = vpop.f32.mrf.mxu0
  %v11654 = vadd.f32 %v11405, %v11653
  %11655 = vmatmul.bf16.gmra.mxu0 %v9635
  %v11656 = vpop.f32.mrf.mxu0
  %v11657 = vadd.f32 %v11408, %v11656
  %v11658 = vpop.f32.mrf.mxu0
  %v11659 = vadd.f32 %v11410, %v11658
  %11660 = vmatmul.bf16.gmra.mxu0 %v9644
  %v11661 = vpop.f32.mrf.mxu0
  %v11662 = vadd.f32 %v11413, %v11661
  %v11663 = vpop.f32.mrf.mxu0
  %v11664 = vadd.f32 %v11415, %v11663
  %11665 = vmatmul.bf16.gmra.mxu0 %v9653
  %v11666 = vpop.f32.mrf.mxu0
  %v11667 = vadd.f32 %v11418, %v11666
  %v11668 = vpop.f32.mrf.mxu0
  %v11669 = vadd.f32 %v11420, %v11668
  %11670 = vmatmul.bf16.gmra.mxu0 %v9662
  %v11671 = vpop.f32.mrf.mxu0
  %v11672 = vadd.f32 %v11423, %v11671
  %v11673 = vpop.f32.mrf.mxu0
  %v11674 = vadd.f32 %v11425, %v11673
  %11675 = vmatmul.bf16.gmra.mxu0 %v9671
  %v11676 = vpop.f32.mrf.mxu0
  %v11677 = vadd.f32 %v11428, %v11676
  %v11678 = vpop.f32.mrf.mxu0
  %v11679 = vadd.f32 %v11430, %v11678
  %11680 = vmatmul.bf16.gmra.mxu0 %v9680
  %v11681 = vpop.f32.mrf.mxu0
  %v11682 = vadd.f32 %v11433, %v11681
  %v11683 = vpop.f32.mrf.mxu0
  %v11684 = vadd.f32 %v11435, %v11683
  %11685 = vmatmul.bf16.gmra.mxu0 %v9689
  %v11686 = vpop.f32.mrf.mxu0
  %v11687 = vadd.f32 %v11438, %v11686
  %v11688 = vpop.f32.mrf.mxu0
  %v11689 = vadd.f32 %v11440, %v11688
  %11690 = vmatmul.bf16.gmra.mxu0 %v9698
  %v11691 = vpop.f32.mrf.mxu0
  %v11692 = vadd.f32 %v11443, %v11691
  %v11693 = vpop.f32.mrf.mxu0
  %v11694 = vadd.f32 %v11445, %v11693
  %11695 = vmatmul.bf16.gmra.mxu0 %v9707
  %v11696 = vpop.f32.mrf.mxu0
  %v11697 = vadd.f32 %v11448, %v11696
  %v11698 = vpop.f32.mrf.mxu0
  %v11699 = vadd.f32 %v11450, %v11698
  %11700 = vmatmul.bf16.gmra.mxu0 %v9716
  %v11701 = vpop.f32.mrf.mxu0
  %v11702 = vadd.f32 %v11453, %v11701
  %v11703 = vpop.f32.mrf.mxu0
  %v11704 = vadd.f32 %v11455, %v11703
  %11705 = vmatmul.bf16.gmra.mxu0 %v9725
  %v11706 = vpop.f32.mrf.mxu0
  %v11707 = vadd.f32 %v11458, %v11706
  %v11708 = vpop.f32.mrf.mxu0
  %v11709 = vadd.f32 %v11460, %v11708
  %11710 = vmatmul.bf16.gmra.mxu0 %v9734
  %v11711 = vpop.f32.mrf.mxu0
  %v11712 = vadd.f32 %v11463, %v11711
  %v11713 = vpop.f32.mrf.mxu0
  %v11714 = vadd.f32 %v11465, %v11713
  %11715 = vmatmul.bf16.gmra.mxu0 %v9743
  %v11716 = vpop.f32.mrf.mxu0
  %v11717 = vadd.f32 %v11468, %v11716
  %v11718 = vpop.f32.mrf.mxu0
  %v11719 = vadd.f32 %v11470, %v11718
  %11720 = vmatmul.bf16.gmra.mxu0 %v9752
  %v11721 = vpop.f32.mrf.mxu0
  %v11722 = vadd.f32 %v11473, %v11721
  %v11723 = vpop.f32.mrf.mxu0
  %v11724 = vadd.f32 %v11475, %v11723
  %11725 = vmatmul.bf16.gmra.mxu0 %v9761
  %v11726 = vpop.f32.mrf.mxu0
  %v11727 = vadd.f32 %v11478, %v11726
  %v11728 = vpop.f32.mrf.mxu0
  %v11729 = vadd.f32 %v11480, %v11728
  %11730 = vmatmul.bf16.gmra.mxu0 %v9770
  %v11731 = vpop.f32.mrf.mxu0
  %v11732 = vadd.f32 %v11483, %v11731
  %v11733 = vpop.f32.mrf.mxu0
  %v11734 = vadd.f32 %v11485, %v11733
  %11735 = vmatmul.bf16.gmra.mxu0 %v9779
  %v11736 = vpop.f32.mrf.mxu0
  %v11737 = vadd.f32 %v11488, %v11736
  %v11738 = vpop.f32.mrf.mxu0
  %v11739 = vadd.f32 %v11490, %v11738
  %11740 = vmatmul.bf16.gmra.mxu0 %v9788
  %v11741 = vpop.f32.mrf.mxu0
  %v11742 = vadd.f32 %v11493, %v11741
  %v11743 = vpop.f32.mrf.mxu0
  %v11744 = vadd.f32 %v11495, %v11743
  %11745 = vmatmul.bf16.gmra.mxu0 %v9797
  %v11746 = vpop.f32.mrf.mxu0
  %v11747 = vadd.f32 %v11498, %v11746
  %v11748 = vpop.f32.mrf.mxu0
  %v11749 = vadd.f32 %v11500, %v11748
  %11750 = vmatmul.bf16.gmra.mxu0 %v9806
  %v11751 = vpop.f32.mrf.mxu0
  %v11752 = vadd.f32 %v11503, %v11751
  %v11753 = vpop.f32.mrf.mxu0
  %v11754 = vadd.f32 %v11505, %v11753
  %11755 = vmatmul.bf16.gmra.mxu0 %v9815
  %v11756 = vpop.f32.mrf.mxu0
  %v11757 = vadd.f32 %v11508, %v11756
  %v11758 = vpop.f32.mrf.mxu0
  %v11759 = vadd.f32 %v11510, %v11758
  %11760 = vmatmul.bf16.gmra.mxu0 %v9824
  %v11761 = vpop.f32.mrf.mxu0
  %v11762 = vadd.f32 %v11513, %v11761
  %v11763 = vpop.f32.mrf.mxu0
  %v11764 = vadd.f32 %v11515, %v11763
  %11765 = vmatmul.bf16.gmra.mxu0 %v9833
  %v11766 = vpop.f32.mrf.mxu0
  %v11767 = vadd.f32 %v11518, %v11766
  %v11768 = vpop.f32.mrf.mxu0
  %v11769 = vadd.f32 %v11520, %v11768
  %11770 = vmatmul.bf16.gmra.mxu0 %v9842
  %v11771 = vpop.f32.mrf.mxu0
  %v11772 = vadd.f32 %v11523, %v11771
  %v11773 = vpop.f32.mrf.mxu0
  %v11774 = vadd.f32 %v11525, %v11773
  %11775 = vmatmul.bf16.gmra.mxu0 %v9851
  %v11776 = vpop.f32.mrf.mxu0
  %v11777 = vadd.f32 %v11528, %v11776
  %v11778 = vpop.f32.mrf.mxu0
  %v11779 = vadd.f32 %v11530, %v11778
  %11780 = vmatmul.bf16.gmra.mxu0 %v9860
  %v11781 = vpop.f32.mrf.mxu0
  %v11782 = vadd.f32 %v11533, %v11781
  %v11783 = vpop.f32.mrf.mxu0
  %v11784 = vadd.f32 %v11535, %v11783
  %11785 = vmatmul.bf16.gmra.mxu0 %v9869
  %v11786 = vpop.f32.mrf.mxu0
  %v11787 = vadd.f32 %v11538, %v11786
  %v11788 = vpop.f32.mrf.mxu0
  %v11789 = vadd.f32 %v11540, %v11788
  %11790 = vmatmul.bf16.gmra.mxu0 %v9878
  %v11791 = vpop.f32.mrf.mxu0
  %v11792 = vadd.f32 %v11543, %v11791
  %v11793 = vpop.f32.mrf.mxu0
  %v11794 = vadd.f32 %v11545, %v11793
  %11795 = vmatmul.bf16.gmra.mxu0 %v9887
  %v11796 = vpop.f32.mrf.mxu0
  %v11797 = vadd.f32 %v11548, %v11796
  %v11798 = vpop.f32.mrf.mxu0
  %v11799 = vadd.f32 %v11550, %v11798
  %11800 = vmatmul.bf16.gmra.mxu0 %v9896
  %v11801 = vpop.f32.mrf.mxu0
  %v11802 = vadd.f32 %v11553, %v11801
  %v11803 = vpop.f32.mrf.mxu0
  %v11804 = vadd.f32 %v11555, %v11803
  %11805 = vmatmul.bf16.gmra.mxu0 %v9905
  %v11806 = vpop.f32.mrf.mxu0
  %v11807 = vadd.f32 %v11558, %v11806
  %v11808 = vpop.f32.mrf.mxu0
  %v11809 = vadd.f32 %v11560, %v11808
  %11810 = vmatmul.bf16.gmra.mxu0 %v9914
  %v11811 = vpop.f32.mrf.mxu0
  %v11812 = vadd.f32 %v11563, %v11811
  %v11813 = vpop.f32.mrf.mxu0
  %v11814 = vadd.f32 %v11565, %v11813
  %11815 = vmatmul.bf16.gmra.mxu0 %v9923
  %v11816 = vpop.f32.mrf.mxu0
  %v11817 = vadd.f32 %v11568, %v11816
  %v11818 = vpop.f32.mrf.mxu0
  %v11819 = vadd.f32 %v11570, %v11818
  %11820 = vmatmul.bf16.gmra.mxu0 %v9932
  %v11821 = vpop.f32.mrf.mxu0
  %v11822 = vadd.f32 %v11573, %v11821
  %v11823 = vpop.f32.mrf.mxu0
  %v11824 = vadd.f32 %v11575, %v11823
  %11825 = vmatmul.bf16.gmra.mxu0 %v9941
  %v11826 = vpop.f32.mrf.mxu0
  %v11827 = vadd.f32 %v11578, %v11826
  %v11828 = vpop.f32.mrf.mxu0
  %v11829 = vadd.f32 %v11580, %v11828
  %11830 = vmatmul.bf16.gmra.mxu0 %v9950
  %v11831 = vpop.f32.mrf.mxu0
  %v11832 = vadd.f32 %v11583, %v11831
  %v11833 = vpop.f32.mrf.mxu0
  %v11834 = vadd.f32 %v11585, %v11833
  %11835 = vmatmul.bf16.gmra.mxu0 %v9959
  %v11836 = vpop.f32.mrf.mxu0
  %v11837 = vadd.f32 %v11588, %v11836
  %v11838 = vpop.f32.mrf.mxu0
  %v11839 = vadd.f32 %v11590, %v11838
  %11840 = vmatmul.bf16.gmra.mxu0 %v9968
  %v11841 = vpop.f32.mrf.mxu0
  %v11842 = vadd.f32 %v11593, %v11841
  %v11843 = vpop.f32.mrf.mxu0
  %v11844 = vadd.f32 %v11595, %v11843
  %11845 = vmatmul.bf16.gmra.mxu0 %v9977
  %v11846 = vpop.f32.mrf.mxu0
  %v11847 = vadd.f32 %v11598, %v11846
  %v11848 = vpop.f32.mrf.mxu0
  %v11849 = vadd.f32 %v11600, %v11848
  %11850 = vmatmul.bf16.gmra.mxu0 %v9986
  %v11851 = vpop.f32.mrf.mxu0
  %v11852 = vadd.f32 %v11603, %v11851
  %v11853 = vpop.f32.mrf.mxu0
  %v11854 = vadd.f32 %v11605, %v11853
  %11855 = vmatmul.bf16.gmra.mxu0 %v9995
  %v11856 = vpop.f32.mrf.mxu0
  %v11857 = vadd.f32 %v11608, %v11856
  %v11858 = vpop.f32.mrf.mxu0
  %v11859 = vadd.f32 %v11610, %v11858
  %11860 = vdwg.mxu0
  %11861 = vmatpush.bf16.msra.mxu0 %v10760
  %11862 = vmatpush.bf16.msra.mxu0 %v10759
  %11863 = vmatpush.bf16.msra.mxu0 %v10758
  %11864 = vmatpush.bf16.msra.mxu0 %v10757
  %11865 = vmatpush.bf16.msra.mxu0 %v10756
  %11866 = vmatpush.bf16.msra.mxu0 %v10755
  %11867 = vmatpush.bf16.msra.mxu0 %v10754
  %11868 = vmatpush.bf16.msra.mxu0 %v10753
  %11869 = vmatmul.bf16.gmra.mxu0 %v9573
  %v11870 = vpop.f32.mrf.mxu0
  %v11871 = vadd.f32 %v11622, %v11870
  %v11872 = vpop.f32.mrf.mxu0
  %v11873 = vadd.f32 %v11624, %v11872
  %11874 = vmatmul.bf16.gmra.mxu0 %v9582
  %v11875 = vpop.f32.mrf.mxu0
  %v11876 = vadd.f32 %v11627, %v11875
  %v11877 = vpop.f32.mrf.mxu0
  %v11878 = vadd.f32 %v11629, %v11877
  %11879 = vmatmul.bf16.gmra.mxu0 %v9591
  %v11880 = vpop.f32.mrf.mxu0
  %v11881 = vadd.f32 %v11632, %v11880
  %v11882 = vpop.f32.mrf.mxu0
  %v11883 = vadd.f32 %v11634, %v11882
  %11884 = vmatmul.bf16.gmra.mxu0 %v9600
  %v11885 = vpop.f32.mrf.mxu0
  %v11886 = vadd.f32 %v11637, %v11885
  %v11887 = vpop.f32.mrf.mxu0
  %v11888 = vadd.f32 %v11639, %v11887
  %11889 = vmatmul.bf16.gmra.mxu0 %v9609
  %v11890 = vpop.f32.mrf.mxu0
  %v11891 = vadd.f32 %v11642, %v11890
  %v11892 = vpop.f32.mrf.mxu0
  %v11893 = vadd.f32 %v11644, %v11892
  %11894 = vmatmul.bf16.gmra.mxu0 %v9618
  %v11895 = vpop.f32.mrf.mxu0
  %v11896 = vadd.f32 %v11647, %v11895
  %v11897 = vpop.f32.mrf.mxu0
  %v11898 = vadd.f32 %v11649, %v11897
  %11899 = vmatmul.bf16.gmra.mxu0 %v9627
  %v11900 = vpop.f32.mrf.mxu0
  %v11901 = vadd.f32 %v11652, %v11900
  %v11902 = vpop.f32.mrf.mxu0
  %v11903 = vadd.f32 %v11654, %v11902
  %11904 = vmatmul.bf16.gmra.mxu0 %v9636
  %v11905 = vpop.f32.mrf.mxu0
  %v11906 = vadd.f32 %v11657, %v11905
  %v11907 = vpop.f32.mrf.mxu0
  %v11908 = vadd.f32 %v11659, %v11907
  %11909 = vmatmul.bf16.gmra.mxu0 %v9645
  %v11910 = vpop.f32.mrf.mxu0
  %v11911 = vadd.f32 %v11662, %v11910
  %v11912 = vpop.f32.mrf.mxu0
  %v11913 = vadd.f32 %v11664, %v11912
  %11914 = vmatmul.bf16.gmra.mxu0 %v9654
  %v11915 = vpop.f32.mrf.mxu0
  %v11916 = vadd.f32 %v11667, %v11915
  %v11917 = vpop.f32.mrf.mxu0
  %v11918 = vadd.f32 %v11669, %v11917
  %11919 = vmatmul.bf16.gmra.mxu0 %v9663
  %v11920 = vpop.f32.mrf.mxu0
  %v11921 = vadd.f32 %v11672, %v11920
  %v11922 = vpop.f32.mrf.mxu0
  %v11923 = vadd.f32 %v11674, %v11922
  %11924 = vmatmul.bf16.gmra.mxu0 %v9672
  %v11925 = vpop.f32.mrf.mxu0
  %v11926 = vadd.f32 %v11677, %v11925
  %v11927 = vpop.f32.mrf.mxu0
  %v11928 = vadd.f32 %v11679, %v11927
  %11929 = vmatmul.bf16.gmra.mxu0 %v9681
  %v11930 = vpop.f32.mrf.mxu0
  %v11931 = vadd.f32 %v11682, %v11930
  %v11932 = vpop.f32.mrf.mxu0
  %v11933 = vadd.f32 %v11684, %v11932
  %11934 = vmatmul.bf16.gmra.mxu0 %v9690
  %v11935 = vpop.f32.mrf.mxu0
  %v11936 = vadd.f32 %v11687, %v11935
  %v11937 = vpop.f32.mrf.mxu0
  %v11938 = vadd.f32 %v11689, %v11937
  %11939 = vmatmul.bf16.gmra.mxu0 %v9699
  %v11940 = vpop.f32.mrf.mxu0
  %v11941 = vadd.f32 %v11692, %v11940
  %v11942 = vpop.f32.mrf.mxu0
  %v11943 = vadd.f32 %v11694, %v11942
  %11944 = vmatmul.bf16.gmra.mxu0 %v9708
  %v11945 = vpop.f32.mrf.mxu0
  %v11946 = vadd.f32 %v11697, %v11945
  %v11947 = vpop.f32.mrf.mxu0
  %v11948 = vadd.f32 %v11699, %v11947
  %11949 = vmatmul.bf16.gmra.mxu0 %v9717
  %v11950 = vpop.f32.mrf.mxu0
  %v11951 = vadd.f32 %v11702, %v11950
  %v11952 = vpop.f32.mrf.mxu0
  %v11953 = vadd.f32 %v11704, %v11952
  %11954 = vmatmul.bf16.gmra.mxu0 %v9726
  %v11955 = vpop.f32.mrf.mxu0
  %v11956 = vadd.f32 %v11707, %v11955
  %v11957 = vpop.f32.mrf.mxu0
  %v11958 = vadd.f32 %v11709, %v11957
  %11959 = vmatmul.bf16.gmra.mxu0 %v9735
  %v11960 = vpop.f32.mrf.mxu0
  %v11961 = vadd.f32 %v11712, %v11960
  %v11962 = vpop.f32.mrf.mxu0
  %v11963 = vadd.f32 %v11714, %v11962
  %11964 = vmatmul.bf16.gmra.mxu0 %v9744
  %v11965 = vpop.f32.mrf.mxu0
  %v11966 = vadd.f32 %v11717, %v11965
  %v11967 = vpop.f32.mrf.mxu0
  %v11968 = vadd.f32 %v11719, %v11967
  %11969 = vmatmul.bf16.gmra.mxu0 %v9753
  %v11970 = vpop.f32.mrf.mxu0
  %v11971 = vadd.f32 %v11722, %v11970
  %v11972 = vpop.f32.mrf.mxu0
  %v11973 = vadd.f32 %v11724, %v11972
  %11974 = vmatmul.bf16.gmra.mxu0 %v9762
  %v11975 = vpop.f32.mrf.mxu0
  %v11976 = vadd.f32 %v11727, %v11975
  %v11977 = vpop.f32.mrf.mxu0
  %v11978 = vadd.f32 %v11729, %v11977
  %11979 = vmatmul.bf16.gmra.mxu0 %v9771
  %v11980 = vpop.f32.mrf.mxu0
  %v11981 = vadd.f32 %v11732, %v11980
  %v11982 = vpop.f32.mrf.mxu0
  %v11983 = vadd.f32 %v11734, %v11982
  %11984 = vmatmul.bf16.gmra.mxu0 %v9780
  %v11985 = vpop.f32.mrf.mxu0
  %v11986 = vadd.f32 %v11737, %v11985
  %v11987 = vpop.f32.mrf.mxu0
  %v11988 = vadd.f32 %v11739, %v11987
  %11989 = vmatmul.bf16.gmra.mxu0 %v9789
  %v11990 = vpop.f32.mrf.mxu0
  %v11991 = vadd.f32 %v11742, %v11990
  %v11992 = vpop.f32.mrf.mxu0
  %v11993 = vadd.f32 %v11744, %v11992
  %11994 = vmatmul.bf16.gmra.mxu0 %v9798
  %v11995 = vpop.f32.mrf.mxu0
  %v11996 = vadd.f32 %v11747, %v11995
  %v11997 = vpop.f32.mrf.mxu0
  %v11998 = vadd.f32 %v11749, %v11997
  %11999 = vmatmul.bf16.gmra.mxu0 %v9807
  %v12000 = vpop.f32.mrf.mxu0
  %v12001 = vadd.f32 %v11752, %v12000
  %v12002 = vpop.f32.mrf.mxu0
  %v12003 = vadd.f32 %v11754, %v12002
  %12004 = vmatmul.bf16.gmra.mxu0 %v9816
  %v12005 = vpop.f32.mrf.mxu0
  %v12006 = vadd.f32 %v11757, %v12005
  %v12007 = vpop.f32.mrf.mxu0
  %v12008 = vadd.f32 %v11759, %v12007
  %12009 = vmatmul.bf16.gmra.mxu0 %v9825
  %v12010 = vpop.f32.mrf.mxu0
  %v12011 = vadd.f32 %v11762, %v12010
  %v12012 = vpop.f32.mrf.mxu0
  %v12013 = vadd.f32 %v11764, %v12012
  %12014 = vmatmul.bf16.gmra.mxu0 %v9834
  %v12015 = vpop.f32.mrf.mxu0
  %v12016 = vadd.f32 %v11767, %v12015
  %v12017 = vpop.f32.mrf.mxu0
  %v12018 = vadd.f32 %v11769, %v12017
  %12019 = vmatmul.bf16.gmra.mxu0 %v9843
  %v12020 = vpop.f32.mrf.mxu0
  %v12021 = vadd.f32 %v11772, %v12020
  %v12022 = vpop.f32.mrf.mxu0
  %v12023 = vadd.f32 %v11774, %v12022
  %12024 = vmatmul.bf16.gmra.mxu0 %v9852
  %v12025 = vpop.f32.mrf.mxu0
  %v12026 = vadd.f32 %v11777, %v12025
  %v12027 = vpop.f32.mrf.mxu0
  %v12028 = vadd.f32 %v11779, %v12027
  %12029 = vmatmul.bf16.gmra.mxu0 %v9861
  %v12030 = vpop.f32.mrf.mxu0
  %v12031 = vadd.f32 %v11782, %v12030
  %v12032 = vpop.f32.mrf.mxu0
  %v12033 = vadd.f32 %v11784, %v12032
  %12034 = vmatmul.bf16.gmra.mxu0 %v9870
  %v12035 = vpop.f32.mrf.mxu0
  %v12036 = vadd.f32 %v11787, %v12035
  %v12037 = vpop.f32.mrf.mxu0
  %v12038 = vadd.f32 %v11789, %v12037
  %12039 = vmatmul.bf16.gmra.mxu0 %v9879
  %v12040 = vpop.f32.mrf.mxu0
  %v12041 = vadd.f32 %v11792, %v12040
  %v12042 = vpop.f32.mrf.mxu0
  %v12043 = vadd.f32 %v11794, %v12042
  %12044 = vmatmul.bf16.gmra.mxu0 %v9888
  %v12045 = vpop.f32.mrf.mxu0
  %v12046 = vadd.f32 %v11797, %v12045
  %v12047 = vpop.f32.mrf.mxu0
  %v12048 = vadd.f32 %v11799, %v12047
  %12049 = vmatmul.bf16.gmra.mxu0 %v9897
  %v12050 = vpop.f32.mrf.mxu0
  %v12051 = vadd.f32 %v11802, %v12050
  %v12052 = vpop.f32.mrf.mxu0
  %v12053 = vadd.f32 %v11804, %v12052
  %12054 = vmatmul.bf16.gmra.mxu0 %v9906
  %v12055 = vpop.f32.mrf.mxu0
  %v12056 = vadd.f32 %v11807, %v12055
  %v12057 = vpop.f32.mrf.mxu0
  %v12058 = vadd.f32 %v11809, %v12057
  %12059 = vmatmul.bf16.gmra.mxu0 %v9915
  %v12060 = vpop.f32.mrf.mxu0
  %v12061 = vadd.f32 %v11812, %v12060
  %v12062 = vpop.f32.mrf.mxu0
  %v12063 = vadd.f32 %v11814, %v12062
  %12064 = vmatmul.bf16.gmra.mxu0 %v9924
  %v12065 = vpop.f32.mrf.mxu0
  %v12066 = vadd.f32 %v11817, %v12065
  %v12067 = vpop.f32.mrf.mxu0
  %v12068 = vadd.f32 %v11819, %v12067
  %12069 = vmatmul.bf16.gmra.mxu0 %v9933
  %v12070 = vpop.f32.mrf.mxu0
  %v12071 = vadd.f32 %v11822, %v12070
  %v12072 = vpop.f32.mrf.mxu0
  %v12073 = vadd.f32 %v11824, %v12072
  %12074 = vmatmul.bf16.gmra.mxu0 %v9942
  %v12075 = vpop.f32.mrf.mxu0
  %v12076 = vadd.f32 %v11827, %v12075
  %v12077 = vpop.f32.mrf.mxu0
  %v12078 = vadd.f32 %v11829, %v12077
  %12079 = vmatmul.bf16.gmra.mxu0 %v9951
  %v12080 = vpop.f32.mrf.mxu0
  %v12081 = vadd.f32 %v11832, %v12080
  %v12082 = vpop.f32.mrf.mxu0
  %v12083 = vadd.f32 %v11834, %v12082
  %12084 = vmatmul.bf16.gmra.mxu0 %v9960
  %v12085 = vpop.f32.mrf.mxu0
  %v12086 = vadd.f32 %v11837, %v12085
  %v12087 = vpop.f32.mrf.mxu0
  %v12088 = vadd.f32 %v11839, %v12087
  %12089 = vmatmul.bf16.gmra.mxu0 %v9969
  %v12090 = vpop.f32.mrf.mxu0
  %v12091 = vadd.f32 %v11842, %v12090
  %v12092 = vpop.f32.mrf.mxu0
  %v12093 = vadd.f32 %v11844, %v12092
  %12094 = vmatmul.bf16.gmra.mxu0 %v9978
  %v12095 = vpop.f32.mrf.mxu0
  %v12096 = vadd.f32 %v11847, %v12095
  %v12097 = vpop.f32.mrf.mxu0
  %v12098 = vadd.f32 %v11849, %v12097
  %12099 = vmatmul.bf16.gmra.mxu0 %v9987
  %v12100 = vpop.f32.mrf.mxu0
  %v12101 = vadd.f32 %v11852, %v12100
  %v12102 = vpop.f32.mrf.mxu0
  %v12103 = vadd.f32 %v11854, %v12102
  %12104 = vmatmul.bf16.gmra.mxu0 %v9996
  %v12105 = vpop.f32.mrf.mxu0
  %v12106 = vadd.f32 %v11857, %v12105
  %v12107 = vpop.f32.mrf.mxu0
  %v12108 = vadd.f32 %v11859, %v12107
  %12109 = vdwg.mxu0
  %12110 = vmatpush.bf16.msra.mxu0 %v10768
  %12111 = vmatpush.bf16.msra.mxu0 %v10767
  %12112 = vmatpush.bf16.msra.mxu0 %v10766
  %12113 = vmatpush.bf16.msra.mxu0 %v10765
  %12114 = vmatpush.bf16.msra.mxu0 %v10764
  %12115 = vmatpush.bf16.msra.mxu0 %v10763
  %12116 = vmatpush.bf16.msra.mxu0 %v10762
  %12117 = vmatpush.bf16.msra.mxu0 %v10761
  %12118 = vmatmul.bf16.gmra.mxu0 %v9574
  %v12119 = vpop.f32.mrf.mxu0
  %v12120 = vadd.f32 %v11871, %v12119
  %v12121 = vpop.f32.mrf.mxu0
  %v12122 = vadd.f32 %v11873, %v12121
  %12123 = vmatmul.bf16.gmra.mxu0 %v9583
  %v12124 = vpop.f32.mrf.mxu0
  %v12125 = vadd.f32 %v11876, %v12124
  %v12126 = vpop.f32.mrf.mxu0
  %v12127 = vadd.f32 %v11878, %v12126
  %12128 = vmatmul.bf16.gmra.mxu0 %v9592
  %v12129 = vpop.f32.mrf.mxu0
  %v12130 = vadd.f32 %v11881, %v12129
  %v12131 = vpop.f32.mrf.mxu0
  %v12132 = vadd.f32 %v11883, %v12131
  %12133 = vmatmul.bf16.gmra.mxu0 %v9601
  %v12134 = vpop.f32.mrf.mxu0
  %v12135 = vadd.f32 %v11886, %v12134
  %v12136 = vpop.f32.mrf.mxu0
  %v12137 = vadd.f32 %v11888, %v12136
  %12138 = vmatmul.bf16.gmra.mxu0 %v9610
  %v12139 = vpop.f32.mrf.mxu0
  %v12140 = vadd.f32 %v11891, %v12139
  %v12141 = vpop.f32.mrf.mxu0
  %v12142 = vadd.f32 %v11893, %v12141
  %12143 = vmatmul.bf16.gmra.mxu0 %v9619
  %v12144 = vpop.f32.mrf.mxu0
  %v12145 = vadd.f32 %v11896, %v12144
  %v12146 = vpop.f32.mrf.mxu0
  %v12147 = vadd.f32 %v11898, %v12146
  %12148 = vmatmul.bf16.gmra.mxu0 %v9628
  %v12149 = vpop.f32.mrf.mxu0
  %v12150 = vadd.f32 %v11901, %v12149
  %v12151 = vpop.f32.mrf.mxu0
  %v12152 = vadd.f32 %v11903, %v12151
  %12153 = vmatmul.bf16.gmra.mxu0 %v9637
  %v12154 = vpop.f32.mrf.mxu0
  %v12155 = vadd.f32 %v11906, %v12154
  %v12156 = vpop.f32.mrf.mxu0
  %v12157 = vadd.f32 %v11908, %v12156
  %12158 = vmatmul.bf16.gmra.mxu0 %v9646
  %v12159 = vpop.f32.mrf.mxu0
  %v12160 = vadd.f32 %v11911, %v12159
  %v12161 = vpop.f32.mrf.mxu0
  %v12162 = vadd.f32 %v11913, %v12161
  %12163 = vmatmul.bf16.gmra.mxu0 %v9655
  %v12164 = vpop.f32.mrf.mxu0
  %v12165 = vadd.f32 %v11916, %v12164
  %v12166 = vpop.f32.mrf.mxu0
  %v12167 = vadd.f32 %v11918, %v12166
  %12168 = vmatmul.bf16.gmra.mxu0 %v9664
  %v12169 = vpop.f32.mrf.mxu0
  %v12170 = vadd.f32 %v11921, %v12169
  %v12171 = vpop.f32.mrf.mxu0
  %v12172 = vadd.f32 %v11923, %v12171
  %12173 = vmatmul.bf16.gmra.mxu0 %v9673
  %v12174 = vpop.f32.mrf.mxu0
  %v12175 = vadd.f32 %v11926, %v12174
  %v12176 = vpop.f32.mrf.mxu0
  %v12177 = vadd.f32 %v11928, %v12176
  %12178 = vmatmul.bf16.gmra.mxu0 %v9682
  %v12179 = vpop.f32.mrf.mxu0
  %v12180 = vadd.f32 %v11931, %v12179
  %v12181 = vpop.f32.mrf.mxu0
  %v12182 = vadd.f32 %v11933, %v12181
  %12183 = vmatmul.bf16.gmra.mxu0 %v9691
  %v12184 = vpop.f32.mrf.mxu0
  %v12185 = vadd.f32 %v11936, %v12184
  %v12186 = vpop.f32.mrf.mxu0
  %v12187 = vadd.f32 %v11938, %v12186
  %12188 = vmatmul.bf16.gmra.mxu0 %v9700
  %v12189 = vpop.f32.mrf.mxu0
  %v12190 = vadd.f32 %v11941, %v12189
  %v12191 = vpop.f32.mrf.mxu0
  %v12192 = vadd.f32 %v11943, %v12191
  %12193 = vmatmul.bf16.gmra.mxu0 %v9709
  %v12194 = vpop.f32.mrf.mxu0
  %v12195 = vadd.f32 %v11946, %v12194
  %v12196 = vpop.f32.mrf.mxu0
  %v12197 = vadd.f32 %v11948, %v12196
  %12198 = vmatmul.bf16.gmra.mxu0 %v9718
  %v12199 = vpop.f32.mrf.mxu0
  %v12200 = vadd.f32 %v11951, %v12199
  %v12201 = vpop.f32.mrf.mxu0
  %v12202 = vadd.f32 %v11953, %v12201
  %12203 = vmatmul.bf16.gmra.mxu0 %v9727
  %v12204 = vpop.f32.mrf.mxu0
  %v12205 = vadd.f32 %v11956, %v12204
  %v12206 = vpop.f32.mrf.mxu0
  %v12207 = vadd.f32 %v11958, %v12206
  %12208 = vmatmul.bf16.gmra.mxu0 %v9736
  %v12209 = vpop.f32.mrf.mxu0
  %v12210 = vadd.f32 %v11961, %v12209
  %v12211 = vpop.f32.mrf.mxu0
  %v12212 = vadd.f32 %v11963, %v12211
  %12213 = vmatmul.bf16.gmra.mxu0 %v9745
  %v12214 = vpop.f32.mrf.mxu0
  %v12215 = vadd.f32 %v11966, %v12214
  %v12216 = vpop.f32.mrf.mxu0
  %v12217 = vadd.f32 %v11968, %v12216
  %12218 = vmatmul.bf16.gmra.mxu0 %v9754
  %v12219 = vpop.f32.mrf.mxu0
  %v12220 = vadd.f32 %v11971, %v12219
  %v12221 = vpop.f32.mrf.mxu0
  %v12222 = vadd.f32 %v11973, %v12221
  %12223 = vmatmul.bf16.gmra.mxu0 %v9763
  %v12224 = vpop.f32.mrf.mxu0
  %v12225 = vadd.f32 %v11976, %v12224
  %v12226 = vpop.f32.mrf.mxu0
  %v12227 = vadd.f32 %v11978, %v12226
  %12228 = vmatmul.bf16.gmra.mxu0 %v9772
  %v12229 = vpop.f32.mrf.mxu0
  %v12230 = vadd.f32 %v11981, %v12229
  %v12231 = vpop.f32.mrf.mxu0
  %v12232 = vadd.f32 %v11983, %v12231
  %12233 = vmatmul.bf16.gmra.mxu0 %v9781
  %v12234 = vpop.f32.mrf.mxu0
  %v12235 = vadd.f32 %v11986, %v12234
  %v12236 = vpop.f32.mrf.mxu0
  %v12237 = vadd.f32 %v11988, %v12236
  %12238 = vmatmul.bf16.gmra.mxu0 %v9790
  %v12239 = vpop.f32.mrf.mxu0
  %v12240 = vadd.f32 %v11991, %v12239
  %v12241 = vpop.f32.mrf.mxu0
  %v12242 = vadd.f32 %v11993, %v12241
  %12243 = vmatmul.bf16.gmra.mxu0 %v9799
  %v12244 = vpop.f32.mrf.mxu0
  %v12245 = vadd.f32 %v11996, %v12244
  %v12246 = vpop.f32.mrf.mxu0
  %v12247 = vadd.f32 %v11998, %v12246
  %12248 = vmatmul.bf16.gmra.mxu0 %v9808
  %v12249 = vpop.f32.mrf.mxu0
  %v12250 = vadd.f32 %v12001, %v12249
  %v12251 = vpop.f32.mrf.mxu0
  %v12252 = vadd.f32 %v12003, %v12251
  %12253 = vmatmul.bf16.gmra.mxu0 %v9817
  %v12254 = vpop.f32.mrf.mxu0
  %v12255 = vadd.f32 %v12006, %v12254
  %v12256 = vpop.f32.mrf.mxu0
  %v12257 = vadd.f32 %v12008, %v12256
  %12258 = vmatmul.bf16.gmra.mxu0 %v9826
  %v12259 = vpop.f32.mrf.mxu0
  %v12260 = vadd.f32 %v12011, %v12259
  %v12261 = vpop.f32.mrf.mxu0
  %v12262 = vadd.f32 %v12013, %v12261
  %12263 = vmatmul.bf16.gmra.mxu0 %v9835
  %v12264 = vpop.f32.mrf.mxu0
  %v12265 = vadd.f32 %v12016, %v12264
  %v12266 = vpop.f32.mrf.mxu0
  %v12267 = vadd.f32 %v12018, %v12266
  %12268 = vmatmul.bf16.gmra.mxu0 %v9844
  %v12269 = vpop.f32.mrf.mxu0
  %v12270 = vadd.f32 %v12021, %v12269
  %v12271 = vpop.f32.mrf.mxu0
  %v12272 = vadd.f32 %v12023, %v12271
  %12273 = vmatmul.bf16.gmra.mxu0 %v9853
  %v12274 = vpop.f32.mrf.mxu0
  %v12275 = vadd.f32 %v12026, %v12274
  %v12276 = vpop.f32.mrf.mxu0
  %v12277 = vadd.f32 %v12028, %v12276
  %12278 = vmatmul.bf16.gmra.mxu0 %v9862
  %v12279 = vpop.f32.mrf.mxu0
  %v12280 = vadd.f32 %v12031, %v12279
  %v12281 = vpop.f32.mrf.mxu0
  %v12282 = vadd.f32 %v12033, %v12281
  %12283 = vmatmul.bf16.gmra.mxu0 %v9871
  %v12284 = vpop.f32.mrf.mxu0
  %v12285 = vadd.f32 %v12036, %v12284
  %v12286 = vpop.f32.mrf.mxu0
  %v12287 = vadd.f32 %v12038, %v12286
  %12288 = vmatmul.bf16.gmra.mxu0 %v9880
  %v12289 = vpop.f32.mrf.mxu0
  %v12290 = vadd.f32 %v12041, %v12289
  %v12291 = vpop.f32.mrf.mxu0
  %v12292 = vadd.f32 %v12043, %v12291
  %12293 = vmatmul.bf16.gmra.mxu0 %v9889
  %v12294 = vpop.f32.mrf.mxu0
  %v12295 = vadd.f32 %v12046, %v12294
  %v12296 = vpop.f32.mrf.mxu0
  %v12297 = vadd.f32 %v12048, %v12296
  %12298 = vmatmul.bf16.gmra.mxu0 %v9898
  %v12299 = vpop.f32.mrf.mxu0
  %v12300 = vadd.f32 %v12051, %v12299
  %v12301 = vpop.f32.mrf.mxu0
  %v12302 = vadd.f32 %v12053, %v12301
  %12303 = vmatmul.bf16.gmra.mxu0 %v9907
  %v12304 = vpop.f32.mrf.mxu0
  %v12305 = vadd.f32 %v12056, %v12304
  %v12306 = vpop.f32.mrf.mxu0
  %v12307 = vadd.f32 %v12058, %v12306
  %12308 = vmatmul.bf16.gmra.mxu0 %v9916
  %v12309 = vpop.f32.mrf.mxu0
  %v12310 = vadd.f32 %v12061, %v12309
  %v12311 = vpop.f32.mrf.mxu0
  %v12312 = vadd.f32 %v12063, %v12311
  %12313 = vmatmul.bf16.gmra.mxu0 %v9925
  %v12314 = vpop.f32.mrf.mxu0
  %v12315 = vadd.f32 %v12066, %v12314
  %v12316 = vpop.f32.mrf.mxu0
  %v12317 = vadd.f32 %v12068, %v12316
  %12318 = vmatmul.bf16.gmra.mxu0 %v9934
  %v12319 = vpop.f32.mrf.mxu0
  %v12320 = vadd.f32 %v12071, %v12319
  %v12321 = vpop.f32.mrf.mxu0
  %v12322 = vadd.f32 %v12073, %v12321
  %12323 = vmatmul.bf16.gmra.mxu0 %v9943
  %v12324 = vpop.f32.mrf.mxu0
  %v12325 = vadd.f32 %v12076, %v12324
  %v12326 = vpop.f32.mrf.mxu0
  %v12327 = vadd.f32 %v12078, %v12326
  %12328 = vmatmul.bf16.gmra.mxu0 %v9952
  %v12329 = vpop.f32.mrf.mxu0
  %v12330 = vadd.f32 %v12081, %v12329
  %v12331 = vpop.f32.mrf.mxu0
  %v12332 = vadd.f32 %v12083, %v12331
  %12333 = vmatmul.bf16.gmra.mxu0 %v9961
  %v12334 = vpop.f32.mrf.mxu0
  %v12335 = vadd.f32 %v12086, %v12334
  %v12336 = vpop.f32.mrf.mxu0
  %v12337 = vadd.f32 %v12088, %v12336
  %12338 = vmatmul.bf16.gmra.mxu0 %v9970
  %v12339 = vpop.f32.mrf.mxu0
  %v12340 = vadd.f32 %v12091, %v12339
  %v12341 = vpop.f32.mrf.mxu0
  %v12342 = vadd.f32 %v12093, %v12341
  %12343 = vmatmul.bf16.gmra.mxu0 %v9979
  %v12344 = vpop.f32.mrf.mxu0
  %v12345 = vadd.f32 %v12096, %v12344
  %v12346 = vpop.f32.mrf.mxu0
  %v12347 = vadd.f32 %v12098, %v12346
  %12348 = vmatmul.bf16.gmra.mxu0 %v9988
  %v12349 = vpop.f32.mrf.mxu0
  %v12350 = vadd.f32 %v12101, %v12349
  %v12351 = vpop.f32.mrf.mxu0
  %v12352 = vadd.f32 %v12103, %v12351
  %12353 = vmatmul.bf16.gmra.mxu0 %v9997
  %v12354 = vpop.f32.mrf.mxu0
  %v12355 = vadd.f32 %v12106, %v12354
  %v12356 = vpop.f32.mrf.mxu0
  %v12357 = vadd.f32 %v12108, %v12356
  %12358 = vdwg.mxu0
  %12359 = vmatpush.bf16.msra.mxu0 %v10776
  %12360 = vmatpush.bf16.msra.mxu0 %v10775
  %12361 = vmatpush.bf16.msra.mxu0 %v10774
  %12362 = vmatpush.bf16.msra.mxu0 %v10773
  %12363 = vmatpush.bf16.msra.mxu0 %v10772
  %12364 = vmatpush.bf16.msra.mxu0 %v10771
  %12365 = vmatpush.bf16.msra.mxu0 %v10770
  %12366 = vmatpush.bf16.msra.mxu0 %v10769
  %12367 = vmatmul.bf16.gmra.mxu0 %v9575
  %v12368 = vpop.f32.mrf.mxu0
  %v12369 = vadd.f32 %v12120, %v12368
  %v12370 = vpop.f32.mrf.mxu0
  %v12371 = vadd.f32 %v12122, %v12370
  %12372 = vmatmul.bf16.gmra.mxu0 %v9584
  %v12373 = vpop.f32.mrf.mxu0
  %v12374 = vadd.f32 %v12125, %v12373
  %v12375 = vpop.f32.mrf.mxu0
  %v12376 = vadd.f32 %v12127, %v12375
  %12377 = vmatmul.bf16.gmra.mxu0 %v9593
  %v12378 = vpop.f32.mrf.mxu0
  %v12379 = vadd.f32 %v12130, %v12378
  %v12380 = vpop.f32.mrf.mxu0
  %v12381 = vadd.f32 %v12132, %v12380
  %12382 = vmatmul.bf16.gmra.mxu0 %v9602
  %v12383 = vpop.f32.mrf.mxu0
  %v12384 = vadd.f32 %v12135, %v12383
  %v12385 = vpop.f32.mrf.mxu0
  %v12386 = vadd.f32 %v12137, %v12385
  %12387 = vmatmul.bf16.gmra.mxu0 %v9611
  %v12388 = vpop.f32.mrf.mxu0
  %v12389 = vadd.f32 %v12140, %v12388
  %v12390 = vpop.f32.mrf.mxu0
  %v12391 = vadd.f32 %v12142, %v12390
  %12392 = vmatmul.bf16.gmra.mxu0 %v9620
  %v12393 = vpop.f32.mrf.mxu0
  %v12394 = vadd.f32 %v12145, %v12393
  %v12395 = vpop.f32.mrf.mxu0
  %v12396 = vadd.f32 %v12147, %v12395
  %12397 = vmatmul.bf16.gmra.mxu0 %v9629
  %v12398 = vpop.f32.mrf.mxu0
  %v12399 = vadd.f32 %v12150, %v12398
  %v12400 = vpop.f32.mrf.mxu0
  %v12401 = vadd.f32 %v12152, %v12400
  %12402 = vmatmul.bf16.gmra.mxu0 %v9638
  %v12403 = vpop.f32.mrf.mxu0
  %v12404 = vadd.f32 %v12155, %v12403
  %v12405 = vpop.f32.mrf.mxu0
  %v12406 = vadd.f32 %v12157, %v12405
  %12407 = vmatmul.bf16.gmra.mxu0 %v9647
  %v12408 = vpop.f32.mrf.mxu0
  %v12409 = vadd.f32 %v12160, %v12408
  %v12410 = vpop.f32.mrf.mxu0
  %v12411 = vadd.f32 %v12162, %v12410
  %12412 = vmatmul.bf16.gmra.mxu0 %v9656
  %v12413 = vpop.f32.mrf.mxu0
  %v12414 = vadd.f32 %v12165, %v12413
  %v12415 = vpop.f32.mrf.mxu0
  %v12416 = vadd.f32 %v12167, %v12415
  %12417 = vmatmul.bf16.gmra.mxu0 %v9665
  %v12418 = vpop.f32.mrf.mxu0
  %v12419 = vadd.f32 %v12170, %v12418
  %v12420 = vpop.f32.mrf.mxu0
  %v12421 = vadd.f32 %v12172, %v12420
  %12422 = vmatmul.bf16.gmra.mxu0 %v9674
  %v12423 = vpop.f32.mrf.mxu0
  %v12424 = vadd.f32 %v12175, %v12423
  %v12425 = vpop.f32.mrf.mxu0
  %v12426 = vadd.f32 %v12177, %v12425
  %12427 = vmatmul.bf16.gmra.mxu0 %v9683
  %v12428 = vpop.f32.mrf.mxu0
  %v12429 = vadd.f32 %v12180, %v12428
  %v12430 = vpop.f32.mrf.mxu0
  %v12431 = vadd.f32 %v12182, %v12430
  %12432 = vmatmul.bf16.gmra.mxu0 %v9692
  %v12433 = vpop.f32.mrf.mxu0
  %v12434 = vadd.f32 %v12185, %v12433
  %v12435 = vpop.f32.mrf.mxu0
  %v12436 = vadd.f32 %v12187, %v12435
  %12437 = vmatmul.bf16.gmra.mxu0 %v9701
  %v12438 = vpop.f32.mrf.mxu0
  %v12439 = vadd.f32 %v12190, %v12438
  %v12440 = vpop.f32.mrf.mxu0
  %v12441 = vadd.f32 %v12192, %v12440
  %12442 = vmatmul.bf16.gmra.mxu0 %v9710
  %v12443 = vpop.f32.mrf.mxu0
  %v12444 = vadd.f32 %v12195, %v12443
  %v12445 = vpop.f32.mrf.mxu0
  %v12446 = vadd.f32 %v12197, %v12445
  %12447 = vmatmul.bf16.gmra.mxu0 %v9719
  %v12448 = vpop.f32.mrf.mxu0
  %v12449 = vadd.f32 %v12200, %v12448
  %v12450 = vpop.f32.mrf.mxu0
  %v12451 = vadd.f32 %v12202, %v12450
  %12452 = vmatmul.bf16.gmra.mxu0 %v9728
  %v12453 = vpop.f32.mrf.mxu0
  %v12454 = vadd.f32 %v12205, %v12453
  %v12455 = vpop.f32.mrf.mxu0
  %v12456 = vadd.f32 %v12207, %v12455
  %12457 = vmatmul.bf16.gmra.mxu0 %v9737
  %v12458 = vpop.f32.mrf.mxu0
  %v12459 = vadd.f32 %v12210, %v12458
  %v12460 = vpop.f32.mrf.mxu0
  %v12461 = vadd.f32 %v12212, %v12460
  %12462 = vmatmul.bf16.gmra.mxu0 %v9746
  %v12463 = vpop.f32.mrf.mxu0
  %v12464 = vadd.f32 %v12215, %v12463
  %v12465 = vpop.f32.mrf.mxu0
  %v12466 = vadd.f32 %v12217, %v12465
  %12467 = vmatmul.bf16.gmra.mxu0 %v9755
  %v12468 = vpop.f32.mrf.mxu0
  %v12469 = vadd.f32 %v12220, %v12468
  %v12470 = vpop.f32.mrf.mxu0
  %v12471 = vadd.f32 %v12222, %v12470
  %12472 = vmatmul.bf16.gmra.mxu0 %v9764
  %v12473 = vpop.f32.mrf.mxu0
  %v12474 = vadd.f32 %v12225, %v12473
  %v12475 = vpop.f32.mrf.mxu0
  %v12476 = vadd.f32 %v12227, %v12475
  %12477 = vmatmul.bf16.gmra.mxu0 %v9773
  %v12478 = vpop.f32.mrf.mxu0
  %v12479 = vadd.f32 %v12230, %v12478
  %v12480 = vpop.f32.mrf.mxu0
  %v12481 = vadd.f32 %v12232, %v12480
  %12482 = vmatmul.bf16.gmra.mxu0 %v9782
  %v12483 = vpop.f32.mrf.mxu0
  %v12484 = vadd.f32 %v12235, %v12483
  %v12485 = vpop.f32.mrf.mxu0
  %v12486 = vadd.f32 %v12237, %v12485
  %12487 = vmatmul.bf16.gmra.mxu0 %v9791
  %v12488 = vpop.f32.mrf.mxu0
  %v12489 = vadd.f32 %v12240, %v12488
  %v12490 = vpop.f32.mrf.mxu0
  %v12491 = vadd.f32 %v12242, %v12490
  %12492 = vmatmul.bf16.gmra.mxu0 %v9800
  %v12493 = vpop.f32.mrf.mxu0
  %v12494 = vadd.f32 %v12245, %v12493
  %v12495 = vpop.f32.mrf.mxu0
  %v12496 = vadd.f32 %v12247, %v12495
  %12497 = vmatmul.bf16.gmra.mxu0 %v9809
  %v12498 = vpop.f32.mrf.mxu0
  %v12499 = vadd.f32 %v12250, %v12498
  %v12500 = vpop.f32.mrf.mxu0
  %v12501 = vadd.f32 %v12252, %v12500
  %12502 = vmatmul.bf16.gmra.mxu0 %v9818
  %v12503 = vpop.f32.mrf.mxu0
  %v12504 = vadd.f32 %v12255, %v12503
  %v12505 = vpop.f32.mrf.mxu0
  %v12506 = vadd.f32 %v12257, %v12505
  %12507 = vmatmul.bf16.gmra.mxu0 %v9827
  %v12508 = vpop.f32.mrf.mxu0
  %v12509 = vadd.f32 %v12260, %v12508
  %v12510 = vpop.f32.mrf.mxu0
  %v12511 = vadd.f32 %v12262, %v12510
  %12512 = vmatmul.bf16.gmra.mxu0 %v9836
  %v12513 = vpop.f32.mrf.mxu0
  %v12514 = vadd.f32 %v12265, %v12513
  %v12515 = vpop.f32.mrf.mxu0
  %v12516 = vadd.f32 %v12267, %v12515
  %12517 = vmatmul.bf16.gmra.mxu0 %v9845
  %v12518 = vpop.f32.mrf.mxu0
  %v12519 = vadd.f32 %v12270, %v12518
  %v12520 = vpop.f32.mrf.mxu0
  %v12521 = vadd.f32 %v12272, %v12520
  %12522 = vmatmul.bf16.gmra.mxu0 %v9854
  %v12523 = vpop.f32.mrf.mxu0
  %v12524 = vadd.f32 %v12275, %v12523
  %v12525 = vpop.f32.mrf.mxu0
  %v12526 = vadd.f32 %v12277, %v12525
  %12527 = vmatmul.bf16.gmra.mxu0 %v9863
  %v12528 = vpop.f32.mrf.mxu0
  %v12529 = vadd.f32 %v12280, %v12528
  %v12530 = vpop.f32.mrf.mxu0
  %v12531 = vadd.f32 %v12282, %v12530
  %12532 = vmatmul.bf16.gmra.mxu0 %v9872
  %v12533 = vpop.f32.mrf.mxu0
  %v12534 = vadd.f32 %v12285, %v12533
  %v12535 = vpop.f32.mrf.mxu0
  %v12536 = vadd.f32 %v12287, %v12535
  %12537 = vmatmul.bf16.gmra.mxu0 %v9881
  %v12538 = vpop.f32.mrf.mxu0
  %v12539 = vadd.f32 %v12290, %v12538
  %v12540 = vpop.f32.mrf.mxu0
  %v12541 = vadd.f32 %v12292, %v12540
  %12542 = vmatmul.bf16.gmra.mxu0 %v9890
  %v12543 = vpop.f32.mrf.mxu0
  %v12544 = vadd.f32 %v12295, %v12543
  %v12545 = vpop.f32.mrf.mxu0
  %v12546 = vadd.f32 %v12297, %v12545
  %12547 = vmatmul.bf16.gmra.mxu0 %v9899
  %v12548 = vpop.f32.mrf.mxu0
  %v12549 = vadd.f32 %v12300, %v12548
  %v12550 = vpop.f32.mrf.mxu0
  %v12551 = vadd.f32 %v12302, %v12550
  %12552 = vmatmul.bf16.gmra.mxu0 %v9908
  %v12553 = vpop.f32.mrf.mxu0
  %v12554 = vadd.f32 %v12305, %v12553
  %v12555 = vpop.f32.mrf.mxu0
  %v12556 = vadd.f32 %v12307, %v12555
  %12557 = vmatmul.bf16.gmra.mxu0 %v9917
  %v12558 = vpop.f32.mrf.mxu0
  %v12559 = vadd.f32 %v12310, %v12558
  %v12560 = vpop.f32.mrf.mxu0
  %v12561 = vadd.f32 %v12312, %v12560
  %12562 = vmatmul.bf16.gmra.mxu0 %v9926
  %v12563 = vpop.f32.mrf.mxu0
  %v12564 = vadd.f32 %v12315, %v12563
  %v12565 = vpop.f32.mrf.mxu0
  %v12566 = vadd.f32 %v12317, %v12565
  %12567 = vmatmul.bf16.gmra.mxu0 %v9935
  %v12568 = vpop.f32.mrf.mxu0
  %v12569 = vadd.f32 %v12320, %v12568
  %v12570 = vpop.f32.mrf.mxu0
  %v12571 = vadd.f32 %v12322, %v12570
  %12572 = vmatmul.bf16.gmra.mxu0 %v9944
  %v12573 = vpop.f32.mrf.mxu0
  %v12574 = vadd.f32 %v12325, %v12573
  %v12575 = vpop.f32.mrf.mxu0
  %v12576 = vadd.f32 %v12327, %v12575
  %12577 = vmatmul.bf16.gmra.mxu0 %v9953
  %v12578 = vpop.f32.mrf.mxu0
  %v12579 = vadd.f32 %v12330, %v12578
  %v12580 = vpop.f32.mrf.mxu0
  %v12581 = vadd.f32 %v12332, %v12580
  %12582 = vmatmul.bf16.gmra.mxu0 %v9962
  %v12583 = vpop.f32.mrf.mxu0
  %v12584 = vadd.f32 %v12335, %v12583
  %v12585 = vpop.f32.mrf.mxu0
  %v12586 = vadd.f32 %v12337, %v12585
  %12587 = vmatmul.bf16.gmra.mxu0 %v9971
  %v12588 = vpop.f32.mrf.mxu0
  %v12589 = vadd.f32 %v12340, %v12588
  %v12590 = vpop.f32.mrf.mxu0
  %v12591 = vadd.f32 %v12342, %v12590
  %12592 = vmatmul.bf16.gmra.mxu0 %v9980
  %v12593 = vpop.f32.mrf.mxu0
  %v12594 = vadd.f32 %v12345, %v12593
  %v12595 = vpop.f32.mrf.mxu0
  %v12596 = vadd.f32 %v12347, %v12595
  %12597 = vmatmul.bf16.gmra.mxu0 %v9989
  %v12598 = vpop.f32.mrf.mxu0
  %v12599 = vadd.f32 %v12350, %v12598
  %v12600 = vpop.f32.mrf.mxu0
  %v12601 = vadd.f32 %v12352, %v12600
  %12602 = vmatmul.bf16.gmra.mxu0 %v9998
  %v12603 = vpop.f32.mrf.mxu0
  %v12604 = vadd.f32 %v12355, %v12603
  %v12605 = vpop.f32.mrf.mxu0
  %v12606 = vadd.f32 %v12357, %v12605
  %12607 = vdwg.mxu0
  %12608 = vmatpush.bf16.msra.mxu0 %v10784
  %12609 = vmatpush.bf16.msra.mxu0 %v10783
  %12610 = vmatpush.bf16.msra.mxu0 %v10782
  %12611 = vmatpush.bf16.msra.mxu0 %v10781
  %12612 = vmatpush.bf16.msra.mxu0 %v10780
  %12613 = vmatpush.bf16.msra.mxu0 %v10779
  %12614 = vmatpush.bf16.msra.mxu0 %v10778
  %12615 = vmatpush.bf16.msra.mxu0 %v10777
  %12616 = vmatmul.bf16.gmra.mxu0 %v9576
  %v12617 = vpop.f32.mrf.mxu0
  %v12618 = vadd.f32 %v12369, %v12617
  %v12619 = vpop.f32.mrf.mxu0
  %v12620 = vadd.f32 %v12371, %v12619
  %12621 = vmatmul.bf16.gmra.mxu0 %v9585
  %v12622 = vpop.f32.mrf.mxu0
  %v12623 = vadd.f32 %v12374, %v12622
  %v12624 = vpop.f32.mrf.mxu0
  %v12625 = vadd.f32 %v12376, %v12624
  %12626 = vmatmul.bf16.gmra.mxu0 %v9594
  %v12627 = vpop.f32.mrf.mxu0
  %v12628 = vadd.f32 %v12379, %v12627
  %v12629 = vpop.f32.mrf.mxu0
  %v12630 = vadd.f32 %v12381, %v12629
  %12631 = vmatmul.bf16.gmra.mxu0 %v9603
  %v12632 = vpop.f32.mrf.mxu0
  %v12633 = vadd.f32 %v12384, %v12632
  %v12634 = vpop.f32.mrf.mxu0
  %v12635 = vadd.f32 %v12386, %v12634
  %12636 = vmatmul.bf16.gmra.mxu0 %v9612
  %v12637 = vpop.f32.mrf.mxu0
  %v12638 = vadd.f32 %v12389, %v12637
  %v12639 = vpop.f32.mrf.mxu0
  %v12640 = vadd.f32 %v12391, %v12639
  %12641 = vmatmul.bf16.gmra.mxu0 %v9621
  %v12642 = vpop.f32.mrf.mxu0
  %v12643 = vadd.f32 %v12394, %v12642
  %v12644 = vpop.f32.mrf.mxu0
  %v12645 = vadd.f32 %v12396, %v12644
  %12646 = vmatmul.bf16.gmra.mxu0 %v9630
  %v12647 = vpop.f32.mrf.mxu0
  %v12648 = vadd.f32 %v12399, %v12647
  %v12649 = vpop.f32.mrf.mxu0
  %v12650 = vadd.f32 %v12401, %v12649
  %12651 = vmatmul.bf16.gmra.mxu0 %v9639
  %v12652 = vpop.f32.mrf.mxu0
  %v12653 = vadd.f32 %v12404, %v12652
  %v12654 = vpop.f32.mrf.mxu0
  %v12655 = vadd.f32 %v12406, %v12654
  %12656 = vmatmul.bf16.gmra.mxu0 %v9648
  %v12657 = vpop.f32.mrf.mxu0
  %v12658 = vadd.f32 %v12409, %v12657
  %v12659 = vpop.f32.mrf.mxu0
  %v12660 = vadd.f32 %v12411, %v12659
  %12661 = vmatmul.bf16.gmra.mxu0 %v9657
  %v12662 = vpop.f32.mrf.mxu0
  %v12663 = vadd.f32 %v12414, %v12662
  %v12664 = vpop.f32.mrf.mxu0
  %v12665 = vadd.f32 %v12416, %v12664
  %12666 = vmatmul.bf16.gmra.mxu0 %v9666
  %v12667 = vpop.f32.mrf.mxu0
  %v12668 = vadd.f32 %v12419, %v12667
  %v12669 = vpop.f32.mrf.mxu0
  %v12670 = vadd.f32 %v12421, %v12669
  %12671 = vmatmul.bf16.gmra.mxu0 %v9675
  %v12672 = vpop.f32.mrf.mxu0
  %v12673 = vadd.f32 %v12424, %v12672
  %v12674 = vpop.f32.mrf.mxu0
  %v12675 = vadd.f32 %v12426, %v12674
  %12676 = vmatmul.bf16.gmra.mxu0 %v9684
  %v12677 = vpop.f32.mrf.mxu0
  %v12678 = vadd.f32 %v12429, %v12677
  %v12679 = vpop.f32.mrf.mxu0
  %v12680 = vadd.f32 %v12431, %v12679
  %12681 = vmatmul.bf16.gmra.mxu0 %v9693
  %v12682 = vpop.f32.mrf.mxu0
  %v12683 = vadd.f32 %v12434, %v12682
  %v12684 = vpop.f32.mrf.mxu0
  %v12685 = vadd.f32 %v12436, %v12684
  %12686 = vmatmul.bf16.gmra.mxu0 %v9702
  %v12687 = vpop.f32.mrf.mxu0
  %v12688 = vadd.f32 %v12439, %v12687
  %v12689 = vpop.f32.mrf.mxu0
  %v12690 = vadd.f32 %v12441, %v12689
  %12691 = vmatmul.bf16.gmra.mxu0 %v9711
  %v12692 = vpop.f32.mrf.mxu0
  %v12693 = vadd.f32 %v12444, %v12692
  %v12694 = vpop.f32.mrf.mxu0
  %v12695 = vadd.f32 %v12446, %v12694
  %12696 = vmatmul.bf16.gmra.mxu0 %v9720
  %v12697 = vpop.f32.mrf.mxu0
  %v12698 = vadd.f32 %v12449, %v12697
  %v12699 = vpop.f32.mrf.mxu0
  %v12700 = vadd.f32 %v12451, %v12699
  %12701 = vmatmul.bf16.gmra.mxu0 %v9729
  %v12702 = vpop.f32.mrf.mxu0
  %v12703 = vadd.f32 %v12454, %v12702
  %v12704 = vpop.f32.mrf.mxu0
  %v12705 = vadd.f32 %v12456, %v12704
  %12706 = vmatmul.bf16.gmra.mxu0 %v9738
  %v12707 = vpop.f32.mrf.mxu0
  %v12708 = vadd.f32 %v12459, %v12707
  %v12709 = vpop.f32.mrf.mxu0
  %v12710 = vadd.f32 %v12461, %v12709
  %12711 = vmatmul.bf16.gmra.mxu0 %v9747
  %v12712 = vpop.f32.mrf.mxu0
  %v12713 = vadd.f32 %v12464, %v12712
  %v12714 = vpop.f32.mrf.mxu0
  %v12715 = vadd.f32 %v12466, %v12714
  %12716 = vmatmul.bf16.gmra.mxu0 %v9756
  %v12717 = vpop.f32.mrf.mxu0
  %v12718 = vadd.f32 %v12469, %v12717
  %v12719 = vpop.f32.mrf.mxu0
  %v12720 = vadd.f32 %v12471, %v12719
  %12721 = vmatmul.bf16.gmra.mxu0 %v9765
  %v12722 = vpop.f32.mrf.mxu0
  %v12723 = vadd.f32 %v12474, %v12722
  %v12724 = vpop.f32.mrf.mxu0
  %v12725 = vadd.f32 %v12476, %v12724
  %12726 = vmatmul.bf16.gmra.mxu0 %v9774
  %v12727 = vpop.f32.mrf.mxu0
  %v12728 = vadd.f32 %v12479, %v12727
  %v12729 = vpop.f32.mrf.mxu0
  %v12730 = vadd.f32 %v12481, %v12729
  %12731 = vmatmul.bf16.gmra.mxu0 %v9783
  %v12732 = vpop.f32.mrf.mxu0
  %v12733 = vadd.f32 %v12484, %v12732
  %v12734 = vpop.f32.mrf.mxu0
  %v12735 = vadd.f32 %v12486, %v12734
  %12736 = vmatmul.bf16.gmra.mxu0 %v9792
  %v12737 = vpop.f32.mrf.mxu0
  %v12738 = vadd.f32 %v12489, %v12737
  %v12739 = vpop.f32.mrf.mxu0
  %v12740 = vadd.f32 %v12491, %v12739
  %12741 = vmatmul.bf16.gmra.mxu0 %v9801
  %v12742 = vpop.f32.mrf.mxu0
  %v12743 = vadd.f32 %v12494, %v12742
  %v12744 = vpop.f32.mrf.mxu0
  %v12745 = vadd.f32 %v12496, %v12744
  %12746 = vmatmul.bf16.gmra.mxu0 %v9810
  %v12747 = vpop.f32.mrf.mxu0
  %v12748 = vadd.f32 %v12499, %v12747
  %v12749 = vpop.f32.mrf.mxu0
  %v12750 = vadd.f32 %v12501, %v12749
  %12751 = vmatmul.bf16.gmra.mxu0 %v9819
  %v12752 = vpop.f32.mrf.mxu0
  %v12753 = vadd.f32 %v12504, %v12752
  %v12754 = vpop.f32.mrf.mxu0
  %v12755 = vadd.f32 %v12506, %v12754
  %12756 = vmatmul.bf16.gmra.mxu0 %v9828
  %v12757 = vpop.f32.mrf.mxu0
  %v12758 = vadd.f32 %v12509, %v12757
  %v12759 = vpop.f32.mrf.mxu0
  %v12760 = vadd.f32 %v12511, %v12759
  %12761 = vmatmul.bf16.gmra.mxu0 %v9837
  %v12762 = vpop.f32.mrf.mxu0
  %v12763 = vadd.f32 %v12514, %v12762
  %v12764 = vpop.f32.mrf.mxu0
  %v12765 = vadd.f32 %v12516, %v12764
  %12766 = vmatmul.bf16.gmra.mxu0 %v9846
  %v12767 = vpop.f32.mrf.mxu0
  %v12768 = vadd.f32 %v12519, %v12767
  %v12769 = vpop.f32.mrf.mxu0
  %v12770 = vadd.f32 %v12521, %v12769
  %12771 = vmatmul.bf16.gmra.mxu0 %v9855
  %v12772 = vpop.f32.mrf.mxu0
  %v12773 = vadd.f32 %v12524, %v12772
  %v12774 = vpop.f32.mrf.mxu0
  %v12775 = vadd.f32 %v12526, %v12774
  %12776 = vmatmul.bf16.gmra.mxu0 %v9864
  %v12777 = vpop.f32.mrf.mxu0
  %v12778 = vadd.f32 %v12529, %v12777
  %v12779 = vpop.f32.mrf.mxu0
  %v12780 = vadd.f32 %v12531, %v12779
  %12781 = vmatmul.bf16.gmra.mxu0 %v9873
  %v12782 = vpop.f32.mrf.mxu0
  %v12783 = vadd.f32 %v12534, %v12782
  %v12784 = vpop.f32.mrf.mxu0
  %v12785 = vadd.f32 %v12536, %v12784
  %12786 = vmatmul.bf16.gmra.mxu0 %v9882
  %v12787 = vpop.f32.mrf.mxu0
  %v12788 = vadd.f32 %v12539, %v12787
  %v12789 = vpop.f32.mrf.mxu0
  %v12790 = vadd.f32 %v12541, %v12789
  %12791 = vmatmul.bf16.gmra.mxu0 %v9891
  %v12792 = vpop.f32.mrf.mxu0
  %v12793 = vadd.f32 %v12544, %v12792
  %v12794 = vpop.f32.mrf.mxu0
  %v12795 = vadd.f32 %v12546, %v12794
  %12796 = vmatmul.bf16.gmra.mxu0 %v9900
  %v12797 = vpop.f32.mrf.mxu0
  %v12798 = vadd.f32 %v12549, %v12797
  %v12799 = vpop.f32.mrf.mxu0
  %v12800 = vadd.f32 %v12551, %v12799
  %12801 = vmatmul.bf16.gmra.mxu0 %v9909
  %v12802 = vpop.f32.mrf.mxu0
  %v12803 = vadd.f32 %v12554, %v12802
  %v12804 = vpop.f32.mrf.mxu0
  %v12805 = vadd.f32 %v12556, %v12804
  %12806 = vmatmul.bf16.gmra.mxu0 %v9918
  %v12807 = vpop.f32.mrf.mxu0
  %v12808 = vadd.f32 %v12559, %v12807
  %v12809 = vpop.f32.mrf.mxu0
  %v12810 = vadd.f32 %v12561, %v12809
  %12811 = vmatmul.bf16.gmra.mxu0 %v9927
  %v12812 = vpop.f32.mrf.mxu0
  %v12813 = vadd.f32 %v12564, %v12812
  %v12814 = vpop.f32.mrf.mxu0
  %v12815 = vadd.f32 %v12566, %v12814
  %12816 = vmatmul.bf16.gmra.mxu0 %v9936
  %v12817 = vpop.f32.mrf.mxu0
  %v12818 = vadd.f32 %v12569, %v12817
  %v12819 = vpop.f32.mrf.mxu0
  %v12820 = vadd.f32 %v12571, %v12819
  %12821 = vmatmul.bf16.gmra.mxu0 %v9945
  %v12822 = vpop.f32.mrf.mxu0
  %v12823 = vadd.f32 %v12574, %v12822
  %v12824 = vpop.f32.mrf.mxu0
  %v12825 = vadd.f32 %v12576, %v12824
  %12826 = vmatmul.bf16.gmra.mxu0 %v9954
  %v12827 = vpop.f32.mrf.mxu0
  %v12828 = vadd.f32 %v12579, %v12827
  %v12829 = vpop.f32.mrf.mxu0
  %v12830 = vadd.f32 %v12581, %v12829
  %12831 = vmatmul.bf16.gmra.mxu0 %v9963
  %v12832 = vpop.f32.mrf.mxu0
  %v12833 = vadd.f32 %v12584, %v12832
  %v12834 = vpop.f32.mrf.mxu0
  %v12835 = vadd.f32 %v12586, %v12834
  %12836 = vmatmul.bf16.gmra.mxu0 %v9972
  %v12837 = vpop.f32.mrf.mxu0
  %v12838 = vadd.f32 %v12589, %v12837
  %v12839 = vpop.f32.mrf.mxu0
  %v12840 = vadd.f32 %v12591, %v12839
  %12841 = vmatmul.bf16.gmra.mxu0 %v9981
  %v12842 = vpop.f32.mrf.mxu0
  %v12843 = vadd.f32 %v12594, %v12842
  %v12844 = vpop.f32.mrf.mxu0
  %v12845 = vadd.f32 %v12596, %v12844
  %12846 = vmatmul.bf16.gmra.mxu0 %v9990
  %v12847 = vpop.f32.mrf.mxu0
  %v12848 = vadd.f32 %v12599, %v12847
  %v12849 = vpop.f32.mrf.mxu0
  %v12850 = vadd.f32 %v12601, %v12849
  %12851 = vmatmul.bf16.gmra.mxu0 %v9999
  %v12852 = vpop.f32.mrf.mxu0
  %v12853 = vadd.f32 %v12604, %v12852
  %v12854 = vpop.f32.mrf.mxu0
  %v12855 = vadd.f32 %v12606, %v12854
  %12856 = vdwg.mxu0
  %12857 = vmatpush.bf16.msra.mxu0 %v10792
  %12858 = vmatpush.bf16.msra.mxu0 %v10791
  %12859 = vmatpush.bf16.msra.mxu0 %v10790
  %12860 = vmatpush.bf16.msra.mxu0 %v10789
  %12861 = vmatpush.bf16.msra.mxu0 %v10788
  %12862 = vmatpush.bf16.msra.mxu0 %v10787
  %12863 = vmatpush.bf16.msra.mxu0 %v10786
  %12864 = vmatpush.bf16.msra.mxu0 %v10785
  %12865 = vmatmul.bf16.gmra.mxu0 %v9577
  %v12866 = vpop.f32.mrf.mxu0
  %v12867 = vadd.f32 %v12618, %v12866
  %v12868 = vpop.f32.mrf.mxu0
  %v12869 = vadd.f32 %v12620, %v12868
  %12870 = vmatmul.bf16.gmra.mxu0 %v9586
  %v12871 = vpop.f32.mrf.mxu0
  %v12872 = vadd.f32 %v12623, %v12871
  %v12873 = vpop.f32.mrf.mxu0
  %v12874 = vadd.f32 %v12625, %v12873
  %12875 = vmatmul.bf16.gmra.mxu0 %v9595
  %v12876 = vpop.f32.mrf.mxu0
  %v12877 = vadd.f32 %v12628, %v12876
  %v12878 = vpop.f32.mrf.mxu0
  %v12879 = vadd.f32 %v12630, %v12878
  %12880 = vmatmul.bf16.gmra.mxu0 %v9604
  %v12881 = vpop.f32.mrf.mxu0
  %v12882 = vadd.f32 %v12633, %v12881
  %v12883 = vpop.f32.mrf.mxu0
  %v12884 = vadd.f32 %v12635, %v12883
  %12885 = vmatmul.bf16.gmra.mxu0 %v9613
  %v12886 = vpop.f32.mrf.mxu0
  %v12887 = vadd.f32 %v12638, %v12886
  %v12888 = vpop.f32.mrf.mxu0
  %v12889 = vadd.f32 %v12640, %v12888
  %12890 = vmatmul.bf16.gmra.mxu0 %v9622
  %v12891 = vpop.f32.mrf.mxu0
  %v12892 = vadd.f32 %v12643, %v12891
  %v12893 = vpop.f32.mrf.mxu0
  %v12894 = vadd.f32 %v12645, %v12893
  %12895 = vmatmul.bf16.gmra.mxu0 %v9631
  %v12896 = vpop.f32.mrf.mxu0
  %v12897 = vadd.f32 %v12648, %v12896
  %v12898 = vpop.f32.mrf.mxu0
  %v12899 = vadd.f32 %v12650, %v12898
  %12900 = vmatmul.bf16.gmra.mxu0 %v9640
  %v12901 = vpop.f32.mrf.mxu0
  %v12902 = vadd.f32 %v12653, %v12901
  %v12903 = vpop.f32.mrf.mxu0
  %v12904 = vadd.f32 %v12655, %v12903
  %12905 = vmatmul.bf16.gmra.mxu0 %v9649
  %v12906 = vpop.f32.mrf.mxu0
  %v12907 = vadd.f32 %v12658, %v12906
  %v12908 = vpop.f32.mrf.mxu0
  %v12909 = vadd.f32 %v12660, %v12908
  %12910 = vmatmul.bf16.gmra.mxu0 %v9658
  %v12911 = vpop.f32.mrf.mxu0
  %v12912 = vadd.f32 %v12663, %v12911
  %v12913 = vpop.f32.mrf.mxu0
  %v12914 = vadd.f32 %v12665, %v12913
  %12915 = vmatmul.bf16.gmra.mxu0 %v9667
  %v12916 = vpop.f32.mrf.mxu0
  %v12917 = vadd.f32 %v12668, %v12916
  %v12918 = vpop.f32.mrf.mxu0
  %v12919 = vadd.f32 %v12670, %v12918
  %12920 = vmatmul.bf16.gmra.mxu0 %v9676
  %v12921 = vpop.f32.mrf.mxu0
  %v12922 = vadd.f32 %v12673, %v12921
  %v12923 = vpop.f32.mrf.mxu0
  %v12924 = vadd.f32 %v12675, %v12923
  %12925 = vmatmul.bf16.gmra.mxu0 %v9685
  %v12926 = vpop.f32.mrf.mxu0
  %v12927 = vadd.f32 %v12678, %v12926
  %v12928 = vpop.f32.mrf.mxu0
  %v12929 = vadd.f32 %v12680, %v12928
  %12930 = vmatmul.bf16.gmra.mxu0 %v9694
  %v12931 = vpop.f32.mrf.mxu0
  %v12932 = vadd.f32 %v12683, %v12931
  %v12933 = vpop.f32.mrf.mxu0
  %v12934 = vadd.f32 %v12685, %v12933
  %12935 = vmatmul.bf16.gmra.mxu0 %v9703
  %v12936 = vpop.f32.mrf.mxu0
  %v12937 = vadd.f32 %v12688, %v12936
  %v12938 = vpop.f32.mrf.mxu0
  %v12939 = vadd.f32 %v12690, %v12938
  %12940 = vmatmul.bf16.gmra.mxu0 %v9712
  %v12941 = vpop.f32.mrf.mxu0
  %v12942 = vadd.f32 %v12693, %v12941
  %v12943 = vpop.f32.mrf.mxu0
  %v12944 = vadd.f32 %v12695, %v12943
  %12945 = vmatmul.bf16.gmra.mxu0 %v9721
  %v12946 = vpop.f32.mrf.mxu0
  %v12947 = vadd.f32 %v12698, %v12946
  %v12948 = vpop.f32.mrf.mxu0
  %v12949 = vadd.f32 %v12700, %v12948
  %12950 = vmatmul.bf16.gmra.mxu0 %v9730
  %v12951 = vpop.f32.mrf.mxu0
  %v12952 = vadd.f32 %v12703, %v12951
  %v12953 = vpop.f32.mrf.mxu0
  %v12954 = vadd.f32 %v12705, %v12953
  %12955 = vmatmul.bf16.gmra.mxu0 %v9739
  %v12956 = vpop.f32.mrf.mxu0
  %v12957 = vadd.f32 %v12708, %v12956
  %v12958 = vpop.f32.mrf.mxu0
  %v12959 = vadd.f32 %v12710, %v12958
  %12960 = vmatmul.bf16.gmra.mxu0 %v9748
  %v12961 = vpop.f32.mrf.mxu0
  %v12962 = vadd.f32 %v12713, %v12961
  %v12963 = vpop.f32.mrf.mxu0
  %v12964 = vadd.f32 %v12715, %v12963
  %12965 = vmatmul.bf16.gmra.mxu0 %v9757
  %v12966 = vpop.f32.mrf.mxu0
  %v12967 = vadd.f32 %v12718, %v12966
  %v12968 = vpop.f32.mrf.mxu0
  %v12969 = vadd.f32 %v12720, %v12968
  %12970 = vmatmul.bf16.gmra.mxu0 %v9766
  %v12971 = vpop.f32.mrf.mxu0
  %v12972 = vadd.f32 %v12723, %v12971
  %v12973 = vpop.f32.mrf.mxu0
  %v12974 = vadd.f32 %v12725, %v12973
  %12975 = vmatmul.bf16.gmra.mxu0 %v9775
  %v12976 = vpop.f32.mrf.mxu0
  %v12977 = vadd.f32 %v12728, %v12976
  %v12978 = vpop.f32.mrf.mxu0
  %v12979 = vadd.f32 %v12730, %v12978
  %12980 = vmatmul.bf16.gmra.mxu0 %v9784
  %v12981 = vpop.f32.mrf.mxu0
  %v12982 = vadd.f32 %v12733, %v12981
  %v12983 = vpop.f32.mrf.mxu0
  %v12984 = vadd.f32 %v12735, %v12983
  %12985 = vmatmul.bf16.gmra.mxu0 %v9793
  %v12986 = vpop.f32.mrf.mxu0
  %v12987 = vadd.f32 %v12738, %v12986
  %v12988 = vpop.f32.mrf.mxu0
  %v12989 = vadd.f32 %v12740, %v12988
  %12990 = vmatmul.bf16.gmra.mxu0 %v9802
  %v12991 = vpop.f32.mrf.mxu0
  %v12992 = vadd.f32 %v12743, %v12991
  %v12993 = vpop.f32.mrf.mxu0
  %v12994 = vadd.f32 %v12745, %v12993
  %12995 = vmatmul.bf16.gmra.mxu0 %v9811
  %v12996 = vpop.f32.mrf.mxu0
  %v12997 = vadd.f32 %v12748, %v12996
  %v12998 = vpop.f32.mrf.mxu0
  %v12999 = vadd.f32 %v12750, %v12998
  %13000 = vmatmul.bf16.gmra.mxu0 %v9820
  %v13001 = vpop.f32.mrf.mxu0
  %v13002 = vadd.f32 %v12753, %v13001
  %v13003 = vpop.f32.mrf.mxu0
  %v13004 = vadd.f32 %v12755, %v13003
  %13005 = vmatmul.bf16.gmra.mxu0 %v9829
  %v13006 = vpop.f32.mrf.mxu0
  %v13007 = vadd.f32 %v12758, %v13006
  %v13008 = vpop.f32.mrf.mxu0
  %v13009 = vadd.f32 %v12760, %v13008
  %13010 = vmatmul.bf16.gmra.mxu0 %v9838
  %v13011 = vpop.f32.mrf.mxu0
  %v13012 = vadd.f32 %v12763, %v13011
  %v13013 = vpop.f32.mrf.mxu0
  %v13014 = vadd.f32 %v12765, %v13013
  %13015 = vmatmul.bf16.gmra.mxu0 %v9847
  %v13016 = vpop.f32.mrf.mxu0
  %v13017 = vadd.f32 %v12768, %v13016
  %v13018 = vpop.f32.mrf.mxu0
  %v13019 = vadd.f32 %v12770, %v13018
  %13020 = vmatmul.bf16.gmra.mxu0 %v9856
  %v13021 = vpop.f32.mrf.mxu0
  %v13022 = vadd.f32 %v12773, %v13021
  %v13023 = vpop.f32.mrf.mxu0
  %v13024 = vadd.f32 %v12775, %v13023
  %13025 = vmatmul.bf16.gmra.mxu0 %v9865
  %v13026 = vpop.f32.mrf.mxu0
  %v13027 = vadd.f32 %v12778, %v13026
  %v13028 = vpop.f32.mrf.mxu0
  %v13029 = vadd.f32 %v12780, %v13028
  %13030 = vmatmul.bf16.gmra.mxu0 %v9874
  %v13031 = vpop.f32.mrf.mxu0
  %v13032 = vadd.f32 %v12783, %v13031
  %v13033 = vpop.f32.mrf.mxu0
  %v13034 = vadd.f32 %v12785, %v13033
  %13035 = vmatmul.bf16.gmra.mxu0 %v9883
  %v13036 = vpop.f32.mrf.mxu0
  %v13037 = vadd.f32 %v12788, %v13036
  %v13038 = vpop.f32.mrf.mxu0
  %v13039 = vadd.f32 %v12790, %v13038
  %13040 = vmatmul.bf16.gmra.mxu0 %v9892
  %v13041 = vpop.f32.mrf.mxu0
  %v13042 = vadd.f32 %v12793, %v13041
  %v13043 = vpop.f32.mrf.mxu0
  %v13044 = vadd.f32 %v12795, %v13043
  %13045 = vmatmul.bf16.gmra.mxu0 %v9901
  %v13046 = vpop.f32.mrf.mxu0
  %v13047 = vadd.f32 %v12798, %v13046
  %v13048 = vpop.f32.mrf.mxu0
  %v13049 = vadd.f32 %v12800, %v13048
  %13050 = vmatmul.bf16.gmra.mxu0 %v9910
  %v13051 = vpop.f32.mrf.mxu0
  %v13052 = vadd.f32 %v12803, %v13051
  %v13053 = vpop.f32.mrf.mxu0
  %v13054 = vadd.f32 %v12805, %v13053
  %13055 = vmatmul.bf16.gmra.mxu0 %v9919
  %v13056 = vpop.f32.mrf.mxu0
  %v13057 = vadd.f32 %v12808, %v13056
  %v13058 = vpop.f32.mrf.mxu0
  %v13059 = vadd.f32 %v12810, %v13058
  %13060 = vmatmul.bf16.gmra.mxu0 %v9928
  %v13061 = vpop.f32.mrf.mxu0
  %v13062 = vadd.f32 %v12813, %v13061
  %v13063 = vpop.f32.mrf.mxu0
  %v13064 = vadd.f32 %v12815, %v13063
  %13065 = vmatmul.bf16.gmra.mxu0 %v9937
  %v13066 = vpop.f32.mrf.mxu0
  %v13067 = vadd.f32 %v12818, %v13066
  %v13068 = vpop.f32.mrf.mxu0
  %v13069 = vadd.f32 %v12820, %v13068
  %13070 = vmatmul.bf16.gmra.mxu0 %v9946
  %v13071 = vpop.f32.mrf.mxu0
  %v13072 = vadd.f32 %v12823, %v13071
  %v13073 = vpop.f32.mrf.mxu0
  %v13074 = vadd.f32 %v12825, %v13073
  %13075 = vmatmul.bf16.gmra.mxu0 %v9955
  %v13076 = vpop.f32.mrf.mxu0
  %v13077 = vadd.f32 %v12828, %v13076
  %v13078 = vpop.f32.mrf.mxu0
  %v13079 = vadd.f32 %v12830, %v13078
  %13080 = vmatmul.bf16.gmra.mxu0 %v9964
  %v13081 = vpop.f32.mrf.mxu0
  %v13082 = vadd.f32 %v12833, %v13081
  %v13083 = vpop.f32.mrf.mxu0
  %v13084 = vadd.f32 %v12835, %v13083
  %13085 = vmatmul.bf16.gmra.mxu0 %v9973
  %v13086 = vpop.f32.mrf.mxu0
  %v13087 = vadd.f32 %v12838, %v13086
  %v13088 = vpop.f32.mrf.mxu0
  %v13089 = vadd.f32 %v12840, %v13088
  %13090 = vmatmul.bf16.gmra.mxu0 %v9982
  %v13091 = vpop.f32.mrf.mxu0
  %v13092 = vadd.f32 %v12843, %v13091
  %v13093 = vpop.f32.mrf.mxu0
  %v13094 = vadd.f32 %v12845, %v13093
  %13095 = vmatmul.bf16.gmra.mxu0 %v9991
  %v13096 = vpop.f32.mrf.mxu0
  %v13097 = vadd.f32 %v12848, %v13096
  %v13098 = vpop.f32.mrf.mxu0
  %v13099 = vadd.f32 %v12850, %v13098
  %13100 = vmatmul.bf16.gmra.mxu0 %v10000
  %v13101 = vpop.f32.mrf.mxu0
  %v13102 = vadd.f32 %v12853, %v13101
  %v13103 = vpop.f32.mrf.mxu0
  %v13104 = vadd.f32 %v12855, %v13103
  %13105 = vdwg.mxu0
  %v13106 = vmax.f32 %v12867, 0.0
  %v13107 = vmax.f32 %v12869, 0.0
  %v13108 = vmax.f32 %v12872, 0.0
  %v13109 = vmax.f32 %v12874, 0.0
  %v13110 = vmax.f32 %v12877, 0.0
  %v13111 = vmax.f32 %v12879, 0.0
  %v13112 = vmax.f32 %v12882, 0.0
  %v13113 = vmax.f32 %v12884, 0.0
  %v13114 = vmax.f32 %v12887, 0.0
  %v13115 = vmax.f32 %v12889, 0.0
  %v13116 = vmax.f32 %v12892, 0.0
  %v13117 = vmax.f32 %v12894, 0.0
  %v13118 = vmax.f32 %v12897, 0.0
  %v13119 = vmax.f32 %v12899, 0.0
  %v13120 = vmax.f32 %v12902, 0.0
  %v13121 = vmax.f32 %v12904, 0.0
  %v13122 = vmax.f32 %v12907, 0.0
  %v13123 = vmax.f32 %v12909, 0.0
  %v13124 = vmax.f32 %v12912, 0.0
  %v13125 = vmax.f32 %v12914, 0.0
  %v13126 = vmax.f32 %v12917, 0.0
  %v13127 = vmax.f32 %v12919, 0.0
  %v13128 = vmax.f32 %v12922, 0.0
  %v13129 = vmax.f32 %v12924, 0.0
  %v13130 = vmax.f32 %v12927, 0.0
  %v13131 = vmax.f32 %v12929, 0.0
  %v13132 = vmax.f32 %v12932, 0.0
  %v13133 = vmax.f32 %v12934, 0.0
  %v13134 = vmax.f32 %v12937, 0.0
  %v13135 = vmax.f32 %v12939, 0.0
  %v13136 = vmax.f32 %v12942, 0.0
  %v13137 = vmax.f32 %v12944, 0.0
  %v13138 = vmax.f32 %v12947, 0.0
  %v13139 = vmax.f32 %v12949, 0.0
  %v13140 = vmax.f32 %v12952, 0.0
  %v13141 = vmax.f32 %v12954, 0.0
  %v13142 = vmax.f32 %v12957, 0.0
  %v13143 = vmax.f32 %v12959, 0.0
  %v13144 = vmax.f32 %v12962, 0.0
  %v13145 = vmax.f32 %v12964, 0.0
  %v13146 = vmax.f32 %v12967, 0.0
  %v13147 = vmax.f32 %v12969, 0.0
  %v13148 = vmax.f32 %v12972, 0.0
  %v13149 = vmax.f32 %v12974, 0.0
  %v13150 = vmax.f32 %v12977, 0.0
  %v13151 = vmax.f32 %v12979, 0.0
  %v13152 = vmax.f32 %v12982, 0.0
  %v13153 = vmax.f32 %v12984, 0.0
  %v13154 = vmax.f32 %v12987, 0.0
  %v13155 = vmax.f32 %v12989, 0.0
  %v13156 = vmax.f32 %v12992, 0.0
  %v13157 = vmax.f32 %v12994, 0.0
  %v13158 = vmax.f32 %v12997, 0.0
  %v13159 = vmax.f32 %v12999, 0.0
  %v13160 = vmax.f32 %v13002, 0.0
  %v13161 = vmax.f32 %v13004, 0.0
  %v13162 = vmax.f32 %v13007, 0.0
  %v13163 = vmax.f32 %v13009, 0.0
  %v13164 = vmax.f32 %v13012, 0.0
  %v13165 = vmax.f32 %v13014, 0.0
  %v13166 = vmax.f32 %v13017, 0.0
  %v13167 = vmax.f32 %v13019, 0.0
  %v13168 = vmax.f32 %v13022, 0.0
  %v13169 = vmax.f32 %v13024, 0.0
  %v13170 = vmax.f32 %v13027, 0.0
  %v13171 = vmax.f32 %v13029, 0.0
  %v13172 = vmax.f32 %v13032, 0.0
  %v13173 = vmax.f32 %v13034, 0.0
  %v13174 = vmax.f32 %v13037, 0.0
  %v13175 = vmax.f32 %v13039, 0.0
  %v13176 = vmax.f32 %v13042, 0.0
  %v13177 = vmax.f32 %v13044, 0.0
  %v13178 = vmax.f32 %v13047, 0.0
  %v13179 = vmax.f32 %v13049, 0.0
  %v13180 = vmax.f32 %v13052, 0.0
  %v13181 = vmax.f32 %v13054, 0.0
  %v13182 = vmax.f32 %v13057, 0.0
  %v13183 = vmax.f32 %v13059, 0.0
  %v13184 = vmax.f32 %v13062, 0.0
  %v13185 = vmax.f32 %v13064, 0.0
  %v13186 = vmax.f32 %v13067, 0.0
  %v13187 = vmax.f32 %v13069, 0.0
  %v13188 = vmax.f32 %v13072, 0.0
  %v13189 = vmax.f32 %v13074, 0.0
  %v13190 = vmax.f32 %v13077, 0.0
  %v13191 = vmax.f32 %v13079, 0.0
  %v13192 = vmax.f32 %v13082, 0.0
  %v13193 = vmax.f32 %v13084, 0.0
  %v13194 = vmax.f32 %v13087, 0.0
  %v13195 = vmax.f32 %v13089, 0.0
  %v13196 = vmax.f32 %v13092, 0.0
  %v13197 = vmax.f32 %v13094, 0.0
  %v13198 = vmax.f32 %v13097, 0.0
  %v13199 = vmax.f32 %v13099, 0.0
  %v13200 = vmax.f32 %v13102, 0.0
  %v13201 = vmax.f32 %v13104, 0.0
  %v13202 = vpack.c.bf16 %v13106, %v13106
  %v13203 = vpack.c.bf16 %v13107, %v13107
  %v13204 = vpack.c.bf16 %v13108, %v13108
  %v13205 = vpack.c.bf16 %v13109, %v13109
  %v13206 = vpack.c.bf16 %v13110, %v13110
  %v13207 = vpack.c.bf16 %v13111, %v13111
  %v13208 = vpack.c.bf16 %v13112, %v13112
  %v13209 = vpack.c.bf16 %v13113, %v13113
  %v13210 = vpack.c.bf16 %v13114, %v13114
  %v13211 = vpack.c.bf16 %v13115, %v13115
  %v13212 = vpack.c.bf16 %v13116, %v13116
  %v13213 = vpack.c.bf16 %v13117, %v13117
  %v13214 = vpack.c.bf16 %v13118, %v13118
  %v13215 = vpack.c.bf16 %v13119, %v13119
  %v13216 = vpack.c.bf16 %v13120, %v13120
  %v13217 = vpack.c.bf16 %v13121, %v13121
  %v13218 = vpack.c.bf16 %v13122, %v13122
  %v13219 = vpack.c.bf16 %v13123, %v13123
  %v13220 = vpack.c.bf16 %v13124, %v13124
  %v13221 = vpack.c.bf16 %v13125, %v13125
  %v13222 = vpack.c.bf16 %v13126, %v13126
  %v13223 = vpack.c.bf16 %v13127, %v13127
  %v13224 = vpack.c.bf16 %v13128, %v13128
  %v13225 = vpack.c.bf16 %v13129, %v13129
  %v13226 = vpack.c.bf16 %v13130, %v13130
  %v13227 = vpack.c.bf16 %v13131, %v13131
  %v13228 = vpack.c.bf16 %v13132, %v13132
  %v13229 = vpack.c.bf16 %v13133, %v13133
  %v13230 = vpack.c.bf16 %v13134, %v13134
  %v13231 = vpack.c.bf16 %v13135, %v13135
  %v13232 = vpack.c.bf16 %v13136, %v13136
  %v13233 = vpack.c.bf16 %v13137, %v13137
  %v13234 = vpack.c.bf16 %v13138, %v13138
  %v13235 = vpack.c.bf16 %v13139, %v13139
  %v13236 = vpack.c.bf16 %v13140, %v13140
  %v13237 = vpack.c.bf16 %v13141, %v13141
  %v13238 = vpack.c.bf16 %v13142, %v13142
  %v13239 = vpack.c.bf16 %v13143, %v13143
  %v13240 = vpack.c.bf16 %v13144, %v13144
  %v13241 = vpack.c.bf16 %v13145, %v13145
  %v13242 = vpack.c.bf16 %v13146, %v13146
  %v13243 = vpack.c.bf16 %v13147, %v13147
  %v13244 = vpack.c.bf16 %v13148, %v13148
  %v13245 = vpack.c.bf16 %v13149, %v13149
  %v13246 = vpack.c.bf16 %v13150, %v13150
  %v13247 = vpack.c.bf16 %v13151, %v13151
  %v13248 = vpack.c.bf16 %v13152, %v13152
  %v13249 = vpack.c.bf16 %v13153, %v13153
  %v13250 = vpack.c.bf16 %v13154, %v13154
  %v13251 = vpack.c.bf16 %v13155, %v13155
  %v13252 = vpack.c.bf16 %v13156, %v13156
  %v13253 = vpack.c.bf16 %v13157, %v13157
  %v13254 = vpack.c.bf16 %v13158, %v13158
  %v13255 = vpack.c.bf16 %v13159, %v13159
  %v13256 = vpack.c.bf16 %v13160, %v13160
  %v13257 = vpack.c.bf16 %v13161, %v13161
  %v13258 = vpack.c.bf16 %v13162, %v13162
  %v13259 = vpack.c.bf16 %v13163, %v13163
  %v13260 = vpack.c.bf16 %v13164, %v13164
  %v13261 = vpack.c.bf16 %v13165, %v13165
  %v13262 = vpack.c.bf16 %v13166, %v13166
  %v13263 = vpack.c.bf16 %v13167, %v13167
  %v13264 = vpack.c.bf16 %v13168, %v13168
  %v13265 = vpack.c.bf16 %v13169, %v13169
  %v13266 = vpack.c.bf16 %v13170, %v13170
  %v13267 = vpack.c.bf16 %v13171, %v13171
  %v13268 = vpack.c.bf16 %v13172, %v13172
  %v13269 = vpack.c.bf16 %v13173, %v13173
  %v13270 = vpack.c.bf16 %v13174, %v13174
  %v13271 = vpack.c.bf16 %v13175, %v13175
  %v13272 = vpack.c.bf16 %v13176, %v13176
  %v13273 = vpack.c.bf16 %v13177, %v13177
  %v13274 = vpack.c.bf16 %v13178, %v13178
  %v13275 = vpack.c.bf16 %v13179, %v13179
  %v13276 = vpack.c.bf16 %v13180, %v13180
  %v13277 = vpack.c.bf16 %v13181, %v13181
  %v13278 = vpack.c.bf16 %v13182, %v13182
  %v13279 = vpack.c.bf16 %v13183, %v13183
  %v13280 = vpack.c.bf16 %v13184, %v13184
  %v13281 = vpack.c.bf16 %v13185, %v13185
  %v13282 = vpack.c.bf16 %v13186, %v13186
  %v13283 = vpack.c.bf16 %v13187, %v13187
  %v13284 = vpack.c.bf16 %v13188, %v13188
  %v13285 = vpack.c.bf16 %v13189, %v13189
  %v13286 = vpack.c.bf16 %v13190, %v13190
  %v13287 = vpack.c.bf16 %v13191, %v13191
  %v13288 = vpack.c.bf16 %v13192, %v13192
  %v13289 = vpack.c.bf16 %v13193, %v13193
  %v13290 = vpack.c.bf16 %v13194, %v13194
  %v13291 = vpack.c.bf16 %v13195, %v13195
  %v13292 = vpack.c.bf16 %v13196, %v13196
  %v13293 = vpack.c.bf16 %v13197, %v13197
  %v13294 = vpack.c.bf16 %v13198, %v13198
  %v13295 = vpack.c.bf16 %v13199, %v13199
  %v13296 = vpack.c.bf16 %v13200, %v13200
  %v13297 = vpack.c.bf16 %v13201, %v13201
  %13298 = vst [vmem:[%s4] sm:$0xf] %v13202
  %13299 = vst [vmem:[%s4 + $0x4] sm:$0xf] %v13203
  %13300 = vst [vmem:[%s4 + $0x8] sm:$0xf] %v13204
  %13301 = vst [vmem:[%s4 + $0xc] sm:$0xf] %v13205
  %13302 = vst [vmem:[%s4 + $0x10] sm:$0xf] %v13206
  %13303 = vst [vmem:[%s4 + $0x14] sm:$0xf] %v13207
  %13304 = vst [vmem:[%s4 + $0x18] sm:$0xf] %v13208
  %13305 = vst [vmem:[%s4 + $0x1c] sm:$0xf] %v13209
  %13306 = vst [vmem:[%s4 + $0x20] sm:$0xf] %v13210
  %13307 = vst [vmem:[%s4 + $0x24] sm:$0xf] %v13211
  %13308 = vst [vmem:[%s4 + $0x28] sm:$0xf] %v13212
  %13309 = vst [vmem:[%s4 + $0x2c] sm:$0xf] %v13213
  %13310 = vst [vmem:[%s4 + $0x30] sm:$0xf] %v13214
  %13311 = vst [vmem:[%s4 + $0x34] sm:$0xf] %v13215
  %13312 = vst [vmem:[%s4 + $0x38] sm:$0xf] %v13216
  %13313 = vst [vmem:[%s4 + $0x3c] sm:$0xf] %v13217
  %13314 = vst [vmem:[%s4 + $0x40] sm:$0xf] %v13218
  %13315 = vst [vmem:[%s4 + $0x44] sm:$0xf] %v13219
  %13316 = vst [vmem:[%s4 + $0x48] sm:$0xf] %v13220
  %13317 = vst [vmem:[%s4 + $0x4c] sm:$0xf] %v13221
  %13318 = vst [vmem:[%s4 + $0x50] sm:$0xf] %v13222
  %13319 = vst [vmem:[%s4 + $0x54] sm:$0xf] %v13223
  %13320 = vst [vmem:[%s4 + $0x58] sm:$0xf] %v13224
  %13321 = vst [vmem:[%s4 + $0x5c] sm:$0xf] %v13225
  %13322 = vst [vmem:[%s4 + $0x60] sm:$0xf] %v13226
  %13323 = vst [vmem:[%s4 + $0x64] sm:$0xf] %v13227
  %13324 = vst [vmem:[%s4 + $0x68] sm:$0xf] %v13228
  %13325 = vst [vmem:[%s4 + $0x6c] sm:$0xf] %v13229
  %13326 = vst [vmem:[%s4 + $0x70] sm:$0xf] %v13230
  %13327 = vst [vmem:[%s4 + $0x74] sm:$0xf] %v13231
  %13328 = vst [vmem:[%s4 + $0x78] sm:$0xf] %v13232
  %13329 = vst [vmem:[%s4 + $0x7c] sm:$0xf] %v13233
  %13330 = vst [vmem:[%s4 + $0x80] sm:$0xf] %v13234
  %13331 = vst [vmem:[%s4 + $0x84] sm:$0xf] %v13235
  %13332 = vst [vmem:[%s4 + $0x88] sm:$0xf] %v13236
  %13333 = vst [vmem:[%s4 + $0x8c] sm:$0xf] %v13237
  %13334 = vst [vmem:[%s4 + $0x90] sm:$0xf] %v13238
  %13335 = vst [vmem:[%s4 + $0x94] sm:$0xf] %v13239
  %13336 = vst [vmem:[%s4 + $0x98] sm:$0xf] %v13240
  %13337 = vst [vmem:[%s4 + $0x9c] sm:$0xf] %v13241
  %13338 = vst [vmem:[%s4 + $0xa0] sm:$0xf] %v13242
  %13339 = vst [vmem:[%s4 + $0xa4] sm:$0xf] %v13243
  %13340 = vst [vmem:[%s4 + $0xa8] sm:$0xf] %v13244
  %13341 = vst [vmem:[%s4 + $0xac] sm:$0xf] %v13245
  %13342 = vst [vmem:[%s4 + $0xb0] sm:$0xf] %v13246
  %13343 = vst [vmem:[%s4 + $0xb4] sm:$0xf] %v13247
  %13344 = vst [vmem:[%s4 + $0xb8] sm:$0xf] %v13248
  %13345 = vst [vmem:[%s4 + $0xbc] sm:$0xf] %v13249
  %13346 = vst [vmem:[%s4 + $0xc0] sm:$0xf] %v13250
  %13347 = vst [vmem:[%s4 + $0xc4] sm:$0xf] %v13251
  %13348 = vst [vmem:[%s4 + $0xc8] sm:$0xf] %v13252
  %13349 = vst [vmem:[%s4 + $0xcc] sm:$0xf] %v13253
  %13350 = vst [vmem:[%s4 + $0xd0] sm:$0xf] %v13254
  %13351 = vst [vmem:[%s4 + $0xd4] sm:$0xf] %v13255
  %13352 = vst [vmem:[%s4 + $0xd8] sm:$0xf] %v13256
  %13353 = vst [vmem:[%s4 + $0xdc] sm:$0xf] %v13257
  %13354 = vst [vmem:[%s4 + $0xe0] sm:$0xf] %v13258
  %13355 = vst [vmem:[%s4 + $0xe4] sm:$0xf] %v13259
  %13356 = vst [vmem:[%s4 + $0xe8] sm:$0xf] %v13260
  %13357 = vst [vmem:[%s4 + $0xec] sm:$0xf] %v13261
  %13358 = vst [vmem:[%s4 + $0xf0] sm:$0xf] %v13262
  %13359 = vst [vmem:[%s4 + $0xf4] sm:$0xf] %v13263
  %13360 = vst [vmem:[%s4 + $0xf8] sm:$0xf] %v13264
  %13361 = vst [vmem:[%s4 + $0xfc] sm:$0xf] %v13265
  %13362 = vst [vmem:[%s4 + $0x100] sm:$0xf] %v13266
  %13363 = vst [vmem:[%s4 + $0x104] sm:$0xf] %v13267
  %13364 = vst [vmem:[%s4 + $0x108] sm:$0xf] %v13268
  %13365 = vst [vmem:[%s4 + $0x10c] sm:$0xf] %v13269
  %13366 = vst [vmem:[%s4 + $0x110] sm:$0xf] %v13270
  %13367 = vst [vmem:[%s4 + $0x114] sm:$0xf] %v13271
  %13368 = vst [vmem:[%s4 + $0x118] sm:$0xf] %v13272
  %13369 = vst [vmem:[%s4 + $0x11c] sm:$0xf] %v13273
  %13370 = vst [vmem:[%s4 + $0x120] sm:$0xf] %v13274
  %13371 = vst [vmem:[%s4 + $0x124] sm:$0xf] %v13275
  %13372 = vst [vmem:[%s4 + $0x128] sm:$0xf] %v13276
  %13373 = vst [vmem:[%s4 + $0x12c] sm:$0xf] %v13277
  %13374 = vst [vmem:[%s4 + $0x130] sm:$0xf] %v13278
  %13375 = vst [vmem:[%s4 + $0x134] sm:$0xf] %v13279
  %13376 = vst [vmem:[%s4 + $0x138] sm:$0xf] %v13280
  %13377 = vst [vmem:[%s4 + $0x13c] sm:$0xf] %v13281
  %13378 = vst [vmem:[%s4 + $0x140] sm:$0xf] %v13282
  %13379 = vst [vmem:[%s4 + $0x144] sm:$0xf] %v13283
  %13380 = vst [vmem:[%s4 + $0x148] sm:$0xf] %v13284
  %13381 = vst [vmem:[%s4 + $0x14c] sm:$0xf] %v13285
  %13382 = vst [vmem:[%s4 + $0x150] sm:$0xf] %v13286
  %13383 = vst [vmem:[%s4 + $0x154] sm:$0xf] %v13287
  %13384 = vst [vmem:[%s4 + $0x158] sm:$0xf] %v13288
  %13385 = vst [vmem:[%s4 + $0x15c] sm:$0xf] %v13289
  %13386 = vst [vmem:[%s4 + $0x160] sm:$0xf] %v13290
  %13387 = vst [vmem:[%s4 + $0x164] sm:$0xf] %v13291
  %13388 = vst [vmem:[%s4 + $0x168] sm:$0xf] %v13292
  %13389 = vst [vmem:[%s4 + $0x16c] sm:$0xf] %v13293
  %13390 = vst [vmem:[%s4 + $0x170] sm:$0xf] %v13294
  %13391 = vst [vmem:[%s4 + $0x174] sm:$0xf] %v13295
  %13392 = vst [vmem:[%s4 + $0x178] sm:$0xf] %v13296
  %13393 = vst [vmem:[%s4 + $0x17c] sm:$0xf] %v13297
  // Predicated region
  $region18: #{inconv_forward.1} parent=0 // pred_check
    _
  $region19: #{inconv_forward.1} parent=0 // pred_check_branch
    %13395 = sbr.rel (0) target = $region21
  $region20: #{inconv_forward.1} parent=0 // pred_region
    _
  $region21: #{inconv_forward.1} parent=0 // pred_fallthru
    _
  // Predicated region
  $region22: #{inconv_forward.1} parent=0 // pred_check
    _
  $region23: #{inconv_forward.1} parent=0 // pred_check_branch
    %13397 = sbr.rel (0) target = $region25
  $region24: #{inconv_forward.1} parent=0 // pred_region
    _
  $region25: #{inconv_forward.1} parent=0 // pred_fallthru
    _

</llo_original>
